<compile_context>
chip_gen: v6e
topology: v6e:2x2x1
jax: 0.10.0
libtpu: 0.0.40
codegen_flags: <defaults>
</compile_context>

<pallas_src>
import functools

import jax
import jax.numpy as jnp
from jax import lax
from jax.experimental import pallas as pl
from jax.experimental.pallas import tpu as pltpu

EPS = 1e-5        # BatchNorm2d default eps
SLOPE = 0.01      # LeakyReLU default negative_slope

RES_LAYER_NUM = 7
DILATIONS = (1, 1, 1, 2, 2, 4, 4)


def _spec(shape):
    # full-array block on a trivial grid=(1,)
    return pl.BlockSpec(tuple(shape), lambda i: (0,) * len(shape))


def _leaky(v):
    # max(v, 0.01*v) == LeakyReLU(0.01) for any sign of v.
    return jnp.maximum(v, SLOPE * v)


def _circ_roll(x, shift, axis=2):
    """jnp.roll with static shift, avoiding zero-sized concat operands."""
    w = x.shape[axis]
    s = shift % w
    if s == 0:
        return x
    return jnp.concatenate(
        [lax.slice_in_dim(x, w - s, w, axis=axis),
         lax.slice_in_dim(x, 0, w - s, axis=axis)], axis=axis)


# -----------------------------------------------------------------------------
# One fused kernel: whole Snake2d forward with VMEM-resident activations.
# Layout: activations are (N, C, W) with N = B*H, channels on sublanes and the
# circular "points" axis W on lanes.  Matmuls are batched over N.
# -----------------------------------------------------------------------------
def _snake_kernel(x_ref, hw_ref, hg_ref, hbe_ref,
                  rw_ref, rg_ref, rbe_ref,
                  fw_ref, fb_ref, w1g_ref, w1s_ref, b1_ref, w2_ref, b2_ref,
                  o_ref, *, n_adj, dilations):
    N, _, W = x_ref.shape
    K = 2 * n_adj + 1
    inv_m = 1.0 / float(N * W)

    def bmm(w2d, rhs_bf):
        # (Co, Ci) x (N, Ci, W) -> (N, Co, W); bf16 operands, f32 accumulation.
        # Weight is broadcast over the batch dim so the contraction lowers as a
        # standard batched MXU matmul (weights are tiny; activations dominate).
        w_b = jnp.broadcast_to(w2d[None], (N,) + w2d.shape)
        return jnp.einsum('nok,nkw->now', w_b, rhs_bf,
                          preferred_element_type=jnp.float32)

    def circ_block(cur_bf, w2d, g, be, dil, residual_f32):
        """circular Conv([1,K], dilation) -> BN(train) -> LeakyReLU (+ residual)."""
        pad = n_adj * dil
        # circular taps: tap k reads x[..., (w + k*dil - pad) mod W], i.e. a
        # static circular roll along the lane (points) axis; concat over taps
        # along the channel (sublane) axis builds the im2col operand in-register.
        col = jnp.concatenate(
            [_circ_roll(cur_bf, pad - k * dil, axis=2) for k in range(K)],
            axis=1)                                   # (N, K*Cin, W) bf16
        acc = bmm(w2d, col)                           # (N, SD, W) f32
        # Conv bias omitted: training-mode BN subtracts the per-channel batch
        # mean, so a constant per-channel shift is a mathematical no-op.
        # BatchNorm2d training forward: two-pass batch stats over (N, W), f32.
        mu = jnp.sum(jnp.sum(acc, axis=2, keepdims=True),
                     axis=0, keepdims=True) * inv_m
        cen = acc - mu
        var = jnp.sum(jnp.sum(cen * cen, axis=2, keepdims=True),
                      axis=0, keepdims=True) * inv_m  # biased variance
        y = cen * lax.rsqrt(var + EPS) * g + be
        y = _leaky(y)
        if residual_f32 is not None:                  # x = block(x) + x
            y = y + residual_f32
        return y                                      # (N, SD, W) f32

    # ---- head + residual chain, fully VMEM-resident ----
    y = circ_block(x_ref[...], hw_ref[...], hg_ref[...], hbe_ref[...], 1, None)
    states = [y.astype(jnp.bfloat16)]                 # bf16: matmul operand only
    for i, dil in enumerate(dilations):
        y = circ_block(states[-1], rw_ref[i], rg_ref[i], rbe_ref[i], dil, y)
        states.append(y.astype(jnp.bfloat16))

    # concatenated states (torch.cat(states, dim=1)) -> (N, 8*SD, W) bf16
    state = jnp.concatenate(states, axis=1)

    # ---- fusion 1x1 conv + max over the points axis (dim=3 in NCHW) ----
    fy = bmm(fw_ref[...], state) + fb_ref[...]        # (N, FD, W) f32
    glob = jnp.max(fy, axis=2, keepdims=True)         # (N, FD, 1)

    # ---- prediction: cat([glob, state]) -> 1x1 -> LeakyReLU -> 1x1 ----
    # (the channel concat is fused by splitting the first conv's weight)
    hs = bmm(w1s_ref[...], state)                     # (N, C1, W)
    hg = bmm(w1g_ref[...], glob.astype(jnp.bfloat16)) # (N, C1, 1)
    h = _leaky(hs + hg + b1_ref[...])
    out = bmm(w2_ref[...], h.astype(jnp.bfloat16)) + b2_ref[...]
    o_ref[...] = out.astype(o_ref.dtype)              # (N, out_dim, W)


# -----------------------------------------------------------------------------
# Full Snake2d forward (NCHW in / NCHW out), single pallas_call.
# -----------------------------------------------------------------------------
def snake2d_forward(x, params, n_adj=4):
    B, Cin, H, W = x.shape
    N = B * H
    K = 2 * n_adj + 1
    SD = params["head"]["w"].shape[2]                 # state_dim
    CC = (RES_LAYER_NUM + 1) * SD                     # concatenated channels
    FD = params["fusion"]["w"].shape[1]               # fusion_state_dim
    C1 = params["pred"]["w2"].shape[0]                # prediction hidden
    out_dim = params["pred"]["w2"].shape[1]

    # NCHW -> (N=B*H, C, W): channels on sublanes, points on lanes; bf16
    # because it is consumed only as a matmul operand.
    xs = jnp.transpose(x, (0, 2, 1, 3)).reshape(N, Cin, W).astype(jnp.bfloat16)

    # pre-reshape / pre-cast weights (tiny, done once wrapper-side).
    head_w = jnp.transpose(
        params["head"]["w"].reshape(K * Cin, SD)).astype(jnp.bfloat16)
    head_g = params["head"]["gamma"].reshape(1, SD, 1)
    head_be = params["head"]["beta"].reshape(1, SD, 1)
    res_w = jnp.stack(
        [jnp.transpose(params[f"res{i}"]["w"].reshape(K * SD, SD))
         for i in range(RES_LAYER_NUM)]).astype(jnp.bfloat16)
    res_g = jnp.stack([params[f"res{i}"]["gamma"].reshape(1, SD, 1)
                       for i in range(RES_LAYER_NUM)])
    res_be = jnp.stack([params[f"res{i}"]["beta"].reshape(1, SD, 1)
                        for i in range(RES_LAYER_NUM)])
    fw = jnp.transpose(params["fusion"]["w"]).astype(jnp.bfloat16)   # (FD, CC)
    fb = params["fusion"]["b"].reshape(1, FD, 1)
    w1g = jnp.transpose(params["pred"]["w1_g"]).astype(jnp.bfloat16) # (C1, FD)
    w1s = jnp.transpose(params["pred"]["w1_s"]).astype(jnp.bfloat16) # (C1, CC)
    b1 = params["pred"]["b1"].reshape(1, C1, 1)
    w2 = jnp.transpose(params["pred"]["w2"]).astype(jnp.bfloat16)    # (out, C1)
    b2 = params["pred"]["b2"].reshape(1, out_dim, 1)

    inputs = (xs, head_w, head_g, head_be, res_w, res_g, res_be,
              fw, fb, w1g, w1s, b1, w2, b2)

    flops = 2 * N * W * (K * Cin * SD
                         + RES_LAYER_NUM * K * SD * SD
                         + CC * FD + CC * C1 + C1 * out_dim) + 2 * N * FD * C1
    bytes_accessed = (sum(int(a.size) * int(a.dtype.itemsize) for a in inputs)
                      + N * out_dim * W * 4)

    kernel = functools.partial(_snake_kernel, n_adj=n_adj, dilations=DILATIONS)
    out3 = pl.pallas_call(
        kernel,
        grid=(1,),
        in_specs=[_spec(a.shape) for a in inputs],
        out_specs=_spec((N, out_dim, W)),
        out_shape=jax.ShapeDtypeStruct((N, out_dim, W), jnp.float32),
        compiler_params=pltpu.CompilerParams(
            dimension_semantics=("arbitrary",),
            vmem_limit_bytes=32 * 1024 * 1024),
        cost_estimate=pl.CostEstimate(
            flops=int(flops),
            transcendentals=int((RES_LAYER_NUM + 1) * SD),
            bytes_accessed=int(bytes_accessed)),
    )(*inputs)

    # (N, 64, W) -> (B, 64, H, W)
    return out3.reshape(B, H, out_dim, W).transpose(0, 2, 1, 3)


# -----------------------------------------------------------------------------
# Deterministic parameter initialization (shapes follow the PyTorch module).
# -----------------------------------------------------------------------------
def init_params(key, state_dim, feature_dim, n_adj=4,
                fusion_dim=256, pred_hidden=256, out_dim=64):
    K = 2 * n_adj + 1
    keys = list(jax.random.split(key, 2 * (2 + RES_LAYER_NUM) + 4))
    ki = iter(keys)

    def conv(kw, kb, ksz, cin, cout):
        bound = 1.0 / (cin * ksz) ** 0.5
        w = jax.random.uniform(kw, (ksz, cin, cout), jnp.float32, -bound, bound)
        b = jax.random.uniform(kb, (1, cout), jnp.float32, -bound, bound)
        return w, b

    def bn(c):
        return jnp.ones((1, c), jnp.float32), jnp.zeros((1, c), jnp.float32)

    params = {}
    w, b = conv(next(ki), next(ki), K, feature_dim, state_dim)
    g, be = bn(state_dim)
    # conv biases before BN are kept for parameter fidelity but are a
    # mathematical no-op under training-mode BN, so the kernel ignores them.
    params["head"] = dict(w=w, b=b, gamma=g, beta=be)
    for i in range(RES_LAYER_NUM):
        w, b = conv(next(ki), next(ki), K, state_dim, state_dim)
        g, be = bn(state_dim)
        params[f"res{i}"] = dict(w=w, b=b, gamma=g, beta=be)

    concat_dim = state_dim * (RES_LAYER_NUM + 1)
    wf, bf = conv(next(ki), next(ki), 1, concat_dim, fusion_dim)
    params["fusion"] = dict(w=wf[0], b=bf)

    w1, b1 = conv(next(ki), next(ki), 1, concat_dim + fusion_dim, pred_hidden)
    w2, b2 = conv(next(ki), next(ki), 1, pred_hidden, out_dim)
    # channel order of torch.cat([global_state, state], dim=1): global first.
    params["pred"] = dict(w1_g=w1[0, :fusion_dim], w1_s=w1[0, fusion_dim:],
                          b1=b1, w2=w2[0], b2=b2)
    return params


if __name__ == "__main__":
    B, FEATURE_DIM, STATE_DIM, KERNEL_H, NUM_POINTS = 2, 8, 16, 2, 40

    root = jax.random.PRNGKey(0)
    kx, kp = jax.random.split(root)
    # x follows PyTorch NCHW: (B, feature_dim, kernel_h, num_points)
    x = jax.random.normal(kx, (B, FEATURE_DIM, KERNEL_H, NUM_POINTS), jnp.float32)
    params = init_params(kp, STATE_DIM, FEATURE_DIM)

    out = jax.jit(snake2d_forward)(x, params)
    out = jax.block_until_ready(out)

    assert out.shape == (B, 64, KERNEL_H, NUM_POINTS), out.shape
    assert jnp.isfinite(out).all()
    print("KERNEL_OK")
</pallas_src>

<mosaic_0001>
module attributes {stable_mosaic.version = 11 : i64} {
  func.func @_snake_kernel(%arg0: i32, %arg1: memref<4x8x40xbf16, #tpu.memory_space<vmem>>, %arg2: memref<16x72xbf16, #tpu.memory_space<vmem>>, %arg3: memref<1x16x1xf32, #tpu.memory_space<vmem>>, %arg4: memref<1x16x1xf32, #tpu.memory_space<vmem>>, %arg5: memref<7x16x144xbf16, #tpu.memory_space<vmem>>, %arg6: memref<7x1x16x1xf32, #tpu.memory_space<vmem>>, %arg7: memref<7x1x16x1xf32, #tpu.memory_space<vmem>>, %arg8: memref<256x128xbf16, #tpu.memory_space<vmem>>, %arg9: memref<1x256x1xf32, #tpu.memory_space<vmem>>, %arg10: memref<256x256xbf16, #tpu.memory_space<vmem>>, %arg11: memref<256x128xbf16, #tpu.memory_space<vmem>>, %arg12: memref<1x256x1xf32, #tpu.memory_space<vmem>>, %arg13: memref<64x256xbf16, #tpu.memory_space<vmem>>, %arg14: memref<1x64x1xf32, #tpu.memory_space<vmem>>, %arg15: memref<4x64x40xf32, #tpu.memory_space<vmem>>) attributes {dimension_semantics = [#tpu.dimension_semantics<arbitrary>], iteration_bounds = array<i64: 1>, scalar_prefetch = 0 : i64, scratch_operands = 0 : i64, tpu.core_type = #tpu.core_type<tc>, window_params = [{pipeline_mode = #tpu.pipeline_mode<synchronous>, transform_indices = @transform_0, window_bounds = array<i64: 4, 8, 40>}, {pipeline_mode = #tpu.pipeline_mode<synchronous>, transform_indices = @transform_1, window_bounds = array<i64: 16, 72>}, {pipeline_mode = #tpu.pipeline_mode<synchronous>, transform_indices = @transform_2, window_bounds = array<i64: 1, 16, 1>}, {pipeline_mode = #tpu.pipeline_mode<synchronous>, transform_indices = @transform_3, window_bounds = array<i64: 1, 16, 1>}, {pipeline_mode = #tpu.pipeline_mode<synchronous>, transform_indices = @transform_4, window_bounds = array<i64: 7, 16, 144>}, {pipeline_mode = #tpu.pipeline_mode<synchronous>, transform_indices = @transform_5, window_bounds = array<i64: 7, 1, 16, 1>}, {pipeline_mode = #tpu.pipeline_mode<synchronous>, transform_indices = @transform_6, window_bounds = array<i64: 7, 1, 16, 1>}, {pipeline_mode = #tpu.pipeline_mode<synchronous>, transform_indices = @transform_7, window_bounds = array<i64: 256, 128>}, {pipeline_mode = #tpu.pipeline_mode<synchronous>, transform_indices = @transform_8, window_bounds = array<i64: 1, 256, 1>}, {pipeline_mode = #tpu.pipeline_mode<synchronous>, transform_indices = @transform_9, window_bounds = array<i64: 256, 256>}, {pipeline_mode = #tpu.pipeline_mode<synchronous>, transform_indices = @transform_10, window_bounds = array<i64: 256, 128>}, {pipeline_mode = #tpu.pipeline_mode<synchronous>, transform_indices = @transform_11, window_bounds = array<i64: 1, 256, 1>}, {pipeline_mode = #tpu.pipeline_mode<synchronous>, transform_indices = @transform_12, window_bounds = array<i64: 64, 256>}, {pipeline_mode = #tpu.pipeline_mode<synchronous>, transform_indices = @transform_13, window_bounds = array<i64: 1, 64, 1>}, {pipeline_mode = #tpu.pipeline_mode<synchronous>, transform_indices = @transform_14, window_bounds = array<i64: 4, 64, 40>}]} {
    %c0 = arith.constant 0 : index
    %c0_0 = arith.constant 0 : index
    %c0_1 = arith.constant 0 : index
    %0 = vector.load %arg1[%c0, %c0_0, %c0_1] : memref<4x8x40xbf16, #tpu.memory_space<vmem>>, vector<4x8x40xbf16>
    %c0_2 = arith.constant 0 : index
    %c0_3 = arith.constant 0 : index
    %1 = vector.load %arg2[%c0_2, %c0_3] : memref<16x72xbf16, #tpu.memory_space<vmem>>, vector<16x72xbf16>
    %c0_4 = arith.constant 0 : index
    %c0_5 = arith.constant 0 : index
    %c0_6 = arith.constant 0 : index
    %2 = vector.load %arg3[%c0_4, %c0_5, %c0_6] : memref<1x16x1xf32, #tpu.memory_space<vmem>>, vector<1x16x1xf32>
    %c0_7 = arith.constant 0 : index
    %c0_8 = arith.constant 0 : index
    %c0_9 = arith.constant 0 : index
    %3 = vector.load %arg4[%c0_7, %c0_8, %c0_9] : memref<1x16x1xf32, #tpu.memory_space<vmem>>, vector<1x16x1xf32>
    %4 = vector.extract_strided_slice %0 {offsets = [0, 0, 36], sizes = [4, 8, 4], strides = [1, 1, 1]} : vector<4x8x40xbf16> to vector<4x8x4xbf16>
    %5 = vector.extract_strided_slice %0 {offsets = [0, 0, 0], sizes = [4, 8, 36], strides = [1, 1, 1]} : vector<4x8x40xbf16> to vector<4x8x36xbf16>
    %6 = tpu.concatenate %4, %5 in 2 : vector<4x8x4xbf16>, vector<4x8x36xbf16> -> vector<4x8x40xbf16>
    %7 = vector.extract_strided_slice %0 {offsets = [0, 0, 37], sizes = [4, 8, 3], strides = [1, 1, 1]} : vector<4x8x40xbf16> to vector<4x8x3xbf16>
    %8 = vector.extract_strided_slice %0 {offsets = [0, 0, 0], sizes = [4, 8, 37], strides = [1, 1, 1]} : vector<4x8x40xbf16> to vector<4x8x37xbf16>
    %9 = tpu.concatenate %7, %8 in 2 : vector<4x8x3xbf16>, vector<4x8x37xbf16> -> vector<4x8x40xbf16>
    %10 = vector.extract_strided_slice %0 {offsets = [0, 0, 38], sizes = [4, 8, 2], strides = [1, 1, 1]} : vector<4x8x40xbf16> to vector<4x8x2xbf16>
    %11 = vector.extract_strided_slice %0 {offsets = [0, 0, 0], sizes = [4, 8, 38], strides = [1, 1, 1]} : vector<4x8x40xbf16> to vector<4x8x38xbf16>
    %12 = tpu.concatenate %10, %11 in 2 : vector<4x8x2xbf16>, vector<4x8x38xbf16> -> vector<4x8x40xbf16>
    %13 = vector.extract_strided_slice %0 {offsets = [0, 0, 39], sizes = [4, 8, 1], strides = [1, 1, 1]} : vector<4x8x40xbf16> to vector<4x8x1xbf16>
    %14 = vector.extract_strided_slice %0 {offsets = [0, 0, 0], sizes = [4, 8, 39], strides = [1, 1, 1]} : vector<4x8x40xbf16> to vector<4x8x39xbf16>
    %15 = tpu.concatenate %13, %14 in 2 : vector<4x8x1xbf16>, vector<4x8x39xbf16> -> vector<4x8x40xbf16>
    %16 = vector.extract_strided_slice %0 {offsets = [0, 0, 1], sizes = [4, 8, 39], strides = [1, 1, 1]} : vector<4x8x40xbf16> to vector<4x8x39xbf16>
    %17 = vector.extract_strided_slice %0 {offsets = [0, 0, 0], sizes = [4, 8, 1], strides = [1, 1, 1]} : vector<4x8x40xbf16> to vector<4x8x1xbf16>
    %18 = tpu.concatenate %16, %17 in 2 : vector<4x8x39xbf16>, vector<4x8x1xbf16> -> vector<4x8x40xbf16>
    %19 = vector.extract_strided_slice %0 {offsets = [0, 0, 2], sizes = [4, 8, 38], strides = [1, 1, 1]} : vector<4x8x40xbf16> to vector<4x8x38xbf16>
    %20 = vector.extract_strided_slice %0 {offsets = [0, 0, 0], sizes = [4, 8, 2], strides = [1, 1, 1]} : vector<4x8x40xbf16> to vector<4x8x2xbf16>
    %21 = tpu.concatenate %19, %20 in 2 : vector<4x8x38xbf16>, vector<4x8x2xbf16> -> vector<4x8x40xbf16>
    %22 = vector.extract_strided_slice %0 {offsets = [0, 0, 3], sizes = [4, 8, 37], strides = [1, 1, 1]} : vector<4x8x40xbf16> to vector<4x8x37xbf16>
    %23 = vector.extract_strided_slice %0 {offsets = [0, 0, 0], sizes = [4, 8, 3], strides = [1, 1, 1]} : vector<4x8x40xbf16> to vector<4x8x3xbf16>
    %24 = tpu.concatenate %22, %23 in 2 : vector<4x8x37xbf16>, vector<4x8x3xbf16> -> vector<4x8x40xbf16>
    %25 = vector.extract_strided_slice %0 {offsets = [0, 0, 4], sizes = [4, 8, 36], strides = [1, 1, 1]} : vector<4x8x40xbf16> to vector<4x8x36xbf16>
    %26 = vector.extract_strided_slice %0 {offsets = [0, 0, 0], sizes = [4, 8, 4], strides = [1, 1, 1]} : vector<4x8x40xbf16> to vector<4x8x4xbf16>
    %27 = tpu.concatenate %25, %26 in 2 : vector<4x8x36xbf16>, vector<4x8x4xbf16> -> vector<4x8x40xbf16>
    %28 = tpu.concatenate %6, %9, %12, %15, %0, %18, %21, %24, %27 in 1 : vector<4x8x40xbf16>, vector<4x8x40xbf16>, vector<4x8x40xbf16>, vector<4x8x40xbf16>, vector<4x8x40xbf16>, vector<4x8x40xbf16>, vector<4x8x40xbf16>, vector<4x8x40xbf16>, vector<4x8x40xbf16> -> vector<4x72x40xbf16>
    %29 = vector.shape_cast %1 : vector<16x72xbf16> to vector<1x16x72xbf16>
    %30 = vector.shape_cast %29 : vector<1x16x72xbf16> to vector<1x16x72xbf16>
    %31 = vector.broadcast %30 : vector<1x16x72xbf16> to vector<4x16x72xbf16>
    "tpu.trace_start"() <{level = 10 : i32, message = "nok,nkw->now"}> : () -> ()
    %cst = arith.constant dense<0.000000e+00> : vector<4x16x40xf32>
    %32 = tpu.matmul %31, %28, %cst {dimension_numbers = #tpu.dot_dimension_numbers<[2], [1], [1], [2], [0, 0, 0, 1, 1, 2], [0], [0]>} : vector<4x16x72xbf16>, vector<4x72x40xbf16>, vector<4x16x40xf32> -> vector<4x16x40xf32>
    "tpu.trace_stop"() : () -> ()
    %cst_10 = arith.constant dense<0.000000e+00> : vector<4x16xf32>
    %33 = vector.multi_reduction <add>, %32, %cst_10 [2] : vector<4x16x40xf32> to vector<4x16xf32>
    %34 = vector.shape_cast %33 : vector<4x16xf32> to vector<4x16x1xf32>
    %cst_11 = arith.constant dense<0.000000e+00> : vector<16x1xf32>
    %35 = vector.multi_reduction <add>, %34, %cst_11 [0] : vector<4x16x1xf32> to vector<16x1xf32>
    %36 = vector.shape_cast %35 : vector<16x1xf32> to vector<1x16x1xf32>
    %cst_12 = arith.constant 6.250000e-03 : f32
    %37 = vector.broadcast %cst_12 : f32 to vector<1x16x1xf32>
    %38 = arith.mulf %36, %37 : vector<1x16x1xf32>
    %39 = vector.broadcast %38 : vector<1x16x1xf32> to vector<4x16x40xf32>
    %40 = arith.subf %32, %39 : vector<4x16x40xf32>
    %41 = arith.mulf %40, %40 : vector<4x16x40xf32>
    %cst_13 = arith.constant dense<0.000000e+00> : vector<4x16xf32>
    %42 = vector.multi_reduction <add>, %41, %cst_13 [2] : vector<4x16x40xf32> to vector<4x16xf32>
    %43 = vector.shape_cast %42 : vector<4x16xf32> to vector<4x16x1xf32>
    %cst_14 = arith.constant dense<0.000000e+00> : vector<16x1xf32>
    %44 = vector.multi_reduction <add>, %43, %cst_14 [0] : vector<4x16x1xf32> to vector<16x1xf32>
    %45 = vector.shape_cast %44 : vector<16x1xf32> to vector<1x16x1xf32>
    %cst_15 = arith.constant 6.250000e-03 : f32
    %46 = vector.broadcast %cst_15 : f32 to vector<1x16x1xf32>
    %47 = arith.mulf %45, %46 : vector<1x16x1xf32>
    %cst_16 = arith.constant 9.99999974E-6 : f32
    %48 = vector.broadcast %cst_16 : f32 to vector<1x16x1xf32>
    %49 = arith.addf %47, %48 : vector<1x16x1xf32>
    %50 = math.rsqrt %49 : vector<1x16x1xf32>
    %51 = vector.broadcast %50 : vector<1x16x1xf32> to vector<4x16x40xf32>
    %52 = arith.mulf %40, %51 : vector<4x16x40xf32>
    %53 = vector.broadcast %2 : vector<1x16x1xf32> to vector<4x16x40xf32>
    %54 = arith.mulf %52, %53 : vector<4x16x40xf32>
    %55 = vector.broadcast %3 : vector<1x16x1xf32> to vector<4x16x40xf32>
    %56 = arith.addf %54, %55 : vector<4x16x40xf32>
    %cst_17 = arith.constant 0.00999999977 : f32
    %57 = vector.broadcast %cst_17 : f32 to vector<4x16x40xf32>
    %58 = arith.mulf %57, %56 : vector<4x16x40xf32>
    %59 = arith.maximumf %56, %58 : vector<4x16x40xf32>
    %60 = arith.truncf %59 : vector<4x16x40xf32> to vector<4x16x40xbf16>
    %c0_18 = arith.constant 0 : index
    %c0_19 = arith.constant 0 : index
    %c0_20 = arith.constant 0 : index
    %61 = vector.load %arg5[%c0_18, %c0_19, %c0_20] : memref<7x16x144xbf16, #tpu.memory_space<vmem>>, vector<1x16x144xbf16>
    %62 = vector.shape_cast %61 : vector<1x16x144xbf16> to vector<16x144xbf16>
    %c0_21 = arith.constant 0 : index
    %c0_22 = arith.constant 0 : index
    %c0_23 = arith.constant 0 : index
    %c0_24 = arith.constant 0 : index
    %63 = vector.load %arg6[%c0_21, %c0_22, %c0_23, %c0_24] : memref<7x1x16x1xf32, #tpu.memory_space<vmem>>, vector<1x1x16x1xf32>
    %64 = vector.shape_cast %63 : vector<1x1x16x1xf32> to vector<1x16x1xf32>
    %c0_25 = arith.constant 0 : index
    %c0_26 = arith.constant 0 : index
    %c0_27 = arith.constant 0 : index
    %c0_28 = arith.constant 0 : index
    %65 = vector.load %arg7[%c0_25, %c0_26, %c0_27, %c0_28] : memref<7x1x16x1xf32, #tpu.memory_space<vmem>>, vector<1x1x16x1xf32>
    %66 = vector.shape_cast %65 : vector<1x1x16x1xf32> to vector<1x16x1xf32>
    %67 = vector.extract_strided_slice %60 {offsets = [0, 0, 36], sizes = [4, 16, 4], strides = [1, 1, 1]} : vector<4x16x40xbf16> to vector<4x16x4xbf16>
    %68 = vector.extract_strided_slice %60 {offsets = [0, 0, 0], sizes = [4, 16, 36], strides = [1, 1, 1]} : vector<4x16x40xbf16> to vector<4x16x36xbf16>
    %69 = tpu.concatenate %67, %68 in 2 : vector<4x16x4xbf16>, vector<4x16x36xbf16> -> vector<4x16x40xbf16>
    %70 = vector.extract_strided_slice %60 {offsets = [0, 0, 37], sizes = [4, 16, 3], strides = [1, 1, 1]} : vector<4x16x40xbf16> to vector<4x16x3xbf16>
    %71 = vector.extract_strided_slice %60 {offsets = [0, 0, 0], sizes = [4, 16, 37], strides = [1, 1, 1]} : vector<4x16x40xbf16> to vector<4x16x37xbf16>
    %72 = tpu.concatenate %70, %71 in 2 : vector<4x16x3xbf16>, vector<4x16x37xbf16> -> vector<4x16x40xbf16>
    %73 = vector.extract_strided_slice %60 {offsets = [0, 0, 38], sizes = [4, 16, 2], strides = [1, 1, 1]} : vector<4x16x40xbf16> to vector<4x16x2xbf16>
    %74 = vector.extract_strided_slice %60 {offsets = [0, 0, 0], sizes = [4, 16, 38], strides = [1, 1, 1]} : vector<4x16x40xbf16> to vector<4x16x38xbf16>
    %75 = tpu.concatenate %73, %74 in 2 : vector<4x16x2xbf16>, vector<4x16x38xbf16> -> vector<4x16x40xbf16>
    %76 = vector.extract_strided_slice %60 {offsets = [0, 0, 39], sizes = [4, 16, 1], strides = [1, 1, 1]} : vector<4x16x40xbf16> to vector<4x16x1xbf16>
    %77 = vector.extract_strided_slice %60 {offsets = [0, 0, 0], sizes = [4, 16, 39], strides = [1, 1, 1]} : vector<4x16x40xbf16> to vector<4x16x39xbf16>
    %78 = tpu.concatenate %76, %77 in 2 : vector<4x16x1xbf16>, vector<4x16x39xbf16> -> vector<4x16x40xbf16>
    %79 = vector.extract_strided_slice %60 {offsets = [0, 0, 1], sizes = [4, 16, 39], strides = [1, 1, 1]} : vector<4x16x40xbf16> to vector<4x16x39xbf16>
    %80 = vector.extract_strided_slice %60 {offsets = [0, 0, 0], sizes = [4, 16, 1], strides = [1, 1, 1]} : vector<4x16x40xbf16> to vector<4x16x1xbf16>
    %81 = tpu.concatenate %79, %80 in 2 : vector<4x16x39xbf16>, vector<4x16x1xbf16> -> vector<4x16x40xbf16>
    %82 = vector.extract_strided_slice %60 {offsets = [0, 0, 2], sizes = [4, 16, 38], strides = [1, 1, 1]} : vector<4x16x40xbf16> to vector<4x16x38xbf16>
    %83 = vector.extract_strided_slice %60 {offsets = [0, 0, 0], sizes = [4, 16, 2], strides = [1, 1, 1]} : vector<4x16x40xbf16> to vector<4x16x2xbf16>
    %84 = tpu.concatenate %82, %83 in 2 : vector<4x16x38xbf16>, vector<4x16x2xbf16> -> vector<4x16x40xbf16>
    %85 = vector.extract_strided_slice %60 {offsets = [0, 0, 3], sizes = [4, 16, 37], strides = [1, 1, 1]} : vector<4x16x40xbf16> to vector<4x16x37xbf16>
    %86 = vector.extract_strided_slice %60 {offsets = [0, 0, 0], sizes = [4, 16, 3], strides = [1, 1, 1]} : vector<4x16x40xbf16> to vector<4x16x3xbf16>
    %87 = tpu.concatenate %85, %86 in 2 : vector<4x16x37xbf16>, vector<4x16x3xbf16> -> vector<4x16x40xbf16>
    %88 = vector.extract_strided_slice %60 {offsets = [0, 0, 4], sizes = [4, 16, 36], strides = [1, 1, 1]} : vector<4x16x40xbf16> to vector<4x16x36xbf16>
    %89 = vector.extract_strided_slice %60 {offsets = [0, 0, 0], sizes = [4, 16, 4], strides = [1, 1, 1]} : vector<4x16x40xbf16> to vector<4x16x4xbf16>
    %90 = tpu.concatenate %88, %89 in 2 : vector<4x16x36xbf16>, vector<4x16x4xbf16> -> vector<4x16x40xbf16>
    %91 = tpu.concatenate %69, %72, %75, %78, %60, %81, %84, %87, %90 in 1 : vector<4x16x40xbf16>, vector<4x16x40xbf16>, vector<4x16x40xbf16>, vector<4x16x40xbf16>, vector<4x16x40xbf16>, vector<4x16x40xbf16>, vector<4x16x40xbf16>, vector<4x16x40xbf16>, vector<4x16x40xbf16> -> vector<4x144x40xbf16>
    %92 = vector.shape_cast %62 : vector<16x144xbf16> to vector<1x16x144xbf16>
    %93 = vector.shape_cast %92 : vector<1x16x144xbf16> to vector<1x16x144xbf16>
    %94 = vector.broadcast %93 : vector<1x16x144xbf16> to vector<4x16x144xbf16>
    "tpu.trace_start"() <{level = 10 : i32, message = "nok,nkw->now"}> : () -> ()
    %cst_29 = arith.constant dense<0.000000e+00> : vector<4x16x40xf32>
    %95 = tpu.matmul %94, %91, %cst_29 {dimension_numbers = #tpu.dot_dimension_numbers<[2], [1], [1], [2], [0, 0, 0, 1, 1, 2], [0], [0]>} : vector<4x16x144xbf16>, vector<4x144x40xbf16>, vector<4x16x40xf32> -> vector<4x16x40xf32>
    "tpu.trace_stop"() : () -> ()
    %cst_30 = arith.constant dense<0.000000e+00> : vector<4x16xf32>
    %96 = vector.multi_reduction <add>, %95, %cst_30 [2] : vector<4x16x40xf32> to vector<4x16xf32>
    %97 = vector.shape_cast %96 : vector<4x16xf32> to vector<4x16x1xf32>
    %cst_31 = arith.constant dense<0.000000e+00> : vector<16x1xf32>
    %98 = vector.multi_reduction <add>, %97, %cst_31 [0] : vector<4x16x1xf32> to vector<16x1xf32>
    %99 = vector.shape_cast %98 : vector<16x1xf32> to vector<1x16x1xf32>
    %cst_32 = arith.constant 6.250000e-03 : f32
    %100 = vector.broadcast %cst_32 : f32 to vector<1x16x1xf32>
    %101 = arith.mulf %99, %100 : vector<1x16x1xf32>
    %102 = vector.broadcast %101 : vector<1x16x1xf32> to vector<4x16x40xf32>
    %103 = arith.subf %95, %102 : vector<4x16x40xf32>
    %104 = arith.mulf %103, %103 : vector<4x16x40xf32>
    %cst_33 = arith.constant dense<0.000000e+00> : vector<4x16xf32>
    %105 = vector.multi_reduction <add>, %104, %cst_33 [2] : vector<4x16x40xf32> to vector<4x16xf32>
    %106 = vector.shape_cast %105 : vector<4x16xf32> to vector<4x16x1xf32>
    %cst_34 = arith.constant dense<0.000000e+00> : vector<16x1xf32>
    %107 = vector.multi_reduction <add>, %106, %cst_34 [0] : vector<4x16x1xf32> to vector<16x1xf32>
    %108 = vector.shape_cast %107 : vector<16x1xf32> to vector<1x16x1xf32>
    %cst_35 = arith.constant 6.250000e-03 : f32
    %109 = vector.broadcast %cst_35 : f32 to vector<1x16x1xf32>
    %110 = arith.mulf %108, %109 : vector<1x16x1xf32>
    %cst_36 = arith.constant 9.99999974E-6 : f32
    %111 = vector.broadcast %cst_36 : f32 to vector<1x16x1xf32>
    %112 = arith.addf %110, %111 : vector<1x16x1xf32>
    %113 = math.rsqrt %112 : vector<1x16x1xf32>
    %114 = vector.broadcast %113 : vector<1x16x1xf32> to vector<4x16x40xf32>
    %115 = arith.mulf %103, %114 : vector<4x16x40xf32>
    %116 = vector.broadcast %64 : vector<1x16x1xf32> to vector<4x16x40xf32>
    %117 = arith.mulf %115, %116 : vector<4x16x40xf32>
    %118 = vector.broadcast %66 : vector<1x16x1xf32> to vector<4x16x40xf32>
    %119 = arith.addf %117, %118 : vector<4x16x40xf32>
    %cst_37 = arith.constant 0.00999999977 : f32
    %120 = vector.broadcast %cst_37 : f32 to vector<4x16x40xf32>
    %121 = arith.mulf %120, %119 : vector<4x16x40xf32>
    %122 = arith.maximumf %119, %121 : vector<4x16x40xf32>
    %123 = arith.addf %122, %59 : vector<4x16x40xf32>
    %124 = arith.truncf %123 : vector<4x16x40xf32> to vector<4x16x40xbf16>
    %c1 = arith.constant 1 : index
    %c0_38 = arith.constant 0 : index
    %c0_39 = arith.constant 0 : index
    %125 = vector.load %arg5[%c1, %c0_38, %c0_39] : memref<7x16x144xbf16, #tpu.memory_space<vmem>>, vector<1x16x144xbf16>
    %126 = vector.shape_cast %125 : vector<1x16x144xbf16> to vector<16x144xbf16>
    %c1_40 = arith.constant 1 : index
    %c0_41 = arith.constant 0 : index
    %c0_42 = arith.constant 0 : index
    %c0_43 = arith.constant 0 : index
    %127 = vector.load %arg6[%c1_40, %c0_41, %c0_42, %c0_43] : memref<7x1x16x1xf32, #tpu.memory_space<vmem>>, vector<1x1x16x1xf32>
    %128 = vector.shape_cast %127 : vector<1x1x16x1xf32> to vector<1x16x1xf32>
    %c1_44 = arith.constant 1 : index
    %c0_45 = arith.constant 0 : index
    %c0_46 = arith.constant 0 : index
    %c0_47 = arith.constant 0 : index
    %129 = vector.load %arg7[%c1_44, %c0_45, %c0_46, %c0_47] : memref<7x1x16x1xf32, #tpu.memory_space<vmem>>, vector<1x1x16x1xf32>
    %130 = vector.shape_cast %129 : vector<1x1x16x1xf32> to vector<1x16x1xf32>
    %131 = vector.extract_strided_slice %124 {offsets = [0, 0, 36], sizes = [4, 16, 4], strides = [1, 1, 1]} : vector<4x16x40xbf16> to vector<4x16x4xbf16>
    %132 = vector.extract_strided_slice %124 {offsets = [0, 0, 0], sizes = [4, 16, 36], strides = [1, 1, 1]} : vector<4x16x40xbf16> to vector<4x16x36xbf16>
    %133 = tpu.concatenate %131, %132 in 2 : vector<4x16x4xbf16>, vector<4x16x36xbf16> -> vector<4x16x40xbf16>
    %134 = vector.extract_strided_slice %124 {offsets = [0, 0, 37], sizes = [4, 16, 3], strides = [1, 1, 1]} : vector<4x16x40xbf16> to vector<4x16x3xbf16>
    %135 = vector.extract_strided_slice %124 {offsets = [0, 0, 0], sizes = [4, 16, 37], strides = [1, 1, 1]} : vector<4x16x40xbf16> to vector<4x16x37xbf16>
    %136 = tpu.concatenate %134, %135 in 2 : vector<4x16x3xbf16>, vector<4x16x37xbf16> -> vector<4x16x40xbf16>
    %137 = vector.extract_strided_slice %124 {offsets = [0, 0, 38], sizes = [4, 16, 2], strides = [1, 1, 1]} : vector<4x16x40xbf16> to vector<4x16x2xbf16>
    %138 = vector.extract_strided_slice %124 {offsets = [0, 0, 0], sizes = [4, 16, 38], strides = [1, 1, 1]} : vector<4x16x40xbf16> to vector<4x16x38xbf16>
    %139 = tpu.concatenate %137, %138 in 2 : vector<4x16x2xbf16>, vector<4x16x38xbf16> -> vector<4x16x40xbf16>
    %140 = vector.extract_strided_slice %124 {offsets = [0, 0, 39], sizes = [4, 16, 1], strides = [1, 1, 1]} : vector<4x16x40xbf16> to vector<4x16x1xbf16>
    %141 = vector.extract_strided_slice %124 {offsets = [0, 0, 0], sizes = [4, 16, 39], strides = [1, 1, 1]} : vector<4x16x40xbf16> to vector<4x16x39xbf16>
    %142 = tpu.concatenate %140, %141 in 2 : vector<4x16x1xbf16>, vector<4x16x39xbf16> -> vector<4x16x40xbf16>
    %143 = vector.extract_strided_slice %124 {offsets = [0, 0, 1], sizes = [4, 16, 39], strides = [1, 1, 1]} : vector<4x16x40xbf16> to vector<4x16x39xbf16>
    %144 = vector.extract_strided_slice %124 {offsets = [0, 0, 0], sizes = [4, 16, 1], strides = [1, 1, 1]} : vector<4x16x40xbf16> to vector<4x16x1xbf16>
    %145 = tpu.concatenate %143, %144 in 2 : vector<4x16x39xbf16>, vector<4x16x1xbf16> -> vector<4x16x40xbf16>
    %146 = vector.extract_strided_slice %124 {offsets = [0, 0, 2], sizes = [4, 16, 38], strides = [1, 1, 1]} : vector<4x16x40xbf16> to vector<4x16x38xbf16>
    %147 = vector.extract_strided_slice %124 {offsets = [0, 0, 0], sizes = [4, 16, 2], strides = [1, 1, 1]} : vector<4x16x40xbf16> to vector<4x16x2xbf16>
    %148 = tpu.concatenate %146, %147 in 2 : vector<4x16x38xbf16>, vector<4x16x2xbf16> -> vector<4x16x40xbf16>
    %149 = vector.extract_strided_slice %124 {offsets = [0, 0, 3], sizes = [4, 16, 37], strides = [1, 1, 1]} : vector<4x16x40xbf16> to vector<4x16x37xbf16>
    %150 = vector.extract_strided_slice %124 {offsets = [0, 0, 0], sizes = [4, 16, 3], strides = [1, 1, 1]} : vector<4x16x40xbf16> to vector<4x16x3xbf16>
    %151 = tpu.concatenate %149, %150 in 2 : vector<4x16x37xbf16>, vector<4x16x3xbf16> -> vector<4x16x40xbf16>
    %152 = vector.extract_strided_slice %124 {offsets = [0, 0, 4], sizes = [4, 16, 36], strides = [1, 1, 1]} : vector<4x16x40xbf16> to vector<4x16x36xbf16>
    %153 = vector.extract_strided_slice %124 {offsets = [0, 0, 0], sizes = [4, 16, 4], strides = [1, 1, 1]} : vector<4x16x40xbf16> to vector<4x16x4xbf16>
    %154 = tpu.concatenate %152, %153 in 2 : vector<4x16x36xbf16>, vector<4x16x4xbf16> -> vector<4x16x40xbf16>
    %155 = tpu.concatenate %133, %136, %139, %142, %124, %145, %148, %151, %154 in 1 : vector<4x16x40xbf16>, vector<4x16x40xbf16>, vector<4x16x40xbf16>, vector<4x16x40xbf16>, vector<4x16x40xbf16>, vector<4x16x40xbf16>, vector<4x16x40xbf16>, vector<4x16x40xbf16>, vector<4x16x40xbf16> -> vector<4x144x40xbf16>
    %156 = vector.shape_cast %126 : vector<16x144xbf16> to vector<1x16x144xbf16>
    %157 = vector.shape_cast %156 : vector<1x16x144xbf16> to vector<1x16x144xbf16>
    %158 = vector.broadcast %157 : vector<1x16x144xbf16> to vector<4x16x144xbf16>
    "tpu.trace_start"() <{level = 10 : i32, message = "nok,nkw->now"}> : () -> ()
    %cst_48 = arith.constant dense<0.000000e+00> : vector<4x16x40xf32>
    %159 = tpu.matmul %158, %155, %cst_48 {dimension_numbers = #tpu.dot_dimension_numbers<[2], [1], [1], [2], [0, 0, 0, 1, 1, 2], [0], [0]>} : vector<4x16x144xbf16>, vector<4x144x40xbf16>, vector<4x16x40xf32> -> vector<4x16x40xf32>
    "tpu.trace_stop"() : () -> ()
    %cst_49 = arith.constant dense<0.000000e+00> : vector<4x16xf32>
    %160 = vector.multi_reduction <add>, %159, %cst_49 [2] : vector<4x16x40xf32> to vector<4x16xf32>
    %161 = vector.shape_cast %160 : vector<4x16xf32> to vector<4x16x1xf32>
    %cst_50 = arith.constant dense<0.000000e+00> : vector<16x1xf32>
    %162 = vector.multi_reduction <add>, %161, %cst_50 [0] : vector<4x16x1xf32> to vector<16x1xf32>
    %163 = vector.shape_cast %162 : vector<16x1xf32> to vector<1x16x1xf32>
    %cst_51 = arith.constant 6.250000e-03 : f32
    %164 = vector.broadcast %cst_51 : f32 to vector<1x16x1xf32>
    %165 = arith.mulf %163, %164 : vector<1x16x1xf32>
    %166 = vector.broadcast %165 : vector<1x16x1xf32> to vector<4x16x40xf32>
    %167 = arith.subf %159, %166 : vector<4x16x40xf32>
    %168 = arith.mulf %167, %167 : vector<4x16x40xf32>
    %cst_52 = arith.constant dense<0.000000e+00> : vector<4x16xf32>
    %169 = vector.multi_reduction <add>, %168, %cst_52 [2] : vector<4x16x40xf32> to vector<4x16xf32>
    %170 = vector.shape_cast %169 : vector<4x16xf32> to vector<4x16x1xf32>
    %cst_53 = arith.constant dense<0.000000e+00> : vector<16x1xf32>
    %171 = vector.multi_reduction <add>, %170, %cst_53 [0] : vector<4x16x1xf32> to vector<16x1xf32>
    %172 = vector.shape_cast %171 : vector<16x1xf32> to vector<1x16x1xf32>
    %cst_54 = arith.constant 6.250000e-03 : f32
    %173 = vector.broadcast %cst_54 : f32 to vector<1x16x1xf32>
    %174 = arith.mulf %172, %173 : vector<1x16x1xf32>
    %cst_55 = arith.constant 9.99999974E-6 : f32
    %175 = vector.broadcast %cst_55 : f32 to vector<1x16x1xf32>
    %176 = arith.addf %174, %175 : vector<1x16x1xf32>
    %177 = math.rsqrt %176 : vector<1x16x1xf32>
    %178 = vector.broadcast %177 : vector<1x16x1xf32> to vector<4x16x40xf32>
    %179 = arith.mulf %167, %178 : vector<4x16x40xf32>
    %180 = vector.broadcast %128 : vector<1x16x1xf32> to vector<4x16x40xf32>
    %181 = arith.mulf %179, %180 : vector<4x16x40xf32>
    %182 = vector.broadcast %130 : vector<1x16x1xf32> to vector<4x16x40xf32>
    %183 = arith.addf %181, %182 : vector<4x16x40xf32>
    %cst_56 = arith.constant 0.00999999977 : f32
    %184 = vector.broadcast %cst_56 : f32 to vector<4x16x40xf32>
    %185 = arith.mulf %184, %183 : vector<4x16x40xf32>
    %186 = arith.maximumf %183, %185 : vector<4x16x40xf32>
    %187 = arith.addf %186, %123 : vector<4x16x40xf32>
    %188 = arith.truncf %187 : vector<4x16x40xf32> to vector<4x16x40xbf16>
    %c2 = arith.constant 2 : index
    %c0_57 = arith.constant 0 : index
    %c0_58 = arith.constant 0 : index
    %189 = vector.load %arg5[%c2, %c0_57, %c0_58] : memref<7x16x144xbf16, #tpu.memory_space<vmem>>, vector<1x16x144xbf16>
    %190 = vector.shape_cast %189 : vector<1x16x144xbf16> to vector<16x144xbf16>
    %c2_59 = arith.constant 2 : index
    %c0_60 = arith.constant 0 : index
    %c0_61 = arith.constant 0 : index
    %c0_62 = arith.constant 0 : index
    %191 = vector.load %arg6[%c2_59, %c0_60, %c0_61, %c0_62] : memref<7x1x16x1xf32, #tpu.memory_space<vmem>>, vector<1x1x16x1xf32>
    %192 = vector.shape_cast %191 : vector<1x1x16x1xf32> to vector<1x16x1xf32>
    %c2_63 = arith.constant 2 : index
    %c0_64 = arith.constant 0 : index
    %c0_65 = arith.constant 0 : index
    %c0_66 = arith.constant 0 : index
    %193 = vector.load %arg7[%c2_63, %c0_64, %c0_65, %c0_66] : memref<7x1x16x1xf32, #tpu.memory_space<vmem>>, vector<1x1x16x1xf32>
    %194 = vector.shape_cast %193 : vector<1x1x16x1xf32> to vector<1x16x1xf32>
    %195 = vector.extract_strided_slice %188 {offsets = [0, 0, 36], sizes = [4, 16, 4], strides = [1, 1, 1]} : vector<4x16x40xbf16> to vector<4x16x4xbf16>
    %196 = vector.extract_strided_slice %188 {offsets = [0, 0, 0], sizes = [4, 16, 36], strides = [1, 1, 1]} : vector<4x16x40xbf16> to vector<4x16x36xbf16>
    %197 = tpu.concatenate %195, %196 in 2 : vector<4x16x4xbf16>, vector<4x16x36xbf16> -> vector<4x16x40xbf16>
    %198 = vector.extract_strided_slice %188 {offsets = [0, 0, 37], sizes = [4, 16, 3], strides = [1, 1, 1]} : vector<4x16x40xbf16> to vector<4x16x3xbf16>
    %199 = vector.extract_strided_slice %188 {offsets = [0, 0, 0], sizes = [4, 16, 37], strides = [1, 1, 1]} : vector<4x16x40xbf16> to vector<4x16x37xbf16>
    %200 = tpu.concatenate %198, %199 in 2 : vector<4x16x3xbf16>, vector<4x16x37xbf16> -> vector<4x16x40xbf16>
    %201 = vector.extract_strided_slice %188 {offsets = [0, 0, 38], sizes = [4, 16, 2], strides = [1, 1, 1]} : vector<4x16x40xbf16> to vector<4x16x2xbf16>
    %202 = vector.extract_strided_slice %188 {offsets = [0, 0, 0], sizes = [4, 16, 38], strides = [1, 1, 1]} : vector<4x16x40xbf16> to vector<4x16x38xbf16>
    %203 = tpu.concatenate %201, %202 in 2 : vector<4x16x2xbf16>, vector<4x16x38xbf16> -> vector<4x16x40xbf16>
    %204 = vector.extract_strided_slice %188 {offsets = [0, 0, 39], sizes = [4, 16, 1], strides = [1, 1, 1]} : vector<4x16x40xbf16> to vector<4x16x1xbf16>
    %205 = vector.extract_strided_slice %188 {offsets = [0, 0, 0], sizes = [4, 16, 39], strides = [1, 1, 1]} : vector<4x16x40xbf16> to vector<4x16x39xbf16>
    %206 = tpu.concatenate %204, %205 in 2 : vector<4x16x1xbf16>, vector<4x16x39xbf16> -> vector<4x16x40xbf16>
    %207 = vector.extract_strided_slice %188 {offsets = [0, 0, 1], sizes = [4, 16, 39], strides = [1, 1, 1]} : vector<4x16x40xbf16> to vector<4x16x39xbf16>
    %208 = vector.extract_strided_slice %188 {offsets = [0, 0, 0], sizes = [4, 16, 1], strides = [1, 1, 1]} : vector<4x16x40xbf16> to vector<4x16x1xbf16>
    %209 = tpu.concatenate %207, %208 in 2 : vector<4x16x39xbf16>, vector<4x16x1xbf16> -> vector<4x16x40xbf16>
    %210 = vector.extract_strided_slice %188 {offsets = [0, 0, 2], sizes = [4, 16, 38], strides = [1, 1, 1]} : vector<4x16x40xbf16> to vector<4x16x38xbf16>
    %211 = vector.extract_strided_slice %188 {offsets = [0, 0, 0], sizes = [4, 16, 2], strides = [1, 1, 1]} : vector<4x16x40xbf16> to vector<4x16x2xbf16>
    %212 = tpu.concatenate %210, %211 in 2 : vector<4x16x38xbf16>, vector<4x16x2xbf16> -> vector<4x16x40xbf16>
    %213 = vector.extract_strided_slice %188 {offsets = [0, 0, 3], sizes = [4, 16, 37], strides = [1, 1, 1]} : vector<4x16x40xbf16> to vector<4x16x37xbf16>
    %214 = vector.extract_strided_slice %188 {offsets = [0, 0, 0], sizes = [4, 16, 3], strides = [1, 1, 1]} : vector<4x16x40xbf16> to vector<4x16x3xbf16>
    %215 = tpu.concatenate %213, %214 in 2 : vector<4x16x37xbf16>, vector<4x16x3xbf16> -> vector<4x16x40xbf16>
    %216 = vector.extract_strided_slice %188 {offsets = [0, 0, 4], sizes = [4, 16, 36], strides = [1, 1, 1]} : vector<4x16x40xbf16> to vector<4x16x36xbf16>
    %217 = vector.extract_strided_slice %188 {offsets = [0, 0, 0], sizes = [4, 16, 4], strides = [1, 1, 1]} : vector<4x16x40xbf16> to vector<4x16x4xbf16>
    %218 = tpu.concatenate %216, %217 in 2 : vector<4x16x36xbf16>, vector<4x16x4xbf16> -> vector<4x16x40xbf16>
    %219 = tpu.concatenate %197, %200, %203, %206, %188, %209, %212, %215, %218 in 1 : vector<4x16x40xbf16>, vector<4x16x40xbf16>, vector<4x16x40xbf16>, vector<4x16x40xbf16>, vector<4x16x40xbf16>, vector<4x16x40xbf16>, vector<4x16x40xbf16>, vector<4x16x40xbf16>, vector<4x16x40xbf16> -> vector<4x144x40xbf16>
    %220 = vector.shape_cast %190 : vector<16x144xbf16> to vector<1x16x144xbf16>
    %221 = vector.shape_cast %220 : vector<1x16x144xbf16> to vector<1x16x144xbf16>
    %222 = vector.broadcast %221 : vector<1x16x144xbf16> to vector<4x16x144xbf16>
    "tpu.trace_start"() <{level = 10 : i32, message = "nok,nkw->now"}> : () -> ()
    %cst_67 = arith.constant dense<0.000000e+00> : vector<4x16x40xf32>
    %223 = tpu.matmul %222, %219, %cst_67 {dimension_numbers = #tpu.dot_dimension_numbers<[2], [1], [1], [2], [0, 0, 0, 1, 1, 2], [0], [0]>} : vector<4x16x144xbf16>, vector<4x144x40xbf16>, vector<4x16x40xf32> -> vector<4x16x40xf32>
    "tpu.trace_stop"() : () -> ()
    %cst_68 = arith.constant dense<0.000000e+00> : vector<4x16xf32>
    %224 = vector.multi_reduction <add>, %223, %cst_68 [2] : vector<4x16x40xf32> to vector<4x16xf32>
    %225 = vector.shape_cast %224 : vector<4x16xf32> to vector<4x16x1xf32>
    %cst_69 = arith.constant dense<0.000000e+00> : vector<16x1xf32>
    %226 = vector.multi_reduction <add>, %225, %cst_69 [0] : vector<4x16x1xf32> to vector<16x1xf32>
    %227 = vector.shape_cast %226 : vector<16x1xf32> to vector<1x16x1xf32>
    %cst_70 = arith.constant 6.250000e-03 : f32
    %228 = vector.broadcast %cst_70 : f32 to vector<1x16x1xf32>
    %229 = arith.mulf %227, %228 : vector<1x16x1xf32>
    %230 = vector.broadcast %229 : vector<1x16x1xf32> to vector<4x16x40xf32>
    %231 = arith.subf %223, %230 : vector<4x16x40xf32>
    %232 = arith.mulf %231, %231 : vector<4x16x40xf32>
    %cst_71 = arith.constant dense<0.000000e+00> : vector<4x16xf32>
    %233 = vector.multi_reduction <add>, %232, %cst_71 [2] : vector<4x16x40xf32> to vector<4x16xf32>
    %234 = vector.shape_cast %233 : vector<4x16xf32> to vector<4x16x1xf32>
    %cst_72 = arith.constant dense<0.000000e+00> : vector<16x1xf32>
    %235 = vector.multi_reduction <add>, %234, %cst_72 [0] : vector<4x16x1xf32> to vector<16x1xf32>
    %236 = vector.shape_cast %235 : vector<16x1xf32> to vector<1x16x1xf32>
    %cst_73 = arith.constant 6.250000e-03 : f32
    %237 = vector.broadcast %cst_73 : f32 to vector<1x16x1xf32>
    %238 = arith.mulf %236, %237 : vector<1x16x1xf32>
    %cst_74 = arith.constant 9.99999974E-6 : f32
    %239 = vector.broadcast %cst_74 : f32 to vector<1x16x1xf32>
    %240 = arith.addf %238, %239 : vector<1x16x1xf32>
    %241 = math.rsqrt %240 : vector<1x16x1xf32>
    %242 = vector.broadcast %241 : vector<1x16x1xf32> to vector<4x16x40xf32>
    %243 = arith.mulf %231, %242 : vector<4x16x40xf32>
    %244 = vector.broadcast %192 : vector<1x16x1xf32> to vector<4x16x40xf32>
    %245 = arith.mulf %243, %244 : vector<4x16x40xf32>
    %246 = vector.broadcast %194 : vector<1x16x1xf32> to vector<4x16x40xf32>
    %247 = arith.addf %245, %246 : vector<4x16x40xf32>
    %cst_75 = arith.constant 0.00999999977 : f32
    %248 = vector.broadcast %cst_75 : f32 to vector<4x16x40xf32>
    %249 = arith.mulf %248, %247 : vector<4x16x40xf32>
    %250 = arith.maximumf %247, %249 : vector<4x16x40xf32>
    %251 = arith.addf %250, %187 : vector<4x16x40xf32>
    %252 = arith.truncf %251 : vector<4x16x40xf32> to vector<4x16x40xbf16>
    %c3 = arith.constant 3 : index
    %c0_76 = arith.constant 0 : index
    %c0_77 = arith.constant 0 : index
    %253 = vector.load %arg5[%c3, %c0_76, %c0_77] : memref<7x16x144xbf16, #tpu.memory_space<vmem>>, vector<1x16x144xbf16>
    %254 = vector.shape_cast %253 : vector<1x16x144xbf16> to vector<16x144xbf16>
    %c3_78 = arith.constant 3 : index
    %c0_79 = arith.constant 0 : index
    %c0_80 = arith.constant 0 : index
    %c0_81 = arith.constant 0 : index
    %255 = vector.load %arg6[%c3_78, %c0_79, %c0_80, %c0_81] : memref<7x1x16x1xf32, #tpu.memory_space<vmem>>, vector<1x1x16x1xf32>
    %256 = vector.shape_cast %255 : vector<1x1x16x1xf32> to vector<1x16x1xf32>
    %c3_82 = arith.constant 3 : index
    %c0_83 = arith.constant 0 : index
    %c0_84 = arith.constant 0 : index
    %c0_85 = arith.constant 0 : index
    %257 = vector.load %arg7[%c3_82, %c0_83, %c0_84, %c0_85] : memref<7x1x16x1xf32, #tpu.memory_space<vmem>>, vector<1x1x16x1xf32>
    %258 = vector.shape_cast %257 : vector<1x1x16x1xf32> to vector<1x16x1xf32>
    %259 = vector.extract_strided_slice %252 {offsets = [0, 0, 32], sizes = [4, 16, 8], strides = [1, 1, 1]} : vector<4x16x40xbf16> to vector<4x16x8xbf16>
    %260 = vector.extract_strided_slice %252 {offsets = [0, 0, 0], sizes = [4, 16, 32], strides = [1, 1, 1]} : vector<4x16x40xbf16> to vector<4x16x32xbf16>
    %261 = tpu.concatenate %259, %260 in 2 : vector<4x16x8xbf16>, vector<4x16x32xbf16> -> vector<4x16x40xbf16>
    %262 = vector.extract_strided_slice %252 {offsets = [0, 0, 34], sizes = [4, 16, 6], strides = [1, 1, 1]} : vector<4x16x40xbf16> to vector<4x16x6xbf16>
    %263 = vector.extract_strided_slice %252 {offsets = [0, 0, 0], sizes = [4, 16, 34], strides = [1, 1, 1]} : vector<4x16x40xbf16> to vector<4x16x34xbf16>
    %264 = tpu.concatenate %262, %263 in 2 : vector<4x16x6xbf16>, vector<4x16x34xbf16> -> vector<4x16x40xbf16>
    %265 = vector.extract_strided_slice %252 {offsets = [0, 0, 36], sizes = [4, 16, 4], strides = [1, 1, 1]} : vector<4x16x40xbf16> to vector<4x16x4xbf16>
    %266 = vector.extract_strided_slice %252 {offsets = [0, 0, 0], sizes = [4, 16, 36], strides = [1, 1, 1]} : vector<4x16x40xbf16> to vector<4x16x36xbf16>
    %267 = tpu.concatenate %265, %266 in 2 : vector<4x16x4xbf16>, vector<4x16x36xbf16> -> vector<4x16x40xbf16>
    %268 = vector.extract_strided_slice %252 {offsets = [0, 0, 38], sizes = [4, 16, 2], strides = [1, 1, 1]} : vector<4x16x40xbf16> to vector<4x16x2xbf16>
    %269 = vector.extract_strided_slice %252 {offsets = [0, 0, 0], sizes = [4, 16, 38], strides = [1, 1, 1]} : vector<4x16x40xbf16> to vector<4x16x38xbf16>
    %270 = tpu.concatenate %268, %269 in 2 : vector<4x16x2xbf16>, vector<4x16x38xbf16> -> vector<4x16x40xbf16>
    %271 = vector.extract_strided_slice %252 {offsets = [0, 0, 2], sizes = [4, 16, 38], strides = [1, 1, 1]} : vector<4x16x40xbf16> to vector<4x16x38xbf16>
    %272 = vector.extract_strided_slice %252 {offsets = [0, 0, 0], sizes = [4, 16, 2], strides = [1, 1, 1]} : vector<4x16x40xbf16> to vector<4x16x2xbf16>
    %273 = tpu.concatenate %271, %272 in 2 : vector<4x16x38xbf16>, vector<4x16x2xbf16> -> vector<4x16x40xbf16>
    %274 = vector.extract_strided_slice %252 {offsets = [0, 0, 4], sizes = [4, 16, 36], strides = [1, 1, 1]} : vector<4x16x40xbf16> to vector<4x16x36xbf16>
    %275 = vector.extract_strided_slice %252 {offsets = [0, 0, 0], sizes = [4, 16, 4], strides = [1, 1, 1]} : vector<4x16x40xbf16> to vector<4x16x4xbf16>
    %276 = tpu.concatenate %274, %275 in 2 : vector<4x16x36xbf16>, vector<4x16x4xbf16> -> vector<4x16x40xbf16>
    %277 = vector.extract_strided_slice %252 {offsets = [0, 0, 6], sizes = [4, 16, 34], strides = [1, 1, 1]} : vector<4x16x40xbf16> to vector<4x16x34xbf16>
    %278 = vector.extract_strided_slice %252 {offsets = [0, 0, 0], sizes = [4, 16, 6], strides = [1, 1, 1]} : vector<4x16x40xbf16> to vector<4x16x6xbf16>
    %279 = tpu.concatenate %277, %278 in 2 : vector<4x16x34xbf16>, vector<4x16x6xbf16> -> vector<4x16x40xbf16>
    %280 = vector.extract_strided_slice %252 {offsets = [0, 0, 8], sizes = [4, 16, 32], strides = [1, 1, 1]} : vector<4x16x40xbf16> to vector<4x16x32xbf16>
    %281 = vector.extract_strided_slice %252 {offsets = [0, 0, 0], sizes = [4, 16, 8], strides = [1, 1, 1]} : vector<4x16x40xbf16> to vector<4x16x8xbf16>
    %282 = tpu.concatenate %280, %281 in 2 : vector<4x16x32xbf16>, vector<4x16x8xbf16> -> vector<4x16x40xbf16>
    %283 = tpu.concatenate %261, %264, %267, %270, %252, %273, %276, %279, %282 in 1 : vector<4x16x40xbf16>, vector<4x16x40xbf16>, vector<4x16x40xbf16>, vector<4x16x40xbf16>, vector<4x16x40xbf16>, vector<4x16x40xbf16>, vector<4x16x40xbf16>, vector<4x16x40xbf16>, vector<4x16x40xbf16> -> vector<4x144x40xbf16>
    %284 = vector.shape_cast %254 : vector<16x144xbf16> to vector<1x16x144xbf16>
    %285 = vector.shape_cast %284 : vector<1x16x144xbf16> to vector<1x16x144xbf16>
    %286 = vector.broadcast %285 : vector<1x16x144xbf16> to vector<4x16x144xbf16>
    "tpu.trace_start"() <{level = 10 : i32, message = "nok,nkw->now"}> : () -> ()
    %cst_86 = arith.constant dense<0.000000e+00> : vector<4x16x40xf32>
    %287 = tpu.matmul %286, %283, %cst_86 {dimension_numbers = #tpu.dot_dimension_numbers<[2], [1], [1], [2], [0, 0, 0, 1, 1, 2], [0], [0]>} : vector<4x16x144xbf16>, vector<4x144x40xbf16>, vector<4x16x40xf32> -> vector<4x16x40xf32>
    "tpu.trace_stop"() : () -> ()
    %cst_87 = arith.constant dense<0.000000e+00> : vector<4x16xf32>
    %288 = vector.multi_reduction <add>, %287, %cst_87 [2] : vector<4x16x40xf32> to vector<4x16xf32>
    %289 = vector.shape_cast %288 : vector<4x16xf32> to vector<4x16x1xf32>
    %cst_88 = arith.constant dense<0.000000e+00> : vector<16x1xf32>
    %290 = vector.multi_reduction <add>, %289, %cst_88 [0] : vector<4x16x1xf32> to vector<16x1xf32>
    %291 = vector.shape_cast %290 : vector<16x1xf32> to vector<1x16x1xf32>
    %cst_89 = arith.constant 6.250000e-03 : f32
    %292 = vector.broadcast %cst_89 : f32 to vector<1x16x1xf32>
    %293 = arith.mulf %291, %292 : vector<1x16x1xf32>
    %294 = vector.broadcast %293 : vector<1x16x1xf32> to vector<4x16x40xf32>
    %295 = arith.subf %287, %294 : vector<4x16x40xf32>
    %296 = arith.mulf %295, %295 : vector<4x16x40xf32>
    %cst_90 = arith.constant dense<0.000000e+00> : vector<4x16xf32>
    %297 = vector.multi_reduction <add>, %296, %cst_90 [2] : vector<4x16x40xf32> to vector<4x16xf32>
    %298 = vector.shape_cast %297 : vector<4x16xf32> to vector<4x16x1xf32>
    %cst_91 = arith.constant dense<0.000000e+00> : vector<16x1xf32>
    %299 = vector.multi_reduction <add>, %298, %cst_91 [0] : vector<4x16x1xf32> to vector<16x1xf32>
    %300 = vector.shape_cast %299 : vector<16x1xf32> to vector<1x16x1xf32>
    %cst_92 = arith.constant 6.250000e-03 : f32
    %301 = vector.broadcast %cst_92 : f32 to vector<1x16x1xf32>
    %302 = arith.mulf %300, %301 : vector<1x16x1xf32>
    %cst_93 = arith.constant 9.99999974E-6 : f32
    %303 = vector.broadcast %cst_93 : f32 to vector<1x16x1xf32>
    %304 = arith.addf %302, %303 : vector<1x16x1xf32>
    %305 = math.rsqrt %304 : vector<1x16x1xf32>
    %306 = vector.broadcast %305 : vector<1x16x1xf32> to vector<4x16x40xf32>
    %307 = arith.mulf %295, %306 : vector<4x16x40xf32>
    %308 = vector.broadcast %256 : vector<1x16x1xf32> to vector<4x16x40xf32>
    %309 = arith.mulf %307, %308 : vector<4x16x40xf32>
    %310 = vector.broadcast %258 : vector<1x16x1xf32> to vector<4x16x40xf32>
    %311 = arith.addf %309, %310 : vector<4x16x40xf32>
    %cst_94 = arith.constant 0.00999999977 : f32
    %312 = vector.broadcast %cst_94 : f32 to vector<4x16x40xf32>
    %313 = arith.mulf %312, %311 : vector<4x16x40xf32>
    %314 = arith.maximumf %311, %313 : vector<4x16x40xf32>
    %315 = arith.addf %314, %251 : vector<4x16x40xf32>
    %316 = arith.truncf %315 : vector<4x16x40xf32> to vector<4x16x40xbf16>
    %c4 = arith.constant 4 : index
    %c0_95 = arith.constant 0 : index
    %c0_96 = arith.constant 0 : index
    %317 = vector.load %arg5[%c4, %c0_95, %c0_96] : memref<7x16x144xbf16, #tpu.memory_space<vmem>>, vector<1x16x144xbf16>
    %318 = vector.shape_cast %317 : vector<1x16x144xbf16> to vector<16x144xbf16>
    %c4_97 = arith.constant 4 : index
    %c0_98 = arith.constant 0 : index
    %c0_99 = arith.constant 0 : index
    %c0_100 = arith.constant 0 : index
    %319 = vector.load %arg6[%c4_97, %c0_98, %c0_99, %c0_100] : memref<7x1x16x1xf32, #tpu.memory_space<vmem>>, vector<1x1x16x1xf32>
    %320 = vector.shape_cast %319 : vector<1x1x16x1xf32> to vector<1x16x1xf32>
    %c4_101 = arith.constant 4 : index
    %c0_102 = arith.constant 0 : index
    %c0_103 = arith.constant 0 : index
    %c0_104 = arith.constant 0 : index
    %321 = vector.load %arg7[%c4_101, %c0_102, %c0_103, %c0_104] : memref<7x1x16x1xf32, #tpu.memory_space<vmem>>, vector<1x1x16x1xf32>
    %322 = vector.shape_cast %321 : vector<1x1x16x1xf32> to vector<1x16x1xf32>
    %323 = vector.extract_strided_slice %316 {offsets = [0, 0, 32], sizes = [4, 16, 8], strides = [1, 1, 1]} : vector<4x16x40xbf16> to vector<4x16x8xbf16>
    %324 = vector.extract_strided_slice %316 {offsets = [0, 0, 0], sizes = [4, 16, 32], strides = [1, 1, 1]} : vector<4x16x40xbf16> to vector<4x16x32xbf16>
    %325 = tpu.concatenate %323, %324 in 2 : vector<4x16x8xbf16>, vector<4x16x32xbf16> -> vector<4x16x40xbf16>
    %326 = vector.extract_strided_slice %316 {offsets = [0, 0, 34], sizes = [4, 16, 6], strides = [1, 1, 1]} : vector<4x16x40xbf16> to vector<4x16x6xbf16>
    %327 = vector.extract_strided_slice %316 {offsets = [0, 0, 0], sizes = [4, 16, 34], strides = [1, 1, 1]} : vector<4x16x40xbf16> to vector<4x16x34xbf16>
    %328 = tpu.concatenate %326, %327 in 2 : vector<4x16x6xbf16>, vector<4x16x34xbf16> -> vector<4x16x40xbf16>
    %329 = vector.extract_strided_slice %316 {offsets = [0, 0, 36], sizes = [4, 16, 4], strides = [1, 1, 1]} : vector<4x16x40xbf16> to vector<4x16x4xbf16>
    %330 = vector.extract_strided_slice %316 {offsets = [0, 0, 0], sizes = [4, 16, 36], strides = [1, 1, 1]} : vector<4x16x40xbf16> to vector<4x16x36xbf16>
    %331 = tpu.concatenate %329, %330 in 2 : vector<4x16x4xbf16>, vector<4x16x36xbf16> -> vector<4x16x40xbf16>
    %332 = vector.extract_strided_slice %316 {offsets = [0, 0, 38], sizes = [4, 16, 2], strides = [1, 1, 1]} : vector<4x16x40xbf16> to vector<4x16x2xbf16>
    %333 = vector.extract_strided_slice %316 {offsets = [0, 0, 0], sizes = [4, 16, 38], strides = [1, 1, 1]} : vector<4x16x40xbf16> to vector<4x16x38xbf16>
    %334 = tpu.concatenate %332, %333 in 2 : vector<4x16x2xbf16>, vector<4x16x38xbf16> -> vector<4x16x40xbf16>
    %335 = vector.extract_strided_slice %316 {offsets = [0, 0, 2], sizes = [4, 16, 38], strides = [1, 1, 1]} : vector<4x16x40xbf16> to vector<4x16x38xbf16>
    %336 = vector.extract_strided_slice %316 {offsets = [0, 0, 0], sizes = [4, 16, 2], strides = [1, 1, 1]} : vector<4x16x40xbf16> to vector<4x16x2xbf16>
    %337 = tpu.concatenate %335, %336 in 2 : vector<4x16x38xbf16>, vector<4x16x2xbf16> -> vector<4x16x40xbf16>
    %338 = vector.extract_strided_slice %316 {offsets = [0, 0, 4], sizes = [4, 16, 36], strides = [1, 1, 1]} : vector<4x16x40xbf16> to vector<4x16x36xbf16>
    %339 = vector.extract_strided_slice %316 {offsets = [0, 0, 0], sizes = [4, 16, 4], strides = [1, 1, 1]} : vector<4x16x40xbf16> to vector<4x16x4xbf16>
    %340 = tpu.concatenate %338, %339 in 2 : vector<4x16x36xbf16>, vector<4x16x4xbf16> -> vector<4x16x40xbf16>
    %341 = vector.extract_strided_slice %316 {offsets = [0, 0, 6], sizes = [4, 16, 34], strides = [1, 1, 1]} : vector<4x16x40xbf16> to vector<4x16x34xbf16>
    %342 = vector.extract_strided_slice %316 {offsets = [0, 0, 0], sizes = [4, 16, 6], strides = [1, 1, 1]} : vector<4x16x40xbf16> to vector<4x16x6xbf16>
    %343 = tpu.concatenate %341, %342 in 2 : vector<4x16x34xbf16>, vector<4x16x6xbf16> -> vector<4x16x40xbf16>
    %344 = vector.extract_strided_slice %316 {offsets = [0, 0, 8], sizes = [4, 16, 32], strides = [1, 1, 1]} : vector<4x16x40xbf16> to vector<4x16x32xbf16>
    %345 = vector.extract_strided_slice %316 {offsets = [0, 0, 0], sizes = [4, 16, 8], strides = [1, 1, 1]} : vector<4x16x40xbf16> to vector<4x16x8xbf16>
    %346 = tpu.concatenate %344, %345 in 2 : vector<4x16x32xbf16>, vector<4x16x8xbf16> -> vector<4x16x40xbf16>
    %347 = tpu.concatenate %325, %328, %331, %334, %316, %337, %340, %343, %346 in 1 : vector<4x16x40xbf16>, vector<4x16x40xbf16>, vector<4x16x40xbf16>, vector<4x16x40xbf16>, vector<4x16x40xbf16>, vector<4x16x40xbf16>, vector<4x16x40xbf16>, vector<4x16x40xbf16>, vector<4x16x40xbf16> -> vector<4x144x40xbf16>
    %348 = vector.shape_cast %318 : vector<16x144xbf16> to vector<1x16x144xbf16>
    %349 = vector.shape_cast %348 : vector<1x16x144xbf16> to vector<1x16x144xbf16>
    %350 = vector.broadcast %349 : vector<1x16x144xbf16> to vector<4x16x144xbf16>
    "tpu.trace_start"() <{level = 10 : i32, message = "nok,nkw->now"}> : () -> ()
    %cst_105 = arith.constant dense<0.000000e+00> : vector<4x16x40xf32>
    %351 = tpu.matmul %350, %347, %cst_105 {dimension_numbers = #tpu.dot_dimension_numbers<[2], [1], [1], [2], [0, 0, 0, 1, 1, 2], [0], [0]>} : vector<4x16x144xbf16>, vector<4x144x40xbf16>, vector<4x16x40xf32> -> vector<4x16x40xf32>
    "tpu.trace_stop"() : () -> ()
    %cst_106 = arith.constant dense<0.000000e+00> : vector<4x16xf32>
    %352 = vector.multi_reduction <add>, %351, %cst_106 [2] : vector<4x16x40xf32> to vector<4x16xf32>
    %353 = vector.shape_cast %352 : vector<4x16xf32> to vector<4x16x1xf32>
    %cst_107 = arith.constant dense<0.000000e+00> : vector<16x1xf32>
    %354 = vector.multi_reduction <add>, %353, %cst_107 [0] : vector<4x16x1xf32> to vector<16x1xf32>
    %355 = vector.shape_cast %354 : vector<16x1xf32> to vector<1x16x1xf32>
    %cst_108 = arith.constant 6.250000e-03 : f32
    %356 = vector.broadcast %cst_108 : f32 to vector<1x16x1xf32>
    %357 = arith.mulf %355, %356 : vector<1x16x1xf32>
    %358 = vector.broadcast %357 : vector<1x16x1xf32> to vector<4x16x40xf32>
    %359 = arith.subf %351, %358 : vector<4x16x40xf32>
    %360 = arith.mulf %359, %359 : vector<4x16x40xf32>
    %cst_109 = arith.constant dense<0.000000e+00> : vector<4x16xf32>
    %361 = vector.multi_reduction <add>, %360, %cst_109 [2] : vector<4x16x40xf32> to vector<4x16xf32>
    %362 = vector.shape_cast %361 : vector<4x16xf32> to vector<4x16x1xf32>
    %cst_110 = arith.constant dense<0.000000e+00> : vector<16x1xf32>
    %363 = vector.multi_reduction <add>, %362, %cst_110 [0] : vector<4x16x1xf32> to vector<16x1xf32>
    %364 = vector.shape_cast %363 : vector<16x1xf32> to vector<1x16x1xf32>
    %cst_111 = arith.constant 6.250000e-03 : f32
    %365 = vector.broadcast %cst_111 : f32 to vector<1x16x1xf32>
    %366 = arith.mulf %364, %365 : vector<1x16x1xf32>
    %cst_112 = arith.constant 9.99999974E-6 : f32
    %367 = vector.broadcast %cst_112 : f32 to vector<1x16x1xf32>
    %368 = arith.addf %366, %367 : vector<1x16x1xf32>
    %369 = math.rsqrt %368 : vector<1x16x1xf32>
    %370 = vector.broadcast %369 : vector<1x16x1xf32> to vector<4x16x40xf32>
    %371 = arith.mulf %359, %370 : vector<4x16x40xf32>
    %372 = vector.broadcast %320 : vector<1x16x1xf32> to vector<4x16x40xf32>
    %373 = arith.mulf %371, %372 : vector<4x16x40xf32>
    %374 = vector.broadcast %322 : vector<1x16x1xf32> to vector<4x16x40xf32>
    %375 = arith.addf %373, %374 : vector<4x16x40xf32>
    %cst_113 = arith.constant 0.00999999977 : f32
    %376 = vector.broadcast %cst_113 : f32 to vector<4x16x40xf32>
    %377 = arith.mulf %376, %375 : vector<4x16x40xf32>
    %378 = arith.maximumf %375, %377 : vector<4x16x40xf32>
    %379 = arith.addf %378, %315 : vector<4x16x40xf32>
    %380 = arith.truncf %379 : vector<4x16x40xf32> to vector<4x16x40xbf16>
    %c5 = arith.constant 5 : index
    %c0_114 = arith.constant 0 : index
    %c0_115 = arith.constant 0 : index
    %381 = vector.load %arg5[%c5, %c0_114, %c0_115] : memref<7x16x144xbf16, #tpu.memory_space<vmem>>, vector<1x16x144xbf16>
    %382 = vector.shape_cast %381 : vector<1x16x144xbf16> to vector<16x144xbf16>
    %c5_116 = arith.constant 5 : index
    %c0_117 = arith.constant 0 : index
    %c0_118 = arith.constant 0 : index
    %c0_119 = arith.constant 0 : index
    %383 = vector.load %arg6[%c5_116, %c0_117, %c0_118, %c0_119] : memref<7x1x16x1xf32, #tpu.memory_space<vmem>>, vector<1x1x16x1xf32>
    %384 = vector.shape_cast %383 : vector<1x1x16x1xf32> to vector<1x16x1xf32>
    %c5_120 = arith.constant 5 : index
    %c0_121 = arith.constant 0 : index
    %c0_122 = arith.constant 0 : index
    %c0_123 = arith.constant 0 : index
    %385 = vector.load %arg7[%c5_120, %c0_121, %c0_122, %c0_123] : memref<7x1x16x1xf32, #tpu.memory_space<vmem>>, vector<1x1x16x1xf32>
    %386 = vector.shape_cast %385 : vector<1x1x16x1xf32> to vector<1x16x1xf32>
    %387 = vector.extract_strided_slice %380 {offsets = [0, 0, 24], sizes = [4, 16, 16], strides = [1, 1, 1]} : vector<4x16x40xbf16> to vector<4x16x16xbf16>
    %388 = vector.extract_strided_slice %380 {offsets = [0, 0, 0], sizes = [4, 16, 24], strides = [1, 1, 1]} : vector<4x16x40xbf16> to vector<4x16x24xbf16>
    %389 = tpu.concatenate %387, %388 in 2 : vector<4x16x16xbf16>, vector<4x16x24xbf16> -> vector<4x16x40xbf16>
    %390 = vector.extract_strided_slice %380 {offsets = [0, 0, 28], sizes = [4, 16, 12], strides = [1, 1, 1]} : vector<4x16x40xbf16> to vector<4x16x12xbf16>
    %391 = vector.extract_strided_slice %380 {offsets = [0, 0, 0], sizes = [4, 16, 28], strides = [1, 1, 1]} : vector<4x16x40xbf16> to vector<4x16x28xbf16>
    %392 = tpu.concatenate %390, %391 in 2 : vector<4x16x12xbf16>, vector<4x16x28xbf16> -> vector<4x16x40xbf16>
    %393 = vector.extract_strided_slice %380 {offsets = [0, 0, 32], sizes = [4, 16, 8], strides = [1, 1, 1]} : vector<4x16x40xbf16> to vector<4x16x8xbf16>
    %394 = vector.extract_strided_slice %380 {offsets = [0, 0, 0], sizes = [4, 16, 32], strides = [1, 1, 1]} : vector<4x16x40xbf16> to vector<4x16x32xbf16>
    %395 = tpu.concatenate %393, %394 in 2 : vector<4x16x8xbf16>, vector<4x16x32xbf16> -> vector<4x16x40xbf16>
    %396 = vector.extract_strided_slice %380 {offsets = [0, 0, 36], sizes = [4, 16, 4], strides = [1, 1, 1]} : vector<4x16x40xbf16> to vector<4x16x4xbf16>
    %397 = vector.extract_strided_slice %380 {offsets = [0, 0, 0], sizes = [4, 16, 36], strides = [1, 1, 1]} : vector<4x16x40xbf16> to vector<4x16x36xbf16>
    %398 = tpu.concatenate %396, %397 in 2 : vector<4x16x4xbf16>, vector<4x16x36xbf16> -> vector<4x16x40xbf16>
    %399 = vector.extract_strided_slice %380 {offsets = [0, 0, 4], sizes = [4, 16, 36], strides = [1, 1, 1]} : vector<4x16x40xbf16> to vector<4x16x36xbf16>
    %400 = vector.extract_strided_slice %380 {offsets = [0, 0, 0], sizes = [4, 16, 4], strides = [1, 1, 1]} : vector<4x16x40xbf16> to vector<4x16x4xbf16>
    %401 = tpu.concatenate %399, %400 in 2 : vector<4x16x36xbf16>, vector<4x16x4xbf16> -> vector<4x16x40xbf16>
    %402 = vector.extract_strided_slice %380 {offsets = [0, 0, 8], sizes = [4, 16, 32], strides = [1, 1, 1]} : vector<4x16x40xbf16> to vector<4x16x32xbf16>
    %403 = vector.extract_strided_slice %380 {offsets = [0, 0, 0], sizes = [4, 16, 8], strides = [1, 1, 1]} : vector<4x16x40xbf16> to vector<4x16x8xbf16>
    %404 = tpu.concatenate %402, %403 in 2 : vector<4x16x32xbf16>, vector<4x16x8xbf16> -> vector<4x16x40xbf16>
    %405 = vector.extract_strided_slice %380 {offsets = [0, 0, 12], sizes = [4, 16, 28], strides = [1, 1, 1]} : vector<4x16x40xbf16> to vector<4x16x28xbf16>
    %406 = vector.extract_strided_slice %380 {offsets = [0, 0, 0], sizes = [4, 16, 12], strides = [1, 1, 1]} : vector<4x16x40xbf16> to vector<4x16x12xbf16>
    %407 = tpu.concatenate %405, %406 in 2 : vector<4x16x28xbf16>, vector<4x16x12xbf16> -> vector<4x16x40xbf16>
    %408 = vector.extract_strided_slice %380 {offsets = [0, 0, 16], sizes = [4, 16, 24], strides = [1, 1, 1]} : vector<4x16x40xbf16> to vector<4x16x24xbf16>
    %409 = vector.extract_strided_slice %380 {offsets = [0, 0, 0], sizes = [4, 16, 16], strides = [1, 1, 1]} : vector<4x16x40xbf16> to vector<4x16x16xbf16>
    %410 = tpu.concatenate %408, %409 in 2 : vector<4x16x24xbf16>, vector<4x16x16xbf16> -> vector<4x16x40xbf16>
    %411 = tpu.concatenate %389, %392, %395, %398, %380, %401, %404, %407, %410 in 1 : vector<4x16x40xbf16>, vector<4x16x40xbf16>, vector<4x16x40xbf16>, vector<4x16x40xbf16>, vector<4x16x40xbf16>, vector<4x16x40xbf16>, vector<4x16x40xbf16>, vector<4x16x40xbf16>, vector<4x16x40xbf16> -> vector<4x144x40xbf16>
    %412 = vector.shape_cast %382 : vector<16x144xbf16> to vector<1x16x144xbf16>
    %413 = vector.shape_cast %412 : vector<1x16x144xbf16> to vector<1x16x144xbf16>
    %414 = vector.broadcast %413 : vector<1x16x144xbf16> to vector<4x16x144xbf16>
    "tpu.trace_start"() <{level = 10 : i32, message = "nok,nkw->now"}> : () -> ()
    %cst_124 = arith.constant dense<0.000000e+00> : vector<4x16x40xf32>
    %415 = tpu.matmul %414, %411, %cst_124 {dimension_numbers = #tpu.dot_dimension_numbers<[2], [1], [1], [2], [0, 0, 0, 1, 1, 2], [0], [0]>} : vector<4x16x144xbf16>, vector<4x144x40xbf16>, vector<4x16x40xf32> -> vector<4x16x40xf32>
    "tpu.trace_stop"() : () -> ()
    %cst_125 = arith.constant dense<0.000000e+00> : vector<4x16xf32>
    %416 = vector.multi_reduction <add>, %415, %cst_125 [2] : vector<4x16x40xf32> to vector<4x16xf32>
    %417 = vector.shape_cast %416 : vector<4x16xf32> to vector<4x16x1xf32>
    %cst_126 = arith.constant dense<0.000000e+00> : vector<16x1xf32>
    %418 = vector.multi_reduction <add>, %417, %cst_126 [0] : vector<4x16x1xf32> to vector<16x1xf32>
    %419 = vector.shape_cast %418 : vector<16x1xf32> to vector<1x16x1xf32>
    %cst_127 = arith.constant 6.250000e-03 : f32
    %420 = vector.broadcast %cst_127 : f32 to vector<1x16x1xf32>
    %421 = arith.mulf %419, %420 : vector<1x16x1xf32>
    %422 = vector.broadcast %421 : vector<1x16x1xf32> to vector<4x16x40xf32>
    %423 = arith.subf %415, %422 : vector<4x16x40xf32>
    %424 = arith.mulf %423, %423 : vector<4x16x40xf32>
    %cst_128 = arith.constant dense<0.000000e+00> : vector<4x16xf32>
    %425 = vector.multi_reduction <add>, %424, %cst_128 [2] : vector<4x16x40xf32> to vector<4x16xf32>
    %426 = vector.shape_cast %425 : vector<4x16xf32> to vector<4x16x1xf32>
    %cst_129 = arith.constant dense<0.000000e+00> : vector<16x1xf32>
    %427 = vector.multi_reduction <add>, %426, %cst_129 [0] : vector<4x16x1xf32> to vector<16x1xf32>
    %428 = vector.shape_cast %427 : vector<16x1xf32> to vector<1x16x1xf32>
    %cst_130 = arith.constant 6.250000e-03 : f32
    %429 = vector.broadcast %cst_130 : f32 to vector<1x16x1xf32>
    %430 = arith.mulf %428, %429 : vector<1x16x1xf32>
    %cst_131 = arith.constant 9.99999974E-6 : f32
    %431 = vector.broadcast %cst_131 : f32 to vector<1x16x1xf32>
    %432 = arith.addf %430, %431 : vector<1x16x1xf32>
    %433 = math.rsqrt %432 : vector<1x16x1xf32>
    %434 = vector.broadcast %433 : vector<1x16x1xf32> to vector<4x16x40xf32>
    %435 = arith.mulf %423, %434 : vector<4x16x40xf32>
    %436 = vector.broadcast %384 : vector<1x16x1xf32> to vector<4x16x40xf32>
    %437 = arith.mulf %435, %436 : vector<4x16x40xf32>
    %438 = vector.broadcast %386 : vector<1x16x1xf32> to vector<4x16x40xf32>
    %439 = arith.addf %437, %438 : vector<4x16x40xf32>
    %cst_132 = arith.constant 0.00999999977 : f32
    %440 = vector.broadcast %cst_132 : f32 to vector<4x16x40xf32>
    %441 = arith.mulf %440, %439 : vector<4x16x40xf32>
    %442 = arith.maximumf %439, %441 : vector<4x16x40xf32>
    %443 = arith.addf %442, %379 : vector<4x16x40xf32>
    %444 = arith.truncf %443 : vector<4x16x40xf32> to vector<4x16x40xbf16>
    %c6 = arith.constant 6 : index
    %c0_133 = arith.constant 0 : index
    %c0_134 = arith.constant 0 : index
    %445 = vector.load %arg5[%c6, %c0_133, %c0_134] : memref<7x16x144xbf16, #tpu.memory_space<vmem>>, vector<1x16x144xbf16>
    %446 = vector.shape_cast %445 : vector<1x16x144xbf16> to vector<16x144xbf16>
    %c6_135 = arith.constant 6 : index
    %c0_136 = arith.constant 0 : index
    %c0_137 = arith.constant 0 : index
    %c0_138 = arith.constant 0 : index
    %447 = vector.load %arg6[%c6_135, %c0_136, %c0_137, %c0_138] : memref<7x1x16x1xf32, #tpu.memory_space<vmem>>, vector<1x1x16x1xf32>
    %448 = vector.shape_cast %447 : vector<1x1x16x1xf32> to vector<1x16x1xf32>
    %c6_139 = arith.constant 6 : index
    %c0_140 = arith.constant 0 : index
    %c0_141 = arith.constant 0 : index
    %c0_142 = arith.constant 0 : index
    %449 = vector.load %arg7[%c6_139, %c0_140, %c0_141, %c0_142] : memref<7x1x16x1xf32, #tpu.memory_space<vmem>>, vector<1x1x16x1xf32>
    %450 = vector.shape_cast %449 : vector<1x1x16x1xf32> to vector<1x16x1xf32>
    %451 = vector.extract_strided_slice %444 {offsets = [0, 0, 24], sizes = [4, 16, 16], strides = [1, 1, 1]} : vector<4x16x40xbf16> to vector<4x16x16xbf16>
    %452 = vector.extract_strided_slice %444 {offsets = [0, 0, 0], sizes = [4, 16, 24], strides = [1, 1, 1]} : vector<4x16x40xbf16> to vector<4x16x24xbf16>
    %453 = tpu.concatenate %451, %452 in 2 : vector<4x16x16xbf16>, vector<4x16x24xbf16> -> vector<4x16x40xbf16>
    %454 = vector.extract_strided_slice %444 {offsets = [0, 0, 28], sizes = [4, 16, 12], strides = [1, 1, 1]} : vector<4x16x40xbf16> to vector<4x16x12xbf16>
    %455 = vector.extract_strided_slice %444 {offsets = [0, 0, 0], sizes = [4, 16, 28], strides = [1, 1, 1]} : vector<4x16x40xbf16> to vector<4x16x28xbf16>
    %456 = tpu.concatenate %454, %455 in 2 : vector<4x16x12xbf16>, vector<4x16x28xbf16> -> vector<4x16x40xbf16>
    %457 = vector.extract_strided_slice %444 {offsets = [0, 0, 32], sizes = [4, 16, 8], strides = [1, 1, 1]} : vector<4x16x40xbf16> to vector<4x16x8xbf16>
    %458 = vector.extract_strided_slice %444 {offsets = [0, 0, 0], sizes = [4, 16, 32], strides = [1, 1, 1]} : vector<4x16x40xbf16> to vector<4x16x32xbf16>
    %459 = tpu.concatenate %457, %458 in 2 : vector<4x16x8xbf16>, vector<4x16x32xbf16> -> vector<4x16x40xbf16>
    %460 = vector.extract_strided_slice %444 {offsets = [0, 0, 36], sizes = [4, 16, 4], strides = [1, 1, 1]} : vector<4x16x40xbf16> to vector<4x16x4xbf16>
    %461 = vector.extract_strided_slice %444 {offsets = [0, 0, 0], sizes = [4, 16, 36], strides = [1, 1, 1]} : vector<4x16x40xbf16> to vector<4x16x36xbf16>
    %462 = tpu.concatenate %460, %461 in 2 : vector<4x16x4xbf16>, vector<4x16x36xbf16> -> vector<4x16x40xbf16>
    %463 = vector.extract_strided_slice %444 {offsets = [0, 0, 4], sizes = [4, 16, 36], strides = [1, 1, 1]} : vector<4x16x40xbf16> to vector<4x16x36xbf16>
    %464 = vector.extract_strided_slice %444 {offsets = [0, 0, 0], sizes = [4, 16, 4], strides = [1, 1, 1]} : vector<4x16x40xbf16> to vector<4x16x4xbf16>
    %465 = tpu.concatenate %463, %464 in 2 : vector<4x16x36xbf16>, vector<4x16x4xbf16> -> vector<4x16x40xbf16>
    %466 = vector.extract_strided_slice %444 {offsets = [0, 0, 8], sizes = [4, 16, 32], strides = [1, 1, 1]} : vector<4x16x40xbf16> to vector<4x16x32xbf16>
    %467 = vector.extract_strided_slice %444 {offsets = [0, 0, 0], sizes = [4, 16, 8], strides = [1, 1, 1]} : vector<4x16x40xbf16> to vector<4x16x8xbf16>
    %468 = tpu.concatenate %466, %467 in 2 : vector<4x16x32xbf16>, vector<4x16x8xbf16> -> vector<4x16x40xbf16>
    %469 = vector.extract_strided_slice %444 {offsets = [0, 0, 12], sizes = [4, 16, 28], strides = [1, 1, 1]} : vector<4x16x40xbf16> to vector<4x16x28xbf16>
    %470 = vector.extract_strided_slice %444 {offsets = [0, 0, 0], sizes = [4, 16, 12], strides = [1, 1, 1]} : vector<4x16x40xbf16> to vector<4x16x12xbf16>
    %471 = tpu.concatenate %469, %470 in 2 : vector<4x16x28xbf16>, vector<4x16x12xbf16> -> vector<4x16x40xbf16>
    %472 = vector.extract_strided_slice %444 {offsets = [0, 0, 16], sizes = [4, 16, 24], strides = [1, 1, 1]} : vector<4x16x40xbf16> to vector<4x16x24xbf16>
    %473 = vector.extract_strided_slice %444 {offsets = [0, 0, 0], sizes = [4, 16, 16], strides = [1, 1, 1]} : vector<4x16x40xbf16> to vector<4x16x16xbf16>
    %474 = tpu.concatenate %472, %473 in 2 : vector<4x16x24xbf16>, vector<4x16x16xbf16> -> vector<4x16x40xbf16>
    %475 = tpu.concatenate %453, %456, %459, %462, %444, %465, %468, %471, %474 in 1 : vector<4x16x40xbf16>, vector<4x16x40xbf16>, vector<4x16x40xbf16>, vector<4x16x40xbf16>, vector<4x16x40xbf16>, vector<4x16x40xbf16>, vector<4x16x40xbf16>, vector<4x16x40xbf16>, vector<4x16x40xbf16> -> vector<4x144x40xbf16>
    %476 = vector.shape_cast %446 : vector<16x144xbf16> to vector<1x16x144xbf16>
    %477 = vector.shape_cast %476 : vector<1x16x144xbf16> to vector<1x16x144xbf16>
    %478 = vector.broadcast %477 : vector<1x16x144xbf16> to vector<4x16x144xbf16>
    "tpu.trace_start"() <{level = 10 : i32, message = "nok,nkw->now"}> : () -> ()
    %cst_143 = arith.constant dense<0.000000e+00> : vector<4x16x40xf32>
    %479 = tpu.matmul %478, %475, %cst_143 {dimension_numbers = #tpu.dot_dimension_numbers<[2], [1], [1], [2], [0, 0, 0, 1, 1, 2], [0], [0]>} : vector<4x16x144xbf16>, vector<4x144x40xbf16>, vector<4x16x40xf32> -> vector<4x16x40xf32>
    "tpu.trace_stop"() : () -> ()
    %cst_144 = arith.constant dense<0.000000e+00> : vector<4x16xf32>
    %480 = vector.multi_reduction <add>, %479, %cst_144 [2] : vector<4x16x40xf32> to vector<4x16xf32>
    %481 = vector.shape_cast %480 : vector<4x16xf32> to vector<4x16x1xf32>
    %cst_145 = arith.constant dense<0.000000e+00> : vector<16x1xf32>
    %482 = vector.multi_reduction <add>, %481, %cst_145 [0] : vector<4x16x1xf32> to vector<16x1xf32>
    %483 = vector.shape_cast %482 : vector<16x1xf32> to vector<1x16x1xf32>
    %cst_146 = arith.constant 6.250000e-03 : f32
    %484 = vector.broadcast %cst_146 : f32 to vector<1x16x1xf32>
    %485 = arith.mulf %483, %484 : vector<1x16x1xf32>
    %486 = vector.broadcast %485 : vector<1x16x1xf32> to vector<4x16x40xf32>
    %487 = arith.subf %479, %486 : vector<4x16x40xf32>
    %488 = arith.mulf %487, %487 : vector<4x16x40xf32>
    %cst_147 = arith.constant dense<0.000000e+00> : vector<4x16xf32>
    %489 = vector.multi_reduction <add>, %488, %cst_147 [2] : vector<4x16x40xf32> to vector<4x16xf32>
    %490 = vector.shape_cast %489 : vector<4x16xf32> to vector<4x16x1xf32>
    %cst_148 = arith.constant dense<0.000000e+00> : vector<16x1xf32>
    %491 = vector.multi_reduction <add>, %490, %cst_148 [0] : vector<4x16x1xf32> to vector<16x1xf32>
    %492 = vector.shape_cast %491 : vector<16x1xf32> to vector<1x16x1xf32>
    %cst_149 = arith.constant 6.250000e-03 : f32
    %493 = vector.broadcast %cst_149 : f32 to vector<1x16x1xf32>
    %494 = arith.mulf %492, %493 : vector<1x16x1xf32>
    %cst_150 = arith.constant 9.99999974E-6 : f32
    %495 = vector.broadcast %cst_150 : f32 to vector<1x16x1xf32>
    %496 = arith.addf %494, %495 : vector<1x16x1xf32>
    %497 = math.rsqrt %496 : vector<1x16x1xf32>
    %498 = vector.broadcast %497 : vector<1x16x1xf32> to vector<4x16x40xf32>
    %499 = arith.mulf %487, %498 : vector<4x16x40xf32>
    %500 = vector.broadcast %448 : vector<1x16x1xf32> to vector<4x16x40xf32>
    %501 = arith.mulf %499, %500 : vector<4x16x40xf32>
    %502 = vector.broadcast %450 : vector<1x16x1xf32> to vector<4x16x40xf32>
    %503 = arith.addf %501, %502 : vector<4x16x40xf32>
    %cst_151 = arith.constant 0.00999999977 : f32
    %504 = vector.broadcast %cst_151 : f32 to vector<4x16x40xf32>
    %505 = arith.mulf %504, %503 : vector<4x16x40xf32>
    %506 = arith.maximumf %503, %505 : vector<4x16x40xf32>
    %507 = arith.addf %506, %443 : vector<4x16x40xf32>
    %508 = arith.truncf %507 : vector<4x16x40xf32> to vector<4x16x40xbf16>
    %509 = tpu.concatenate %60, %124, %188, %252, %316, %380, %444, %508 in 1 : vector<4x16x40xbf16>, vector<4x16x40xbf16>, vector<4x16x40xbf16>, vector<4x16x40xbf16>, vector<4x16x40xbf16>, vector<4x16x40xbf16>, vector<4x16x40xbf16>, vector<4x16x40xbf16> -> vector<4x128x40xbf16>
    %c0_152 = arith.constant 0 : index
    %c0_153 = arith.constant 0 : index
    %510 = vector.load %arg8[%c0_152, %c0_153] : memref<256x128xbf16, #tpu.memory_space<vmem>>, vector<256x128xbf16>
    %511 = vector.shape_cast %510 : vector<256x128xbf16> to vector<1x256x128xbf16>
    %512 = vector.shape_cast %511 : vector<1x256x128xbf16> to vector<1x256x128xbf16>
    %513 = vector.broadcast %512 : vector<1x256x128xbf16> to vector<4x256x128xbf16>
    "tpu.trace_start"() <{level = 10 : i32, message = "nok,nkw->now"}> : () -> ()
    %cst_154 = arith.constant dense<0.000000e+00> : vector<4x256x40xf32>
    %514 = tpu.matmul %513, %509, %cst_154 {dimension_numbers = #tpu.dot_dimension_numbers<[2], [1], [1], [2], [0, 0, 0, 1, 1, 2], [0], [0]>} : vector<4x256x128xbf16>, vector<4x128x40xbf16>, vector<4x256x40xf32> -> vector<4x256x40xf32>
    "tpu.trace_stop"() : () -> ()
    %c0_155 = arith.constant 0 : index
    %c0_156 = arith.constant 0 : index
    %c0_157 = arith.constant 0 : index
    %515 = vector.load %arg9[%c0_155, %c0_156, %c0_157] : memref<1x256x1xf32, #tpu.memory_space<vmem>>, vector<1x256x1xf32>
    %516 = vector.broadcast %515 : vector<1x256x1xf32> to vector<4x256x40xf32>
    %517 = arith.addf %514, %516 : vector<4x256x40xf32>
    %cst_158 = arith.constant dense<0xFF800000> : vector<4x256xf32>
    %518 = vector.multi_reduction <maximumf>, %517, %cst_158 [2] : vector<4x256x40xf32> to vector<4x256xf32>
    %519 = vector.shape_cast %518 : vector<4x256xf32> to vector<4x256x1xf32>
    %c0_159 = arith.constant 0 : index
    %c0_160 = arith.constant 0 : index
    %520 = vector.load %arg11[%c0_159, %c0_160] : memref<256x128xbf16, #tpu.memory_space<vmem>>, vector<256x128xbf16>
    %521 = vector.shape_cast %520 : vector<256x128xbf16> to vector<1x256x128xbf16>
    %522 = vector.shape_cast %521 : vector<1x256x128xbf16> to vector<1x256x128xbf16>
    %523 = vector.broadcast %522 : vector<1x256x128xbf16> to vector<4x256x128xbf16>
    "tpu.trace_start"() <{level = 10 : i32, message = "nok,nkw->now"}> : () -> ()
    %cst_161 = arith.constant dense<0.000000e+00> : vector<4x256x40xf32>
    %524 = tpu.matmul %523, %509, %cst_161 {dimension_numbers = #tpu.dot_dimension_numbers<[2], [1], [1], [2], [0, 0, 0, 1, 1, 2], [0], [0]>} : vector<4x256x128xbf16>, vector<4x128x40xbf16>, vector<4x256x40xf32> -> vector<4x256x40xf32>
    "tpu.trace_stop"() : () -> ()
    %c0_162 = arith.constant 0 : index
    %c0_163 = arith.constant 0 : index
    %525 = vector.load %arg10[%c0_162, %c0_163] : memref<256x256xbf16, #tpu.memory_space<vmem>>, vector<256x256xbf16>
    %526 = arith.truncf %519 : vector<4x256x1xf32> to vector<4x256x1xbf16>
    %527 = vector.shape_cast %525 : vector<256x256xbf16> to vector<1x256x256xbf16>
    %528 = vector.shape_cast %527 : vector<1x256x256xbf16> to vector<1x256x256xbf16>
    %529 = vector.broadcast %528 : vector<1x256x256xbf16> to vector<4x256x256xbf16>
    "tpu.trace_start"() <{level = 10 : i32, message = "nok,nkw->now"}> : () -> ()
    %cst_164 = arith.constant dense<0.000000e+00> : vector<4x256x1xf32>
    %530 = tpu.matmul %529, %526, %cst_164 {dimension_numbers = #tpu.dot_dimension_numbers<[2], [1], [1], [2], [0, 0, 0, 1, 1, 2], [0], [0]>} : vector<4x256x256xbf16>, vector<4x256x1xbf16>, vector<4x256x1xf32> -> vector<4x256x1xf32>
    "tpu.trace_stop"() : () -> ()
    %531 = vector.broadcast %530 : vector<4x256x1xf32> to vector<4x256x40xf32>
    %532 = arith.addf %524, %531 : vector<4x256x40xf32>
    %c0_165 = arith.constant 0 : index
    %c0_166 = arith.constant 0 : index
    %c0_167 = arith.constant 0 : index
    %533 = vector.load %arg12[%c0_165, %c0_166, %c0_167] : memref<1x256x1xf32, #tpu.memory_space<vmem>>, vector<1x256x1xf32>
    %534 = vector.broadcast %533 : vector<1x256x1xf32> to vector<4x256x40xf32>
    %535 = arith.addf %532, %534 : vector<4x256x40xf32>
    %cst_168 = arith.constant 0.00999999977 : f32
    %536 = vector.broadcast %cst_168 : f32 to vector<4x256x40xf32>
    %537 = arith.mulf %536, %535 : vector<4x256x40xf32>
    %538 = arith.maximumf %535, %537 : vector<4x256x40xf32>
    %c0_169 = arith.constant 0 : index
    %c0_170 = arith.constant 0 : index
    %539 = vector.load %arg13[%c0_169, %c0_170] : memref<64x256xbf16, #tpu.memory_space<vmem>>, vector<64x256xbf16>
    %540 = arith.truncf %538 : vector<4x256x40xf32> to vector<4x256x40xbf16>
    %541 = vector.shape_cast %539 : vector<64x256xbf16> to vector<1x64x256xbf16>
    %542 = vector.shape_cast %541 : vector<1x64x256xbf16> to vector<1x64x256xbf16>
    %543 = vector.broadcast %542 : vector<1x64x256xbf16> to vector<4x64x256xbf16>
    "tpu.trace_start"() <{level = 10 : i32, message = "nok,nkw->now"}> : () -> ()
    %cst_171 = arith.constant dense<0.000000e+00> : vector<4x64x40xf32>
    %544 = tpu.matmul %543, %540, %cst_171 {dimension_numbers = #tpu.dot_dimension_numbers<[2], [1], [1], [2], [0, 0, 0, 1, 1, 2], [0], [0]>} : vector<4x64x256xbf16>, vector<4x256x40xbf16>, vector<4x64x40xf32> -> vector<4x64x40xf32>
    "tpu.trace_stop"() : () -> ()
    %c0_172 = arith.constant 0 : index
    %c0_173 = arith.constant 0 : index
    %c0_174 = arith.constant 0 : index
    %545 = vector.load %arg14[%c0_172, %c0_173, %c0_174] : memref<1x64x1xf32, #tpu.memory_space<vmem>>, vector<1x64x1xf32>
    %546 = vector.broadcast %545 : vector<1x64x1xf32> to vector<4x64x40xf32>
    %547 = arith.addf %544, %546 : vector<4x64x40xf32>
    %c0_175 = arith.constant 0 : index
    %c0_176 = arith.constant 0 : index
    %c0_177 = arith.constant 0 : index
    %548 = vector.load %arg15[%c0_175, %c0_176, %c0_177] : memref<4x64x40xf32, #tpu.memory_space<vmem>>, vector<4x64x40xf32>
    tpu.vector_store %arg15[%c0_175, %c0_176, %c0_177], %547 {strides = array<i32>} : memref<4x64x40xf32, #tpu.memory_space<vmem>>, vector<4x64x40xf32>,
    return
  }
  func.func @transform_0(%arg0: i32) -> (i32, i32, i32) {
    %c0_i32 = arith.constant 0 : i32
    %c0_i32_0 = arith.constant 0 : i32
    %c0_i32_1 = arith.constant 0 : i32
    %c0_i32_2 = arith.constant 0 : i32
    return %c0_i32, %c0_i32_0, %c0_i32_1 : i32, i32, i32
  }
  func.func @transform_1(%arg0: i32) -> (i32, i32) {
    %c0_i32 = arith.constant 0 : i32
    %c0_i32_0 = arith.constant 0 : i32
    %c0_i32_1 = arith.constant 0 : i32
    return %c0_i32, %c0_i32_0 : i32, i32
  }
  func.func @transform_2(%arg0: i32) -> (i32, i32, i32) {
    %c0_i32 = arith.constant 0 : i32
    %c0_i32_0 = arith.constant 0 : i32
    %c0_i32_1 = arith.constant 0 : i32
    %c0_i32_2 = arith.constant 0 : i32
    return %c0_i32, %c0_i32_0, %c0_i32_1 : i32, i32, i32
  }
  func.func @transform_3(%arg0: i32) -> (i32, i32, i32) {
    %c0_i32 = arith.constant 0 : i32
    %c0_i32_0 = arith.constant 0 : i32
    %c0_i32_1 = arith.constant 0 : i32
    %c0_i32_2 = arith.constant 0 : i32
    return %c0_i32, %c0_i32_0, %c0_i32_1 : i32, i32, i32
  }
  func.func @transform_4(%arg0: i32) -> (i32, i32, i32) {
    %c0_i32 = arith.constant 0 : i32
    %c0_i32_0 = arith.constant 0 : i32
    %c0_i32_1 = arith.constant 0 : i32
    %c0_i32_2 = arith.constant 0 : i32
    return %c0_i32, %c0_i32_0, %c0_i32_1 : i32, i32, i32
  }
  func.func @transform_5(%arg0: i32) -> (i32, i32, i32, i32) {
    %c0_i32 = arith.constant 0 : i32
    %c0_i32_0 = arith.constant 0 : i32
    %c0_i32_1 = arith.constant 0 : i32
    %c0_i32_2 = arith.constant 0 : i32
    %c0_i32_3 = arith.constant 0 : i32
    return %c0_i32, %c0_i32_0, %c0_i32_1, %c0_i32_2 : i32, i32, i32, i32
  }
  func.func @transform_6(%arg0: i32) -> (i32, i32, i32, i32) {
    %c0_i32 = arith.constant 0 : i32
    %c0_i32_0 = arith.constant 0 : i32
    %c0_i32_1 = arith.constant 0 : i32
    %c0_i32_2 = arith.constant 0 : i32
    %c0_i32_3 = arith.constant 0 : i32
    return %c0_i32, %c0_i32_0, %c0_i32_1, %c0_i32_2 : i32, i32, i32, i32
  }
  func.func @transform_7(%arg0: i32) -> (i32, i32) {
    %c0_i32 = arith.constant 0 : i32
    %c0_i32_0 = arith.constant 0 : i32
    %c0_i32_1 = arith.constant 0 : i32
    return %c0_i32, %c0_i32_0 : i32, i32
  }
  func.func @transform_8(%arg0: i32) -> (i32, i32, i32) {
    %c0_i32 = arith.constant 0 : i32
    %c0_i32_0 = arith.constant 0 : i32
    %c0_i32_1 = arith.constant 0 : i32
    %c0_i32_2 = arith.constant 0 : i32
    return %c0_i32, %c0_i32_0, %c0_i32_1 : i32, i32, i32
  }
  func.func @transform_9(%arg0: i32) -> (i32, i32) {
    %c0_i32 = arith.constant 0 : i32
    %c0_i32_0 = arith.constant 0 : i32
    %c0_i32_1 = arith.constant 0 : i32
    return %c0_i32, %c0_i32_0 : i32, i32
  }
  func.func @transform_10(%arg0: i32) -> (i32, i32) {
    %c0_i32 = arith.constant 0 : i32
    %c0_i32_0 = arith.constant 0 : i32
    %c0_i32_1 = arith.constant 0 : i32
    return %c0_i32, %c0_i32_0 : i32, i32
  }
  func.func @transform_11(%arg0: i32) -> (i32, i32, i32) {
    %c0_i32 = arith.constant 0 : i32
    %c0_i32_0 = arith.constant 0 : i32
    %c0_i32_1 = arith.constant 0 : i32
    %c0_i32_2 = arith.constant 0 : i32
    return %c0_i32, %c0_i32_0, %c0_i32_1 : i32, i32, i32
  }
  func.func @transform_12(%arg0: i32) -> (i32, i32) {
    %c0_i32 = arith.constant 0 : i32
    %c0_i32_0 = arith.constant 0 : i32
    %c0_i32_1 = arith.constant 0 : i32
    return %c0_i32, %c0_i32_0 : i32, i32
  }
  func.func @transform_13(%arg0: i32) -> (i32, i32, i32) {
    %c0_i32 = arith.constant 0 : i32
    %c0_i32_0 = arith.constant 0 : i32
    %c0_i32_1 = arith.constant 0 : i32
    %c0_i32_2 = arith.constant 0 : i32
    return %c0_i32, %c0_i32_0, %c0_i32_1 : i32, i32, i32
  }
  func.func @transform_14(%arg0: i32) -> (i32, i32, i32) {
    %c0_i32 = arith.constant 0 : i32
    %c0_i32_0 = arith.constant 0 : i32
    %c0_i32_1 = arith.constant 0 : i32
    %c0_i32_2 = arith.constant 0 : i32
    return %c0_i32, %c0_i32_0, %c0_i32_1 : i32, i32, i32
  }
}

</mosaic_0001>

<llo_original>
// kernel: snake2d_forward.1
$region0: #{snake2d_forward.1}
  #allocation0 [shape = 'u32[]', space=smem, size = 0x4, offset = 0x4, fixed_abs, tag = 'smem constant byte address 0x4 - core index']
  #allocation1 [shape = 'u32[144,128]{1,0:T(1,128)}', space=vmem, size = 0x12000, scoped, tag = 'internal scratch']
  %s0 = inlined_call_operand.vmem [shape: bf16[4,8,40], index: 0, kind: input, shape index: {}]
  %s1 = inlined_call_operand.vmem [shape: bf16[16,72], index: 1, kind: input, shape index: {}]
  %s2 = inlined_call_operand.vmem [shape: f32[1,16,1], index: 2, kind: input, shape index: {}]
  %s3 = inlined_call_operand.vmem [shape: f32[1,16,1], index: 3, kind: input, shape index: {}]
  %s4 = inlined_call_operand.vmem [shape: bf16[7,16,144], index: 4, kind: input, shape index: {}]
  %s5 = inlined_call_operand.vmem [shape: f32[7,1,16,1], index: 5, kind: input, shape index: {}]
  %s6 = inlined_call_operand.vmem [shape: f32[7,1,16,1], index: 6, kind: input, shape index: {}]
  %s7 = inlined_call_operand.vmem [shape: bf16[256,128], index: 7, kind: input, shape index: {}]
  %s8 = inlined_call_operand.vmem [shape: f32[1,256,1], index: 8, kind: input, shape index: {}]
  %s9 = inlined_call_operand.vmem [shape: bf16[256,256], index: 9, kind: input, shape index: {}]
  %s10 = inlined_call_operand.vmem [shape: bf16[256,128], index: 10, kind: input, shape index: {}]
  %s11 = inlined_call_operand.vmem [shape: f32[1,256,1], index: 11, kind: input, shape index: {}]
  %s12 = inlined_call_operand.vmem [shape: bf16[64,256], index: 12, kind: input, shape index: {}]
  %s13 = inlined_call_operand.vmem [shape: f32[1,64,1], index: 13, kind: input, shape index: {}]
  %s14 = inlined_call_operand.vmem [shape: f32[4,64,40], index: 14, kind: output, shape index: {}]
  %s15 = sld [smem:[#allocation0]]
  $region66: #{snake2d_forward.1} parent=0
    _
  %s17 = ssub.s32 1, %s15
  %s18 = scalar_select 0, %s17, %s15
  // Predicated region
  $region2: #{snake2d_forward.1} parent=0 // pred_check
    _
  $region3: #{snake2d_forward.1} parent=0 // pred_check_branch
    %20 = sbr.rel (0) target = $region5
  $region4: #{snake2d_forward.1} parent=0 // pred_region
    _
  $region5: #{snake2d_forward.1} parent=0 // pred_fallthru
    _
  // Predicated region
  $region6: #{snake2d_forward.1} parent=0 // pred_check
    _
  $region7: #{snake2d_forward.1} parent=0 // pred_check_branch
    %22 = sbr.rel (0) target = $region9
  $region8: #{snake2d_forward.1} parent=0 // pred_region
    _
  $region9: #{snake2d_forward.1} parent=0 // pred_fallthru
    _
  // Predicated region
  $region10: #{snake2d_forward.1} parent=0 // pred_check
    _
  $region11: #{snake2d_forward.1} parent=0 // pred_check_branch
    %24 = sbr.rel (0) target = $region13
  $region12: #{snake2d_forward.1} parent=0 // pred_region
    _
  $region13: #{snake2d_forward.1} parent=0 // pred_fallthru
    _
  // Predicated region
  $region14: #{snake2d_forward.1} parent=0 // pred_check
    _
  $region15: #{snake2d_forward.1} parent=0 // pred_check_branch
    %26 = sbr.rel (0) target = $region17
  $region16: #{snake2d_forward.1} parent=0 // pred_region
    _
  $region17: #{snake2d_forward.1} parent=0 // pred_fallthru
    _
  // Predicated region
  $region18: #{snake2d_forward.1} parent=0 // pred_check
    _
  $region19: #{snake2d_forward.1} parent=0 // pred_check_branch
    %28 = sbr.rel (0) target = $region21
  $region20: #{snake2d_forward.1} parent=0 // pred_region
    _
  $region21: #{snake2d_forward.1} parent=0 // pred_fallthru
    _
  // Predicated region
  $region22: #{snake2d_forward.1} parent=0 // pred_check
    _
  $region23: #{snake2d_forward.1} parent=0 // pred_check_branch
    %30 = sbr.rel (0) target = $region25
  $region24: #{snake2d_forward.1} parent=0 // pred_region
    _
  $region25: #{snake2d_forward.1} parent=0 // pred_fallthru
    _
  // Predicated region
  $region26: #{snake2d_forward.1} parent=0 // pred_check
    _
  $region27: #{snake2d_forward.1} parent=0 // pred_check_branch
    %32 = sbr.rel (0) target = $region29
  $region28: #{snake2d_forward.1} parent=0 // pred_region
    _
  $region29: #{snake2d_forward.1} parent=0 // pred_fallthru
    _
  // Predicated region
  $region30: #{snake2d_forward.1} parent=0 // pred_check
    _
  $region31: #{snake2d_forward.1} parent=0 // pred_check_branch
    %34 = sbr.rel (0) target = $region33
  $region32: #{snake2d_forward.1} parent=0 // pred_region
    _
  $region33: #{snake2d_forward.1} parent=0 // pred_fallthru
    _
  // Predicated region
  $region34: #{snake2d_forward.1} parent=0 // pred_check
    _
  $region35: #{snake2d_forward.1} parent=0 // pred_check_branch
    %36 = sbr.rel (0) target = $region37
  $region36: #{snake2d_forward.1} parent=0 // pred_region
    _
  $region37: #{snake2d_forward.1} parent=0 // pred_fallthru
    _
  // Predicated region
  $region38: #{snake2d_forward.1} parent=0 // pred_check
    _
  $region39: #{snake2d_forward.1} parent=0 // pred_check_branch
    %38 = sbr.rel (0) target = $region41
  $region40: #{snake2d_forward.1} parent=0 // pred_region
    _
  $region41: #{snake2d_forward.1} parent=0 // pred_fallthru
    _
  // Predicated region
  $region42: #{snake2d_forward.1} parent=0 // pred_check
    _
  $region43: #{snake2d_forward.1} parent=0 // pred_check_branch
    %40 = sbr.rel (0) target = $region45
  $region44: #{snake2d_forward.1} parent=0 // pred_region
    _
  $region45: #{snake2d_forward.1} parent=0 // pred_fallthru
    _
  // Predicated region
  $region46: #{snake2d_forward.1} parent=0 // pred_check
    _
  $region47: #{snake2d_forward.1} parent=0 // pred_check_branch
    %42 = sbr.rel (0) target = $region49
  $region48: #{snake2d_forward.1} parent=0 // pred_region
    _
  $region49: #{snake2d_forward.1} parent=0 // pred_fallthru
    _
  // Predicated region
  $region50: #{snake2d_forward.1} parent=0 // pred_check
    _
  $region51: #{snake2d_forward.1} parent=0 // pred_check_branch
    %44 = sbr.rel (0) target = $region53
  $region52: #{snake2d_forward.1} parent=0 // pred_region
    _
  $region53: #{snake2d_forward.1} parent=0 // pred_fallthru
    _
  // Predicated region
  $region54: #{snake2d_forward.1} parent=0 // pred_check
    _
  $region55: #{snake2d_forward.1} parent=0 // pred_check_branch
    %46 = sbr.rel (0) target = $region57
  $region56: #{snake2d_forward.1} parent=0 // pred_region
    _
  $region57: #{snake2d_forward.1} parent=0 // pred_fallthru
    _
  %v48 = vld [vmem:[%s0] sm:$0xf]
  %v49 = vld [vmem:[%s0 + $0x4] sm:$0xf]
  %v50 = vld [vmem:[%s0 + $0x8] sm:$0xf]
  %v51 = vld [vmem:[%s0 + $0xc] sm:$0xf]
  %v52 = vld [vmem:[%s1] sm:$0xf]
  %v53 = vld [vmem:[%s1 + $0x4] sm:$0xf]
  %v54 = vld [vmem:[%s2] sm:$0xff]
  %v55 = vld [vmem:[%s2 + $0x8] sm:$0xff]
  %v56 = vld [vmem:[%s3] sm:$0xff]
  %v57 = vld [vmem:[%s3 + $0x8] sm:$0xff]
  %v62 = vunpack.c.l.b16 %v48
  %v63 = vunpack.c.l.b16 %v49
  %v64 = vunpack.c.l.b16 %v50
  %v65 = vunpack.c.l.b16 %v51
  %v66 = vpack.c.b16 %v62, %v62
  %v67 = vpack.c.b16 %v63, %v63
  %v68 = vpack.c.b16 %v64, %v64
  %v69 = vpack.c.b16 %v65, %v65
  %70 = vrot.lane.b32.xlu0 %v66, 92
  %v71 = vpop.permute.xlu0 %70
  %72 = vrot.lane.b32.xlu0 %v67, 92
  %v73 = vpop.permute.xlu0 %72
  %74 = vrot.lane.b32.xlu0 %v68, 92
  %v75 = vpop.permute.xlu0 %74
  %76 = vrot.lane.b32.xlu0 %v69, 92
  %v77 = vpop.permute.xlu0 %76
  %78 = vrot.lane.b32.xlu0 %v66, 4
  %v79 = vpop.permute.xlu0 %78
  %80 = vrot.lane.b32.xlu0 %v67, 4
  %v81 = vpop.permute.xlu0 %80
  %82 = vrot.lane.b32.xlu0 %v68, 4
  %v83 = vpop.permute.xlu0 %82
  %84 = vrot.lane.b32.xlu0 %v69, 4
  %v85 = vpop.permute.xlu0 %84
  %vm86 = vcmask 31744
  %v89 = vsel %vm86, %v71, %v79
  %v92 = vsel %vm86, %v73, %v81
  %v95 = vsel %vm86, %v75, %v83
  %v98 = vsel %vm86, %v77, %v85
  %99 = vrot.lane.b32.xlu0 %v66, 91
  %v100 = vpop.permute.xlu0 %99
  %101 = vrot.lane.b32.xlu0 %v67, 91
  %v102 = vpop.permute.xlu0 %101
  %103 = vrot.lane.b32.xlu0 %v68, 91
  %v104 = vpop.permute.xlu0 %103
  %105 = vrot.lane.b32.xlu0 %v69, 91
  %v106 = vpop.permute.xlu0 %105
  %107 = vrot.lane.b32.xlu0 %v66, 3
  %v108 = vpop.permute.xlu0 %107
  %109 = vrot.lane.b32.xlu0 %v67, 3
  %v110 = vpop.permute.xlu0 %109
  %111 = vrot.lane.b32.xlu0 %v68, 3
  %v112 = vpop.permute.xlu0 %111
  %113 = vrot.lane.b32.xlu0 %v69, 3
  %v114 = vpop.permute.xlu0 %113
  %vm115 = vcmask 23552
  %v118 = vsel %vm115, %v100, %v108
  %v121 = vsel %vm115, %v102, %v110
  %v124 = vsel %vm115, %v104, %v112
  %v127 = vsel %vm115, %v106, %v114
  %128 = vrot.lane.b32.xlu0 %v66, 90
  %v129 = vpop.permute.xlu0 %128
  %130 = vrot.lane.b32.xlu0 %v67, 90
  %v131 = vpop.permute.xlu0 %130
  %132 = vrot.lane.b32.xlu0 %v68, 90
  %v133 = vpop.permute.xlu0 %132
  %134 = vrot.lane.b32.xlu0 %v69, 90
  %v135 = vpop.permute.xlu0 %134
  %136 = vrot.lane.b32.xlu0 %v66, 2
  %v137 = vpop.permute.xlu0 %136
  %138 = vrot.lane.b32.xlu0 %v67, 2
  %v139 = vpop.permute.xlu0 %138
  %140 = vrot.lane.b32.xlu0 %v68, 2
  %v141 = vpop.permute.xlu0 %140
  %142 = vrot.lane.b32.xlu0 %v69, 2
  %v143 = vpop.permute.xlu0 %142
  %vm144 = vcmask 15360
  %v147 = vsel %vm144, %v129, %v137
  %v150 = vsel %vm144, %v131, %v139
  %v153 = vsel %vm144, %v133, %v141
  %v156 = vsel %vm144, %v135, %v143
  %157 = vrot.lane.b32.xlu0 %v66, 89
  %v158 = vpop.permute.xlu0 %157
  %159 = vrot.lane.b32.xlu0 %v67, 89
  %v160 = vpop.permute.xlu0 %159
  %161 = vrot.lane.b32.xlu0 %v68, 89
  %v162 = vpop.permute.xlu0 %161
  %163 = vrot.lane.b32.xlu0 %v69, 89
  %v164 = vpop.permute.xlu0 %163
  %165 = vrot.lane.b32.xlu0 %v66, 1
  %v166 = vpop.permute.xlu0 %165
  %167 = vrot.lane.b32.xlu0 %v67, 1
  %v168 = vpop.permute.xlu0 %167
  %169 = vrot.lane.b32.xlu0 %v68, 1
  %v170 = vpop.permute.xlu0 %169
  %171 = vrot.lane.b32.xlu0 %v69, 1
  %v172 = vpop.permute.xlu0 %171
  %vm173 = vcmask 7168
  %v176 = vsel %vm173, %v158, %v166
  %v179 = vsel %vm173, %v160, %v168
  %v182 = vsel %vm173, %v162, %v170
  %v185 = vsel %vm173, %v164, %v172
  %186 = vrot.lane.b32.xlu0 %v66, 127
  %v187 = vpop.permute.xlu0 %186
  %188 = vrot.lane.b32.xlu0 %v67, 127
  %v189 = vpop.permute.xlu0 %188
  %190 = vrot.lane.b32.xlu0 %v68, 127
  %v191 = vpop.permute.xlu0 %190
  %192 = vrot.lane.b32.xlu0 %v69, 127
  %v193 = vpop.permute.xlu0 %192
  %194 = vrot.lane.b32.xlu0 %v66, 39
  %v195 = vpop.permute.xlu0 %194
  %196 = vrot.lane.b32.xlu0 %v67, 39
  %v197 = vpop.permute.xlu0 %196
  %198 = vrot.lane.b32.xlu0 %v68, 39
  %v199 = vpop.permute.xlu0 %198
  %200 = vrot.lane.b32.xlu0 %v69, 39
  %v201 = vpop.permute.xlu0 %200
  %vm202 = vcmask 318464
  %v205 = vsel %vm202, %v187, %v195
  %v208 = vsel %vm202, %v189, %v197
  %v211 = vsel %vm202, %v191, %v199
  %v214 = vsel %vm202, %v193, %v201
  %215 = vrot.lane.b32.xlu0 %v66, 126
  %v216 = vpop.permute.xlu0 %215
  %217 = vrot.lane.b32.xlu0 %v67, 126
  %v218 = vpop.permute.xlu0 %217
  %219 = vrot.lane.b32.xlu0 %v68, 126
  %v220 = vpop.permute.xlu0 %219
  %221 = vrot.lane.b32.xlu0 %v69, 126
  %v222 = vpop.permute.xlu0 %221
  %223 = vrot.lane.b32.xlu0 %v66, 38
  %v224 = vpop.permute.xlu0 %223
  %225 = vrot.lane.b32.xlu0 %v67, 38
  %v226 = vpop.permute.xlu0 %225
  %227 = vrot.lane.b32.xlu0 %v68, 38
  %v228 = vpop.permute.xlu0 %227
  %229 = vrot.lane.b32.xlu0 %v69, 38
  %v230 = vpop.permute.xlu0 %229
  %vm231 = vcmask 310272
  %v234 = vsel %vm231, %v216, %v224
  %v237 = vsel %vm231, %v218, %v226
  %v240 = vsel %vm231, %v220, %v228
  %v243 = vsel %vm231, %v222, %v230
  %244 = vrot.lane.b32.xlu0 %v66, 125
  %v245 = vpop.permute.xlu0 %244
  %246 = vrot.lane.b32.xlu0 %v67, 125
  %v247 = vpop.permute.xlu0 %246
  %248 = vrot.lane.b32.xlu0 %v68, 125
  %v249 = vpop.permute.xlu0 %248
  %250 = vrot.lane.b32.xlu0 %v69, 125
  %v251 = vpop.permute.xlu0 %250
  %252 = vrot.lane.b32.xlu0 %v66, 37
  %v253 = vpop.permute.xlu0 %252
  %254 = vrot.lane.b32.xlu0 %v67, 37
  %v255 = vpop.permute.xlu0 %254
  %256 = vrot.lane.b32.xlu0 %v68, 37
  %v257 = vpop.permute.xlu0 %256
  %258 = vrot.lane.b32.xlu0 %v69, 37
  %v259 = vpop.permute.xlu0 %258
  %vm260 = vcmask 302080
  %v263 = vsel %vm260, %v245, %v253
  %v266 = vsel %vm260, %v247, %v255
  %v269 = vsel %vm260, %v249, %v257
  %v272 = vsel %vm260, %v251, %v259
  %273 = vrot.lane.b32.xlu0 %v66, 124
  %v274 = vpop.permute.xlu0 %273
  %275 = vrot.lane.b32.xlu0 %v67, 124
  %v276 = vpop.permute.xlu0 %275
  %277 = vrot.lane.b32.xlu0 %v68, 124
  %v278 = vpop.permute.xlu0 %277
  %279 = vrot.lane.b32.xlu0 %v69, 124
  %v280 = vpop.permute.xlu0 %279
  %281 = vrot.lane.b32.xlu0 %v66, 36
  %v282 = vpop.permute.xlu0 %281
  %283 = vrot.lane.b32.xlu0 %v67, 36
  %v284 = vpop.permute.xlu0 %283
  %285 = vrot.lane.b32.xlu0 %v68, 36
  %v286 = vpop.permute.xlu0 %285
  %287 = vrot.lane.b32.xlu0 %v69, 36
  %v288 = vpop.permute.xlu0 %287
  %vm289 = vcmask 293888
  %v292 = vsel %vm289, %v274, %v282
  %v295 = vsel %vm289, %v276, %v284
  %v298 = vsel %vm289, %v278, %v286
  %v301 = vsel %vm289, %v280, %v288
  %v306 = vrot.slane %v118, 4
  %v307 = vrot.slane %v121, 4
  %v308 = vrot.slane %v124, 4
  %v309 = vrot.slane %v127, 4
  %v314 = vrot.slane %v176, 4
  %v315 = vrot.slane %v179, 4
  %v316 = vrot.slane %v182, 4
  %v317 = vrot.slane %v185, 4
  %v322 = vrot.slane %v205, 4
  %v323 = vrot.slane %v208, 4
  %v324 = vrot.slane %v211, 4
  %v325 = vrot.slane %v214, 4
  %v330 = vrot.slane %v263, 4
  %v331 = vrot.slane %v266, 4
  %v332 = vrot.slane %v269, 4
  %v333 = vrot.slane %v272, 4
  %vm334 = vcmask 1043456
  %v336 = vsel %vm334, %v89, %v306
  %v339 = vsel %vm334, %v92, %v307
  %v342 = vsel %vm334, %v95, %v308
  %v345 = vsel %vm334, %v98, %v309
  %v348 = vsel %vm334, %v147, %v314
  %v351 = vsel %vm334, %v150, %v315
  %v354 = vsel %vm334, %v153, %v316
  %v357 = vsel %vm334, %v156, %v317
  %v361 = vsel %vm334, %v48, %v322
  %v365 = vsel %vm334, %v49, %v323
  %v369 = vsel %vm334, %v50, %v324
  %v373 = vsel %vm334, %v51, %v325
  %v376 = vsel %vm334, %v234, %v330
  %v379 = vsel %vm334, %v237, %v331
  %v382 = vsel %vm334, %v240, %v332
  %v385 = vsel %vm334, %v243, %v333
  %v389 = vunpack.c.l.b16 %v52
  %v390 = vunpack.c.l.b16 %v53
  %v391 = vpack.c.b16 %v390, %v389
  %vm392 = vcmask 588800
  %v394 = vsel %vm392, %v391, 0
  %v396 = vsel %vm334, %v292, 0
  %398 = vmatprep.subr.bf16.mxu0 0
  %399 = vmatpush1.bf16.msra.mxu0 0
  %400 = vmatprep.subr.bf16.mxu0 0
  %401 = vmatpush1.bf16.msra.mxu0 0
  %402 = vmatprep.subr.bf16.mxu0 0
  %403 = vmatpush1.bf16.msra.mxu0 0
  %404 = vmatprep.subr.bf16.mxu0 0
  %405 = vmatpush1.bf16.msra.mxu0 %v396
  %406 = vmatprep.subr.bf16.mxu0 0
  %407 = vmatpush1.bf16.msra.mxu0 %v376
  %408 = vmatprep.subr.bf16.mxu0 0
  %409 = vmatpush1.bf16.msra.mxu0 %v361
  %410 = vmatprep.subr.bf16.mxu0 0
  %411 = vmatpush1.bf16.msra.mxu0 %v348
  %412 = vmatprep.subr.bf16.mxu0 0
  %413 = vmatpush1.bf16.msra.mxu0 %v336
  %414 = vmatprep.subr.bf16.mxu0 0
  %415 = vmatpush2.bf16.msra.mxu0 0
  %416 = vmatprep.subr.bf16.mxu0 0
  %417 = vmatpush2.bf16.msra.mxu0 0
  %418 = vmatprep.subr.bf16.mxu0 0
  %419 = vmatpush2.bf16.msra.mxu0 0
  %420 = vmatprep.subr.bf16.mxu0 0
  %421 = vmatpush2.bf16.msra.mxu0 0
  %422 = vmatprep.subr.bf16.mxu0 0
  %423 = vmatpush2.bf16.msra.mxu0 0
  %424 = vmatprep.subr.bf16.mxu0 0
  %425 = vmatpush2.bf16.msra.mxu0 0
  %426 = vmatprep.subr.bf16.mxu0 0
  %427 = vmatpush2.bf16.msra.mxu0 0
  %428 = vmatprep.subr.bf16.mxu0 0
  %429 = vmatpush2.bf16.msra.mxu0 0
  %430 = vmatprep.mubr.bf16.mxu0 0
  %431 = vmatmul.mubr.bf16.gmra.mxu0 %v394
  %v432 = vpop.f32.mrf.mxu0
  %v433 = vadd.f32 0.0, %v432
  %v434 = vpop.f32.mrf.mxu0
  %v435 = vpop.f32.mrf.mxu0
  %v436 = vadd.f32 0.0, %v435
  %v437 = vpop.f32.mrf.mxu0
  %438 = vdwg.mxu0
  %v439 = vsel %vm334, %v295, 0
  %441 = vmatprep.subr.bf16.mxu0 0
  %442 = vmatpush1.bf16.msra.mxu0 0
  %443 = vmatprep.subr.bf16.mxu0 0
  %444 = vmatpush1.bf16.msra.mxu0 0
  %445 = vmatprep.subr.bf16.mxu0 0
  %446 = vmatpush1.bf16.msra.mxu0 0
  %447 = vmatprep.subr.bf16.mxu0 0
  %448 = vmatpush1.bf16.msra.mxu0 %v439
  %449 = vmatprep.subr.bf16.mxu0 0
  %450 = vmatpush1.bf16.msra.mxu0 %v379
  %451 = vmatprep.subr.bf16.mxu0 0
  %452 = vmatpush1.bf16.msra.mxu0 %v365
  %453 = vmatprep.subr.bf16.mxu0 0
  %454 = vmatpush1.bf16.msra.mxu0 %v351
  %455 = vmatprep.subr.bf16.mxu0 0
  %456 = vmatpush1.bf16.msra.mxu0 %v339
  %457 = vmatprep.subr.bf16.mxu0 0
  %458 = vmatpush2.bf16.msra.mxu0 0
  %459 = vmatprep.subr.bf16.mxu0 0
  %460 = vmatpush2.bf16.msra.mxu0 0
  %461 = vmatprep.subr.bf16.mxu0 0
  %462 = vmatpush2.bf16.msra.mxu0 0
  %463 = vmatprep.subr.bf16.mxu0 0
  %464 = vmatpush2.bf16.msra.mxu0 0
  %465 = vmatprep.subr.bf16.mxu0 0
  %466 = vmatpush2.bf16.msra.mxu0 0
  %467 = vmatprep.subr.bf16.mxu0 0
  %468 = vmatpush2.bf16.msra.mxu0 0
  %469 = vmatprep.subr.bf16.mxu0 0
  %470 = vmatpush2.bf16.msra.mxu0 0
  %471 = vmatprep.subr.bf16.mxu0 0
  %472 = vmatpush2.bf16.msra.mxu0 0
  %473 = vmatprep.mubr.bf16.mxu0 0
  %474 = vmatmul.mubr.bf16.gmra.mxu0 %v394
  %v475 = vpop.f32.mrf.mxu0
  %v476 = vadd.f32 0.0, %v475
  %v477 = vpop.f32.mrf.mxu0
  %v478 = vpop.f32.mrf.mxu0
  %v479 = vadd.f32 0.0, %v478
  %v480 = vpop.f32.mrf.mxu0
  %481 = vdwg.mxu0
  %v482 = vsel %vm334, %v298, 0
  %484 = vmatprep.subr.bf16.mxu0 0
  %485 = vmatpush1.bf16.msra.mxu0 0
  %486 = vmatprep.subr.bf16.mxu0 0
  %487 = vmatpush1.bf16.msra.mxu0 0
  %488 = vmatprep.subr.bf16.mxu0 0
  %489 = vmatpush1.bf16.msra.mxu0 0
  %490 = vmatprep.subr.bf16.mxu0 0
  %491 = vmatpush1.bf16.msra.mxu0 %v482
  %492 = vmatprep.subr.bf16.mxu0 0
  %493 = vmatpush1.bf16.msra.mxu0 %v382
  %494 = vmatprep.subr.bf16.mxu0 0
  %495 = vmatpush1.bf16.msra.mxu0 %v369
  %496 = vmatprep.subr.bf16.mxu0 0
  %497 = vmatpush1.bf16.msra.mxu0 %v354
  %498 = vmatprep.subr.bf16.mxu0 0
  %499 = vmatpush1.bf16.msra.mxu0 %v342
  %500 = vmatprep.subr.bf16.mxu0 0
  %501 = vmatpush2.bf16.msra.mxu0 0
  %502 = vmatprep.subr.bf16.mxu0 0
  %503 = vmatpush2.bf16.msra.mxu0 0
  %504 = vmatprep.subr.bf16.mxu0 0
  %505 = vmatpush2.bf16.msra.mxu0 0
  %506 = vmatprep.subr.bf16.mxu0 0
  %507 = vmatpush2.bf16.msra.mxu0 0
  %508 = vmatprep.subr.bf16.mxu0 0
  %509 = vmatpush2.bf16.msra.mxu0 0
  %510 = vmatprep.subr.bf16.mxu0 0
  %511 = vmatpush2.bf16.msra.mxu0 0
  %512 = vmatprep.subr.bf16.mxu0 0
  %513 = vmatpush2.bf16.msra.mxu0 0
  %514 = vmatprep.subr.bf16.mxu0 0
  %515 = vmatpush2.bf16.msra.mxu0 0
  %516 = vmatprep.mubr.bf16.mxu0 0
  %517 = vmatmul.mubr.bf16.gmra.mxu0 %v394
  %v518 = vpop.f32.mrf.mxu0
  %v519 = vadd.f32 0.0, %v518
  %v520 = vpop.f32.mrf.mxu0
  %v521 = vpop.f32.mrf.mxu0
  %v522 = vadd.f32 0.0, %v521
  %v523 = vpop.f32.mrf.mxu0
  %524 = vdwg.mxu0
  %v525 = vsel %vm334, %v301, 0
  %527 = vmatprep.subr.bf16.mxu0 0
  %528 = vmatpush1.bf16.msra.mxu0 0
  %529 = vmatprep.subr.bf16.mxu0 0
  %530 = vmatpush1.bf16.msra.mxu0 0
  %531 = vmatprep.subr.bf16.mxu0 0
  %532 = vmatpush1.bf16.msra.mxu0 0
  %533 = vmatprep.subr.bf16.mxu0 0
  %534 = vmatpush1.bf16.msra.mxu0 %v525
  %535 = vmatprep.subr.bf16.mxu0 0
  %536 = vmatpush1.bf16.msra.mxu0 %v385
  %537 = vmatprep.subr.bf16.mxu0 0
  %538 = vmatpush1.bf16.msra.mxu0 %v373
  %539 = vmatprep.subr.bf16.mxu0 0
  %540 = vmatpush1.bf16.msra.mxu0 %v357
  %541 = vmatprep.subr.bf16.mxu0 0
  %542 = vmatpush1.bf16.msra.mxu0 %v345
  %543 = vmatprep.subr.bf16.mxu0 0
  %544 = vmatpush2.bf16.msra.mxu0 0
  %545 = vmatprep.subr.bf16.mxu0 0
  %546 = vmatpush2.bf16.msra.mxu0 0
  %547 = vmatprep.subr.bf16.mxu0 0
  %548 = vmatpush2.bf16.msra.mxu0 0
  %549 = vmatprep.subr.bf16.mxu0 0
  %550 = vmatpush2.bf16.msra.mxu0 0
  %551 = vmatprep.subr.bf16.mxu0 0
  %552 = vmatpush2.bf16.msra.mxu0 0
  %553 = vmatprep.subr.bf16.mxu0 0
  %554 = vmatpush2.bf16.msra.mxu0 0
  %555 = vmatprep.subr.bf16.mxu0 0
  %556 = vmatpush2.bf16.msra.mxu0 0
  %557 = vmatprep.subr.bf16.mxu0 0
  %558 = vmatpush2.bf16.msra.mxu0 0
  %559 = vmatprep.mubr.bf16.mxu0 0
  %560 = vmatmul.mubr.bf16.gmra.mxu0 %v394
  %v561 = vpop.f32.mrf.mxu0
  %v562 = vadd.f32 0.0, %v561
  %v563 = vpop.f32.mrf.mxu0
  %v564 = vpop.f32.mrf.mxu0
  %v565 = vadd.f32 0.0, %v564
  %v566 = vpop.f32.mrf.mxu0
  %567 = vdwg.mxu0
  %vm568 = vcmask 326656
  %v569 = vsel %vm568, %v433, 0.0
  %570 = vadd.xlane.f32.xlu0 %v569
  %v571 = vpop.xlane.xlu0 %570
  %v572 = vsel %vm568, %v436, 0.0
  %573 = vadd.xlane.f32.xlu0 %v572
  %v574 = vpop.xlane.xlu0 %573
  %v575 = vsel %vm568, %v476, 0.0
  %576 = vadd.xlane.f32.xlu0 %v575
  %v577 = vpop.xlane.xlu0 %576
  %v578 = vsel %vm568, %v479, 0.0
  %579 = vadd.xlane.f32.xlu0 %v578
  %v580 = vpop.xlane.xlu0 %579
  %v581 = vsel %vm568, %v519, 0.0
  %582 = vadd.xlane.f32.xlu0 %v581
  %v583 = vpop.xlane.xlu0 %582
  %v584 = vsel %vm568, %v522, 0.0
  %585 = vadd.xlane.f32.xlu0 %v584
  %v586 = vpop.xlane.xlu0 %585
  %v587 = vsel %vm568, %v562, 0.0
  %588 = vadd.xlane.f32.xlu0 %v587
  %v589 = vpop.xlane.xlu0 %588
  %v590 = vsel %vm568, %v565, 0.0
  %591 = vadd.xlane.f32.xlu0 %v590
  %v592 = vpop.xlane.xlu0 %591
  %v593 = vadd.f32 %v571, %v577
  %v594 = vadd.f32 %v593, %v583
  %v595 = vadd.f32 %v594, %v589
  %v596 = vadd.f32 %v574, %v580
  %v597 = vadd.f32 %v596, %v586
  %v598 = vadd.f32 %v597, %v592
  %v599 = vmul.f32 %v595, 0.00625
  %v600 = vmul.f32 %v598, 0.00625
  %v601 = vsub.f32 %v433, %v599
  %v602 = vsub.f32 %v436, %v600
  %v603 = vsub.f32 %v476, %v599
  %v604 = vsub.f32 %v479, %v600
  %v605 = vsub.f32 %v519, %v599
  %v606 = vsub.f32 %v522, %v600
  %v607 = vsub.f32 %v562, %v599
  %v608 = vsub.f32 %v565, %v600
  %v609 = vmul.f32 %v601, %v601
  %v610 = vmul.f32 %v602, %v602
  %v611 = vmul.f32 %v603, %v603
  %v612 = vmul.f32 %v604, %v604
  %v613 = vmul.f32 %v605, %v605
  %v614 = vmul.f32 %v606, %v606
  %v615 = vmul.f32 %v607, %v607
  %v616 = vmul.f32 %v608, %v608
  %v617 = vsel %vm568, %v609, 0.0
  %618 = vadd.xlane.f32.xlu0 %v617
  %v619 = vpop.xlane.xlu0 %618
  %v620 = vsel %vm568, %v610, 0.0
  %621 = vadd.xlane.f32.xlu0 %v620
  %v622 = vpop.xlane.xlu0 %621
  %v623 = vsel %vm568, %v611, 0.0
  %624 = vadd.xlane.f32.xlu0 %v623
  %v625 = vpop.xlane.xlu0 %624
  %v626 = vsel %vm568, %v612, 0.0
  %627 = vadd.xlane.f32.xlu0 %v626
  %v628 = vpop.xlane.xlu0 %627
  %v629 = vsel %vm568, %v613, 0.0
  %630 = vadd.xlane.f32.xlu0 %v629
  %v631 = vpop.xlane.xlu0 %630
  %v632 = vsel %vm568, %v614, 0.0
  %633 = vadd.xlane.f32.xlu0 %v632
  %v634 = vpop.xlane.xlu0 %633
  %v635 = vsel %vm568, %v615, 0.0
  %636 = vadd.xlane.f32.xlu0 %v635
  %v637 = vpop.xlane.xlu0 %636
  %v638 = vsel %vm568, %v616, 0.0
  %639 = vadd.xlane.f32.xlu0 %v638
  %v640 = vpop.xlane.xlu0 %639
  %v641 = vadd.f32 %v619, %v625
  %v642 = vadd.f32 %v641, %v631
  %v643 = vadd.f32 %v642, %v637
  %v644 = vadd.f32 %v622, %v628
  %v645 = vadd.f32 %v644, %v634
  %v646 = vadd.f32 %v645, %v640
  %v647 = vmul.f32 %v643, 0.00625
  %v648 = vmul.f32 %v646, 0.00625
  %v649 = vadd.f32 %v647, 1e-05
  %v650 = vadd.f32 %v648, 1e-05
  %v651 = vrsqrt.pop %v649
  %v652 = vrsqrt.pop %v650
  %v653 = vmul.f32 %v601, %v651
  %v654 = vmul.f32 %v602, %v652
  %v655 = vmul.f32 %v603, %v651
  %v656 = vmul.f32 %v604, %v652
  %v657 = vmul.f32 %v605, %v651
  %v658 = vmul.f32 %v606, %v652
  %v659 = vmul.f32 %v607, %v651
  %v660 = vmul.f32 %v608, %v652
  %662 = vset.pattern.permute.xlu0 0
  %663 = vperm.xlu0 %662, %v54
  %v664 = vpop.permute.xlu0 %663
  %667 = vset.pattern.permute.xlu0 0
  %668 = vperm.xlu0 %667, %v55
  %v669 = vpop.permute.xlu0 %668
  %v671 = vmul.f32 %v653, %v664
  %v672 = vmul.f32 %v654, %v669
  %v673 = vmul.f32 %v655, %v664
  %v674 = vmul.f32 %v656, %v669
  %v675 = vmul.f32 %v657, %v664
  %v676 = vmul.f32 %v658, %v669
  %v677 = vmul.f32 %v659, %v664
  %v678 = vmul.f32 %v660, %v669
  %680 = vset.pattern.permute.xlu0 0
  %681 = vperm.xlu0 %680, %v56
  %v682 = vpop.permute.xlu0 %681
  %685 = vset.pattern.permute.xlu0 0
  %686 = vperm.xlu0 %685, %v57
  %v687 = vpop.permute.xlu0 %686
  %v689 = vadd.f32 %v671, %v682
  %v690 = vadd.f32 %v672, %v687
  %v691 = vadd.f32 %v673, %v682
  %v692 = vadd.f32 %v674, %v687
  %v693 = vadd.f32 %v675, %v682
  %v694 = vadd.f32 %v676, %v687
  %v695 = vadd.f32 %v677, %v682
  %v696 = vadd.f32 %v678, %v687
  %v697 = vmul.f32 %v689, 0.01
  %v698 = vmul.f32 %v690, 0.01
  %v699 = vmul.f32 %v691, 0.01
  %v700 = vmul.f32 %v692, 0.01
  %v701 = vmul.f32 %v693, 0.01
  %v702 = vmul.f32 %v694, 0.01
  %v703 = vmul.f32 %v695, 0.01
  %v704 = vmul.f32 %v696, 0.01
  %v705 = vmax.f32 %v689, %v697
  %v706 = vmax.f32 %v690, %v698
  %v707 = vmax.f32 %v691, %v699
  %v708 = vmax.f32 %v692, %v700
  %v709 = vmax.f32 %v693, %v701
  %v710 = vmax.f32 %v694, %v702
  %v711 = vmax.f32 %v695, %v703
  %v712 = vmax.f32 %v696, %v704
  %v713 = vpack.c.bf16 %v706, %v705
  %v714 = vpack.c.bf16 %v708, %v707
  %v715 = vpack.c.bf16 %v710, %v709
  %v716 = vpack.c.bf16 %v712, %v711
  %v717 = vld [vmem:[%s4] sm:$0xff]
  %v718 = vld [vmem:[%s4 + $0x8] sm:$0xff]
  %v719 = vld [vmem:[%s5] sm:$0xff]
  %v720 = vld [vmem:[%s5 + $0x8] sm:$0xff]
  %v721 = vld [vmem:[%s6] sm:$0xff]
  %v722 = vld [vmem:[%s6 + $0x8] sm:$0xff]
  %727 = vrot.lane.b32.xlu0 %v713, 92
  %v728 = vpop.permute.xlu0 %727
  %729 = vrot.lane.b32.xlu0 %v714, 92
  %v730 = vpop.permute.xlu0 %729
  %731 = vrot.lane.b32.xlu0 %v715, 92
  %v732 = vpop.permute.xlu0 %731
  %733 = vrot.lane.b32.xlu0 %v716, 92
  %v734 = vpop.permute.xlu0 %733
  %735 = vrot.lane.b32.xlu0 %v713, 4
  %v736 = vpop.permute.xlu0 %735
  %737 = vrot.lane.b32.xlu0 %v714, 4
  %v738 = vpop.permute.xlu0 %737
  %739 = vrot.lane.b32.xlu0 %v715, 4
  %v740 = vpop.permute.xlu0 %739
  %741 = vrot.lane.b32.xlu0 %v716, 4
  %v742 = vpop.permute.xlu0 %741
  %v745 = vsel %vm86, %v728, %v736
  %v749 = vsel %vm86, %v730, %v738
  %v753 = vsel %vm86, %v732, %v740
  %v757 = vsel %vm86, %v734, %v742
  %759 = vrot.lane.b32.xlu0 %v713, 91
  %v760 = vpop.permute.xlu0 %759
  %761 = vrot.lane.b32.xlu0 %v714, 91
  %v762 = vpop.permute.xlu0 %761
  %763 = vrot.lane.b32.xlu0 %v715, 91
  %v764 = vpop.permute.xlu0 %763
  %765 = vrot.lane.b32.xlu0 %v716, 91
  %v766 = vpop.permute.xlu0 %765
  %767 = vrot.lane.b32.xlu0 %v713, 3
  %v768 = vpop.permute.xlu0 %767
  %769 = vrot.lane.b32.xlu0 %v714, 3
  %v770 = vpop.permute.xlu0 %769
  %771 = vrot.lane.b32.xlu0 %v715, 3
  %v772 = vpop.permute.xlu0 %771
  %773 = vrot.lane.b32.xlu0 %v716, 3
  %v774 = vpop.permute.xlu0 %773
  %v777 = vsel %vm115, %v760, %v768
  %v781 = vsel %vm115, %v762, %v770
  %v785 = vsel %vm115, %v764, %v772
  %v789 = vsel %vm115, %v766, %v774
  %791 = vrot.lane.b32.xlu0 %v713, 90
  %v792 = vpop.permute.xlu0 %791
  %793 = vrot.lane.b32.xlu0 %v714, 90
  %v794 = vpop.permute.xlu0 %793
  %795 = vrot.lane.b32.xlu0 %v715, 90
  %v796 = vpop.permute.xlu0 %795
  %797 = vrot.lane.b32.xlu0 %v716, 90
  %v798 = vpop.permute.xlu0 %797
  %799 = vrot.lane.b32.xlu0 %v713, 2
  %v800 = vpop.permute.xlu0 %799
  %801 = vrot.lane.b32.xlu0 %v714, 2
  %v802 = vpop.permute.xlu0 %801
  %803 = vrot.lane.b32.xlu0 %v715, 2
  %v804 = vpop.permute.xlu0 %803
  %805 = vrot.lane.b32.xlu0 %v716, 2
  %v806 = vpop.permute.xlu0 %805
  %v809 = vsel %vm144, %v792, %v800
  %v813 = vsel %vm144, %v794, %v802
  %v817 = vsel %vm144, %v796, %v804
  %v821 = vsel %vm144, %v798, %v806
  %823 = vrot.lane.b32.xlu0 %v713, 89
  %v824 = vpop.permute.xlu0 %823
  %825 = vrot.lane.b32.xlu0 %v714, 89
  %v826 = vpop.permute.xlu0 %825
  %827 = vrot.lane.b32.xlu0 %v715, 89
  %v828 = vpop.permute.xlu0 %827
  %829 = vrot.lane.b32.xlu0 %v716, 89
  %v830 = vpop.permute.xlu0 %829
  %831 = vrot.lane.b32.xlu0 %v713, 1
  %v832 = vpop.permute.xlu0 %831
  %833 = vrot.lane.b32.xlu0 %v714, 1
  %v834 = vpop.permute.xlu0 %833
  %835 = vrot.lane.b32.xlu0 %v715, 1
  %v836 = vpop.permute.xlu0 %835
  %837 = vrot.lane.b32.xlu0 %v716, 1
  %v838 = vpop.permute.xlu0 %837
  %v841 = vsel %vm173, %v824, %v832
  %v845 = vsel %vm173, %v826, %v834
  %v849 = vsel %vm173, %v828, %v836
  %v853 = vsel %vm173, %v830, %v838
  %855 = vrot.lane.b32.xlu0 %v713, 127
  %v856 = vpop.permute.xlu0 %855
  %857 = vrot.lane.b32.xlu0 %v714, 127
  %v858 = vpop.permute.xlu0 %857
  %859 = vrot.lane.b32.xlu0 %v715, 127
  %v860 = vpop.permute.xlu0 %859
  %861 = vrot.lane.b32.xlu0 %v716, 127
  %v862 = vpop.permute.xlu0 %861
  %863 = vrot.lane.b32.xlu0 %v713, 39
  %v864 = vpop.permute.xlu0 %863
  %865 = vrot.lane.b32.xlu0 %v714, 39
  %v866 = vpop.permute.xlu0 %865
  %867 = vrot.lane.b32.xlu0 %v715, 39
  %v868 = vpop.permute.xlu0 %867
  %869 = vrot.lane.b32.xlu0 %v716, 39
  %v870 = vpop.permute.xlu0 %869
  %v873 = vsel %vm202, %v856, %v864
  %v877 = vsel %vm202, %v858, %v866
  %v881 = vsel %vm202, %v860, %v868
  %v885 = vsel %vm202, %v862, %v870
  %887 = vrot.lane.b32.xlu0 %v713, 126
  %v888 = vpop.permute.xlu0 %887
  %889 = vrot.lane.b32.xlu0 %v714, 126
  %v890 = vpop.permute.xlu0 %889
  %891 = vrot.lane.b32.xlu0 %v715, 126
  %v892 = vpop.permute.xlu0 %891
  %893 = vrot.lane.b32.xlu0 %v716, 126
  %v894 = vpop.permute.xlu0 %893
  %895 = vrot.lane.b32.xlu0 %v713, 38
  %v896 = vpop.permute.xlu0 %895
  %897 = vrot.lane.b32.xlu0 %v714, 38
  %v898 = vpop.permute.xlu0 %897
  %899 = vrot.lane.b32.xlu0 %v715, 38
  %v900 = vpop.permute.xlu0 %899
  %901 = vrot.lane.b32.xlu0 %v716, 38
  %v902 = vpop.permute.xlu0 %901
  %v905 = vsel %vm231, %v888, %v896
  %v909 = vsel %vm231, %v890, %v898
  %v913 = vsel %vm231, %v892, %v900
  %v917 = vsel %vm231, %v894, %v902
  %919 = vrot.lane.b32.xlu0 %v713, 125
  %v920 = vpop.permute.xlu0 %919
  %921 = vrot.lane.b32.xlu0 %v714, 125
  %v922 = vpop.permute.xlu0 %921
  %923 = vrot.lane.b32.xlu0 %v715, 125
  %v924 = vpop.permute.xlu0 %923
  %925 = vrot.lane.b32.xlu0 %v716, 125
  %v926 = vpop.permute.xlu0 %925
  %927 = vrot.lane.b32.xlu0 %v713, 37
  %v928 = vpop.permute.xlu0 %927
  %929 = vrot.lane.b32.xlu0 %v714, 37
  %v930 = vpop.permute.xlu0 %929
  %931 = vrot.lane.b32.xlu0 %v715, 37
  %v932 = vpop.permute.xlu0 %931
  %933 = vrot.lane.b32.xlu0 %v716, 37
  %v934 = vpop.permute.xlu0 %933
  %v937 = vsel %vm260, %v920, %v928
  %v941 = vsel %vm260, %v922, %v930
  %v945 = vsel %vm260, %v924, %v932
  %v949 = vsel %vm260, %v926, %v934
  %951 = vrot.lane.b32.xlu0 %v713, 124
  %v952 = vpop.permute.xlu0 %951
  %953 = vrot.lane.b32.xlu0 %v714, 124
  %v954 = vpop.permute.xlu0 %953
  %955 = vrot.lane.b32.xlu0 %v715, 124
  %v956 = vpop.permute.xlu0 %955
  %957 = vrot.lane.b32.xlu0 %v716, 124
  %v958 = vpop.permute.xlu0 %957
  %959 = vrot.lane.b32.xlu0 %v713, 36
  %v960 = vpop.permute.xlu0 %959
  %961 = vrot.lane.b32.xlu0 %v714, 36
  %v962 = vpop.permute.xlu0 %961
  %963 = vrot.lane.b32.xlu0 %v715, 36
  %v964 = vpop.permute.xlu0 %963
  %965 = vrot.lane.b32.xlu0 %v716, 36
  %v966 = vpop.permute.xlu0 %965
  %v969 = vsel %vm289, %v952, %v960
  %v973 = vsel %vm289, %v954, %v962
  %v977 = vsel %vm289, %v956, %v964
  %v981 = vsel %vm289, %v958, %v966
  %v985 = vunpack.c.l.b16 %v717
  %v986 = vunpack.c.h.b16 %v717
  %v987 = vunpack.c.l.b16 %v718
  %v988 = vunpack.c.h.b16 %v718
  %v989 = vpack.c.b16 %v987, %v985
  %v990 = vpack.c.b16 %v988, %v986
  %vm992 = vcmask 130048
  %v994 = vsel %vm992, %v990, 0
  %996 = vmatprep.subr.bf16.mxu0 0
  %997 = vmatpush1.bf16.msra.mxu0 %v937
  %998 = vmatprep.subr.bf16.mxu0 0
  %999 = vmatpush1.bf16.msra.mxu0 %v905
  %1000 = vmatprep.subr.bf16.mxu0 0
  %1001 = vmatpush1.bf16.msra.mxu0 %v873
  %1002 = vmatprep.subr.bf16.mxu0 0
  %1003 = vmatpush1.bf16.msra.mxu0 %v713
  %1004 = vmatprep.subr.bf16.mxu0 0
  %1005 = vmatpush1.bf16.msra.mxu0 %v841
  %1006 = vmatprep.subr.bf16.mxu0 0
  %1007 = vmatpush1.bf16.msra.mxu0 %v809
  %1008 = vmatprep.subr.bf16.mxu0 0
  %1009 = vmatpush1.bf16.msra.mxu0 %v777
  %1010 = vmatprep.subr.bf16.mxu0 0
  %1011 = vmatpush1.bf16.msra.mxu0 %v745
  %1012 = vmatprep.subr.bf16.mxu0 0
  %1013 = vmatpush2.bf16.msra.mxu0 0
  %1014 = vmatprep.subr.bf16.mxu0 0
  %1015 = vmatpush2.bf16.msra.mxu0 0
  %1016 = vmatprep.subr.bf16.mxu0 0
  %1017 = vmatpush2.bf16.msra.mxu0 0
  %1018 = vmatprep.subr.bf16.mxu0 0
  %1019 = vmatpush2.bf16.msra.mxu0 0
  %1020 = vmatprep.subr.bf16.mxu0 0
  %1021 = vmatpush2.bf16.msra.mxu0 0
  %1022 = vmatprep.subr.bf16.mxu0 0
  %1023 = vmatpush2.bf16.msra.mxu0 0
  %1024 = vmatprep.subr.bf16.mxu0 0
  %1025 = vmatpush2.bf16.msra.mxu0 0
  %1026 = vmatprep.subr.bf16.mxu0 0
  %1027 = vmatpush2.bf16.msra.mxu0 %v969
  %1028 = vmatprep.mubr.bf16.mxu0 %v994
  %1029 = vmatmul.mubr.bf16.gmra.mxu0 %v989
  %v1030 = vpop.f32.mrf.mxu0
  %v1031 = vadd.f32 0.0, %v1030
  %v1032 = vpop.f32.mrf.mxu0
  %v1033 = vpop.f32.mrf.mxu0
  %v1034 = vadd.f32 0.0, %v1033
  %v1035 = vpop.f32.mrf.mxu0
  %1036 = vdwg.mxu0
  %1037 = vmatprep.subr.bf16.mxu0 0
  %1038 = vmatpush1.bf16.msra.mxu0 %v941
  %1039 = vmatprep.subr.bf16.mxu0 0
  %1040 = vmatpush1.bf16.msra.mxu0 %v909
  %1041 = vmatprep.subr.bf16.mxu0 0
  %1042 = vmatpush1.bf16.msra.mxu0 %v877
  %1043 = vmatprep.subr.bf16.mxu0 0
  %1044 = vmatpush1.bf16.msra.mxu0 %v714
  %1045 = vmatprep.subr.bf16.mxu0 0
  %1046 = vmatpush1.bf16.msra.mxu0 %v845
  %1047 = vmatprep.subr.bf16.mxu0 0
  %1048 = vmatpush1.bf16.msra.mxu0 %v813
  %1049 = vmatprep.subr.bf16.mxu0 0
  %1050 = vmatpush1.bf16.msra.mxu0 %v781
  %1051 = vmatprep.subr.bf16.mxu0 0
  %1052 = vmatpush1.bf16.msra.mxu0 %v749
  %1053 = vmatprep.subr.bf16.mxu0 0
  %1054 = vmatpush2.bf16.msra.mxu0 0
  %1055 = vmatprep.subr.bf16.mxu0 0
  %1056 = vmatpush2.bf16.msra.mxu0 0
  %1057 = vmatprep.subr.bf16.mxu0 0
  %1058 = vmatpush2.bf16.msra.mxu0 0
  %1059 = vmatprep.subr.bf16.mxu0 0
  %1060 = vmatpush2.bf16.msra.mxu0 0
  %1061 = vmatprep.subr.bf16.mxu0 0
  %1062 = vmatpush2.bf16.msra.mxu0 0
  %1063 = vmatprep.subr.bf16.mxu0 0
  %1064 = vmatpush2.bf16.msra.mxu0 0
  %1065 = vmatprep.subr.bf16.mxu0 0
  %1066 = vmatpush2.bf16.msra.mxu0 0
  %1067 = vmatprep.subr.bf16.mxu0 0
  %1068 = vmatpush2.bf16.msra.mxu0 %v973
  %1069 = vmatprep.mubr.bf16.mxu0 %v994
  %1070 = vmatmul.mubr.bf16.gmra.mxu0 %v989
  %v1071 = vpop.f32.mrf.mxu0
  %v1072 = vadd.f32 0.0, %v1071
  %v1073 = vpop.f32.mrf.mxu0
  %v1074 = vpop.f32.mrf.mxu0
  %v1075 = vadd.f32 0.0, %v1074
  %v1076 = vpop.f32.mrf.mxu0
  %1077 = vdwg.mxu0
  %1078 = vmatprep.subr.bf16.mxu0 0
  %1079 = vmatpush1.bf16.msra.mxu0 %v945
  %1080 = vmatprep.subr.bf16.mxu0 0
  %1081 = vmatpush1.bf16.msra.mxu0 %v913
  %1082 = vmatprep.subr.bf16.mxu0 0
  %1083 = vmatpush1.bf16.msra.mxu0 %v881
  %1084 = vmatprep.subr.bf16.mxu0 0
  %1085 = vmatpush1.bf16.msra.mxu0 %v715
  %1086 = vmatprep.subr.bf16.mxu0 0
  %1087 = vmatpush1.bf16.msra.mxu0 %v849
  %1088 = vmatprep.subr.bf16.mxu0 0
  %1089 = vmatpush1.bf16.msra.mxu0 %v817
  %1090 = vmatprep.subr.bf16.mxu0 0
  %1091 = vmatpush1.bf16.msra.mxu0 %v785
  %1092 = vmatprep.subr.bf16.mxu0 0
  %1093 = vmatpush1.bf16.msra.mxu0 %v753
  %1094 = vmatprep.subr.bf16.mxu0 0
  %1095 = vmatpush2.bf16.msra.mxu0 0
  %1096 = vmatprep.subr.bf16.mxu0 0
  %1097 = vmatpush2.bf16.msra.mxu0 0
  %1098 = vmatprep.subr.bf16.mxu0 0
  %1099 = vmatpush2.bf16.msra.mxu0 0
  %1100 = vmatprep.subr.bf16.mxu0 0
  %1101 = vmatpush2.bf16.msra.mxu0 0
  %1102 = vmatprep.subr.bf16.mxu0 0
  %1103 = vmatpush2.bf16.msra.mxu0 0
  %1104 = vmatprep.subr.bf16.mxu0 0
  %1105 = vmatpush2.bf16.msra.mxu0 0
  %1106 = vmatprep.subr.bf16.mxu0 0
  %1107 = vmatpush2.bf16.msra.mxu0 0
  %1108 = vmatprep.subr.bf16.mxu0 0
  %1109 = vmatpush2.bf16.msra.mxu0 %v977
  %1110 = vmatprep.mubr.bf16.mxu0 %v994
  %1111 = vmatmul.mubr.bf16.gmra.mxu0 %v989
  %v1112 = vpop.f32.mrf.mxu0
  %v1113 = vadd.f32 0.0, %v1112
  %v1114 = vpop.f32.mrf.mxu0
  %v1115 = vpop.f32.mrf.mxu0
  %v1116 = vadd.f32 0.0, %v1115
  %v1117 = vpop.f32.mrf.mxu0
  %1118 = vdwg.mxu0
  %1119 = vmatprep.subr.bf16.mxu0 0
  %1120 = vmatpush1.bf16.msra.mxu0 %v949
  %1121 = vmatprep.subr.bf16.mxu0 0
  %1122 = vmatpush1.bf16.msra.mxu0 %v917
  %1123 = vmatprep.subr.bf16.mxu0 0
  %1124 = vmatpush1.bf16.msra.mxu0 %v885
  %1125 = vmatprep.subr.bf16.mxu0 0
  %1126 = vmatpush1.bf16.msra.mxu0 %v716
  %1127 = vmatprep.subr.bf16.mxu0 0
  %1128 = vmatpush1.bf16.msra.mxu0 %v853
  %1129 = vmatprep.subr.bf16.mxu0 0
  %1130 = vmatpush1.bf16.msra.mxu0 %v821
  %1131 = vmatprep.subr.bf16.mxu0 0
  %1132 = vmatpush1.bf16.msra.mxu0 %v789
  %1133 = vmatprep.subr.bf16.mxu0 0
  %1134 = vmatpush1.bf16.msra.mxu0 %v757
  %1135 = vmatprep.subr.bf16.mxu0 0
  %1136 = vmatpush2.bf16.msra.mxu0 0
  %1137 = vmatprep.subr.bf16.mxu0 0
  %1138 = vmatpush2.bf16.msra.mxu0 0
  %1139 = vmatprep.subr.bf16.mxu0 0
  %1140 = vmatpush2.bf16.msra.mxu0 0
  %1141 = vmatprep.subr.bf16.mxu0 0
  %1142 = vmatpush2.bf16.msra.mxu0 0
  %1143 = vmatprep.subr.bf16.mxu0 0
  %1144 = vmatpush2.bf16.msra.mxu0 0
  %1145 = vmatprep.subr.bf16.mxu0 0
  %1146 = vmatpush2.bf16.msra.mxu0 0
  %1147 = vmatprep.subr.bf16.mxu0 0
  %1148 = vmatpush2.bf16.msra.mxu0 0
  %1149 = vmatprep.subr.bf16.mxu0 0
  %1150 = vmatpush2.bf16.msra.mxu0 %v981
  %1151 = vmatprep.mubr.bf16.mxu0 %v994
  %1152 = vmatmul.mubr.bf16.gmra.mxu0 %v989
  %v1153 = vpop.f32.mrf.mxu0
  %v1154 = vadd.f32 0.0, %v1153
  %v1155 = vpop.f32.mrf.mxu0
  %v1156 = vpop.f32.mrf.mxu0
  %v1157 = vadd.f32 0.0, %v1156
  %v1158 = vpop.f32.mrf.mxu0
  %1159 = vdwg.mxu0
  %v1160 = vsel %vm568, %v1031, 0.0
  %1161 = vadd.xlane.f32.xlu0 %v1160
  %v1162 = vpop.xlane.xlu0 %1161
  %v1163 = vsel %vm568, %v1034, 0.0
  %1164 = vadd.xlane.f32.xlu0 %v1163
  %v1165 = vpop.xlane.xlu0 %1164
  %v1166 = vsel %vm568, %v1072, 0.0
  %1167 = vadd.xlane.f32.xlu0 %v1166
  %v1168 = vpop.xlane.xlu0 %1167
  %v1169 = vsel %vm568, %v1075, 0.0
  %1170 = vadd.xlane.f32.xlu0 %v1169
  %v1171 = vpop.xlane.xlu0 %1170
  %v1172 = vsel %vm568, %v1113, 0.0
  %1173 = vadd.xlane.f32.xlu0 %v1172
  %v1174 = vpop.xlane.xlu0 %1173
  %v1175 = vsel %vm568, %v1116, 0.0
  %1176 = vadd.xlane.f32.xlu0 %v1175
  %v1177 = vpop.xlane.xlu0 %1176
  %v1178 = vsel %vm568, %v1154, 0.0
  %1179 = vadd.xlane.f32.xlu0 %v1178
  %v1180 = vpop.xlane.xlu0 %1179
  %v1181 = vsel %vm568, %v1157, 0.0
  %1182 = vadd.xlane.f32.xlu0 %v1181
  %v1183 = vpop.xlane.xlu0 %1182
  %v1184 = vadd.f32 %v1162, %v1168
  %v1185 = vadd.f32 %v1184, %v1174
  %v1186 = vadd.f32 %v1185, %v1180
  %v1187 = vadd.f32 %v1165, %v1171
  %v1188 = vadd.f32 %v1187, %v1177
  %v1189 = vadd.f32 %v1188, %v1183
  %v1190 = vmul.f32 %v1186, 0.00625
  %v1191 = vmul.f32 %v1189, 0.00625
  %v1192 = vsub.f32 %v1031, %v1190
  %v1193 = vsub.f32 %v1034, %v1191
  %v1194 = vsub.f32 %v1072, %v1190
  %v1195 = vsub.f32 %v1075, %v1191
  %v1196 = vsub.f32 %v1113, %v1190
  %v1197 = vsub.f32 %v1116, %v1191
  %v1198 = vsub.f32 %v1154, %v1190
  %v1199 = vsub.f32 %v1157, %v1191
  %v1200 = vmul.f32 %v1192, %v1192
  %v1201 = vmul.f32 %v1193, %v1193
  %v1202 = vmul.f32 %v1194, %v1194
  %v1203 = vmul.f32 %v1195, %v1195
  %v1204 = vmul.f32 %v1196, %v1196
  %v1205 = vmul.f32 %v1197, %v1197
  %v1206 = vmul.f32 %v1198, %v1198
  %v1207 = vmul.f32 %v1199, %v1199
  %v1208 = vsel %vm568, %v1200, 0.0
  %1209 = vadd.xlane.f32.xlu0 %v1208
  %v1210 = vpop.xlane.xlu0 %1209
  %v1211 = vsel %vm568, %v1201, 0.0
  %1212 = vadd.xlane.f32.xlu0 %v1211
  %v1213 = vpop.xlane.xlu0 %1212
  %v1214 = vsel %vm568, %v1202, 0.0
  %1215 = vadd.xlane.f32.xlu0 %v1214
  %v1216 = vpop.xlane.xlu0 %1215
  %v1217 = vsel %vm568, %v1203, 0.0
  %1218 = vadd.xlane.f32.xlu0 %v1217
  %v1219 = vpop.xlane.xlu0 %1218
  %v1220 = vsel %vm568, %v1204, 0.0
  %1221 = vadd.xlane.f32.xlu0 %v1220
  %v1222 = vpop.xlane.xlu0 %1221
  %v1223 = vsel %vm568, %v1205, 0.0
  %1224 = vadd.xlane.f32.xlu0 %v1223
  %v1225 = vpop.xlane.xlu0 %1224
  %v1226 = vsel %vm568, %v1206, 0.0
  %1227 = vadd.xlane.f32.xlu0 %v1226
  %v1228 = vpop.xlane.xlu0 %1227
  %v1229 = vsel %vm568, %v1207, 0.0
  %1230 = vadd.xlane.f32.xlu0 %v1229
  %v1231 = vpop.xlane.xlu0 %1230
  %v1232 = vadd.f32 %v1210, %v1216
  %v1233 = vadd.f32 %v1232, %v1222
  %v1234 = vadd.f32 %v1233, %v1228
  %v1235 = vadd.f32 %v1213, %v1219
  %v1236 = vadd.f32 %v1235, %v1225
  %v1237 = vadd.f32 %v1236, %v1231
  %v1238 = vmul.f32 %v1234, 0.00625
  %v1239 = vmul.f32 %v1237, 0.00625
  %v1240 = vadd.f32 %v1238, 1e-05
  %v1241 = vadd.f32 %v1239, 1e-05
  %v1242 = vrsqrt.pop %v1240
  %v1243 = vrsqrt.pop %v1241
  %v1244 = vmul.f32 %v1192, %v1242
  %v1245 = vmul.f32 %v1193, %v1243
  %v1246 = vmul.f32 %v1194, %v1242
  %v1247 = vmul.f32 %v1195, %v1243
  %v1248 = vmul.f32 %v1196, %v1242
  %v1249 = vmul.f32 %v1197, %v1243
  %v1250 = vmul.f32 %v1198, %v1242
  %v1251 = vmul.f32 %v1199, %v1243
  %1253 = vset.pattern.permute.xlu0 0
  %1254 = vperm.xlu0 %1253, %v719
  %v1255 = vpop.permute.xlu0 %1254
  %1258 = vset.pattern.permute.xlu0 0
  %1259 = vperm.xlu0 %1258, %v720
  %v1260 = vpop.permute.xlu0 %1259
  %v1262 = vmul.f32 %v1244, %v1255
  %v1263 = vmul.f32 %v1245, %v1260
  %v1264 = vmul.f32 %v1246, %v1255
  %v1265 = vmul.f32 %v1247, %v1260
  %v1266 = vmul.f32 %v1248, %v1255
  %v1267 = vmul.f32 %v1249, %v1260
  %v1268 = vmul.f32 %v1250, %v1255
  %v1269 = vmul.f32 %v1251, %v1260
  %1271 = vset.pattern.permute.xlu0 0
  %1272 = vperm.xlu0 %1271, %v721
  %v1273 = vpop.permute.xlu0 %1272
  %1276 = vset.pattern.permute.xlu0 0
  %1277 = vperm.xlu0 %1276, %v722
  %v1278 = vpop.permute.xlu0 %1277
  %v1280 = vadd.f32 %v1262, %v1273
  %v1281 = vadd.f32 %v1263, %v1278
  %v1282 = vadd.f32 %v1264, %v1273
  %v1283 = vadd.f32 %v1265, %v1278
  %v1284 = vadd.f32 %v1266, %v1273
  %v1285 = vadd.f32 %v1267, %v1278
  %v1286 = vadd.f32 %v1268, %v1273
  %v1287 = vadd.f32 %v1269, %v1278
  %v1288 = vmul.f32 %v1280, 0.01
  %v1289 = vmul.f32 %v1281, 0.01
  %v1290 = vmul.f32 %v1282, 0.01
  %v1291 = vmul.f32 %v1283, 0.01
  %v1292 = vmul.f32 %v1284, 0.01
  %v1293 = vmul.f32 %v1285, 0.01
  %v1294 = vmul.f32 %v1286, 0.01
  %v1295 = vmul.f32 %v1287, 0.01
  %v1296 = vmax.f32 %v1280, %v1288
  %v1297 = vmax.f32 %v1281, %v1289
  %v1298 = vmax.f32 %v1282, %v1290
  %v1299 = vmax.f32 %v1283, %v1291
  %v1300 = vmax.f32 %v1284, %v1292
  %v1301 = vmax.f32 %v1285, %v1293
  %v1302 = vmax.f32 %v1286, %v1294
  %v1303 = vmax.f32 %v1287, %v1295
  %v1304 = vadd.f32 %v1296, %v705
  %v1305 = vadd.f32 %v1297, %v706
  %v1306 = vadd.f32 %v1298, %v707
  %v1307 = vadd.f32 %v1299, %v708
  %v1308 = vadd.f32 %v1300, %v709
  %v1309 = vadd.f32 %v1301, %v710
  %v1310 = vadd.f32 %v1302, %v711
  %v1311 = vadd.f32 %v1303, %v712
  %v1312 = vpack.c.bf16 %v1305, %v1304
  %v1313 = vpack.c.bf16 %v1307, %v1306
  %v1314 = vpack.c.bf16 %v1309, %v1308
  %v1315 = vpack.c.bf16 %v1311, %v1310
  %s1316 = scalar_lea.vmem %s4, 16
  %v1317 = vld [vmem:[%s1316] sm:$0xff]
  %v1318 = vld [vmem:[%s1316 + $0x8] sm:$0xff]
  %s1319 = scalar_lea.vmem %s5, 16
  %v1320 = vld [vmem:[%s1319] sm:$0xff]
  %v1321 = vld [vmem:[%s1319 + $0x8] sm:$0xff]
  %s1322 = scalar_lea.vmem %s6, 16
  %v1323 = vld [vmem:[%s1322] sm:$0xff]
  %v1324 = vld [vmem:[%s1322 + $0x8] sm:$0xff]
  %1329 = vrot.lane.b32.xlu0 %v1312, 92
  %v1330 = vpop.permute.xlu0 %1329
  %1331 = vrot.lane.b32.xlu0 %v1313, 92
  %v1332 = vpop.permute.xlu0 %1331
  %1333 = vrot.lane.b32.xlu0 %v1314, 92
  %v1334 = vpop.permute.xlu0 %1333
  %1335 = vrot.lane.b32.xlu0 %v1315, 92
  %v1336 = vpop.permute.xlu0 %1335
  %1337 = vrot.lane.b32.xlu0 %v1312, 4
  %v1338 = vpop.permute.xlu0 %1337
  %1339 = vrot.lane.b32.xlu0 %v1313, 4
  %v1340 = vpop.permute.xlu0 %1339
  %1341 = vrot.lane.b32.xlu0 %v1314, 4
  %v1342 = vpop.permute.xlu0 %1341
  %1343 = vrot.lane.b32.xlu0 %v1315, 4
  %v1344 = vpop.permute.xlu0 %1343
  %v1347 = vsel %vm86, %v1330, %v1338
  %v1351 = vsel %vm86, %v1332, %v1340
  %v1355 = vsel %vm86, %v1334, %v1342
  %v1359 = vsel %vm86, %v1336, %v1344
  %1361 = vrot.lane.b32.xlu0 %v1312, 91
  %v1362 = vpop.permute.xlu0 %1361
  %1363 = vrot.lane.b32.xlu0 %v1313, 91
  %v1364 = vpop.permute.xlu0 %1363
  %1365 = vrot.lane.b32.xlu0 %v1314, 91
  %v1366 = vpop.permute.xlu0 %1365
  %1367 = vrot.lane.b32.xlu0 %v1315, 91
  %v1368 = vpop.permute.xlu0 %1367
  %1369 = vrot.lane.b32.xlu0 %v1312, 3
  %v1370 = vpop.permute.xlu0 %1369
  %1371 = vrot.lane.b32.xlu0 %v1313, 3
  %v1372 = vpop.permute.xlu0 %1371
  %1373 = vrot.lane.b32.xlu0 %v1314, 3
  %v1374 = vpop.permute.xlu0 %1373
  %1375 = vrot.lane.b32.xlu0 %v1315, 3
  %v1376 = vpop.permute.xlu0 %1375
  %v1379 = vsel %vm115, %v1362, %v1370
  %v1383 = vsel %vm115, %v1364, %v1372
  %v1387 = vsel %vm115, %v1366, %v1374
  %v1391 = vsel %vm115, %v1368, %v1376
  %1393 = vrot.lane.b32.xlu0 %v1312, 90
  %v1394 = vpop.permute.xlu0 %1393
  %1395 = vrot.lane.b32.xlu0 %v1313, 90
  %v1396 = vpop.permute.xlu0 %1395
  %1397 = vrot.lane.b32.xlu0 %v1314, 90
  %v1398 = vpop.permute.xlu0 %1397
  %1399 = vrot.lane.b32.xlu0 %v1315, 90
  %v1400 = vpop.permute.xlu0 %1399
  %1401 = vrot.lane.b32.xlu0 %v1312, 2
  %v1402 = vpop.permute.xlu0 %1401
  %1403 = vrot.lane.b32.xlu0 %v1313, 2
  %v1404 = vpop.permute.xlu0 %1403
  %1405 = vrot.lane.b32.xlu0 %v1314, 2
  %v1406 = vpop.permute.xlu0 %1405
  %1407 = vrot.lane.b32.xlu0 %v1315, 2
  %v1408 = vpop.permute.xlu0 %1407
  %v1411 = vsel %vm144, %v1394, %v1402
  %v1415 = vsel %vm144, %v1396, %v1404
  %v1419 = vsel %vm144, %v1398, %v1406
  %v1423 = vsel %vm144, %v1400, %v1408
  %1425 = vrot.lane.b32.xlu0 %v1312, 89
  %v1426 = vpop.permute.xlu0 %1425
  %1427 = vrot.lane.b32.xlu0 %v1313, 89
  %v1428 = vpop.permute.xlu0 %1427
  %1429 = vrot.lane.b32.xlu0 %v1314, 89
  %v1430 = vpop.permute.xlu0 %1429
  %1431 = vrot.lane.b32.xlu0 %v1315, 89
  %v1432 = vpop.permute.xlu0 %1431
  %1433 = vrot.lane.b32.xlu0 %v1312, 1
  %v1434 = vpop.permute.xlu0 %1433
  %1435 = vrot.lane.b32.xlu0 %v1313, 1
  %v1436 = vpop.permute.xlu0 %1435
  %1437 = vrot.lane.b32.xlu0 %v1314, 1
  %v1438 = vpop.permute.xlu0 %1437
  %1439 = vrot.lane.b32.xlu0 %v1315, 1
  %v1440 = vpop.permute.xlu0 %1439
  %v1443 = vsel %vm173, %v1426, %v1434
  %v1447 = vsel %vm173, %v1428, %v1436
  %v1451 = vsel %vm173, %v1430, %v1438
  %v1455 = vsel %vm173, %v1432, %v1440
  %1457 = vrot.lane.b32.xlu0 %v1312, 127
  %v1458 = vpop.permute.xlu0 %1457
  %1459 = vrot.lane.b32.xlu0 %v1313, 127
  %v1460 = vpop.permute.xlu0 %1459
  %1461 = vrot.lane.b32.xlu0 %v1314, 127
  %v1462 = vpop.permute.xlu0 %1461
  %1463 = vrot.lane.b32.xlu0 %v1315, 127
  %v1464 = vpop.permute.xlu0 %1463
  %1465 = vrot.lane.b32.xlu0 %v1312, 39
  %v1466 = vpop.permute.xlu0 %1465
  %1467 = vrot.lane.b32.xlu0 %v1313, 39
  %v1468 = vpop.permute.xlu0 %1467
  %1469 = vrot.lane.b32.xlu0 %v1314, 39
  %v1470 = vpop.permute.xlu0 %1469
  %1471 = vrot.lane.b32.xlu0 %v1315, 39
  %v1472 = vpop.permute.xlu0 %1471
  %v1475 = vsel %vm202, %v1458, %v1466
  %v1479 = vsel %vm202, %v1460, %v1468
  %v1483 = vsel %vm202, %v1462, %v1470
  %v1487 = vsel %vm202, %v1464, %v1472
  %1489 = vrot.lane.b32.xlu0 %v1312, 126
  %v1490 = vpop.permute.xlu0 %1489
  %1491 = vrot.lane.b32.xlu0 %v1313, 126
  %v1492 = vpop.permute.xlu0 %1491
  %1493 = vrot.lane.b32.xlu0 %v1314, 126
  %v1494 = vpop.permute.xlu0 %1493
  %1495 = vrot.lane.b32.xlu0 %v1315, 126
  %v1496 = vpop.permute.xlu0 %1495
  %1497 = vrot.lane.b32.xlu0 %v1312, 38
  %v1498 = vpop.permute.xlu0 %1497
  %1499 = vrot.lane.b32.xlu0 %v1313, 38
  %v1500 = vpop.permute.xlu0 %1499
  %1501 = vrot.lane.b32.xlu0 %v1314, 38
  %v1502 = vpop.permute.xlu0 %1501
  %1503 = vrot.lane.b32.xlu0 %v1315, 38
  %v1504 = vpop.permute.xlu0 %1503
  %v1507 = vsel %vm231, %v1490, %v1498
  %v1511 = vsel %vm231, %v1492, %v1500
  %v1515 = vsel %vm231, %v1494, %v1502
  %v1519 = vsel %vm231, %v1496, %v1504
  %1521 = vrot.lane.b32.xlu0 %v1312, 125
  %v1522 = vpop.permute.xlu0 %1521
  %1523 = vrot.lane.b32.xlu0 %v1313, 125
  %v1524 = vpop.permute.xlu0 %1523
  %1525 = vrot.lane.b32.xlu0 %v1314, 125
  %v1526 = vpop.permute.xlu0 %1525
  %1527 = vrot.lane.b32.xlu0 %v1315, 125
  %v1528 = vpop.permute.xlu0 %1527
  %1529 = vrot.lane.b32.xlu0 %v1312, 37
  %v1530 = vpop.permute.xlu0 %1529
  %1531 = vrot.lane.b32.xlu0 %v1313, 37
  %v1532 = vpop.permute.xlu0 %1531
  %1533 = vrot.lane.b32.xlu0 %v1314, 37
  %v1534 = vpop.permute.xlu0 %1533
  %1535 = vrot.lane.b32.xlu0 %v1315, 37
  %v1536 = vpop.permute.xlu0 %1535
  %v1539 = vsel %vm260, %v1522, %v1530
  %v1543 = vsel %vm260, %v1524, %v1532
  %v1547 = vsel %vm260, %v1526, %v1534
  %v1551 = vsel %vm260, %v1528, %v1536
  %1553 = vrot.lane.b32.xlu0 %v1312, 124
  %v1554 = vpop.permute.xlu0 %1553
  %1555 = vrot.lane.b32.xlu0 %v1313, 124
  %v1556 = vpop.permute.xlu0 %1555
  %1557 = vrot.lane.b32.xlu0 %v1314, 124
  %v1558 = vpop.permute.xlu0 %1557
  %1559 = vrot.lane.b32.xlu0 %v1315, 124
  %v1560 = vpop.permute.xlu0 %1559
  %1561 = vrot.lane.b32.xlu0 %v1312, 36
  %v1562 = vpop.permute.xlu0 %1561
  %1563 = vrot.lane.b32.xlu0 %v1313, 36
  %v1564 = vpop.permute.xlu0 %1563
  %1565 = vrot.lane.b32.xlu0 %v1314, 36
  %v1566 = vpop.permute.xlu0 %1565
  %1567 = vrot.lane.b32.xlu0 %v1315, 36
  %v1568 = vpop.permute.xlu0 %1567
  %v1571 = vsel %vm289, %v1554, %v1562
  %v1575 = vsel %vm289, %v1556, %v1564
  %v1579 = vsel %vm289, %v1558, %v1566
  %v1583 = vsel %vm289, %v1560, %v1568
  %v1587 = vunpack.c.l.b16 %v1317
  %v1588 = vunpack.c.h.b16 %v1317
  %v1589 = vunpack.c.l.b16 %v1318
  %v1590 = vunpack.c.h.b16 %v1318
  %v1591 = vpack.c.b16 %v1589, %v1587
  %v1592 = vpack.c.b16 %v1590, %v1588
  %v1595 = vsel %vm992, %v1592, 0
  %1597 = vmatprep.subr.bf16.mxu0 0
  %1598 = vmatpush1.bf16.msra.mxu0 %v1539
  %1599 = vmatprep.subr.bf16.mxu0 0
  %1600 = vmatpush1.bf16.msra.mxu0 %v1507
  %1601 = vmatprep.subr.bf16.mxu0 0
  %1602 = vmatpush1.bf16.msra.mxu0 %v1475
  %1603 = vmatprep.subr.bf16.mxu0 0
  %1604 = vmatpush1.bf16.msra.mxu0 %v1312
  %1605 = vmatprep.subr.bf16.mxu0 0
  %1606 = vmatpush1.bf16.msra.mxu0 %v1443
  %1607 = vmatprep.subr.bf16.mxu0 0
  %1608 = vmatpush1.bf16.msra.mxu0 %v1411
  %1609 = vmatprep.subr.bf16.mxu0 0
  %1610 = vmatpush1.bf16.msra.mxu0 %v1379
  %1611 = vmatprep.subr.bf16.mxu0 0
  %1612 = vmatpush1.bf16.msra.mxu0 %v1347
  %1613 = vmatprep.subr.bf16.mxu0 0
  %1614 = vmatpush2.bf16.msra.mxu0 0
  %1615 = vmatprep.subr.bf16.mxu0 0
  %1616 = vmatpush2.bf16.msra.mxu0 0
  %1617 = vmatprep.subr.bf16.mxu0 0
  %1618 = vmatpush2.bf16.msra.mxu0 0
  %1619 = vmatprep.subr.bf16.mxu0 0
  %1620 = vmatpush2.bf16.msra.mxu0 0
  %1621 = vmatprep.subr.bf16.mxu0 0
  %1622 = vmatpush2.bf16.msra.mxu0 0
  %1623 = vmatprep.subr.bf16.mxu0 0
  %1624 = vmatpush2.bf16.msra.mxu0 0
  %1625 = vmatprep.subr.bf16.mxu0 0
  %1626 = vmatpush2.bf16.msra.mxu0 0
  %1627 = vmatprep.subr.bf16.mxu0 0
  %1628 = vmatpush2.bf16.msra.mxu0 %v1571
  %1629 = vmatprep.mubr.bf16.mxu0 %v1595
  %1630 = vmatmul.mubr.bf16.gmra.mxu0 %v1591
  %v1631 = vpop.f32.mrf.mxu0
  %v1632 = vadd.f32 0.0, %v1631
  %v1633 = vpop.f32.mrf.mxu0
  %v1634 = vpop.f32.mrf.mxu0
  %v1635 = vadd.f32 0.0, %v1634
  %v1636 = vpop.f32.mrf.mxu0
  %1637 = vdwg.mxu0
  %1638 = vmatprep.subr.bf16.mxu0 0
  %1639 = vmatpush1.bf16.msra.mxu0 %v1543
  %1640 = vmatprep.subr.bf16.mxu0 0
  %1641 = vmatpush1.bf16.msra.mxu0 %v1511
  %1642 = vmatprep.subr.bf16.mxu0 0
  %1643 = vmatpush1.bf16.msra.mxu0 %v1479
  %1644 = vmatprep.subr.bf16.mxu0 0
  %1645 = vmatpush1.bf16.msra.mxu0 %v1313
  %1646 = vmatprep.subr.bf16.mxu0 0
  %1647 = vmatpush1.bf16.msra.mxu0 %v1447
  %1648 = vmatprep.subr.bf16.mxu0 0
  %1649 = vmatpush1.bf16.msra.mxu0 %v1415
  %1650 = vmatprep.subr.bf16.mxu0 0
  %1651 = vmatpush1.bf16.msra.mxu0 %v1383
  %1652 = vmatprep.subr.bf16.mxu0 0
  %1653 = vmatpush1.bf16.msra.mxu0 %v1351
  %1654 = vmatprep.subr.bf16.mxu0 0
  %1655 = vmatpush2.bf16.msra.mxu0 0
  %1656 = vmatprep.subr.bf16.mxu0 0
  %1657 = vmatpush2.bf16.msra.mxu0 0
  %1658 = vmatprep.subr.bf16.mxu0 0
  %1659 = vmatpush2.bf16.msra.mxu0 0
  %1660 = vmatprep.subr.bf16.mxu0 0
  %1661 = vmatpush2.bf16.msra.mxu0 0
  %1662 = vmatprep.subr.bf16.mxu0 0
  %1663 = vmatpush2.bf16.msra.mxu0 0
  %1664 = vmatprep.subr.bf16.mxu0 0
  %1665 = vmatpush2.bf16.msra.mxu0 0
  %1666 = vmatprep.subr.bf16.mxu0 0
  %1667 = vmatpush2.bf16.msra.mxu0 0
  %1668 = vmatprep.subr.bf16.mxu0 0
  %1669 = vmatpush2.bf16.msra.mxu0 %v1575
  %1670 = vmatprep.mubr.bf16.mxu0 %v1595
  %1671 = vmatmul.mubr.bf16.gmra.mxu0 %v1591
  %v1672 = vpop.f32.mrf.mxu0
  %v1673 = vadd.f32 0.0, %v1672
  %v1674 = vpop.f32.mrf.mxu0
  %v1675 = vpop.f32.mrf.mxu0
  %v1676 = vadd.f32 0.0, %v1675
  %v1677 = vpop.f32.mrf.mxu0
  %1678 = vdwg.mxu0
  %1679 = vmatprep.subr.bf16.mxu0 0
  %1680 = vmatpush1.bf16.msra.mxu0 %v1547
  %1681 = vmatprep.subr.bf16.mxu0 0
  %1682 = vmatpush1.bf16.msra.mxu0 %v1515
  %1683 = vmatprep.subr.bf16.mxu0 0
  %1684 = vmatpush1.bf16.msra.mxu0 %v1483
  %1685 = vmatprep.subr.bf16.mxu0 0
  %1686 = vmatpush1.bf16.msra.mxu0 %v1314
  %1687 = vmatprep.subr.bf16.mxu0 0
  %1688 = vmatpush1.bf16.msra.mxu0 %v1451
  %1689 = vmatprep.subr.bf16.mxu0 0
  %1690 = vmatpush1.bf16.msra.mxu0 %v1419
  %1691 = vmatprep.subr.bf16.mxu0 0
  %1692 = vmatpush1.bf16.msra.mxu0 %v1387
  %1693 = vmatprep.subr.bf16.mxu0 0
  %1694 = vmatpush1.bf16.msra.mxu0 %v1355
  %1695 = vmatprep.subr.bf16.mxu0 0
  %1696 = vmatpush2.bf16.msra.mxu0 0
  %1697 = vmatprep.subr.bf16.mxu0 0
  %1698 = vmatpush2.bf16.msra.mxu0 0
  %1699 = vmatprep.subr.bf16.mxu0 0
  %1700 = vmatpush2.bf16.msra.mxu0 0
  %1701 = vmatprep.subr.bf16.mxu0 0
  %1702 = vmatpush2.bf16.msra.mxu0 0
  %1703 = vmatprep.subr.bf16.mxu0 0
  %1704 = vmatpush2.bf16.msra.mxu0 0
  %1705 = vmatprep.subr.bf16.mxu0 0
  %1706 = vmatpush2.bf16.msra.mxu0 0
  %1707 = vmatprep.subr.bf16.mxu0 0
  %1708 = vmatpush2.bf16.msra.mxu0 0
  %1709 = vmatprep.subr.bf16.mxu0 0
  %1710 = vmatpush2.bf16.msra.mxu0 %v1579
  %1711 = vmatprep.mubr.bf16.mxu0 %v1595
  %1712 = vmatmul.mubr.bf16.gmra.mxu0 %v1591
  %v1713 = vpop.f32.mrf.mxu0
  %v1714 = vadd.f32 0.0, %v1713
  %v1715 = vpop.f32.mrf.mxu0
  %v1716 = vpop.f32.mrf.mxu0
  %v1717 = vadd.f32 0.0, %v1716
  %v1718 = vpop.f32.mrf.mxu0
  %1719 = vdwg.mxu0
  %1720 = vmatprep.subr.bf16.mxu0 0
  %1721 = vmatpush1.bf16.msra.mxu0 %v1551
  %1722 = vmatprep.subr.bf16.mxu0 0
  %1723 = vmatpush1.bf16.msra.mxu0 %v1519
  %1724 = vmatprep.subr.bf16.mxu0 0
  %1725 = vmatpush1.bf16.msra.mxu0 %v1487
  %1726 = vmatprep.subr.bf16.mxu0 0
  %1727 = vmatpush1.bf16.msra.mxu0 %v1315
  %1728 = vmatprep.subr.bf16.mxu0 0
  %1729 = vmatpush1.bf16.msra.mxu0 %v1455
  %1730 = vmatprep.subr.bf16.mxu0 0
  %1731 = vmatpush1.bf16.msra.mxu0 %v1423
  %1732 = vmatprep.subr.bf16.mxu0 0
  %1733 = vmatpush1.bf16.msra.mxu0 %v1391
  %1734 = vmatprep.subr.bf16.mxu0 0
  %1735 = vmatpush1.bf16.msra.mxu0 %v1359
  %1736 = vmatprep.subr.bf16.mxu0 0
  %1737 = vmatpush2.bf16.msra.mxu0 0
  %1738 = vmatprep.subr.bf16.mxu0 0
  %1739 = vmatpush2.bf16.msra.mxu0 0
  %1740 = vmatprep.subr.bf16.mxu0 0
  %1741 = vmatpush2.bf16.msra.mxu0 0
  %1742 = vmatprep.subr.bf16.mxu0 0
  %1743 = vmatpush2.bf16.msra.mxu0 0
  %1744 = vmatprep.subr.bf16.mxu0 0
  %1745 = vmatpush2.bf16.msra.mxu0 0
  %1746 = vmatprep.subr.bf16.mxu0 0
  %1747 = vmatpush2.bf16.msra.mxu0 0
  %1748 = vmatprep.subr.bf16.mxu0 0
  %1749 = vmatpush2.bf16.msra.mxu0 0
  %1750 = vmatprep.subr.bf16.mxu0 0
  %1751 = vmatpush2.bf16.msra.mxu0 %v1583
  %1752 = vmatprep.mubr.bf16.mxu0 %v1595
  %1753 = vmatmul.mubr.bf16.gmra.mxu0 %v1591
  %v1754 = vpop.f32.mrf.mxu0
  %v1755 = vadd.f32 0.0, %v1754
  %v1756 = vpop.f32.mrf.mxu0
  %v1757 = vpop.f32.mrf.mxu0
  %v1758 = vadd.f32 0.0, %v1757
  %v1759 = vpop.f32.mrf.mxu0
  %1760 = vdwg.mxu0
  %v1761 = vsel %vm568, %v1632, 0.0
  %1762 = vadd.xlane.f32.xlu0 %v1761
  %v1763 = vpop.xlane.xlu0 %1762
  %v1764 = vsel %vm568, %v1635, 0.0
  %1765 = vadd.xlane.f32.xlu0 %v1764
  %v1766 = vpop.xlane.xlu0 %1765
  %v1767 = vsel %vm568, %v1673, 0.0
  %1768 = vadd.xlane.f32.xlu0 %v1767
  %v1769 = vpop.xlane.xlu0 %1768
  %v1770 = vsel %vm568, %v1676, 0.0
  %1771 = vadd.xlane.f32.xlu0 %v1770
  %v1772 = vpop.xlane.xlu0 %1771
  %v1773 = vsel %vm568, %v1714, 0.0
  %1774 = vadd.xlane.f32.xlu0 %v1773
  %v1775 = vpop.xlane.xlu0 %1774
  %v1776 = vsel %vm568, %v1717, 0.0
  %1777 = vadd.xlane.f32.xlu0 %v1776
  %v1778 = vpop.xlane.xlu0 %1777
  %v1779 = vsel %vm568, %v1755, 0.0
  %1780 = vadd.xlane.f32.xlu0 %v1779
  %v1781 = vpop.xlane.xlu0 %1780
  %v1782 = vsel %vm568, %v1758, 0.0
  %1783 = vadd.xlane.f32.xlu0 %v1782
  %v1784 = vpop.xlane.xlu0 %1783
  %v1785 = vadd.f32 %v1763, %v1769
  %v1786 = vadd.f32 %v1785, %v1775
  %v1787 = vadd.f32 %v1786, %v1781
  %v1788 = vadd.f32 %v1766, %v1772
  %v1789 = vadd.f32 %v1788, %v1778
  %v1790 = vadd.f32 %v1789, %v1784
  %v1791 = vmul.f32 %v1787, 0.00625
  %v1792 = vmul.f32 %v1790, 0.00625
  %v1793 = vsub.f32 %v1632, %v1791
  %v1794 = vsub.f32 %v1635, %v1792
  %v1795 = vsub.f32 %v1673, %v1791
  %v1796 = vsub.f32 %v1676, %v1792
  %v1797 = vsub.f32 %v1714, %v1791
  %v1798 = vsub.f32 %v1717, %v1792
  %v1799 = vsub.f32 %v1755, %v1791
  %v1800 = vsub.f32 %v1758, %v1792
  %v1801 = vmul.f32 %v1793, %v1793
  %v1802 = vmul.f32 %v1794, %v1794
  %v1803 = vmul.f32 %v1795, %v1795
  %v1804 = vmul.f32 %v1796, %v1796
  %v1805 = vmul.f32 %v1797, %v1797
  %v1806 = vmul.f32 %v1798, %v1798
  %v1807 = vmul.f32 %v1799, %v1799
  %v1808 = vmul.f32 %v1800, %v1800
  %v1809 = vsel %vm568, %v1801, 0.0
  %1810 = vadd.xlane.f32.xlu0 %v1809
  %v1811 = vpop.xlane.xlu0 %1810
  %v1812 = vsel %vm568, %v1802, 0.0
  %1813 = vadd.xlane.f32.xlu0 %v1812
  %v1814 = vpop.xlane.xlu0 %1813
  %v1815 = vsel %vm568, %v1803, 0.0
  %1816 = vadd.xlane.f32.xlu0 %v1815
  %v1817 = vpop.xlane.xlu0 %1816
  %v1818 = vsel %vm568, %v1804, 0.0
  %1819 = vadd.xlane.f32.xlu0 %v1818
  %v1820 = vpop.xlane.xlu0 %1819
  %v1821 = vsel %vm568, %v1805, 0.0
  %1822 = vadd.xlane.f32.xlu0 %v1821
  %v1823 = vpop.xlane.xlu0 %1822
  %v1824 = vsel %vm568, %v1806, 0.0
  %1825 = vadd.xlane.f32.xlu0 %v1824
  %v1826 = vpop.xlane.xlu0 %1825
  %v1827 = vsel %vm568, %v1807, 0.0
  %1828 = vadd.xlane.f32.xlu0 %v1827
  %v1829 = vpop.xlane.xlu0 %1828
  %v1830 = vsel %vm568, %v1808, 0.0
  %1831 = vadd.xlane.f32.xlu0 %v1830
  %v1832 = vpop.xlane.xlu0 %1831
  %v1833 = vadd.f32 %v1811, %v1817
  %v1834 = vadd.f32 %v1833, %v1823
  %v1835 = vadd.f32 %v1834, %v1829
  %v1836 = vadd.f32 %v1814, %v1820
  %v1837 = vadd.f32 %v1836, %v1826
  %v1838 = vadd.f32 %v1837, %v1832
  %v1839 = vmul.f32 %v1835, 0.00625
  %v1840 = vmul.f32 %v1838, 0.00625
  %v1841 = vadd.f32 %v1839, 1e-05
  %v1842 = vadd.f32 %v1840, 1e-05
  %v1843 = vrsqrt.pop %v1841
  %v1844 = vrsqrt.pop %v1842
  %v1845 = vmul.f32 %v1793, %v1843
  %v1846 = vmul.f32 %v1794, %v1844
  %v1847 = vmul.f32 %v1795, %v1843
  %v1848 = vmul.f32 %v1796, %v1844
  %v1849 = vmul.f32 %v1797, %v1843
  %v1850 = vmul.f32 %v1798, %v1844
  %v1851 = vmul.f32 %v1799, %v1843
  %v1852 = vmul.f32 %v1800, %v1844
  %1854 = vset.pattern.permute.xlu0 0
  %1855 = vperm.xlu0 %1854, %v1320
  %v1856 = vpop.permute.xlu0 %1855
  %1859 = vset.pattern.permute.xlu0 0
  %1860 = vperm.xlu0 %1859, %v1321
  %v1861 = vpop.permute.xlu0 %1860
  %v1863 = vmul.f32 %v1845, %v1856
  %v1864 = vmul.f32 %v1846, %v1861
  %v1865 = vmul.f32 %v1847, %v1856
  %v1866 = vmul.f32 %v1848, %v1861
  %v1867 = vmul.f32 %v1849, %v1856
  %v1868 = vmul.f32 %v1850, %v1861
  %v1869 = vmul.f32 %v1851, %v1856
  %v1870 = vmul.f32 %v1852, %v1861
  %1872 = vset.pattern.permute.xlu0 0
  %1873 = vperm.xlu0 %1872, %v1323
  %v1874 = vpop.permute.xlu0 %1873
  %1877 = vset.pattern.permute.xlu0 0
  %1878 = vperm.xlu0 %1877, %v1324
  %v1879 = vpop.permute.xlu0 %1878
  %v1881 = vadd.f32 %v1863, %v1874
  %v1882 = vadd.f32 %v1864, %v1879
  %v1883 = vadd.f32 %v1865, %v1874
  %v1884 = vadd.f32 %v1866, %v1879
  %v1885 = vadd.f32 %v1867, %v1874
  %v1886 = vadd.f32 %v1868, %v1879
  %v1887 = vadd.f32 %v1869, %v1874
  %v1888 = vadd.f32 %v1870, %v1879
  %v1889 = vmul.f32 %v1881, 0.01
  %v1890 = vmul.f32 %v1882, 0.01
  %v1891 = vmul.f32 %v1883, 0.01
  %v1892 = vmul.f32 %v1884, 0.01
  %v1893 = vmul.f32 %v1885, 0.01
  %v1894 = vmul.f32 %v1886, 0.01
  %v1895 = vmul.f32 %v1887, 0.01
  %v1896 = vmul.f32 %v1888, 0.01
  %v1897 = vmax.f32 %v1881, %v1889
  %v1898 = vmax.f32 %v1882, %v1890
  %v1899 = vmax.f32 %v1883, %v1891
  %v1900 = vmax.f32 %v1884, %v1892
  %v1901 = vmax.f32 %v1885, %v1893
  %v1902 = vmax.f32 %v1886, %v1894
  %v1903 = vmax.f32 %v1887, %v1895
  %v1904 = vmax.f32 %v1888, %v1896
  %v1905 = vadd.f32 %v1897, %v1304
  %v1906 = vadd.f32 %v1898, %v1305
  %v1907 = vadd.f32 %v1899, %v1306
  %v1908 = vadd.f32 %v1900, %v1307
  %v1909 = vadd.f32 %v1901, %v1308
  %v1910 = vadd.f32 %v1902, %v1309
  %v1911 = vadd.f32 %v1903, %v1310
  %v1912 = vadd.f32 %v1904, %v1311
  %v1913 = vpack.c.bf16 %v1906, %v1905
  %v1914 = vpack.c.bf16 %v1908, %v1907
  %v1915 = vpack.c.bf16 %v1910, %v1909
  %v1916 = vpack.c.bf16 %v1912, %v1911
  %s1917 = scalar_lea.vmem %s4, 32
  %v1918 = vld [vmem:[%s1917] sm:$0xff]
  %v1919 = vld [vmem:[%s1917 + $0x8] sm:$0xff]
  %s1920 = scalar_lea.vmem %s5, 32
  %v1921 = vld [vmem:[%s1920] sm:$0xff]
  %v1922 = vld [vmem:[%s1920 + $0x8] sm:$0xff]
  %s1923 = scalar_lea.vmem %s6, 32
  %v1924 = vld [vmem:[%s1923] sm:$0xff]
  %v1925 = vld [vmem:[%s1923 + $0x8] sm:$0xff]
  %1930 = vrot.lane.b32.xlu0 %v1913, 92
  %v1931 = vpop.permute.xlu0 %1930
  %1932 = vrot.lane.b32.xlu0 %v1914, 92
  %v1933 = vpop.permute.xlu0 %1932
  %1934 = vrot.lane.b32.xlu0 %v1915, 92
  %v1935 = vpop.permute.xlu0 %1934
  %1936 = vrot.lane.b32.xlu0 %v1916, 92
  %v1937 = vpop.permute.xlu0 %1936
  %1938 = vrot.lane.b32.xlu0 %v1913, 4
  %v1939 = vpop.permute.xlu0 %1938
  %1940 = vrot.lane.b32.xlu0 %v1914, 4
  %v1941 = vpop.permute.xlu0 %1940
  %1942 = vrot.lane.b32.xlu0 %v1915, 4
  %v1943 = vpop.permute.xlu0 %1942
  %1944 = vrot.lane.b32.xlu0 %v1916, 4
  %v1945 = vpop.permute.xlu0 %1944
  %v1948 = vsel %vm86, %v1931, %v1939
  %v1952 = vsel %vm86, %v1933, %v1941
  %v1956 = vsel %vm86, %v1935, %v1943
  %v1960 = vsel %vm86, %v1937, %v1945
  %1962 = vrot.lane.b32.xlu0 %v1913, 91
  %v1963 = vpop.permute.xlu0 %1962
  %1964 = vrot.lane.b32.xlu0 %v1914, 91
  %v1965 = vpop.permute.xlu0 %1964
  %1966 = vrot.lane.b32.xlu0 %v1915, 91
  %v1967 = vpop.permute.xlu0 %1966
  %1968 = vrot.lane.b32.xlu0 %v1916, 91
  %v1969 = vpop.permute.xlu0 %1968
  %1970 = vrot.lane.b32.xlu0 %v1913, 3
  %v1971 = vpop.permute.xlu0 %1970
  %1972 = vrot.lane.b32.xlu0 %v1914, 3
  %v1973 = vpop.permute.xlu0 %1972
  %1974 = vrot.lane.b32.xlu0 %v1915, 3
  %v1975 = vpop.permute.xlu0 %1974
  %1976 = vrot.lane.b32.xlu0 %v1916, 3
  %v1977 = vpop.permute.xlu0 %1976
  %v1980 = vsel %vm115, %v1963, %v1971
  %v1984 = vsel %vm115, %v1965, %v1973
  %v1988 = vsel %vm115, %v1967, %v1975
  %v1992 = vsel %vm115, %v1969, %v1977
  %1994 = vrot.lane.b32.xlu0 %v1913, 90
  %v1995 = vpop.permute.xlu0 %1994
  %1996 = vrot.lane.b32.xlu0 %v1914, 90
  %v1997 = vpop.permute.xlu0 %1996
  %1998 = vrot.lane.b32.xlu0 %v1915, 90
  %v1999 = vpop.permute.xlu0 %1998
  %2000 = vrot.lane.b32.xlu0 %v1916, 90
  %v2001 = vpop.permute.xlu0 %2000
  %2002 = vrot.lane.b32.xlu0 %v1913, 2
  %v2003 = vpop.permute.xlu0 %2002
  %2004 = vrot.lane.b32.xlu0 %v1914, 2
  %v2005 = vpop.permute.xlu0 %2004
  %2006 = vrot.lane.b32.xlu0 %v1915, 2
  %v2007 = vpop.permute.xlu0 %2006
  %2008 = vrot.lane.b32.xlu0 %v1916, 2
  %v2009 = vpop.permute.xlu0 %2008
  %v2012 = vsel %vm144, %v1995, %v2003
  %v2016 = vsel %vm144, %v1997, %v2005
  %v2020 = vsel %vm144, %v1999, %v2007
  %v2024 = vsel %vm144, %v2001, %v2009
  %2026 = vrot.lane.b32.xlu0 %v1913, 89
  %v2027 = vpop.permute.xlu0 %2026
  %2028 = vrot.lane.b32.xlu0 %v1914, 89
  %v2029 = vpop.permute.xlu0 %2028
  %2030 = vrot.lane.b32.xlu0 %v1915, 89
  %v2031 = vpop.permute.xlu0 %2030
  %2032 = vrot.lane.b32.xlu0 %v1916, 89
  %v2033 = vpop.permute.xlu0 %2032
  %2034 = vrot.lane.b32.xlu0 %v1913, 1
  %v2035 = vpop.permute.xlu0 %2034
  %2036 = vrot.lane.b32.xlu0 %v1914, 1
  %v2037 = vpop.permute.xlu0 %2036
  %2038 = vrot.lane.b32.xlu0 %v1915, 1
  %v2039 = vpop.permute.xlu0 %2038
  %2040 = vrot.lane.b32.xlu0 %v1916, 1
  %v2041 = vpop.permute.xlu0 %2040
  %v2044 = vsel %vm173, %v2027, %v2035
  %v2048 = vsel %vm173, %v2029, %v2037
  %v2052 = vsel %vm173, %v2031, %v2039
  %v2056 = vsel %vm173, %v2033, %v2041
  %2058 = vrot.lane.b32.xlu0 %v1913, 127
  %v2059 = vpop.permute.xlu0 %2058
  %2060 = vrot.lane.b32.xlu0 %v1914, 127
  %v2061 = vpop.permute.xlu0 %2060
  %2062 = vrot.lane.b32.xlu0 %v1915, 127
  %v2063 = vpop.permute.xlu0 %2062
  %2064 = vrot.lane.b32.xlu0 %v1916, 127
  %v2065 = vpop.permute.xlu0 %2064
  %2066 = vrot.lane.b32.xlu0 %v1913, 39
  %v2067 = vpop.permute.xlu0 %2066
  %2068 = vrot.lane.b32.xlu0 %v1914, 39
  %v2069 = vpop.permute.xlu0 %2068
  %2070 = vrot.lane.b32.xlu0 %v1915, 39
  %v2071 = vpop.permute.xlu0 %2070
  %2072 = vrot.lane.b32.xlu0 %v1916, 39
  %v2073 = vpop.permute.xlu0 %2072
  %v2076 = vsel %vm202, %v2059, %v2067
  %v2080 = vsel %vm202, %v2061, %v2069
  %v2084 = vsel %vm202, %v2063, %v2071
  %v2088 = vsel %vm202, %v2065, %v2073
  %2090 = vrot.lane.b32.xlu0 %v1913, 126
  %v2091 = vpop.permute.xlu0 %2090
  %2092 = vrot.lane.b32.xlu0 %v1914, 126
  %v2093 = vpop.permute.xlu0 %2092
  %2094 = vrot.lane.b32.xlu0 %v1915, 126
  %v2095 = vpop.permute.xlu0 %2094
  %2096 = vrot.lane.b32.xlu0 %v1916, 126
  %v2097 = vpop.permute.xlu0 %2096
  %2098 = vrot.lane.b32.xlu0 %v1913, 38
  %v2099 = vpop.permute.xlu0 %2098
  %2100 = vrot.lane.b32.xlu0 %v1914, 38
  %v2101 = vpop.permute.xlu0 %2100
  %2102 = vrot.lane.b32.xlu0 %v1915, 38
  %v2103 = vpop.permute.xlu0 %2102
  %2104 = vrot.lane.b32.xlu0 %v1916, 38
  %v2105 = vpop.permute.xlu0 %2104
  %v2108 = vsel %vm231, %v2091, %v2099
  %v2112 = vsel %vm231, %v2093, %v2101
  %v2116 = vsel %vm231, %v2095, %v2103
  %v2120 = vsel %vm231, %v2097, %v2105
  %2122 = vrot.lane.b32.xlu0 %v1913, 125
  %v2123 = vpop.permute.xlu0 %2122
  %2124 = vrot.lane.b32.xlu0 %v1914, 125
  %v2125 = vpop.permute.xlu0 %2124
  %2126 = vrot.lane.b32.xlu0 %v1915, 125
  %v2127 = vpop.permute.xlu0 %2126
  %2128 = vrot.lane.b32.xlu0 %v1916, 125
  %v2129 = vpop.permute.xlu0 %2128
  %2130 = vrot.lane.b32.xlu0 %v1913, 37
  %v2131 = vpop.permute.xlu0 %2130
  %2132 = vrot.lane.b32.xlu0 %v1914, 37
  %v2133 = vpop.permute.xlu0 %2132
  %2134 = vrot.lane.b32.xlu0 %v1915, 37
  %v2135 = vpop.permute.xlu0 %2134
  %2136 = vrot.lane.b32.xlu0 %v1916, 37
  %v2137 = vpop.permute.xlu0 %2136
  %v2140 = vsel %vm260, %v2123, %v2131
  %v2144 = vsel %vm260, %v2125, %v2133
  %v2148 = vsel %vm260, %v2127, %v2135
  %v2152 = vsel %vm260, %v2129, %v2137
  %2154 = vrot.lane.b32.xlu0 %v1913, 124
  %v2155 = vpop.permute.xlu0 %2154
  %2156 = vrot.lane.b32.xlu0 %v1914, 124
  %v2157 = vpop.permute.xlu0 %2156
  %2158 = vrot.lane.b32.xlu0 %v1915, 124
  %v2159 = vpop.permute.xlu0 %2158
  %2160 = vrot.lane.b32.xlu0 %v1916, 124
  %v2161 = vpop.permute.xlu0 %2160
  %2162 = vrot.lane.b32.xlu0 %v1913, 36
  %v2163 = vpop.permute.xlu0 %2162
  %2164 = vrot.lane.b32.xlu0 %v1914, 36
  %v2165 = vpop.permute.xlu0 %2164
  %2166 = vrot.lane.b32.xlu0 %v1915, 36
  %v2167 = vpop.permute.xlu0 %2166
  %2168 = vrot.lane.b32.xlu0 %v1916, 36
  %v2169 = vpop.permute.xlu0 %2168
  %v2172 = vsel %vm289, %v2155, %v2163
  %v2176 = vsel %vm289, %v2157, %v2165
  %v2180 = vsel %vm289, %v2159, %v2167
  %v2184 = vsel %vm289, %v2161, %v2169
  %v2188 = vunpack.c.l.b16 %v1918
  %v2189 = vunpack.c.h.b16 %v1918
  %v2190 = vunpack.c.l.b16 %v1919
  %v2191 = vunpack.c.h.b16 %v1919
  %v2192 = vpack.c.b16 %v2190, %v2188
  %v2193 = vpack.c.b16 %v2191, %v2189
  %v2196 = vsel %vm992, %v2193, 0
  %2198 = vmatprep.subr.bf16.mxu0 0
  %2199 = vmatpush1.bf16.msra.mxu0 %v2140
  %2200 = vmatprep.subr.bf16.mxu0 0
  %2201 = vmatpush1.bf16.msra.mxu0 %v2108
  %2202 = vmatprep.subr.bf16.mxu0 0
  %2203 = vmatpush1.bf16.msra.mxu0 %v2076
  %2204 = vmatprep.subr.bf16.mxu0 0
  %2205 = vmatpush1.bf16.msra.mxu0 %v1913
  %2206 = vmatprep.subr.bf16.mxu0 0
  %2207 = vmatpush1.bf16.msra.mxu0 %v2044
  %2208 = vmatprep.subr.bf16.mxu0 0
  %2209 = vmatpush1.bf16.msra.mxu0 %v2012
  %2210 = vmatprep.subr.bf16.mxu0 0
  %2211 = vmatpush1.bf16.msra.mxu0 %v1980
  %2212 = vmatprep.subr.bf16.mxu0 0
  %2213 = vmatpush1.bf16.msra.mxu0 %v1948
  %2214 = vmatprep.subr.bf16.mxu0 0
  %2215 = vmatpush2.bf16.msra.mxu0 0
  %2216 = vmatprep.subr.bf16.mxu0 0
  %2217 = vmatpush2.bf16.msra.mxu0 0
  %2218 = vmatprep.subr.bf16.mxu0 0
  %2219 = vmatpush2.bf16.msra.mxu0 0
  %2220 = vmatprep.subr.bf16.mxu0 0
  %2221 = vmatpush2.bf16.msra.mxu0 0
  %2222 = vmatprep.subr.bf16.mxu0 0
  %2223 = vmatpush2.bf16.msra.mxu0 0
  %2224 = vmatprep.subr.bf16.mxu0 0
  %2225 = vmatpush2.bf16.msra.mxu0 0
  %2226 = vmatprep.subr.bf16.mxu0 0
  %2227 = vmatpush2.bf16.msra.mxu0 0
  %2228 = vmatprep.subr.bf16.mxu0 0
  %2229 = vmatpush2.bf16.msra.mxu0 %v2172
  %2230 = vmatprep.mubr.bf16.mxu0 %v2196
  %2231 = vmatmul.mubr.bf16.gmra.mxu0 %v2192
  %v2232 = vpop.f32.mrf.mxu0
  %v2233 = vadd.f32 0.0, %v2232
  %v2234 = vpop.f32.mrf.mxu0
  %v2235 = vpop.f32.mrf.mxu0
  %v2236 = vadd.f32 0.0, %v2235
  %v2237 = vpop.f32.mrf.mxu0
  %2238 = vdwg.mxu0
  %2239 = vmatprep.subr.bf16.mxu0 0
  %2240 = vmatpush1.bf16.msra.mxu0 %v2144
  %2241 = vmatprep.subr.bf16.mxu0 0
  %2242 = vmatpush1.bf16.msra.mxu0 %v2112
  %2243 = vmatprep.subr.bf16.mxu0 0
  %2244 = vmatpush1.bf16.msra.mxu0 %v2080
  %2245 = vmatprep.subr.bf16.mxu0 0
  %2246 = vmatpush1.bf16.msra.mxu0 %v1914
  %2247 = vmatprep.subr.bf16.mxu0 0
  %2248 = vmatpush1.bf16.msra.mxu0 %v2048
  %2249 = vmatprep.subr.bf16.mxu0 0
  %2250 = vmatpush1.bf16.msra.mxu0 %v2016
  %2251 = vmatprep.subr.bf16.mxu0 0
  %2252 = vmatpush1.bf16.msra.mxu0 %v1984
  %2253 = vmatprep.subr.bf16.mxu0 0
  %2254 = vmatpush1.bf16.msra.mxu0 %v1952
  %2255 = vmatprep.subr.bf16.mxu0 0
  %2256 = vmatpush2.bf16.msra.mxu0 0
  %2257 = vmatprep.subr.bf16.mxu0 0
  %2258 = vmatpush2.bf16.msra.mxu0 0
  %2259 = vmatprep.subr.bf16.mxu0 0
  %2260 = vmatpush2.bf16.msra.mxu0 0
  %2261 = vmatprep.subr.bf16.mxu0 0
  %2262 = vmatpush2.bf16.msra.mxu0 0
  %2263 = vmatprep.subr.bf16.mxu0 0
  %2264 = vmatpush2.bf16.msra.mxu0 0
  %2265 = vmatprep.subr.bf16.mxu0 0
  %2266 = vmatpush2.bf16.msra.mxu0 0
  %2267 = vmatprep.subr.bf16.mxu0 0
  %2268 = vmatpush2.bf16.msra.mxu0 0
  %2269 = vmatprep.subr.bf16.mxu0 0
  %2270 = vmatpush2.bf16.msra.mxu0 %v2176
  %2271 = vmatprep.mubr.bf16.mxu0 %v2196
  %2272 = vmatmul.mubr.bf16.gmra.mxu0 %v2192
  %v2273 = vpop.f32.mrf.mxu0
  %v2274 = vadd.f32 0.0, %v2273
  %v2275 = vpop.f32.mrf.mxu0
  %v2276 = vpop.f32.mrf.mxu0
  %v2277 = vadd.f32 0.0, %v2276
  %v2278 = vpop.f32.mrf.mxu0
  %2279 = vdwg.mxu0
  %2280 = vmatprep.subr.bf16.mxu0 0
  %2281 = vmatpush1.bf16.msra.mxu0 %v2148
  %2282 = vmatprep.subr.bf16.mxu0 0
  %2283 = vmatpush1.bf16.msra.mxu0 %v2116
  %2284 = vmatprep.subr.bf16.mxu0 0
  %2285 = vmatpush1.bf16.msra.mxu0 %v2084
  %2286 = vmatprep.subr.bf16.mxu0 0
  %2287 = vmatpush1.bf16.msra.mxu0 %v1915
  %2288 = vmatprep.subr.bf16.mxu0 0
  %2289 = vmatpush1.bf16.msra.mxu0 %v2052
  %2290 = vmatprep.subr.bf16.mxu0 0
  %2291 = vmatpush1.bf16.msra.mxu0 %v2020
  %2292 = vmatprep.subr.bf16.mxu0 0
  %2293 = vmatpush1.bf16.msra.mxu0 %v1988
  %2294 = vmatprep.subr.bf16.mxu0 0
  %2295 = vmatpush1.bf16.msra.mxu0 %v1956
  %2296 = vmatprep.subr.bf16.mxu0 0
  %2297 = vmatpush2.bf16.msra.mxu0 0
  %2298 = vmatprep.subr.bf16.mxu0 0
  %2299 = vmatpush2.bf16.msra.mxu0 0
  %2300 = vmatprep.subr.bf16.mxu0 0
  %2301 = vmatpush2.bf16.msra.mxu0 0
  %2302 = vmatprep.subr.bf16.mxu0 0
  %2303 = vmatpush2.bf16.msra.mxu0 0
  %2304 = vmatprep.subr.bf16.mxu0 0
  %2305 = vmatpush2.bf16.msra.mxu0 0
  %2306 = vmatprep.subr.bf16.mxu0 0
  %2307 = vmatpush2.bf16.msra.mxu0 0
  %2308 = vmatprep.subr.bf16.mxu0 0
  %2309 = vmatpush2.bf16.msra.mxu0 0
  %2310 = vmatprep.subr.bf16.mxu0 0
  %2311 = vmatpush2.bf16.msra.mxu0 %v2180
  %2312 = vmatprep.mubr.bf16.mxu0 %v2196
  %2313 = vmatmul.mubr.bf16.gmra.mxu0 %v2192
  %v2314 = vpop.f32.mrf.mxu0
  %v2315 = vadd.f32 0.0, %v2314
  %v2316 = vpop.f32.mrf.mxu0
  %v2317 = vpop.f32.mrf.mxu0
  %v2318 = vadd.f32 0.0, %v2317
  %v2319 = vpop.f32.mrf.mxu0
  %2320 = vdwg.mxu0
  %2321 = vmatprep.subr.bf16.mxu0 0
  %2322 = vmatpush1.bf16.msra.mxu0 %v2152
  %2323 = vmatprep.subr.bf16.mxu0 0
  %2324 = vmatpush1.bf16.msra.mxu0 %v2120
  %2325 = vmatprep.subr.bf16.mxu0 0
  %2326 = vmatpush1.bf16.msra.mxu0 %v2088
  %2327 = vmatprep.subr.bf16.mxu0 0
  %2328 = vmatpush1.bf16.msra.mxu0 %v1916
  %2329 = vmatprep.subr.bf16.mxu0 0
  %2330 = vmatpush1.bf16.msra.mxu0 %v2056
  %2331 = vmatprep.subr.bf16.mxu0 0
  %2332 = vmatpush1.bf16.msra.mxu0 %v2024
  %2333 = vmatprep.subr.bf16.mxu0 0
  %2334 = vmatpush1.bf16.msra.mxu0 %v1992
  %2335 = vmatprep.subr.bf16.mxu0 0
  %2336 = vmatpush1.bf16.msra.mxu0 %v1960
  %2337 = vmatprep.subr.bf16.mxu0 0
  %2338 = vmatpush2.bf16.msra.mxu0 0
  %2339 = vmatprep.subr.bf16.mxu0 0
  %2340 = vmatpush2.bf16.msra.mxu0 0
  %2341 = vmatprep.subr.bf16.mxu0 0
  %2342 = vmatpush2.bf16.msra.mxu0 0
  %2343 = vmatprep.subr.bf16.mxu0 0
  %2344 = vmatpush2.bf16.msra.mxu0 0
  %2345 = vmatprep.subr.bf16.mxu0 0
  %2346 = vmatpush2.bf16.msra.mxu0 0
  %2347 = vmatprep.subr.bf16.mxu0 0
  %2348 = vmatpush2.bf16.msra.mxu0 0
  %2349 = vmatprep.subr.bf16.mxu0 0
  %2350 = vmatpush2.bf16.msra.mxu0 0
  %2351 = vmatprep.subr.bf16.mxu0 0
  %2352 = vmatpush2.bf16.msra.mxu0 %v2184
  %2353 = vmatprep.mubr.bf16.mxu0 %v2196
  %2354 = vmatmul.mubr.bf16.gmra.mxu0 %v2192
  %v2355 = vpop.f32.mrf.mxu0
  %v2356 = vadd.f32 0.0, %v2355
  %v2357 = vpop.f32.mrf.mxu0
  %v2358 = vpop.f32.mrf.mxu0
  %v2359 = vadd.f32 0.0, %v2358
  %v2360 = vpop.f32.mrf.mxu0
  %2361 = vdwg.mxu0
  %v2362 = vsel %vm568, %v2233, 0.0
  %2363 = vadd.xlane.f32.xlu0 %v2362
  %v2364 = vpop.xlane.xlu0 %2363
  %v2365 = vsel %vm568, %v2236, 0.0
  %2366 = vadd.xlane.f32.xlu0 %v2365
  %v2367 = vpop.xlane.xlu0 %2366
  %v2368 = vsel %vm568, %v2274, 0.0
  %2369 = vadd.xlane.f32.xlu0 %v2368
  %v2370 = vpop.xlane.xlu0 %2369
  %v2371 = vsel %vm568, %v2277, 0.0
  %2372 = vadd.xlane.f32.xlu0 %v2371
  %v2373 = vpop.xlane.xlu0 %2372
  %v2374 = vsel %vm568, %v2315, 0.0
  %2375 = vadd.xlane.f32.xlu0 %v2374
  %v2376 = vpop.xlane.xlu0 %2375
  %v2377 = vsel %vm568, %v2318, 0.0
  %2378 = vadd.xlane.f32.xlu0 %v2377
  %v2379 = vpop.xlane.xlu0 %2378
  %v2380 = vsel %vm568, %v2356, 0.0
  %2381 = vadd.xlane.f32.xlu0 %v2380
  %v2382 = vpop.xlane.xlu0 %2381
  %v2383 = vsel %vm568, %v2359, 0.0
  %2384 = vadd.xlane.f32.xlu0 %v2383
  %v2385 = vpop.xlane.xlu0 %2384
  %v2386 = vadd.f32 %v2364, %v2370
  %v2387 = vadd.f32 %v2386, %v2376
  %v2388 = vadd.f32 %v2387, %v2382
  %v2389 = vadd.f32 %v2367, %v2373
  %v2390 = vadd.f32 %v2389, %v2379
  %v2391 = vadd.f32 %v2390, %v2385
  %v2392 = vmul.f32 %v2388, 0.00625
  %v2393 = vmul.f32 %v2391, 0.00625
  %v2394 = vsub.f32 %v2233, %v2392
  %v2395 = vsub.f32 %v2236, %v2393
  %v2396 = vsub.f32 %v2274, %v2392
  %v2397 = vsub.f32 %v2277, %v2393
  %v2398 = vsub.f32 %v2315, %v2392
  %v2399 = vsub.f32 %v2318, %v2393
  %v2400 = vsub.f32 %v2356, %v2392
  %v2401 = vsub.f32 %v2359, %v2393
  %v2402 = vmul.f32 %v2394, %v2394
  %v2403 = vmul.f32 %v2395, %v2395
  %v2404 = vmul.f32 %v2396, %v2396
  %v2405 = vmul.f32 %v2397, %v2397
  %v2406 = vmul.f32 %v2398, %v2398
  %v2407 = vmul.f32 %v2399, %v2399
  %v2408 = vmul.f32 %v2400, %v2400
  %v2409 = vmul.f32 %v2401, %v2401
  %v2410 = vsel %vm568, %v2402, 0.0
  %2411 = vadd.xlane.f32.xlu0 %v2410
  %v2412 = vpop.xlane.xlu0 %2411
  %v2413 = vsel %vm568, %v2403, 0.0
  %2414 = vadd.xlane.f32.xlu0 %v2413
  %v2415 = vpop.xlane.xlu0 %2414
  %v2416 = vsel %vm568, %v2404, 0.0
  %2417 = vadd.xlane.f32.xlu0 %v2416
  %v2418 = vpop.xlane.xlu0 %2417
  %v2419 = vsel %vm568, %v2405, 0.0
  %2420 = vadd.xlane.f32.xlu0 %v2419
  %v2421 = vpop.xlane.xlu0 %2420
  %v2422 = vsel %vm568, %v2406, 0.0
  %2423 = vadd.xlane.f32.xlu0 %v2422
  %v2424 = vpop.xlane.xlu0 %2423
  %v2425 = vsel %vm568, %v2407, 0.0
  %2426 = vadd.xlane.f32.xlu0 %v2425
  %v2427 = vpop.xlane.xlu0 %2426
  %v2428 = vsel %vm568, %v2408, 0.0
  %2429 = vadd.xlane.f32.xlu0 %v2428
  %v2430 = vpop.xlane.xlu0 %2429
  %v2431 = vsel %vm568, %v2409, 0.0
  %2432 = vadd.xlane.f32.xlu0 %v2431
  %v2433 = vpop.xlane.xlu0 %2432
  %v2434 = vadd.f32 %v2412, %v2418
  %v2435 = vadd.f32 %v2434, %v2424
  %v2436 = vadd.f32 %v2435, %v2430
  %v2437 = vadd.f32 %v2415, %v2421
  %v2438 = vadd.f32 %v2437, %v2427
  %v2439 = vadd.f32 %v2438, %v2433
  %v2440 = vmul.f32 %v2436, 0.00625
  %v2441 = vmul.f32 %v2439, 0.00625
  %v2442 = vadd.f32 %v2440, 1e-05
  %v2443 = vadd.f32 %v2441, 1e-05
  %v2444 = vrsqrt.pop %v2442
  %v2445 = vrsqrt.pop %v2443
  %v2446 = vmul.f32 %v2394, %v2444
  %v2447 = vmul.f32 %v2395, %v2445
  %v2448 = vmul.f32 %v2396, %v2444
  %v2449 = vmul.f32 %v2397, %v2445
  %v2450 = vmul.f32 %v2398, %v2444
  %v2451 = vmul.f32 %v2399, %v2445
  %v2452 = vmul.f32 %v2400, %v2444
  %v2453 = vmul.f32 %v2401, %v2445
  %2455 = vset.pattern.permute.xlu0 0
  %2456 = vperm.xlu0 %2455, %v1921
  %v2457 = vpop.permute.xlu0 %2456
  %2460 = vset.pattern.permute.xlu0 0
  %2461 = vperm.xlu0 %2460, %v1922
  %v2462 = vpop.permute.xlu0 %2461
  %v2464 = vmul.f32 %v2446, %v2457
  %v2465 = vmul.f32 %v2447, %v2462
  %v2466 = vmul.f32 %v2448, %v2457
  %v2467 = vmul.f32 %v2449, %v2462
  %v2468 = vmul.f32 %v2450, %v2457
  %v2469 = vmul.f32 %v2451, %v2462
  %v2470 = vmul.f32 %v2452, %v2457
  %v2471 = vmul.f32 %v2453, %v2462
  %2473 = vset.pattern.permute.xlu0 0
  %2474 = vperm.xlu0 %2473, %v1924
  %v2475 = vpop.permute.xlu0 %2474
  %2478 = vset.pattern.permute.xlu0 0
  %2479 = vperm.xlu0 %2478, %v1925
  %v2480 = vpop.permute.xlu0 %2479
  %v2482 = vadd.f32 %v2464, %v2475
  %v2483 = vadd.f32 %v2465, %v2480
  %v2484 = vadd.f32 %v2466, %v2475
  %v2485 = vadd.f32 %v2467, %v2480
  %v2486 = vadd.f32 %v2468, %v2475
  %v2487 = vadd.f32 %v2469, %v2480
  %v2488 = vadd.f32 %v2470, %v2475
  %v2489 = vadd.f32 %v2471, %v2480
  %v2490 = vmul.f32 %v2482, 0.01
  %v2491 = vmul.f32 %v2483, 0.01
  %v2492 = vmul.f32 %v2484, 0.01
  %v2493 = vmul.f32 %v2485, 0.01
  %v2494 = vmul.f32 %v2486, 0.01
  %v2495 = vmul.f32 %v2487, 0.01
  %v2496 = vmul.f32 %v2488, 0.01
  %v2497 = vmul.f32 %v2489, 0.01
  %v2498 = vmax.f32 %v2482, %v2490
  %v2499 = vmax.f32 %v2483, %v2491
  %v2500 = vmax.f32 %v2484, %v2492
  %v2501 = vmax.f32 %v2485, %v2493
  %v2502 = vmax.f32 %v2486, %v2494
  %v2503 = vmax.f32 %v2487, %v2495
  %v2504 = vmax.f32 %v2488, %v2496
  %v2505 = vmax.f32 %v2489, %v2497
  %v2506 = vadd.f32 %v2498, %v1905
  %v2507 = vadd.f32 %v2499, %v1906
  %v2508 = vadd.f32 %v2500, %v1907
  %v2509 = vadd.f32 %v2501, %v1908
  %v2510 = vadd.f32 %v2502, %v1909
  %v2511 = vadd.f32 %v2503, %v1910
  %v2512 = vadd.f32 %v2504, %v1911
  %v2513 = vadd.f32 %v2505, %v1912
  %v2514 = vpack.c.bf16 %v2507, %v2506
  %v2515 = vpack.c.bf16 %v2509, %v2508
  %v2516 = vpack.c.bf16 %v2511, %v2510
  %v2517 = vpack.c.bf16 %v2513, %v2512
  %s2518 = scalar_lea.vmem %s4, 48
  %v2519 = vld [vmem:[%s2518] sm:$0xff]
  %v2520 = vld [vmem:[%s2518 + $0x8] sm:$0xff]
  %s2521 = scalar_lea.vmem %s5, 48
  %v2522 = vld [vmem:[%s2521] sm:$0xff]
  %v2523 = vld [vmem:[%s2521 + $0x8] sm:$0xff]
  %s2524 = scalar_lea.vmem %s6, 48
  %v2525 = vld [vmem:[%s2524] sm:$0xff]
  %v2526 = vld [vmem:[%s2524 + $0x8] sm:$0xff]
  %2531 = vrot.lane.b32.xlu0 %v2514, 96
  %v2532 = vpop.permute.xlu0 %2531
  %2533 = vrot.lane.b32.xlu0 %v2515, 96
  %v2534 = vpop.permute.xlu0 %2533
  %2535 = vrot.lane.b32.xlu0 %v2516, 96
  %v2536 = vpop.permute.xlu0 %2535
  %2537 = vrot.lane.b32.xlu0 %v2517, 96
  %v2538 = vpop.permute.xlu0 %2537
  %2539 = vrot.lane.b32.xlu0 %v2514, 8
  %v2540 = vpop.permute.xlu0 %2539
  %2541 = vrot.lane.b32.xlu0 %v2515, 8
  %v2542 = vpop.permute.xlu0 %2541
  %2543 = vrot.lane.b32.xlu0 %v2516, 8
  %v2544 = vpop.permute.xlu0 %2543
  %2545 = vrot.lane.b32.xlu0 %v2517, 8
  %v2546 = vpop.permute.xlu0 %2545
  %vm2547 = vcmask 64512
  %v2550 = vsel %vm2547, %v2532, %v2540
  %v2554 = vsel %vm2547, %v2534, %v2542
  %v2558 = vsel %vm2547, %v2536, %v2544
  %v2562 = vsel %vm2547, %v2538, %v2546
  %2564 = vrot.lane.b32.xlu0 %v2514, 94
  %v2565 = vpop.permute.xlu0 %2564
  %2566 = vrot.lane.b32.xlu0 %v2515, 94
  %v2567 = vpop.permute.xlu0 %2566
  %2568 = vrot.lane.b32.xlu0 %v2516, 94
  %v2569 = vpop.permute.xlu0 %2568
  %2570 = vrot.lane.b32.xlu0 %v2517, 94
  %v2571 = vpop.permute.xlu0 %2570
  %2572 = vrot.lane.b32.xlu0 %v2514, 6
  %v2573 = vpop.permute.xlu0 %2572
  %2574 = vrot.lane.b32.xlu0 %v2515, 6
  %v2575 = vpop.permute.xlu0 %2574
  %2576 = vrot.lane.b32.xlu0 %v2516, 6
  %v2577 = vpop.permute.xlu0 %2576
  %2578 = vrot.lane.b32.xlu0 %v2517, 6
  %v2579 = vpop.permute.xlu0 %2578
  %vm2580 = vcmask 48128
  %v2583 = vsel %vm2580, %v2565, %v2573
  %v2587 = vsel %vm2580, %v2567, %v2575
  %v2591 = vsel %vm2580, %v2569, %v2577
  %v2595 = vsel %vm2580, %v2571, %v2579
  %2597 = vrot.lane.b32.xlu0 %v2514, 92
  %v2598 = vpop.permute.xlu0 %2597
  %2599 = vrot.lane.b32.xlu0 %v2515, 92
  %v2600 = vpop.permute.xlu0 %2599
  %2601 = vrot.lane.b32.xlu0 %v2516, 92
  %v2602 = vpop.permute.xlu0 %2601
  %2603 = vrot.lane.b32.xlu0 %v2517, 92
  %v2604 = vpop.permute.xlu0 %2603
  %2605 = vrot.lane.b32.xlu0 %v2514, 4
  %v2606 = vpop.permute.xlu0 %2605
  %2607 = vrot.lane.b32.xlu0 %v2515, 4
  %v2608 = vpop.permute.xlu0 %2607
  %2609 = vrot.lane.b32.xlu0 %v2516, 4
  %v2610 = vpop.permute.xlu0 %2609
  %2611 = vrot.lane.b32.xlu0 %v2517, 4
  %v2612 = vpop.permute.xlu0 %2611
  %v2615 = vsel %vm86, %v2598, %v2606
  %v2619 = vsel %vm86, %v2600, %v2608
  %v2623 = vsel %vm86, %v2602, %v2610
  %v2627 = vsel %vm86, %v2604, %v2612
  %2629 = vrot.lane.b32.xlu0 %v2514, 90
  %v2630 = vpop.permute.xlu0 %2629
  %2631 = vrot.lane.b32.xlu0 %v2515, 90
  %v2632 = vpop.permute.xlu0 %2631
  %2633 = vrot.lane.b32.xlu0 %v2516, 90
  %v2634 = vpop.permute.xlu0 %2633
  %2635 = vrot.lane.b32.xlu0 %v2517, 90
  %v2636 = vpop.permute.xlu0 %2635
  %2637 = vrot.lane.b32.xlu0 %v2514, 2
  %v2638 = vpop.permute.xlu0 %2637
  %2639 = vrot.lane.b32.xlu0 %v2515, 2
  %v2640 = vpop.permute.xlu0 %2639
  %2641 = vrot.lane.b32.xlu0 %v2516, 2
  %v2642 = vpop.permute.xlu0 %2641
  %2643 = vrot.lane.b32.xlu0 %v2517, 2
  %v2644 = vpop.permute.xlu0 %2643
  %v2647 = vsel %vm144, %v2630, %v2638
  %v2651 = vsel %vm144, %v2632, %v2640
  %v2655 = vsel %vm144, %v2634, %v2642
  %v2659 = vsel %vm144, %v2636, %v2644
  %2661 = vrot.lane.b32.xlu0 %v2514, 126
  %v2662 = vpop.permute.xlu0 %2661
  %2663 = vrot.lane.b32.xlu0 %v2515, 126
  %v2664 = vpop.permute.xlu0 %2663
  %2665 = vrot.lane.b32.xlu0 %v2516, 126
  %v2666 = vpop.permute.xlu0 %2665
  %2667 = vrot.lane.b32.xlu0 %v2517, 126
  %v2668 = vpop.permute.xlu0 %2667
  %2669 = vrot.lane.b32.xlu0 %v2514, 38
  %v2670 = vpop.permute.xlu0 %2669
  %2671 = vrot.lane.b32.xlu0 %v2515, 38
  %v2672 = vpop.permute.xlu0 %2671
  %2673 = vrot.lane.b32.xlu0 %v2516, 38
  %v2674 = vpop.permute.xlu0 %2673
  %2675 = vrot.lane.b32.xlu0 %v2517, 38
  %v2676 = vpop.permute.xlu0 %2675
  %v2679 = vsel %vm231, %v2662, %v2670
  %v2683 = vsel %vm231, %v2664, %v2672
  %v2687 = vsel %vm231, %v2666, %v2674
  %v2691 = vsel %vm231, %v2668, %v2676
  %2693 = vrot.lane.b32.xlu0 %v2514, 124
  %v2694 = vpop.permute.xlu0 %2693
  %2695 = vrot.lane.b32.xlu0 %v2515, 124
  %v2696 = vpop.permute.xlu0 %2695
  %2697 = vrot.lane.b32.xlu0 %v2516, 124
  %v2698 = vpop.permute.xlu0 %2697
  %2699 = vrot.lane.b32.xlu0 %v2517, 124
  %v2700 = vpop.permute.xlu0 %2699
  %2701 = vrot.lane.b32.xlu0 %v2514, 36
  %v2702 = vpop.permute.xlu0 %2701
  %2703 = vrot.lane.b32.xlu0 %v2515, 36
  %v2704 = vpop.permute.xlu0 %2703
  %2705 = vrot.lane.b32.xlu0 %v2516, 36
  %v2706 = vpop.permute.xlu0 %2705
  %2707 = vrot.lane.b32.xlu0 %v2517, 36
  %v2708 = vpop.permute.xlu0 %2707
  %v2711 = vsel %vm289, %v2694, %v2702
  %v2715 = vsel %vm289, %v2696, %v2704
  %v2719 = vsel %vm289, %v2698, %v2706
  %v2723 = vsel %vm289, %v2700, %v2708
  %2725 = vrot.lane.b32.xlu0 %v2514, 122
  %v2726 = vpop.permute.xlu0 %2725
  %2727 = vrot.lane.b32.xlu0 %v2515, 122
  %v2728 = vpop.permute.xlu0 %2727
  %2729 = vrot.lane.b32.xlu0 %v2516, 122
  %v2730 = vpop.permute.xlu0 %2729
  %2731 = vrot.lane.b32.xlu0 %v2517, 122
  %v2732 = vpop.permute.xlu0 %2731
  %2733 = vrot.lane.b32.xlu0 %v2514, 34
  %v2734 = vpop.permute.xlu0 %2733
  %2735 = vrot.lane.b32.xlu0 %v2515, 34
  %v2736 = vpop.permute.xlu0 %2735
  %2737 = vrot.lane.b32.xlu0 %v2516, 34
  %v2738 = vpop.permute.xlu0 %2737
  %2739 = vrot.lane.b32.xlu0 %v2517, 34
  %v2740 = vpop.permute.xlu0 %2739
  %vm2741 = vcmask 277504
  %v2744 = vsel %vm2741, %v2726, %v2734
  %v2748 = vsel %vm2741, %v2728, %v2736
  %v2752 = vsel %vm2741, %v2730, %v2738
  %v2756 = vsel %vm2741, %v2732, %v2740
  %2758 = vrot.lane.b32.xlu0 %v2514, 120
  %v2759 = vpop.permute.xlu0 %2758
  %2760 = vrot.lane.b32.xlu0 %v2515, 120
  %v2761 = vpop.permute.xlu0 %2760
  %2762 = vrot.lane.b32.xlu0 %v2516, 120
  %v2763 = vpop.permute.xlu0 %2762
  %2764 = vrot.lane.b32.xlu0 %v2517, 120
  %v2765 = vpop.permute.xlu0 %2764
  %2766 = vrot.lane.b32.xlu0 %v2514, 32
  %v2767 = vpop.permute.xlu0 %2766
  %2768 = vrot.lane.b32.xlu0 %v2515, 32
  %v2769 = vpop.permute.xlu0 %2768
  %2770 = vrot.lane.b32.xlu0 %v2516, 32
  %v2771 = vpop.permute.xlu0 %2770
  %2772 = vrot.lane.b32.xlu0 %v2517, 32
  %v2773 = vpop.permute.xlu0 %2772
  %vm2774 = vcmask 261120
  %v2777 = vsel %vm2774, %v2759, %v2767
  %v2781 = vsel %vm2774, %v2761, %v2769
  %v2785 = vsel %vm2774, %v2763, %v2771
  %v2789 = vsel %vm2774, %v2765, %v2773
  %v2793 = vunpack.c.l.b16 %v2519
  %v2794 = vunpack.c.h.b16 %v2519
  %v2795 = vunpack.c.l.b16 %v2520
  %v2796 = vunpack.c.h.b16 %v2520
  %v2797 = vpack.c.b16 %v2795, %v2793
  %v2798 = vpack.c.b16 %v2796, %v2794
  %v2801 = vsel %vm992, %v2798, 0
  %2803 = vmatprep.subr.bf16.mxu0 0
  %2804 = vmatpush1.bf16.msra.mxu0 %v2744
  %2805 = vmatprep.subr.bf16.mxu0 0
  %2806 = vmatpush1.bf16.msra.mxu0 %v2711
  %2807 = vmatprep.subr.bf16.mxu0 0
  %2808 = vmatpush1.bf16.msra.mxu0 %v2679
  %2809 = vmatprep.subr.bf16.mxu0 0
  %2810 = vmatpush1.bf16.msra.mxu0 %v2514
  %2811 = vmatprep.subr.bf16.mxu0 0
  %2812 = vmatpush1.bf16.msra.mxu0 %v2647
  %2813 = vmatprep.subr.bf16.mxu0 0
  %2814 = vmatpush1.bf16.msra.mxu0 %v2615
  %2815 = vmatprep.subr.bf16.mxu0 0
  %2816 = vmatpush1.bf16.msra.mxu0 %v2583
  %2817 = vmatprep.subr.bf16.mxu0 0
  %2818 = vmatpush1.bf16.msra.mxu0 %v2550
  %2819 = vmatprep.subr.bf16.mxu0 0
  %2820 = vmatpush2.bf16.msra.mxu0 0
  %2821 = vmatprep.subr.bf16.mxu0 0
  %2822 = vmatpush2.bf16.msra.mxu0 0
  %2823 = vmatprep.subr.bf16.mxu0 0
  %2824 = vmatpush2.bf16.msra.mxu0 0
  %2825 = vmatprep.subr.bf16.mxu0 0
  %2826 = vmatpush2.bf16.msra.mxu0 0
  %2827 = vmatprep.subr.bf16.mxu0 0
  %2828 = vmatpush2.bf16.msra.mxu0 0
  %2829 = vmatprep.subr.bf16.mxu0 0
  %2830 = vmatpush2.bf16.msra.mxu0 0
  %2831 = vmatprep.subr.bf16.mxu0 0
  %2832 = vmatpush2.bf16.msra.mxu0 0
  %2833 = vmatprep.subr.bf16.mxu0 0
  %2834 = vmatpush2.bf16.msra.mxu0 %v2777
  %2835 = vmatprep.mubr.bf16.mxu0 %v2801
  %2836 = vmatmul.mubr.bf16.gmra.mxu0 %v2797
  %v2837 = vpop.f32.mrf.mxu0
  %v2838 = vadd.f32 0.0, %v2837
  %v2839 = vpop.f32.mrf.mxu0
  %v2840 = vpop.f32.mrf.mxu0
  %v2841 = vadd.f32 0.0, %v2840
  %v2842 = vpop.f32.mrf.mxu0
  %2843 = vdwg.mxu0
  %2844 = vmatprep.subr.bf16.mxu0 0
  %2845 = vmatpush1.bf16.msra.mxu0 %v2748
  %2846 = vmatprep.subr.bf16.mxu0 0
  %2847 = vmatpush1.bf16.msra.mxu0 %v2715
  %2848 = vmatprep.subr.bf16.mxu0 0
  %2849 = vmatpush1.bf16.msra.mxu0 %v2683
  %2850 = vmatprep.subr.bf16.mxu0 0
  %2851 = vmatpush1.bf16.msra.mxu0 %v2515
  %2852 = vmatprep.subr.bf16.mxu0 0
  %2853 = vmatpush1.bf16.msra.mxu0 %v2651
  %2854 = vmatprep.subr.bf16.mxu0 0
  %2855 = vmatpush1.bf16.msra.mxu0 %v2619
  %2856 = vmatprep.subr.bf16.mxu0 0
  %2857 = vmatpush1.bf16.msra.mxu0 %v2587
  %2858 = vmatprep.subr.bf16.mxu0 0
  %2859 = vmatpush1.bf16.msra.mxu0 %v2554
  %2860 = vmatprep.subr.bf16.mxu0 0
  %2861 = vmatpush2.bf16.msra.mxu0 0
  %2862 = vmatprep.subr.bf16.mxu0 0
  %2863 = vmatpush2.bf16.msra.mxu0 0
  %2864 = vmatprep.subr.bf16.mxu0 0
  %2865 = vmatpush2.bf16.msra.mxu0 0
  %2866 = vmatprep.subr.bf16.mxu0 0
  %2867 = vmatpush2.bf16.msra.mxu0 0
  %2868 = vmatprep.subr.bf16.mxu0 0
  %2869 = vmatpush2.bf16.msra.mxu0 0
  %2870 = vmatprep.subr.bf16.mxu0 0
  %2871 = vmatpush2.bf16.msra.mxu0 0
  %2872 = vmatprep.subr.bf16.mxu0 0
  %2873 = vmatpush2.bf16.msra.mxu0 0
  %2874 = vmatprep.subr.bf16.mxu0 0
  %2875 = vmatpush2.bf16.msra.mxu0 %v2781
  %2876 = vmatprep.mubr.bf16.mxu0 %v2801
  %2877 = vmatmul.mubr.bf16.gmra.mxu0 %v2797
  %v2878 = vpop.f32.mrf.mxu0
  %v2879 = vadd.f32 0.0, %v2878
  %v2880 = vpop.f32.mrf.mxu0
  %v2881 = vpop.f32.mrf.mxu0
  %v2882 = vadd.f32 0.0, %v2881
  %v2883 = vpop.f32.mrf.mxu0
  %2884 = vdwg.mxu0
  %2885 = vmatprep.subr.bf16.mxu0 0
  %2886 = vmatpush1.bf16.msra.mxu0 %v2752
  %2887 = vmatprep.subr.bf16.mxu0 0
  %2888 = vmatpush1.bf16.msra.mxu0 %v2719
  %2889 = vmatprep.subr.bf16.mxu0 0
  %2890 = vmatpush1.bf16.msra.mxu0 %v2687
  %2891 = vmatprep.subr.bf16.mxu0 0
  %2892 = vmatpush1.bf16.msra.mxu0 %v2516
  %2893 = vmatprep.subr.bf16.mxu0 0
  %2894 = vmatpush1.bf16.msra.mxu0 %v2655
  %2895 = vmatprep.subr.bf16.mxu0 0
  %2896 = vmatpush1.bf16.msra.mxu0 %v2623
  %2897 = vmatprep.subr.bf16.mxu0 0
  %2898 = vmatpush1.bf16.msra.mxu0 %v2591
  %2899 = vmatprep.subr.bf16.mxu0 0
  %2900 = vmatpush1.bf16.msra.mxu0 %v2558
  %2901 = vmatprep.subr.bf16.mxu0 0
  %2902 = vmatpush2.bf16.msra.mxu0 0
  %2903 = vmatprep.subr.bf16.mxu0 0
  %2904 = vmatpush2.bf16.msra.mxu0 0
  %2905 = vmatprep.subr.bf16.mxu0 0
  %2906 = vmatpush2.bf16.msra.mxu0 0
  %2907 = vmatprep.subr.bf16.mxu0 0
  %2908 = vmatpush2.bf16.msra.mxu0 0
  %2909 = vmatprep.subr.bf16.mxu0 0
  %2910 = vmatpush2.bf16.msra.mxu0 0
  %2911 = vmatprep.subr.bf16.mxu0 0
  %2912 = vmatpush2.bf16.msra.mxu0 0
  %2913 = vmatprep.subr.bf16.mxu0 0
  %2914 = vmatpush2.bf16.msra.mxu0 0
  %2915 = vmatprep.subr.bf16.mxu0 0
  %2916 = vmatpush2.bf16.msra.mxu0 %v2785
  %2917 = vmatprep.mubr.bf16.mxu0 %v2801
  %2918 = vmatmul.mubr.bf16.gmra.mxu0 %v2797
  %v2919 = vpop.f32.mrf.mxu0
  %v2920 = vadd.f32 0.0, %v2919
  %v2921 = vpop.f32.mrf.mxu0
  %v2922 = vpop.f32.mrf.mxu0
  %v2923 = vadd.f32 0.0, %v2922
  %v2924 = vpop.f32.mrf.mxu0
  %2925 = vdwg.mxu0
  %2926 = vmatprep.subr.bf16.mxu0 0
  %2927 = vmatpush1.bf16.msra.mxu0 %v2756
  %2928 = vmatprep.subr.bf16.mxu0 0
  %2929 = vmatpush1.bf16.msra.mxu0 %v2723
  %2930 = vmatprep.subr.bf16.mxu0 0
  %2931 = vmatpush1.bf16.msra.mxu0 %v2691
  %2932 = vmatprep.subr.bf16.mxu0 0
  %2933 = vmatpush1.bf16.msra.mxu0 %v2517
  %2934 = vmatprep.subr.bf16.mxu0 0
  %2935 = vmatpush1.bf16.msra.mxu0 %v2659
  %2936 = vmatprep.subr.bf16.mxu0 0
  %2937 = vmatpush1.bf16.msra.mxu0 %v2627
  %2938 = vmatprep.subr.bf16.mxu0 0
  %2939 = vmatpush1.bf16.msra.mxu0 %v2595
  %2940 = vmatprep.subr.bf16.mxu0 0
  %2941 = vmatpush1.bf16.msra.mxu0 %v2562
  %2942 = vmatprep.subr.bf16.mxu0 0
  %2943 = vmatpush2.bf16.msra.mxu0 0
  %2944 = vmatprep.subr.bf16.mxu0 0
  %2945 = vmatpush2.bf16.msra.mxu0 0
  %2946 = vmatprep.subr.bf16.mxu0 0
  %2947 = vmatpush2.bf16.msra.mxu0 0
  %2948 = vmatprep.subr.bf16.mxu0 0
  %2949 = vmatpush2.bf16.msra.mxu0 0
  %2950 = vmatprep.subr.bf16.mxu0 0
  %2951 = vmatpush2.bf16.msra.mxu0 0
  %2952 = vmatprep.subr.bf16.mxu0 0
  %2953 = vmatpush2.bf16.msra.mxu0 0
  %2954 = vmatprep.subr.bf16.mxu0 0
  %2955 = vmatpush2.bf16.msra.mxu0 0
  %2956 = vmatprep.subr.bf16.mxu0 0
  %2957 = vmatpush2.bf16.msra.mxu0 %v2789
  %2958 = vmatprep.mubr.bf16.mxu0 %v2801
  %2959 = vmatmul.mubr.bf16.gmra.mxu0 %v2797
  %v2960 = vpop.f32.mrf.mxu0
  %v2961 = vadd.f32 0.0, %v2960
  %v2962 = vpop.f32.mrf.mxu0
  %v2963 = vpop.f32.mrf.mxu0
  %v2964 = vadd.f32 0.0, %v2963
  %v2965 = vpop.f32.mrf.mxu0
  %2966 = vdwg.mxu0
  %v2967 = vsel %vm568, %v2838, 0.0
  %2968 = vadd.xlane.f32.xlu0 %v2967
  %v2969 = vpop.xlane.xlu0 %2968
  %v2970 = vsel %vm568, %v2841, 0.0
  %2971 = vadd.xlane.f32.xlu0 %v2970
  %v2972 = vpop.xlane.xlu0 %2971
  %v2973 = vsel %vm568, %v2879, 0.0
  %2974 = vadd.xlane.f32.xlu0 %v2973
  %v2975 = vpop.xlane.xlu0 %2974
  %v2976 = vsel %vm568, %v2882, 0.0
  %2977 = vadd.xlane.f32.xlu0 %v2976
  %v2978 = vpop.xlane.xlu0 %2977
  %v2979 = vsel %vm568, %v2920, 0.0
  %2980 = vadd.xlane.f32.xlu0 %v2979
  %v2981 = vpop.xlane.xlu0 %2980
  %v2982 = vsel %vm568, %v2923, 0.0
  %2983 = vadd.xlane.f32.xlu0 %v2982
  %v2984 = vpop.xlane.xlu0 %2983
  %v2985 = vsel %vm568, %v2961, 0.0
  %2986 = vadd.xlane.f32.xlu0 %v2985
  %v2987 = vpop.xlane.xlu0 %2986
  %v2988 = vsel %vm568, %v2964, 0.0
  %2989 = vadd.xlane.f32.xlu0 %v2988
  %v2990 = vpop.xlane.xlu0 %2989
  %v2991 = vadd.f32 %v2969, %v2975
  %v2992 = vadd.f32 %v2991, %v2981
  %v2993 = vadd.f32 %v2992, %v2987
  %v2994 = vadd.f32 %v2972, %v2978
  %v2995 = vadd.f32 %v2994, %v2984
  %v2996 = vadd.f32 %v2995, %v2990
  %v2997 = vmul.f32 %v2993, 0.00625
  %v2998 = vmul.f32 %v2996, 0.00625
  %v2999 = vsub.f32 %v2838, %v2997
  %v3000 = vsub.f32 %v2841, %v2998
  %v3001 = vsub.f32 %v2879, %v2997
  %v3002 = vsub.f32 %v2882, %v2998
  %v3003 = vsub.f32 %v2920, %v2997
  %v3004 = vsub.f32 %v2923, %v2998
  %v3005 = vsub.f32 %v2961, %v2997
  %v3006 = vsub.f32 %v2964, %v2998
  %v3007 = vmul.f32 %v2999, %v2999
  %v3008 = vmul.f32 %v3000, %v3000
  %v3009 = vmul.f32 %v3001, %v3001
  %v3010 = vmul.f32 %v3002, %v3002
  %v3011 = vmul.f32 %v3003, %v3003
  %v3012 = vmul.f32 %v3004, %v3004
  %v3013 = vmul.f32 %v3005, %v3005
  %v3014 = vmul.f32 %v3006, %v3006
  %v3015 = vsel %vm568, %v3007, 0.0
  %3016 = vadd.xlane.f32.xlu0 %v3015
  %v3017 = vpop.xlane.xlu0 %3016
  %v3018 = vsel %vm568, %v3008, 0.0
  %3019 = vadd.xlane.f32.xlu0 %v3018
  %v3020 = vpop.xlane.xlu0 %3019
  %v3021 = vsel %vm568, %v3009, 0.0
  %3022 = vadd.xlane.f32.xlu0 %v3021
  %v3023 = vpop.xlane.xlu0 %3022
  %v3024 = vsel %vm568, %v3010, 0.0
  %3025 = vadd.xlane.f32.xlu0 %v3024
  %v3026 = vpop.xlane.xlu0 %3025
  %v3027 = vsel %vm568, %v3011, 0.0
  %3028 = vadd.xlane.f32.xlu0 %v3027
  %v3029 = vpop.xlane.xlu0 %3028
  %v3030 = vsel %vm568, %v3012, 0.0
  %3031 = vadd.xlane.f32.xlu0 %v3030
  %v3032 = vpop.xlane.xlu0 %3031
  %v3033 = vsel %vm568, %v3013, 0.0
  %3034 = vadd.xlane.f32.xlu0 %v3033
  %v3035 = vpop.xlane.xlu0 %3034
  %v3036 = vsel %vm568, %v3014, 0.0
  %3037 = vadd.xlane.f32.xlu0 %v3036
  %v3038 = vpop.xlane.xlu0 %3037
  %v3039 = vadd.f32 %v3017, %v3023
  %v3040 = vadd.f32 %v3039, %v3029
  %v3041 = vadd.f32 %v3040, %v3035
  %v3042 = vadd.f32 %v3020, %v3026
  %v3043 = vadd.f32 %v3042, %v3032
  %v3044 = vadd.f32 %v3043, %v3038
  %v3045 = vmul.f32 %v3041, 0.00625
  %v3046 = vmul.f32 %v3044, 0.00625
  %v3047 = vadd.f32 %v3045, 1e-05
  %v3048 = vadd.f32 %v3046, 1e-05
  %v3049 = vrsqrt.pop %v3047
  %v3050 = vrsqrt.pop %v3048
  %v3051 = vmul.f32 %v2999, %v3049
  %v3052 = vmul.f32 %v3000, %v3050
  %v3053 = vmul.f32 %v3001, %v3049
  %v3054 = vmul.f32 %v3002, %v3050
  %v3055 = vmul.f32 %v3003, %v3049
  %v3056 = vmul.f32 %v3004, %v3050
  %v3057 = vmul.f32 %v3005, %v3049
  %v3058 = vmul.f32 %v3006, %v3050
  %3060 = vset.pattern.permute.xlu0 0
  %3061 = vperm.xlu0 %3060, %v2522
  %v3062 = vpop.permute.xlu0 %3061
  %3065 = vset.pattern.permute.xlu0 0
  %3066 = vperm.xlu0 %3065, %v2523
  %v3067 = vpop.permute.xlu0 %3066
  %v3069 = vmul.f32 %v3051, %v3062
  %v3070 = vmul.f32 %v3052, %v3067
  %v3071 = vmul.f32 %v3053, %v3062
  %v3072 = vmul.f32 %v3054, %v3067
  %v3073 = vmul.f32 %v3055, %v3062
  %v3074 = vmul.f32 %v3056, %v3067
  %v3075 = vmul.f32 %v3057, %v3062
  %v3076 = vmul.f32 %v3058, %v3067
  %3078 = vset.pattern.permute.xlu0 0
  %3079 = vperm.xlu0 %3078, %v2525
  %v3080 = vpop.permute.xlu0 %3079
  %3083 = vset.pattern.permute.xlu0 0
  %3084 = vperm.xlu0 %3083, %v2526
  %v3085 = vpop.permute.xlu0 %3084
  %v3087 = vadd.f32 %v3069, %v3080
  %v3088 = vadd.f32 %v3070, %v3085
  %v3089 = vadd.f32 %v3071, %v3080
  %v3090 = vadd.f32 %v3072, %v3085
  %v3091 = vadd.f32 %v3073, %v3080
  %v3092 = vadd.f32 %v3074, %v3085
  %v3093 = vadd.f32 %v3075, %v3080
  %v3094 = vadd.f32 %v3076, %v3085
  %v3095 = vmul.f32 %v3087, 0.01
  %v3096 = vmul.f32 %v3088, 0.01
  %v3097 = vmul.f32 %v3089, 0.01
  %v3098 = vmul.f32 %v3090, 0.01
  %v3099 = vmul.f32 %v3091, 0.01
  %v3100 = vmul.f32 %v3092, 0.01
  %v3101 = vmul.f32 %v3093, 0.01
  %v3102 = vmul.f32 %v3094, 0.01
  %v3103 = vmax.f32 %v3087, %v3095
  %v3104 = vmax.f32 %v3088, %v3096
  %v3105 = vmax.f32 %v3089, %v3097
  %v3106 = vmax.f32 %v3090, %v3098
  %v3107 = vmax.f32 %v3091, %v3099
  %v3108 = vmax.f32 %v3092, %v3100
  %v3109 = vmax.f32 %v3093, %v3101
  %v3110 = vmax.f32 %v3094, %v3102
  %v3111 = vadd.f32 %v3103, %v2506
  %v3112 = vadd.f32 %v3104, %v2507
  %v3113 = vadd.f32 %v3105, %v2508
  %v3114 = vadd.f32 %v3106, %v2509
  %v3115 = vadd.f32 %v3107, %v2510
  %v3116 = vadd.f32 %v3108, %v2511
  %v3117 = vadd.f32 %v3109, %v2512
  %v3118 = vadd.f32 %v3110, %v2513
  %v3119 = vpack.c.bf16 %v3112, %v3111
  %v3120 = vpack.c.bf16 %v3114, %v3113
  %v3121 = vpack.c.bf16 %v3116, %v3115
  %v3122 = vpack.c.bf16 %v3118, %v3117
  %s3123 = scalar_lea.vmem %s4, 64
  %v3124 = vld [vmem:[%s3123] sm:$0xff]
  %v3125 = vld [vmem:[%s3123 + $0x8] sm:$0xff]
  %s3126 = scalar_lea.vmem %s5, 64
  %v3127 = vld [vmem:[%s3126] sm:$0xff]
  %v3128 = vld [vmem:[%s3126 + $0x8] sm:$0xff]
  %s3129 = scalar_lea.vmem %s6, 64
  %v3130 = vld [vmem:[%s3129] sm:$0xff]
  %v3131 = vld [vmem:[%s3129 + $0x8] sm:$0xff]
  %3136 = vrot.lane.b32.xlu0 %v3119, 96
  %v3137 = vpop.permute.xlu0 %3136
  %3138 = vrot.lane.b32.xlu0 %v3120, 96
  %v3139 = vpop.permute.xlu0 %3138
  %3140 = vrot.lane.b32.xlu0 %v3121, 96
  %v3141 = vpop.permute.xlu0 %3140
  %3142 = vrot.lane.b32.xlu0 %v3122, 96
  %v3143 = vpop.permute.xlu0 %3142
  %3144 = vrot.lane.b32.xlu0 %v3119, 8
  %v3145 = vpop.permute.xlu0 %3144
  %3146 = vrot.lane.b32.xlu0 %v3120, 8
  %v3147 = vpop.permute.xlu0 %3146
  %3148 = vrot.lane.b32.xlu0 %v3121, 8
  %v3149 = vpop.permute.xlu0 %3148
  %3150 = vrot.lane.b32.xlu0 %v3122, 8
  %v3151 = vpop.permute.xlu0 %3150
  %v3154 = vsel %vm2547, %v3137, %v3145
  %v3158 = vsel %vm2547, %v3139, %v3147
  %v3162 = vsel %vm2547, %v3141, %v3149
  %v3166 = vsel %vm2547, %v3143, %v3151
  %3168 = vrot.lane.b32.xlu0 %v3119, 94
  %v3169 = vpop.permute.xlu0 %3168
  %3170 = vrot.lane.b32.xlu0 %v3120, 94
  %v3171 = vpop.permute.xlu0 %3170
  %3172 = vrot.lane.b32.xlu0 %v3121, 94
  %v3173 = vpop.permute.xlu0 %3172
  %3174 = vrot.lane.b32.xlu0 %v3122, 94
  %v3175 = vpop.permute.xlu0 %3174
  %3176 = vrot.lane.b32.xlu0 %v3119, 6
  %v3177 = vpop.permute.xlu0 %3176
  %3178 = vrot.lane.b32.xlu0 %v3120, 6
  %v3179 = vpop.permute.xlu0 %3178
  %3180 = vrot.lane.b32.xlu0 %v3121, 6
  %v3181 = vpop.permute.xlu0 %3180
  %3182 = vrot.lane.b32.xlu0 %v3122, 6
  %v3183 = vpop.permute.xlu0 %3182
  %v3186 = vsel %vm2580, %v3169, %v3177
  %v3190 = vsel %vm2580, %v3171, %v3179
  %v3194 = vsel %vm2580, %v3173, %v3181
  %v3198 = vsel %vm2580, %v3175, %v3183
  %3200 = vrot.lane.b32.xlu0 %v3119, 92
  %v3201 = vpop.permute.xlu0 %3200
  %3202 = vrot.lane.b32.xlu0 %v3120, 92
  %v3203 = vpop.permute.xlu0 %3202
  %3204 = vrot.lane.b32.xlu0 %v3121, 92
  %v3205 = vpop.permute.xlu0 %3204
  %3206 = vrot.lane.b32.xlu0 %v3122, 92
  %v3207 = vpop.permute.xlu0 %3206
  %3208 = vrot.lane.b32.xlu0 %v3119, 4
  %v3209 = vpop.permute.xlu0 %3208
  %3210 = vrot.lane.b32.xlu0 %v3120, 4
  %v3211 = vpop.permute.xlu0 %3210
  %3212 = vrot.lane.b32.xlu0 %v3121, 4
  %v3213 = vpop.permute.xlu0 %3212
  %3214 = vrot.lane.b32.xlu0 %v3122, 4
  %v3215 = vpop.permute.xlu0 %3214
  %v3218 = vsel %vm86, %v3201, %v3209
  %v3222 = vsel %vm86, %v3203, %v3211
  %v3226 = vsel %vm86, %v3205, %v3213
  %v3230 = vsel %vm86, %v3207, %v3215
  %3232 = vrot.lane.b32.xlu0 %v3119, 90
  %v3233 = vpop.permute.xlu0 %3232
  %3234 = vrot.lane.b32.xlu0 %v3120, 90
  %v3235 = vpop.permute.xlu0 %3234
  %3236 = vrot.lane.b32.xlu0 %v3121, 90
  %v3237 = vpop.permute.xlu0 %3236
  %3238 = vrot.lane.b32.xlu0 %v3122, 90
  %v3239 = vpop.permute.xlu0 %3238
  %3240 = vrot.lane.b32.xlu0 %v3119, 2
  %v3241 = vpop.permute.xlu0 %3240
  %3242 = vrot.lane.b32.xlu0 %v3120, 2
  %v3243 = vpop.permute.xlu0 %3242
  %3244 = vrot.lane.b32.xlu0 %v3121, 2
  %v3245 = vpop.permute.xlu0 %3244
  %3246 = vrot.lane.b32.xlu0 %v3122, 2
  %v3247 = vpop.permute.xlu0 %3246
  %v3250 = vsel %vm144, %v3233, %v3241
  %v3254 = vsel %vm144, %v3235, %v3243
  %v3258 = vsel %vm144, %v3237, %v3245
  %v3262 = vsel %vm144, %v3239, %v3247
  %3264 = vrot.lane.b32.xlu0 %v3119, 126
  %v3265 = vpop.permute.xlu0 %3264
  %3266 = vrot.lane.b32.xlu0 %v3120, 126
  %v3267 = vpop.permute.xlu0 %3266
  %3268 = vrot.lane.b32.xlu0 %v3121, 126
  %v3269 = vpop.permute.xlu0 %3268
  %3270 = vrot.lane.b32.xlu0 %v3122, 126
  %v3271 = vpop.permute.xlu0 %3270
  %3272 = vrot.lane.b32.xlu0 %v3119, 38
  %v3273 = vpop.permute.xlu0 %3272
  %3274 = vrot.lane.b32.xlu0 %v3120, 38
  %v3275 = vpop.permute.xlu0 %3274
  %3276 = vrot.lane.b32.xlu0 %v3121, 38
  %v3277 = vpop.permute.xlu0 %3276
  %3278 = vrot.lane.b32.xlu0 %v3122, 38
  %v3279 = vpop.permute.xlu0 %3278
  %v3282 = vsel %vm231, %v3265, %v3273
  %v3286 = vsel %vm231, %v3267, %v3275
  %v3290 = vsel %vm231, %v3269, %v3277
  %v3294 = vsel %vm231, %v3271, %v3279
  %3296 = vrot.lane.b32.xlu0 %v3119, 124
  %v3297 = vpop.permute.xlu0 %3296
  %3298 = vrot.lane.b32.xlu0 %v3120, 124
  %v3299 = vpop.permute.xlu0 %3298
  %3300 = vrot.lane.b32.xlu0 %v3121, 124
  %v3301 = vpop.permute.xlu0 %3300
  %3302 = vrot.lane.b32.xlu0 %v3122, 124
  %v3303 = vpop.permute.xlu0 %3302
  %3304 = vrot.lane.b32.xlu0 %v3119, 36
  %v3305 = vpop.permute.xlu0 %3304
  %3306 = vrot.lane.b32.xlu0 %v3120, 36
  %v3307 = vpop.permute.xlu0 %3306
  %3308 = vrot.lane.b32.xlu0 %v3121, 36
  %v3309 = vpop.permute.xlu0 %3308
  %3310 = vrot.lane.b32.xlu0 %v3122, 36
  %v3311 = vpop.permute.xlu0 %3310
  %v3314 = vsel %vm289, %v3297, %v3305
  %v3318 = vsel %vm289, %v3299, %v3307
  %v3322 = vsel %vm289, %v3301, %v3309
  %v3326 = vsel %vm289, %v3303, %v3311
  %3328 = vrot.lane.b32.xlu0 %v3119, 122
  %v3329 = vpop.permute.xlu0 %3328
  %3330 = vrot.lane.b32.xlu0 %v3120, 122
  %v3331 = vpop.permute.xlu0 %3330
  %3332 = vrot.lane.b32.xlu0 %v3121, 122
  %v3333 = vpop.permute.xlu0 %3332
  %3334 = vrot.lane.b32.xlu0 %v3122, 122
  %v3335 = vpop.permute.xlu0 %3334
  %3336 = vrot.lane.b32.xlu0 %v3119, 34
  %v3337 = vpop.permute.xlu0 %3336
  %3338 = vrot.lane.b32.xlu0 %v3120, 34
  %v3339 = vpop.permute.xlu0 %3338
  %3340 = vrot.lane.b32.xlu0 %v3121, 34
  %v3341 = vpop.permute.xlu0 %3340
  %3342 = vrot.lane.b32.xlu0 %v3122, 34
  %v3343 = vpop.permute.xlu0 %3342
  %v3346 = vsel %vm2741, %v3329, %v3337
  %v3350 = vsel %vm2741, %v3331, %v3339
  %v3354 = vsel %vm2741, %v3333, %v3341
  %v3358 = vsel %vm2741, %v3335, %v3343
  %3360 = vrot.lane.b32.xlu0 %v3119, 120
  %v3361 = vpop.permute.xlu0 %3360
  %3362 = vrot.lane.b32.xlu0 %v3120, 120
  %v3363 = vpop.permute.xlu0 %3362
  %3364 = vrot.lane.b32.xlu0 %v3121, 120
  %v3365 = vpop.permute.xlu0 %3364
  %3366 = vrot.lane.b32.xlu0 %v3122, 120
  %v3367 = vpop.permute.xlu0 %3366
  %3368 = vrot.lane.b32.xlu0 %v3119, 32
  %v3369 = vpop.permute.xlu0 %3368
  %3370 = vrot.lane.b32.xlu0 %v3120, 32
  %v3371 = vpop.permute.xlu0 %3370
  %3372 = vrot.lane.b32.xlu0 %v3121, 32
  %v3373 = vpop.permute.xlu0 %3372
  %3374 = vrot.lane.b32.xlu0 %v3122, 32
  %v3375 = vpop.permute.xlu0 %3374
  %v3378 = vsel %vm2774, %v3361, %v3369
  %v3382 = vsel %vm2774, %v3363, %v3371
  %v3386 = vsel %vm2774, %v3365, %v3373
  %v3390 = vsel %vm2774, %v3367, %v3375
  %v3394 = vunpack.c.l.b16 %v3124
  %v3395 = vunpack.c.h.b16 %v3124
  %v3396 = vunpack.c.l.b16 %v3125
  %v3397 = vunpack.c.h.b16 %v3125
  %v3398 = vpack.c.b16 %v3396, %v3394
  %v3399 = vpack.c.b16 %v3397, %v3395
  %v3402 = vsel %vm992, %v3399, 0
  %3404 = vmatprep.subr.bf16.mxu0 0
  %3405 = vmatpush1.bf16.msra.mxu0 %v3346
  %3406 = vmatprep.subr.bf16.mxu0 0
  %3407 = vmatpush1.bf16.msra.mxu0 %v3314
  %3408 = vmatprep.subr.bf16.mxu0 0
  %3409 = vmatpush1.bf16.msra.mxu0 %v3282
  %3410 = vmatprep.subr.bf16.mxu0 0
  %3411 = vmatpush1.bf16.msra.mxu0 %v3119
  %3412 = vmatprep.subr.bf16.mxu0 0
  %3413 = vmatpush1.bf16.msra.mxu0 %v3250
  %3414 = vmatprep.subr.bf16.mxu0 0
  %3415 = vmatpush1.bf16.msra.mxu0 %v3218
  %3416 = vmatprep.subr.bf16.mxu0 0
  %3417 = vmatpush1.bf16.msra.mxu0 %v3186
  %3418 = vmatprep.subr.bf16.mxu0 0
  %3419 = vmatpush1.bf16.msra.mxu0 %v3154
  %3420 = vmatprep.subr.bf16.mxu0 0
  %3421 = vmatpush2.bf16.msra.mxu0 0
  %3422 = vmatprep.subr.bf16.mxu0 0
  %3423 = vmatpush2.bf16.msra.mxu0 0
  %3424 = vmatprep.subr.bf16.mxu0 0
  %3425 = vmatpush2.bf16.msra.mxu0 0
  %3426 = vmatprep.subr.bf16.mxu0 0
  %3427 = vmatpush2.bf16.msra.mxu0 0
  %3428 = vmatprep.subr.bf16.mxu0 0
  %3429 = vmatpush2.bf16.msra.mxu0 0
  %3430 = vmatprep.subr.bf16.mxu0 0
  %3431 = vmatpush2.bf16.msra.mxu0 0
  %3432 = vmatprep.subr.bf16.mxu0 0
  %3433 = vmatpush2.bf16.msra.mxu0 0
  %3434 = vmatprep.subr.bf16.mxu0 0
  %3435 = vmatpush2.bf16.msra.mxu0 %v3378
  %3436 = vmatprep.mubr.bf16.mxu0 %v3402
  %3437 = vmatmul.mubr.bf16.gmra.mxu0 %v3398
  %v3438 = vpop.f32.mrf.mxu0
  %v3439 = vadd.f32 0.0, %v3438
  %v3440 = vpop.f32.mrf.mxu0
  %v3441 = vpop.f32.mrf.mxu0
  %v3442 = vadd.f32 0.0, %v3441
  %v3443 = vpop.f32.mrf.mxu0
  %3444 = vdwg.mxu0
  %3445 = vmatprep.subr.bf16.mxu0 0
  %3446 = vmatpush1.bf16.msra.mxu0 %v3350
  %3447 = vmatprep.subr.bf16.mxu0 0
  %3448 = vmatpush1.bf16.msra.mxu0 %v3318
  %3449 = vmatprep.subr.bf16.mxu0 0
  %3450 = vmatpush1.bf16.msra.mxu0 %v3286
  %3451 = vmatprep.subr.bf16.mxu0 0
  %3452 = vmatpush1.bf16.msra.mxu0 %v3120
  %3453 = vmatprep.subr.bf16.mxu0 0
  %3454 = vmatpush1.bf16.msra.mxu0 %v3254
  %3455 = vmatprep.subr.bf16.mxu0 0
  %3456 = vmatpush1.bf16.msra.mxu0 %v3222
  %3457 = vmatprep.subr.bf16.mxu0 0
  %3458 = vmatpush1.bf16.msra.mxu0 %v3190
  %3459 = vmatprep.subr.bf16.mxu0 0
  %3460 = vmatpush1.bf16.msra.mxu0 %v3158
  %3461 = vmatprep.subr.bf16.mxu0 0
  %3462 = vmatpush2.bf16.msra.mxu0 0
  %3463 = vmatprep.subr.bf16.mxu0 0
  %3464 = vmatpush2.bf16.msra.mxu0 0
  %3465 = vmatprep.subr.bf16.mxu0 0
  %3466 = vmatpush2.bf16.msra.mxu0 0
  %3467 = vmatprep.subr.bf16.mxu0 0
  %3468 = vmatpush2.bf16.msra.mxu0 0
  %3469 = vmatprep.subr.bf16.mxu0 0
  %3470 = vmatpush2.bf16.msra.mxu0 0
  %3471 = vmatprep.subr.bf16.mxu0 0
  %3472 = vmatpush2.bf16.msra.mxu0 0
  %3473 = vmatprep.subr.bf16.mxu0 0
  %3474 = vmatpush2.bf16.msra.mxu0 0
  %3475 = vmatprep.subr.bf16.mxu0 0
  %3476 = vmatpush2.bf16.msra.mxu0 %v3382
  %3477 = vmatprep.mubr.bf16.mxu0 %v3402
  %3478 = vmatmul.mubr.bf16.gmra.mxu0 %v3398
  %v3479 = vpop.f32.mrf.mxu0
  %v3480 = vadd.f32 0.0, %v3479
  %v3481 = vpop.f32.mrf.mxu0
  %v3482 = vpop.f32.mrf.mxu0
  %v3483 = vadd.f32 0.0, %v3482
  %v3484 = vpop.f32.mrf.mxu0
  %3485 = vdwg.mxu0
  %3486 = vmatprep.subr.bf16.mxu0 0
  %3487 = vmatpush1.bf16.msra.mxu0 %v3354
  %3488 = vmatprep.subr.bf16.mxu0 0
  %3489 = vmatpush1.bf16.msra.mxu0 %v3322
  %3490 = vmatprep.subr.bf16.mxu0 0
  %3491 = vmatpush1.bf16.msra.mxu0 %v3290
  %3492 = vmatprep.subr.bf16.mxu0 0
  %3493 = vmatpush1.bf16.msra.mxu0 %v3121
  %3494 = vmatprep.subr.bf16.mxu0 0
  %3495 = vmatpush1.bf16.msra.mxu0 %v3258
  %3496 = vmatprep.subr.bf16.mxu0 0
  %3497 = vmatpush1.bf16.msra.mxu0 %v3226
  %3498 = vmatprep.subr.bf16.mxu0 0
  %3499 = vmatpush1.bf16.msra.mxu0 %v3194
  %3500 = vmatprep.subr.bf16.mxu0 0
  %3501 = vmatpush1.bf16.msra.mxu0 %v3162
  %3502 = vmatprep.subr.bf16.mxu0 0
  %3503 = vmatpush2.bf16.msra.mxu0 0
  %3504 = vmatprep.subr.bf16.mxu0 0
  %3505 = vmatpush2.bf16.msra.mxu0 0
  %3506 = vmatprep.subr.bf16.mxu0 0
  %3507 = vmatpush2.bf16.msra.mxu0 0
  %3508 = vmatprep.subr.bf16.mxu0 0
  %3509 = vmatpush2.bf16.msra.mxu0 0
  %3510 = vmatprep.subr.bf16.mxu0 0
  %3511 = vmatpush2.bf16.msra.mxu0 0
  %3512 = vmatprep.subr.bf16.mxu0 0
  %3513 = vmatpush2.bf16.msra.mxu0 0
  %3514 = vmatprep.subr.bf16.mxu0 0
  %3515 = vmatpush2.bf16.msra.mxu0 0
  %3516 = vmatprep.subr.bf16.mxu0 0
  %3517 = vmatpush2.bf16.msra.mxu0 %v3386
  %3518 = vmatprep.mubr.bf16.mxu0 %v3402
  %3519 = vmatmul.mubr.bf16.gmra.mxu0 %v3398
  %v3520 = vpop.f32.mrf.mxu0
  %v3521 = vadd.f32 0.0, %v3520
  %v3522 = vpop.f32.mrf.mxu0
  %v3523 = vpop.f32.mrf.mxu0
  %v3524 = vadd.f32 0.0, %v3523
  %v3525 = vpop.f32.mrf.mxu0
  %3526 = vdwg.mxu0
  %3527 = vmatprep.subr.bf16.mxu0 0
  %3528 = vmatpush1.bf16.msra.mxu0 %v3358
  %3529 = vmatprep.subr.bf16.mxu0 0
  %3530 = vmatpush1.bf16.msra.mxu0 %v3326
  %3531 = vmatprep.subr.bf16.mxu0 0
  %3532 = vmatpush1.bf16.msra.mxu0 %v3294
  %3533 = vmatprep.subr.bf16.mxu0 0
  %3534 = vmatpush1.bf16.msra.mxu0 %v3122
  %3535 = vmatprep.subr.bf16.mxu0 0
  %3536 = vmatpush1.bf16.msra.mxu0 %v3262
  %3537 = vmatprep.subr.bf16.mxu0 0
  %3538 = vmatpush1.bf16.msra.mxu0 %v3230
  %3539 = vmatprep.subr.bf16.mxu0 0
  %3540 = vmatpush1.bf16.msra.mxu0 %v3198
  %3541 = vmatprep.subr.bf16.mxu0 0
  %3542 = vmatpush1.bf16.msra.mxu0 %v3166
  %3543 = vmatprep.subr.bf16.mxu0 0
  %3544 = vmatpush2.bf16.msra.mxu0 0
  %3545 = vmatprep.subr.bf16.mxu0 0
  %3546 = vmatpush2.bf16.msra.mxu0 0
  %3547 = vmatprep.subr.bf16.mxu0 0
  %3548 = vmatpush2.bf16.msra.mxu0 0
  %3549 = vmatprep.subr.bf16.mxu0 0
  %3550 = vmatpush2.bf16.msra.mxu0 0
  %3551 = vmatprep.subr.bf16.mxu0 0
  %3552 = vmatpush2.bf16.msra.mxu0 0
  %3553 = vmatprep.subr.bf16.mxu0 0
  %3554 = vmatpush2.bf16.msra.mxu0 0
  %3555 = vmatprep.subr.bf16.mxu0 0
  %3556 = vmatpush2.bf16.msra.mxu0 0
  %3557 = vmatprep.subr.bf16.mxu0 0
  %3558 = vmatpush2.bf16.msra.mxu0 %v3390
  %3559 = vmatprep.mubr.bf16.mxu0 %v3402
  %3560 = vmatmul.mubr.bf16.gmra.mxu0 %v3398
  %v3561 = vpop.f32.mrf.mxu0
  %v3562 = vadd.f32 0.0, %v3561
  %v3563 = vpop.f32.mrf.mxu0
  %v3564 = vpop.f32.mrf.mxu0
  %v3565 = vadd.f32 0.0, %v3564
  %v3566 = vpop.f32.mrf.mxu0
  %3567 = vdwg.mxu0
  %v3568 = vsel %vm568, %v3439, 0.0
  %3569 = vadd.xlane.f32.xlu0 %v3568
  %v3570 = vpop.xlane.xlu0 %3569
  %v3571 = vsel %vm568, %v3442, 0.0
  %3572 = vadd.xlane.f32.xlu0 %v3571
  %v3573 = vpop.xlane.xlu0 %3572
  %v3574 = vsel %vm568, %v3480, 0.0
  %3575 = vadd.xlane.f32.xlu0 %v3574
  %v3576 = vpop.xlane.xlu0 %3575
  %v3577 = vsel %vm568, %v3483, 0.0
  %3578 = vadd.xlane.f32.xlu0 %v3577
  %v3579 = vpop.xlane.xlu0 %3578
  %v3580 = vsel %vm568, %v3521, 0.0
  %3581 = vadd.xlane.f32.xlu0 %v3580
  %v3582 = vpop.xlane.xlu0 %3581
  %v3583 = vsel %vm568, %v3524, 0.0
  %3584 = vadd.xlane.f32.xlu0 %v3583
  %v3585 = vpop.xlane.xlu0 %3584
  %v3586 = vsel %vm568, %v3562, 0.0
  %3587 = vadd.xlane.f32.xlu0 %v3586
  %v3588 = vpop.xlane.xlu0 %3587
  %v3589 = vsel %vm568, %v3565, 0.0
  %3590 = vadd.xlane.f32.xlu0 %v3589
  %v3591 = vpop.xlane.xlu0 %3590
  %v3592 = vadd.f32 %v3570, %v3576
  %v3593 = vadd.f32 %v3592, %v3582
  %v3594 = vadd.f32 %v3593, %v3588
  %v3595 = vadd.f32 %v3573, %v3579
  %v3596 = vadd.f32 %v3595, %v3585
  %v3597 = vadd.f32 %v3596, %v3591
  %v3598 = vmul.f32 %v3594, 0.00625
  %v3599 = vmul.f32 %v3597, 0.00625
  %v3600 = vsub.f32 %v3439, %v3598
  %v3601 = vsub.f32 %v3442, %v3599
  %v3602 = vsub.f32 %v3480, %v3598
  %v3603 = vsub.f32 %v3483, %v3599
  %v3604 = vsub.f32 %v3521, %v3598
  %v3605 = vsub.f32 %v3524, %v3599
  %v3606 = vsub.f32 %v3562, %v3598
  %v3607 = vsub.f32 %v3565, %v3599
  %v3608 = vmul.f32 %v3600, %v3600
  %v3609 = vmul.f32 %v3601, %v3601
  %v3610 = vmul.f32 %v3602, %v3602
  %v3611 = vmul.f32 %v3603, %v3603
  %v3612 = vmul.f32 %v3604, %v3604
  %v3613 = vmul.f32 %v3605, %v3605
  %v3614 = vmul.f32 %v3606, %v3606
  %v3615 = vmul.f32 %v3607, %v3607
  %v3616 = vsel %vm568, %v3608, 0.0
  %3617 = vadd.xlane.f32.xlu0 %v3616
  %v3618 = vpop.xlane.xlu0 %3617
  %v3619 = vsel %vm568, %v3609, 0.0
  %3620 = vadd.xlane.f32.xlu0 %v3619
  %v3621 = vpop.xlane.xlu0 %3620
  %v3622 = vsel %vm568, %v3610, 0.0
  %3623 = vadd.xlane.f32.xlu0 %v3622
  %v3624 = vpop.xlane.xlu0 %3623
  %v3625 = vsel %vm568, %v3611, 0.0
  %3626 = vadd.xlane.f32.xlu0 %v3625
  %v3627 = vpop.xlane.xlu0 %3626
  %v3628 = vsel %vm568, %v3612, 0.0
  %3629 = vadd.xlane.f32.xlu0 %v3628
  %v3630 = vpop.xlane.xlu0 %3629
  %v3631 = vsel %vm568, %v3613, 0.0
  %3632 = vadd.xlane.f32.xlu0 %v3631
  %v3633 = vpop.xlane.xlu0 %3632
  %v3634 = vsel %vm568, %v3614, 0.0
  %3635 = vadd.xlane.f32.xlu0 %v3634
  %v3636 = vpop.xlane.xlu0 %3635
  %v3637 = vsel %vm568, %v3615, 0.0
  %3638 = vadd.xlane.f32.xlu0 %v3637
  %v3639 = vpop.xlane.xlu0 %3638
  %v3640 = vadd.f32 %v3618, %v3624
  %v3641 = vadd.f32 %v3640, %v3630
  %v3642 = vadd.f32 %v3641, %v3636
  %v3643 = vadd.f32 %v3621, %v3627
  %v3644 = vadd.f32 %v3643, %v3633
  %v3645 = vadd.f32 %v3644, %v3639
  %v3646 = vmul.f32 %v3642, 0.00625
  %v3647 = vmul.f32 %v3645, 0.00625
  %v3648 = vadd.f32 %v3646, 1e-05
  %v3649 = vadd.f32 %v3647, 1e-05
  %v3650 = vrsqrt.pop %v3648
  %v3651 = vrsqrt.pop %v3649
  %v3652 = vmul.f32 %v3600, %v3650
  %v3653 = vmul.f32 %v3601, %v3651
  %v3654 = vmul.f32 %v3602, %v3650
  %v3655 = vmul.f32 %v3603, %v3651
  %v3656 = vmul.f32 %v3604, %v3650
  %v3657 = vmul.f32 %v3605, %v3651
  %v3658 = vmul.f32 %v3606, %v3650
  %v3659 = vmul.f32 %v3607, %v3651
  %3661 = vset.pattern.permute.xlu0 0
  %3662 = vperm.xlu0 %3661, %v3127
  %v3663 = vpop.permute.xlu0 %3662
  %3666 = vset.pattern.permute.xlu0 0
  %3667 = vperm.xlu0 %3666, %v3128
  %v3668 = vpop.permute.xlu0 %3667
  %v3670 = vmul.f32 %v3652, %v3663
  %v3671 = vmul.f32 %v3653, %v3668
  %v3672 = vmul.f32 %v3654, %v3663
  %v3673 = vmul.f32 %v3655, %v3668
  %v3674 = vmul.f32 %v3656, %v3663
  %v3675 = vmul.f32 %v3657, %v3668
  %v3676 = vmul.f32 %v3658, %v3663
  %v3677 = vmul.f32 %v3659, %v3668
  %3679 = vset.pattern.permute.xlu0 0
  %3680 = vperm.xlu0 %3679, %v3130
  %v3681 = vpop.permute.xlu0 %3680
  %3684 = vset.pattern.permute.xlu0 0
  %3685 = vperm.xlu0 %3684, %v3131
  %v3686 = vpop.permute.xlu0 %3685
  %v3688 = vadd.f32 %v3670, %v3681
  %v3689 = vadd.f32 %v3671, %v3686
  %v3690 = vadd.f32 %v3672, %v3681
  %v3691 = vadd.f32 %v3673, %v3686
  %v3692 = vadd.f32 %v3674, %v3681
  %v3693 = vadd.f32 %v3675, %v3686
  %v3694 = vadd.f32 %v3676, %v3681
  %v3695 = vadd.f32 %v3677, %v3686
  %v3696 = vmul.f32 %v3688, 0.01
  %v3697 = vmul.f32 %v3689, 0.01
  %v3698 = vmul.f32 %v3690, 0.01
  %v3699 = vmul.f32 %v3691, 0.01
  %v3700 = vmul.f32 %v3692, 0.01
  %v3701 = vmul.f32 %v3693, 0.01
  %v3702 = vmul.f32 %v3694, 0.01
  %v3703 = vmul.f32 %v3695, 0.01
  %v3704 = vmax.f32 %v3688, %v3696
  %v3705 = vmax.f32 %v3689, %v3697
  %v3706 = vmax.f32 %v3690, %v3698
  %v3707 = vmax.f32 %v3691, %v3699
  %v3708 = vmax.f32 %v3692, %v3700
  %v3709 = vmax.f32 %v3693, %v3701
  %v3710 = vmax.f32 %v3694, %v3702
  %v3711 = vmax.f32 %v3695, %v3703
  %v3712 = vadd.f32 %v3704, %v3111
  %v3713 = vadd.f32 %v3705, %v3112
  %v3714 = vadd.f32 %v3706, %v3113
  %v3715 = vadd.f32 %v3707, %v3114
  %v3716 = vadd.f32 %v3708, %v3115
  %v3717 = vadd.f32 %v3709, %v3116
  %v3718 = vadd.f32 %v3710, %v3117
  %v3719 = vadd.f32 %v3711, %v3118
  %v3720 = vpack.c.bf16 %v3713, %v3712
  %v3721 = vpack.c.bf16 %v3715, %v3714
  %v3722 = vpack.c.bf16 %v3717, %v3716
  %v3723 = vpack.c.bf16 %v3719, %v3718
  %s3724 = scalar_lea.vmem %s4, 80
  %v3725 = vld [vmem:[%s3724] sm:$0xff]
  %v3726 = vld [vmem:[%s3724 + $0x8] sm:$0xff]
  %s3727 = scalar_lea.vmem %s5, 80
  %v3728 = vld [vmem:[%s3727] sm:$0xff]
  %v3729 = vld [vmem:[%s3727 + $0x8] sm:$0xff]
  %s3730 = scalar_lea.vmem %s6, 80
  %v3731 = vld [vmem:[%s3730] sm:$0xff]
  %v3732 = vld [vmem:[%s3730 + $0x8] sm:$0xff]
  %3737 = vrot.lane.b32.xlu0 %v3720, 104
  %v3738 = vpop.permute.xlu0 %3737
  %3739 = vrot.lane.b32.xlu0 %v3721, 104
  %v3740 = vpop.permute.xlu0 %3739
  %3741 = vrot.lane.b32.xlu0 %v3722, 104
  %v3742 = vpop.permute.xlu0 %3741
  %3743 = vrot.lane.b32.xlu0 %v3723, 104
  %v3744 = vpop.permute.xlu0 %3743
  %3745 = vrot.lane.b32.xlu0 %v3720, 16
  %v3746 = vpop.permute.xlu0 %3745
  %3747 = vrot.lane.b32.xlu0 %v3721, 16
  %v3748 = vpop.permute.xlu0 %3747
  %3749 = vrot.lane.b32.xlu0 %v3722, 16
  %v3750 = vpop.permute.xlu0 %3749
  %3751 = vrot.lane.b32.xlu0 %v3723, 16
  %v3752 = vpop.permute.xlu0 %3751
  %v3755 = vsel %vm992, %v3738, %v3746
  %v3759 = vsel %vm992, %v3740, %v3748
  %v3763 = vsel %vm992, %v3742, %v3750
  %v3767 = vsel %vm992, %v3744, %v3752
  %3769 = vrot.lane.b32.xlu0 %v3720, 100
  %v3770 = vpop.permute.xlu0 %3769
  %3771 = vrot.lane.b32.xlu0 %v3721, 100
  %v3772 = vpop.permute.xlu0 %3771
  %3773 = vrot.lane.b32.xlu0 %v3722, 100
  %v3774 = vpop.permute.xlu0 %3773
  %3775 = vrot.lane.b32.xlu0 %v3723, 100
  %v3776 = vpop.permute.xlu0 %3775
  %3777 = vrot.lane.b32.xlu0 %v3720, 12
  %v3778 = vpop.permute.xlu0 %3777
  %3779 = vrot.lane.b32.xlu0 %v3721, 12
  %v3780 = vpop.permute.xlu0 %3779
  %3781 = vrot.lane.b32.xlu0 %v3722, 12
  %v3782 = vpop.permute.xlu0 %3781
  %3783 = vrot.lane.b32.xlu0 %v3723, 12
  %v3784 = vpop.permute.xlu0 %3783
  %vm3785 = vcmask 97280
  %v3788 = vsel %vm3785, %v3770, %v3778
  %v3792 = vsel %vm3785, %v3772, %v3780
  %v3796 = vsel %vm3785, %v3774, %v3782
  %v3800 = vsel %vm3785, %v3776, %v3784
  %3802 = vrot.lane.b32.xlu0 %v3720, 96
  %v3803 = vpop.permute.xlu0 %3802
  %3804 = vrot.lane.b32.xlu0 %v3721, 96
  %v3805 = vpop.permute.xlu0 %3804
  %3806 = vrot.lane.b32.xlu0 %v3722, 96
  %v3807 = vpop.permute.xlu0 %3806
  %3808 = vrot.lane.b32.xlu0 %v3723, 96
  %v3809 = vpop.permute.xlu0 %3808
  %3810 = vrot.lane.b32.xlu0 %v3720, 8
  %v3811 = vpop.permute.xlu0 %3810
  %3812 = vrot.lane.b32.xlu0 %v3721, 8
  %v3813 = vpop.permute.xlu0 %3812
  %3814 = vrot.lane.b32.xlu0 %v3722, 8
  %v3815 = vpop.permute.xlu0 %3814
  %3816 = vrot.lane.b32.xlu0 %v3723, 8
  %v3817 = vpop.permute.xlu0 %3816
  %v3820 = vsel %vm2547, %v3803, %v3811
  %v3824 = vsel %vm2547, %v3805, %v3813
  %v3828 = vsel %vm2547, %v3807, %v3815
  %v3832 = vsel %vm2547, %v3809, %v3817
  %3834 = vrot.lane.b32.xlu0 %v3720, 92
  %v3835 = vpop.permute.xlu0 %3834
  %3836 = vrot.lane.b32.xlu0 %v3721, 92
  %v3837 = vpop.permute.xlu0 %3836
  %3838 = vrot.lane.b32.xlu0 %v3722, 92
  %v3839 = vpop.permute.xlu0 %3838
  %3840 = vrot.lane.b32.xlu0 %v3723, 92
  %v3841 = vpop.permute.xlu0 %3840
  %3842 = vrot.lane.b32.xlu0 %v3720, 4
  %v3843 = vpop.permute.xlu0 %3842
  %3844 = vrot.lane.b32.xlu0 %v3721, 4
  %v3845 = vpop.permute.xlu0 %3844
  %3846 = vrot.lane.b32.xlu0 %v3722, 4
  %v3847 = vpop.permute.xlu0 %3846
  %3848 = vrot.lane.b32.xlu0 %v3723, 4
  %v3849 = vpop.permute.xlu0 %3848
  %v3852 = vsel %vm86, %v3835, %v3843
  %v3856 = vsel %vm86, %v3837, %v3845
  %v3860 = vsel %vm86, %v3839, %v3847
  %v3864 = vsel %vm86, %v3841, %v3849
  %3866 = vrot.lane.b32.xlu0 %v3720, 124
  %v3867 = vpop.permute.xlu0 %3866
  %3868 = vrot.lane.b32.xlu0 %v3721, 124
  %v3869 = vpop.permute.xlu0 %3868
  %3870 = vrot.lane.b32.xlu0 %v3722, 124
  %v3871 = vpop.permute.xlu0 %3870
  %3872 = vrot.lane.b32.xlu0 %v3723, 124
  %v3873 = vpop.permute.xlu0 %3872
  %3874 = vrot.lane.b32.xlu0 %v3720, 36
  %v3875 = vpop.permute.xlu0 %3874
  %3876 = vrot.lane.b32.xlu0 %v3721, 36
  %v3877 = vpop.permute.xlu0 %3876
  %3878 = vrot.lane.b32.xlu0 %v3722, 36
  %v3879 = vpop.permute.xlu0 %3878
  %3880 = vrot.lane.b32.xlu0 %v3723, 36
  %v3881 = vpop.permute.xlu0 %3880
  %v3884 = vsel %vm289, %v3867, %v3875
  %v3888 = vsel %vm289, %v3869, %v3877
  %v3892 = vsel %vm289, %v3871, %v3879
  %v3896 = vsel %vm289, %v3873, %v3881
  %3898 = vrot.lane.b32.xlu0 %v3720, 120
  %v3899 = vpop.permute.xlu0 %3898
  %3900 = vrot.lane.b32.xlu0 %v3721, 120
  %v3901 = vpop.permute.xlu0 %3900
  %3902 = vrot.lane.b32.xlu0 %v3722, 120
  %v3903 = vpop.permute.xlu0 %3902
  %3904 = vrot.lane.b32.xlu0 %v3723, 120
  %v3905 = vpop.permute.xlu0 %3904
  %3906 = vrot.lane.b32.xlu0 %v3720, 32
  %v3907 = vpop.permute.xlu0 %3906
  %3908 = vrot.lane.b32.xlu0 %v3721, 32
  %v3909 = vpop.permute.xlu0 %3908
  %3910 = vrot.lane.b32.xlu0 %v3722, 32
  %v3911 = vpop.permute.xlu0 %3910
  %3912 = vrot.lane.b32.xlu0 %v3723, 32
  %v3913 = vpop.permute.xlu0 %3912
  %v3916 = vsel %vm2774, %v3899, %v3907
  %v3920 = vsel %vm2774, %v3901, %v3909
  %v3924 = vsel %vm2774, %v3903, %v3911
  %v3928 = vsel %vm2774, %v3905, %v3913
  %3930 = vrot.lane.b32.xlu0 %v3720, 116
  %v3931 = vpop.permute.xlu0 %3930
  %3932 = vrot.lane.b32.xlu0 %v3721, 116
  %v3933 = vpop.permute.xlu0 %3932
  %3934 = vrot.lane.b32.xlu0 %v3722, 116
  %v3935 = vpop.permute.xlu0 %3934
  %3936 = vrot.lane.b32.xlu0 %v3723, 116
  %v3937 = vpop.permute.xlu0 %3936
  %3938 = vrot.lane.b32.xlu0 %v3720, 28
  %v3939 = vpop.permute.xlu0 %3938
  %3940 = vrot.lane.b32.xlu0 %v3721, 28
  %v3941 = vpop.permute.xlu0 %3940
  %3942 = vrot.lane.b32.xlu0 %v3722, 28
  %v3943 = vpop.permute.xlu0 %3942
  %3944 = vrot.lane.b32.xlu0 %v3723, 28
  %v3945 = vpop.permute.xlu0 %3944
  %vm3946 = vcmask 228352
  %v3949 = vsel %vm3946, %v3931, %v3939
  %v3953 = vsel %vm3946, %v3933, %v3941
  %v3957 = vsel %vm3946, %v3935, %v3943
  %v3961 = vsel %vm3946, %v3937, %v3945
  %3963 = vrot.lane.b32.xlu0 %v3720, 112
  %v3964 = vpop.permute.xlu0 %3963
  %3965 = vrot.lane.b32.xlu0 %v3721, 112
  %v3966 = vpop.permute.xlu0 %3965
  %3967 = vrot.lane.b32.xlu0 %v3722, 112
  %v3968 = vpop.permute.xlu0 %3967
  %3969 = vrot.lane.b32.xlu0 %v3723, 112
  %v3970 = vpop.permute.xlu0 %3969
  %3971 = vrot.lane.b32.xlu0 %v3720, 24
  %v3972 = vpop.permute.xlu0 %3971
  %3973 = vrot.lane.b32.xlu0 %v3721, 24
  %v3974 = vpop.permute.xlu0 %3973
  %3975 = vrot.lane.b32.xlu0 %v3722, 24
  %v3976 = vpop.permute.xlu0 %3975
  %3977 = vrot.lane.b32.xlu0 %v3723, 24
  %v3978 = vpop.permute.xlu0 %3977
  %vm3979 = vcmask 195584
  %v3982 = vsel %vm3979, %v3964, %v3972
  %v3986 = vsel %vm3979, %v3966, %v3974
  %v3990 = vsel %vm3979, %v3968, %v3976
  %v3994 = vsel %vm3979, %v3970, %v3978
  %v3998 = vunpack.c.l.b16 %v3725
  %v3999 = vunpack.c.h.b16 %v3725
  %v4000 = vunpack.c.l.b16 %v3726
  %v4001 = vunpack.c.h.b16 %v3726
  %v4002 = vpack.c.b16 %v4000, %v3998
  %v4003 = vpack.c.b16 %v4001, %v3999
  %v4006 = vsel %vm992, %v4003, 0
  %4008 = vmatprep.subr.bf16.mxu0 0
  %4009 = vmatpush1.bf16.msra.mxu0 %v3949
  %4010 = vmatprep.subr.bf16.mxu0 0
  %4011 = vmatpush1.bf16.msra.mxu0 %v3916
  %4012 = vmatprep.subr.bf16.mxu0 0
  %4013 = vmatpush1.bf16.msra.mxu0 %v3884
  %4014 = vmatprep.subr.bf16.mxu0 0
  %4015 = vmatpush1.bf16.msra.mxu0 %v3720
  %4016 = vmatprep.subr.bf16.mxu0 0
  %4017 = vmatpush1.bf16.msra.mxu0 %v3852
  %4018 = vmatprep.subr.bf16.mxu0 0
  %4019 = vmatpush1.bf16.msra.mxu0 %v3820
  %4020 = vmatprep.subr.bf16.mxu0 0
  %4021 = vmatpush1.bf16.msra.mxu0 %v3788
  %4022 = vmatprep.subr.bf16.mxu0 0
  %4023 = vmatpush1.bf16.msra.mxu0 %v3755
  %4024 = vmatprep.subr.bf16.mxu0 0
  %4025 = vmatpush2.bf16.msra.mxu0 0
  %4026 = vmatprep.subr.bf16.mxu0 0
  %4027 = vmatpush2.bf16.msra.mxu0 0
  %4028 = vmatprep.subr.bf16.mxu0 0
  %4029 = vmatpush2.bf16.msra.mxu0 0
  %4030 = vmatprep.subr.bf16.mxu0 0
  %4031 = vmatpush2.bf16.msra.mxu0 0
  %4032 = vmatprep.subr.bf16.mxu0 0
  %4033 = vmatpush2.bf16.msra.mxu0 0
  %4034 = vmatprep.subr.bf16.mxu0 0
  %4035 = vmatpush2.bf16.msra.mxu0 0
  %4036 = vmatprep.subr.bf16.mxu0 0
  %4037 = vmatpush2.bf16.msra.mxu0 0
  %4038 = vmatprep.subr.bf16.mxu0 0
  %4039 = vmatpush2.bf16.msra.mxu0 %v3982
  %4040 = vmatprep.mubr.bf16.mxu0 %v4006
  %4041 = vmatmul.mubr.bf16.gmra.mxu0 %v4002
  %v4042 = vpop.f32.mrf.mxu0
  %v4043 = vadd.f32 0.0, %v4042
  %v4044 = vpop.f32.mrf.mxu0
  %v4045 = vpop.f32.mrf.mxu0
  %v4046 = vadd.f32 0.0, %v4045
  %v4047 = vpop.f32.mrf.mxu0
  %4048 = vdwg.mxu0
  %4049 = vmatprep.subr.bf16.mxu0 0
  %4050 = vmatpush1.bf16.msra.mxu0 %v3953
  %4051 = vmatprep.subr.bf16.mxu0 0
  %4052 = vmatpush1.bf16.msra.mxu0 %v3920
  %4053 = vmatprep.subr.bf16.mxu0 0
  %4054 = vmatpush1.bf16.msra.mxu0 %v3888
  %4055 = vmatprep.subr.bf16.mxu0 0
  %4056 = vmatpush1.bf16.msra.mxu0 %v3721
  %4057 = vmatprep.subr.bf16.mxu0 0
  %4058 = vmatpush1.bf16.msra.mxu0 %v3856
  %4059 = vmatprep.subr.bf16.mxu0 0
  %4060 = vmatpush1.bf16.msra.mxu0 %v3824
  %4061 = vmatprep.subr.bf16.mxu0 0
  %4062 = vmatpush1.bf16.msra.mxu0 %v3792
  %4063 = vmatprep.subr.bf16.mxu0 0
  %4064 = vmatpush1.bf16.msra.mxu0 %v3759
  %4065 = vmatprep.subr.bf16.mxu0 0
  %4066 = vmatpush2.bf16.msra.mxu0 0
  %4067 = vmatprep.subr.bf16.mxu0 0
  %4068 = vmatpush2.bf16.msra.mxu0 0
  %4069 = vmatprep.subr.bf16.mxu0 0
  %4070 = vmatpush2.bf16.msra.mxu0 0
  %4071 = vmatprep.subr.bf16.mxu0 0
  %4072 = vmatpush2.bf16.msra.mxu0 0
  %4073 = vmatprep.subr.bf16.mxu0 0
  %4074 = vmatpush2.bf16.msra.mxu0 0
  %4075 = vmatprep.subr.bf16.mxu0 0
  %4076 = vmatpush2.bf16.msra.mxu0 0
  %4077 = vmatprep.subr.bf16.mxu0 0
  %4078 = vmatpush2.bf16.msra.mxu0 0
  %4079 = vmatprep.subr.bf16.mxu0 0
  %4080 = vmatpush2.bf16.msra.mxu0 %v3986
  %4081 = vmatprep.mubr.bf16.mxu0 %v4006
  %4082 = vmatmul.mubr.bf16.gmra.mxu0 %v4002
  %v4083 = vpop.f32.mrf.mxu0
  %v4084 = vadd.f32 0.0, %v4083
  %v4085 = vpop.f32.mrf.mxu0
  %v4086 = vpop.f32.mrf.mxu0
  %v4087 = vadd.f32 0.0, %v4086
  %v4088 = vpop.f32.mrf.mxu0
  %4089 = vdwg.mxu0
  %4090 = vmatprep.subr.bf16.mxu0 0
  %4091 = vmatpush1.bf16.msra.mxu0 %v3957
  %4092 = vmatprep.subr.bf16.mxu0 0
  %4093 = vmatpush1.bf16.msra.mxu0 %v3924
  %4094 = vmatprep.subr.bf16.mxu0 0
  %4095 = vmatpush1.bf16.msra.mxu0 %v3892
  %4096 = vmatprep.subr.bf16.mxu0 0
  %4097 = vmatpush1.bf16.msra.mxu0 %v3722
  %4098 = vmatprep.subr.bf16.mxu0 0
  %4099 = vmatpush1.bf16.msra.mxu0 %v3860
  %4100 = vmatprep.subr.bf16.mxu0 0
  %4101 = vmatpush1.bf16.msra.mxu0 %v3828
  %4102 = vmatprep.subr.bf16.mxu0 0
  %4103 = vmatpush1.bf16.msra.mxu0 %v3796
  %4104 = vmatprep.subr.bf16.mxu0 0
  %4105 = vmatpush1.bf16.msra.mxu0 %v3763
  %4106 = vmatprep.subr.bf16.mxu0 0
  %4107 = vmatpush2.bf16.msra.mxu0 0
  %4108 = vmatprep.subr.bf16.mxu0 0
  %4109 = vmatpush2.bf16.msra.mxu0 0
  %4110 = vmatprep.subr.bf16.mxu0 0
  %4111 = vmatpush2.bf16.msra.mxu0 0
  %4112 = vmatprep.subr.bf16.mxu0 0
  %4113 = vmatpush2.bf16.msra.mxu0 0
  %4114 = vmatprep.subr.bf16.mxu0 0
  %4115 = vmatpush2.bf16.msra.mxu0 0
  %4116 = vmatprep.subr.bf16.mxu0 0
  %4117 = vmatpush2.bf16.msra.mxu0 0
  %4118 = vmatprep.subr.bf16.mxu0 0
  %4119 = vmatpush2.bf16.msra.mxu0 0
  %4120 = vmatprep.subr.bf16.mxu0 0
  %4121 = vmatpush2.bf16.msra.mxu0 %v3990
  %4122 = vmatprep.mubr.bf16.mxu0 %v4006
  %4123 = vmatmul.mubr.bf16.gmra.mxu0 %v4002
  %v4124 = vpop.f32.mrf.mxu0
  %v4125 = vadd.f32 0.0, %v4124
  %v4126 = vpop.f32.mrf.mxu0
  %v4127 = vpop.f32.mrf.mxu0
  %v4128 = vadd.f32 0.0, %v4127
  %v4129 = vpop.f32.mrf.mxu0
  %4130 = vdwg.mxu0
  %4131 = vmatprep.subr.bf16.mxu0 0
  %4132 = vmatpush1.bf16.msra.mxu0 %v3961
  %4133 = vmatprep.subr.bf16.mxu0 0
  %4134 = vmatpush1.bf16.msra.mxu0 %v3928
  %4135 = vmatprep.subr.bf16.mxu0 0
  %4136 = vmatpush1.bf16.msra.mxu0 %v3896
  %4137 = vmatprep.subr.bf16.mxu0 0
  %4138 = vmatpush1.bf16.msra.mxu0 %v3723
  %4139 = vmatprep.subr.bf16.mxu0 0
  %4140 = vmatpush1.bf16.msra.mxu0 %v3864
  %4141 = vmatprep.subr.bf16.mxu0 0
  %4142 = vmatpush1.bf16.msra.mxu0 %v3832
  %4143 = vmatprep.subr.bf16.mxu0 0
  %4144 = vmatpush1.bf16.msra.mxu0 %v3800
  %4145 = vmatprep.subr.bf16.mxu0 0
  %4146 = vmatpush1.bf16.msra.mxu0 %v3767
  %4147 = vmatprep.subr.bf16.mxu0 0
  %4148 = vmatpush2.bf16.msra.mxu0 0
  %4149 = vmatprep.subr.bf16.mxu0 0
  %4150 = vmatpush2.bf16.msra.mxu0 0
  %4151 = vmatprep.subr.bf16.mxu0 0
  %4152 = vmatpush2.bf16.msra.mxu0 0
  %4153 = vmatprep.subr.bf16.mxu0 0
  %4154 = vmatpush2.bf16.msra.mxu0 0
  %4155 = vmatprep.subr.bf16.mxu0 0
  %4156 = vmatpush2.bf16.msra.mxu0 0
  %4157 = vmatprep.subr.bf16.mxu0 0
  %4158 = vmatpush2.bf16.msra.mxu0 0
  %4159 = vmatprep.subr.bf16.mxu0 0
  %4160 = vmatpush2.bf16.msra.mxu0 0
  %4161 = vmatprep.subr.bf16.mxu0 0
  %4162 = vmatpush2.bf16.msra.mxu0 %v3994
  %4163 = vmatprep.mubr.bf16.mxu0 %v4006
  %4164 = vmatmul.mubr.bf16.gmra.mxu0 %v4002
  %v4165 = vpop.f32.mrf.mxu0
  %v4166 = vadd.f32 0.0, %v4165
  %v4167 = vpop.f32.mrf.mxu0
  %v4168 = vpop.f32.mrf.mxu0
  %v4169 = vadd.f32 0.0, %v4168
  %v4170 = vpop.f32.mrf.mxu0
  %4171 = vdwg.mxu0
  %v4172 = vsel %vm568, %v4043, 0.0
  %4173 = vadd.xlane.f32.xlu0 %v4172
  %v4174 = vpop.xlane.xlu0 %4173
  %v4175 = vsel %vm568, %v4046, 0.0
  %4176 = vadd.xlane.f32.xlu0 %v4175
  %v4177 = vpop.xlane.xlu0 %4176
  %v4178 = vsel %vm568, %v4084, 0.0
  %4179 = vadd.xlane.f32.xlu0 %v4178
  %v4180 = vpop.xlane.xlu0 %4179
  %v4181 = vsel %vm568, %v4087, 0.0
  %4182 = vadd.xlane.f32.xlu0 %v4181
  %v4183 = vpop.xlane.xlu0 %4182
  %v4184 = vsel %vm568, %v4125, 0.0
  %4185 = vadd.xlane.f32.xlu0 %v4184
  %v4186 = vpop.xlane.xlu0 %4185
  %v4187 = vsel %vm568, %v4128, 0.0
  %4188 = vadd.xlane.f32.xlu0 %v4187
  %v4189 = vpop.xlane.xlu0 %4188
  %v4190 = vsel %vm568, %v4166, 0.0
  %4191 = vadd.xlane.f32.xlu0 %v4190
  %v4192 = vpop.xlane.xlu0 %4191
  %v4193 = vsel %vm568, %v4169, 0.0
  %4194 = vadd.xlane.f32.xlu0 %v4193
  %v4195 = vpop.xlane.xlu0 %4194
  %v4196 = vadd.f32 %v4174, %v4180
  %v4197 = vadd.f32 %v4196, %v4186
  %v4198 = vadd.f32 %v4197, %v4192
  %v4199 = vadd.f32 %v4177, %v4183
  %v4200 = vadd.f32 %v4199, %v4189
  %v4201 = vadd.f32 %v4200, %v4195
  %v4202 = vmul.f32 %v4198, 0.00625
  %v4203 = vmul.f32 %v4201, 0.00625
  %v4204 = vsub.f32 %v4043, %v4202
  %v4205 = vsub.f32 %v4046, %v4203
  %v4206 = vsub.f32 %v4084, %v4202
  %v4207 = vsub.f32 %v4087, %v4203
  %v4208 = vsub.f32 %v4125, %v4202
  %v4209 = vsub.f32 %v4128, %v4203
  %v4210 = vsub.f32 %v4166, %v4202
  %v4211 = vsub.f32 %v4169, %v4203
  %v4212 = vmul.f32 %v4204, %v4204
  %v4213 = vmul.f32 %v4205, %v4205
  %v4214 = vmul.f32 %v4206, %v4206
  %v4215 = vmul.f32 %v4207, %v4207
  %v4216 = vmul.f32 %v4208, %v4208
  %v4217 = vmul.f32 %v4209, %v4209
  %v4218 = vmul.f32 %v4210, %v4210
  %v4219 = vmul.f32 %v4211, %v4211
  %v4220 = vsel %vm568, %v4212, 0.0
  %4221 = vadd.xlane.f32.xlu0 %v4220
  %v4222 = vpop.xlane.xlu0 %4221
  %v4223 = vsel %vm568, %v4213, 0.0
  %4224 = vadd.xlane.f32.xlu0 %v4223
  %v4225 = vpop.xlane.xlu0 %4224
  %v4226 = vsel %vm568, %v4214, 0.0
  %4227 = vadd.xlane.f32.xlu0 %v4226
  %v4228 = vpop.xlane.xlu0 %4227
  %v4229 = vsel %vm568, %v4215, 0.0
  %4230 = vadd.xlane.f32.xlu0 %v4229
  %v4231 = vpop.xlane.xlu0 %4230
  %v4232 = vsel %vm568, %v4216, 0.0
  %4233 = vadd.xlane.f32.xlu0 %v4232
  %v4234 = vpop.xlane.xlu0 %4233
  %v4235 = vsel %vm568, %v4217, 0.0
  %4236 = vadd.xlane.f32.xlu0 %v4235
  %v4237 = vpop.xlane.xlu0 %4236
  %v4238 = vsel %vm568, %v4218, 0.0
  %4239 = vadd.xlane.f32.xlu0 %v4238
  %v4240 = vpop.xlane.xlu0 %4239
  %v4241 = vsel %vm568, %v4219, 0.0
  %4242 = vadd.xlane.f32.xlu0 %v4241
  %v4243 = vpop.xlane.xlu0 %4242
  %v4244 = vadd.f32 %v4222, %v4228
  %v4245 = vadd.f32 %v4244, %v4234
  %v4246 = vadd.f32 %v4245, %v4240
  %v4247 = vadd.f32 %v4225, %v4231
  %v4248 = vadd.f32 %v4247, %v4237
  %v4249 = vadd.f32 %v4248, %v4243
  %v4250 = vmul.f32 %v4246, 0.00625
  %v4251 = vmul.f32 %v4249, 0.00625
  %v4252 = vadd.f32 %v4250, 1e-05
  %v4253 = vadd.f32 %v4251, 1e-05
  %v4254 = vrsqrt.pop %v4252
  %v4255 = vrsqrt.pop %v4253
  %v4256 = vmul.f32 %v4204, %v4254
  %v4257 = vmul.f32 %v4205, %v4255
  %v4258 = vmul.f32 %v4206, %v4254
  %v4259 = vmul.f32 %v4207, %v4255
  %v4260 = vmul.f32 %v4208, %v4254
  %v4261 = vmul.f32 %v4209, %v4255
  %v4262 = vmul.f32 %v4210, %v4254
  %v4263 = vmul.f32 %v4211, %v4255
  %4265 = vset.pattern.permute.xlu0 0
  %4266 = vperm.xlu0 %4265, %v3728
  %v4267 = vpop.permute.xlu0 %4266
  %4270 = vset.pattern.permute.xlu0 0
  %4271 = vperm.xlu0 %4270, %v3729
  %v4272 = vpop.permute.xlu0 %4271
  %v4274 = vmul.f32 %v4256, %v4267
  %v4275 = vmul.f32 %v4257, %v4272
  %v4276 = vmul.f32 %v4258, %v4267
  %v4277 = vmul.f32 %v4259, %v4272
  %v4278 = vmul.f32 %v4260, %v4267
  %v4279 = vmul.f32 %v4261, %v4272
  %v4280 = vmul.f32 %v4262, %v4267
  %v4281 = vmul.f32 %v4263, %v4272
  %4283 = vset.pattern.permute.xlu0 0
  %4284 = vperm.xlu0 %4283, %v3731
  %v4285 = vpop.permute.xlu0 %4284
  %4288 = vset.pattern.permute.xlu0 0
  %4289 = vperm.xlu0 %4288, %v3732
  %v4290 = vpop.permute.xlu0 %4289
  %v4292 = vadd.f32 %v4274, %v4285
  %v4293 = vadd.f32 %v4275, %v4290
  %v4294 = vadd.f32 %v4276, %v4285
  %v4295 = vadd.f32 %v4277, %v4290
  %v4296 = vadd.f32 %v4278, %v4285
  %v4297 = vadd.f32 %v4279, %v4290
  %v4298 = vadd.f32 %v4280, %v4285
  %v4299 = vadd.f32 %v4281, %v4290
  %v4300 = vmul.f32 %v4292, 0.01
  %v4301 = vmul.f32 %v4293, 0.01
  %v4302 = vmul.f32 %v4294, 0.01
  %v4303 = vmul.f32 %v4295, 0.01
  %v4304 = vmul.f32 %v4296, 0.01
  %v4305 = vmul.f32 %v4297, 0.01
  %v4306 = vmul.f32 %v4298, 0.01
  %v4307 = vmul.f32 %v4299, 0.01
  %v4308 = vmax.f32 %v4292, %v4300
  %v4309 = vmax.f32 %v4293, %v4301
  %v4310 = vmax.f32 %v4294, %v4302
  %v4311 = vmax.f32 %v4295, %v4303
  %v4312 = vmax.f32 %v4296, %v4304
  %v4313 = vmax.f32 %v4297, %v4305
  %v4314 = vmax.f32 %v4298, %v4306
  %v4315 = vmax.f32 %v4299, %v4307
  %v4316 = vadd.f32 %v4308, %v3712
  %v4317 = vadd.f32 %v4309, %v3713
  %v4318 = vadd.f32 %v4310, %v3714
  %v4319 = vadd.f32 %v4311, %v3715
  %v4320 = vadd.f32 %v4312, %v3716
  %v4321 = vadd.f32 %v4313, %v3717
  %v4322 = vadd.f32 %v4314, %v3718
  %v4323 = vadd.f32 %v4315, %v3719
  %v4324 = vpack.c.bf16 %v4317, %v4316
  %v4325 = vpack.c.bf16 %v4319, %v4318
  %v4326 = vpack.c.bf16 %v4321, %v4320
  %v4327 = vpack.c.bf16 %v4323, %v4322
  %s4328 = scalar_lea.vmem %s4, 96
  %v4329 = vld [vmem:[%s4328] sm:$0xff]
  %v4330 = vld [vmem:[%s4328 + $0x8] sm:$0xff]
  %s4331 = scalar_lea.vmem %s5, 96
  %v4332 = vld [vmem:[%s4331] sm:$0xff]
  %v4333 = vld [vmem:[%s4331 + $0x8] sm:$0xff]
  %s4334 = scalar_lea.vmem %s6, 96
  %v4335 = vld [vmem:[%s4334] sm:$0xff]
  %v4336 = vld [vmem:[%s4334 + $0x8] sm:$0xff]
  %4341 = vrot.lane.b32.xlu0 %v4324, 104
  %v4342 = vpop.permute.xlu0 %4341
  %4343 = vrot.lane.b32.xlu0 %v4325, 104
  %v4344 = vpop.permute.xlu0 %4343
  %4345 = vrot.lane.b32.xlu0 %v4326, 104
  %v4346 = vpop.permute.xlu0 %4345
  %4347 = vrot.lane.b32.xlu0 %v4327, 104
  %v4348 = vpop.permute.xlu0 %4347
  %4349 = vrot.lane.b32.xlu0 %v4324, 16
  %v4350 = vpop.permute.xlu0 %4349
  %4351 = vrot.lane.b32.xlu0 %v4325, 16
  %v4352 = vpop.permute.xlu0 %4351
  %4353 = vrot.lane.b32.xlu0 %v4326, 16
  %v4354 = vpop.permute.xlu0 %4353
  %4355 = vrot.lane.b32.xlu0 %v4327, 16
  %v4356 = vpop.permute.xlu0 %4355
  %v4359 = vsel %vm992, %v4342, %v4350
  %v4363 = vsel %vm992, %v4344, %v4352
  %v4367 = vsel %vm992, %v4346, %v4354
  %v4371 = vsel %vm992, %v4348, %v4356
  %4373 = vrot.lane.b32.xlu0 %v4324, 100
  %v4374 = vpop.permute.xlu0 %4373
  %4375 = vrot.lane.b32.xlu0 %v4325, 100
  %v4376 = vpop.permute.xlu0 %4375
  %4377 = vrot.lane.b32.xlu0 %v4326, 100
  %v4378 = vpop.permute.xlu0 %4377
  %4379 = vrot.lane.b32.xlu0 %v4327, 100
  %v4380 = vpop.permute.xlu0 %4379
  %4381 = vrot.lane.b32.xlu0 %v4324, 12
  %v4382 = vpop.permute.xlu0 %4381
  %4383 = vrot.lane.b32.xlu0 %v4325, 12
  %v4384 = vpop.permute.xlu0 %4383
  %4385 = vrot.lane.b32.xlu0 %v4326, 12
  %v4386 = vpop.permute.xlu0 %4385
  %4387 = vrot.lane.b32.xlu0 %v4327, 12
  %v4388 = vpop.permute.xlu0 %4387
  %v4391 = vsel %vm3785, %v4374, %v4382
  %v4395 = vsel %vm3785, %v4376, %v4384
  %v4399 = vsel %vm3785, %v4378, %v4386
  %v4403 = vsel %vm3785, %v4380, %v4388
  %4405 = vrot.lane.b32.xlu0 %v4324, 96
  %v4406 = vpop.permute.xlu0 %4405
  %4407 = vrot.lane.b32.xlu0 %v4325, 96
  %v4408 = vpop.permute.xlu0 %4407
  %4409 = vrot.lane.b32.xlu0 %v4326, 96
  %v4410 = vpop.permute.xlu0 %4409
  %4411 = vrot.lane.b32.xlu0 %v4327, 96
  %v4412 = vpop.permute.xlu0 %4411
  %4413 = vrot.lane.b32.xlu0 %v4324, 8
  %v4414 = vpop.permute.xlu0 %4413
  %4415 = vrot.lane.b32.xlu0 %v4325, 8
  %v4416 = vpop.permute.xlu0 %4415
  %4417 = vrot.lane.b32.xlu0 %v4326, 8
  %v4418 = vpop.permute.xlu0 %4417
  %4419 = vrot.lane.b32.xlu0 %v4327, 8
  %v4420 = vpop.permute.xlu0 %4419
  %v4423 = vsel %vm2547, %v4406, %v4414
  %v4427 = vsel %vm2547, %v4408, %v4416
  %v4431 = vsel %vm2547, %v4410, %v4418
  %v4435 = vsel %vm2547, %v4412, %v4420
  %4437 = vrot.lane.b32.xlu0 %v4324, 92
  %v4438 = vpop.permute.xlu0 %4437
  %4439 = vrot.lane.b32.xlu0 %v4325, 92
  %v4440 = vpop.permute.xlu0 %4439
  %4441 = vrot.lane.b32.xlu0 %v4326, 92
  %v4442 = vpop.permute.xlu0 %4441
  %4443 = vrot.lane.b32.xlu0 %v4327, 92
  %v4444 = vpop.permute.xlu0 %4443
  %4445 = vrot.lane.b32.xlu0 %v4324, 4
  %v4446 = vpop.permute.xlu0 %4445
  %4447 = vrot.lane.b32.xlu0 %v4325, 4
  %v4448 = vpop.permute.xlu0 %4447
  %4449 = vrot.lane.b32.xlu0 %v4326, 4
  %v4450 = vpop.permute.xlu0 %4449
  %4451 = vrot.lane.b32.xlu0 %v4327, 4
  %v4452 = vpop.permute.xlu0 %4451
  %v4455 = vsel %vm86, %v4438, %v4446
  %v4459 = vsel %vm86, %v4440, %v4448
  %v4463 = vsel %vm86, %v4442, %v4450
  %v4467 = vsel %vm86, %v4444, %v4452
  %4469 = vrot.lane.b32.xlu0 %v4324, 124
  %v4470 = vpop.permute.xlu0 %4469
  %4471 = vrot.lane.b32.xlu0 %v4325, 124
  %v4472 = vpop.permute.xlu0 %4471
  %4473 = vrot.lane.b32.xlu0 %v4326, 124
  %v4474 = vpop.permute.xlu0 %4473
  %4475 = vrot.lane.b32.xlu0 %v4327, 124
  %v4476 = vpop.permute.xlu0 %4475
  %4477 = vrot.lane.b32.xlu0 %v4324, 36
  %v4478 = vpop.permute.xlu0 %4477
  %4479 = vrot.lane.b32.xlu0 %v4325, 36
  %v4480 = vpop.permute.xlu0 %4479
  %4481 = vrot.lane.b32.xlu0 %v4326, 36
  %v4482 = vpop.permute.xlu0 %4481
  %4483 = vrot.lane.b32.xlu0 %v4327, 36
  %v4484 = vpop.permute.xlu0 %4483
  %v4487 = vsel %vm289, %v4470, %v4478
  %v4491 = vsel %vm289, %v4472, %v4480
  %v4495 = vsel %vm289, %v4474, %v4482
  %v4499 = vsel %vm289, %v4476, %v4484
  %4501 = vrot.lane.b32.xlu0 %v4324, 120
  %v4502 = vpop.permute.xlu0 %4501
  %4503 = vrot.lane.b32.xlu0 %v4325, 120
  %v4504 = vpop.permute.xlu0 %4503
  %4505 = vrot.lane.b32.xlu0 %v4326, 120
  %v4506 = vpop.permute.xlu0 %4505
  %4507 = vrot.lane.b32.xlu0 %v4327, 120
  %v4508 = vpop.permute.xlu0 %4507
  %4509 = vrot.lane.b32.xlu0 %v4324, 32
  %v4510 = vpop.permute.xlu0 %4509
  %4511 = vrot.lane.b32.xlu0 %v4325, 32
  %v4512 = vpop.permute.xlu0 %4511
  %4513 = vrot.lane.b32.xlu0 %v4326, 32
  %v4514 = vpop.permute.xlu0 %4513
  %4515 = vrot.lane.b32.xlu0 %v4327, 32
  %v4516 = vpop.permute.xlu0 %4515
  %v4519 = vsel %vm2774, %v4502, %v4510
  %v4523 = vsel %vm2774, %v4504, %v4512
  %v4527 = vsel %vm2774, %v4506, %v4514
  %v4531 = vsel %vm2774, %v4508, %v4516
  %4533 = vrot.lane.b32.xlu0 %v4324, 116
  %v4534 = vpop.permute.xlu0 %4533
  %4535 = vrot.lane.b32.xlu0 %v4325, 116
  %v4536 = vpop.permute.xlu0 %4535
  %4537 = vrot.lane.b32.xlu0 %v4326, 116
  %v4538 = vpop.permute.xlu0 %4537
  %4539 = vrot.lane.b32.xlu0 %v4327, 116
  %v4540 = vpop.permute.xlu0 %4539
  %4541 = vrot.lane.b32.xlu0 %v4324, 28
  %v4542 = vpop.permute.xlu0 %4541
  %4543 = vrot.lane.b32.xlu0 %v4325, 28
  %v4544 = vpop.permute.xlu0 %4543
  %4545 = vrot.lane.b32.xlu0 %v4326, 28
  %v4546 = vpop.permute.xlu0 %4545
  %4547 = vrot.lane.b32.xlu0 %v4327, 28
  %v4548 = vpop.permute.xlu0 %4547
  %v4551 = vsel %vm3946, %v4534, %v4542
  %v4555 = vsel %vm3946, %v4536, %v4544
  %v4559 = vsel %vm3946, %v4538, %v4546
  %v4563 = vsel %vm3946, %v4540, %v4548
  %4565 = vrot.lane.b32.xlu0 %v4324, 112
  %v4566 = vpop.permute.xlu0 %4565
  %4567 = vrot.lane.b32.xlu0 %v4325, 112
  %v4568 = vpop.permute.xlu0 %4567
  %4569 = vrot.lane.b32.xlu0 %v4326, 112
  %v4570 = vpop.permute.xlu0 %4569
  %4571 = vrot.lane.b32.xlu0 %v4327, 112
  %v4572 = vpop.permute.xlu0 %4571
  %4573 = vrot.lane.b32.xlu0 %v4324, 24
  %v4574 = vpop.permute.xlu0 %4573
  %4575 = vrot.lane.b32.xlu0 %v4325, 24
  %v4576 = vpop.permute.xlu0 %4575
  %4577 = vrot.lane.b32.xlu0 %v4326, 24
  %v4578 = vpop.permute.xlu0 %4577
  %4579 = vrot.lane.b32.xlu0 %v4327, 24
  %v4580 = vpop.permute.xlu0 %4579
  %v4583 = vsel %vm3979, %v4566, %v4574
  %v4587 = vsel %vm3979, %v4568, %v4576
  %v4591 = vsel %vm3979, %v4570, %v4578
  %v4595 = vsel %vm3979, %v4572, %v4580
  %v4599 = vunpack.c.l.b16 %v4329
  %v4600 = vunpack.c.h.b16 %v4329
  %v4601 = vunpack.c.l.b16 %v4330
  %v4602 = vunpack.c.h.b16 %v4330
  %v4603 = vpack.c.b16 %v4601, %v4599
  %v4604 = vpack.c.b16 %v4602, %v4600
  %v4607 = vsel %vm992, %v4604, 0
  %4609 = vmatprep.subr.bf16.mxu0 0
  %4610 = vmatpush1.bf16.msra.mxu0 %v4551
  %4611 = vmatprep.subr.bf16.mxu0 0
  %4612 = vmatpush1.bf16.msra.mxu0 %v4519
  %4613 = vmatprep.subr.bf16.mxu0 0
  %4614 = vmatpush1.bf16.msra.mxu0 %v4487
  %4615 = vmatprep.subr.bf16.mxu0 0
  %4616 = vmatpush1.bf16.msra.mxu0 %v4324
  %4617 = vmatprep.subr.bf16.mxu0 0
  %4618 = vmatpush1.bf16.msra.mxu0 %v4455
  %4619 = vmatprep.subr.bf16.mxu0 0
  %4620 = vmatpush1.bf16.msra.mxu0 %v4423
  %4621 = vmatprep.subr.bf16.mxu0 0
  %4622 = vmatpush1.bf16.msra.mxu0 %v4391
  %4623 = vmatprep.subr.bf16.mxu0 0
  %4624 = vmatpush1.bf16.msra.mxu0 %v4359
  %4625 = vmatprep.subr.bf16.mxu0 0
  %4626 = vmatpush2.bf16.msra.mxu0 0
  %4627 = vmatprep.subr.bf16.mxu0 0
  %4628 = vmatpush2.bf16.msra.mxu0 0
  %4629 = vmatprep.subr.bf16.mxu0 0
  %4630 = vmatpush2.bf16.msra.mxu0 0
  %4631 = vmatprep.subr.bf16.mxu0 0
  %4632 = vmatpush2.bf16.msra.mxu0 0
  %4633 = vmatprep.subr.bf16.mxu0 0
  %4634 = vmatpush2.bf16.msra.mxu0 0
  %4635 = vmatprep.subr.bf16.mxu0 0
  %4636 = vmatpush2.bf16.msra.mxu0 0
  %4637 = vmatprep.subr.bf16.mxu0 0
  %4638 = vmatpush2.bf16.msra.mxu0 0
  %4639 = vmatprep.subr.bf16.mxu0 0
  %4640 = vmatpush2.bf16.msra.mxu0 %v4583
  %4641 = vmatprep.mubr.bf16.mxu0 %v4607
  %4642 = vmatmul.mubr.bf16.gmra.mxu0 %v4603
  %v4643 = vpop.f32.mrf.mxu0
  %v4644 = vadd.f32 0.0, %v4643
  %v4645 = vpop.f32.mrf.mxu0
  %v4646 = vpop.f32.mrf.mxu0
  %v4647 = vadd.f32 0.0, %v4646
  %v4648 = vpop.f32.mrf.mxu0
  %4649 = vdwg.mxu0
  %4650 = vmatprep.subr.bf16.mxu0 0
  %4651 = vmatpush1.bf16.msra.mxu0 %v4555
  %4652 = vmatprep.subr.bf16.mxu0 0
  %4653 = vmatpush1.bf16.msra.mxu0 %v4523
  %4654 = vmatprep.subr.bf16.mxu0 0
  %4655 = vmatpush1.bf16.msra.mxu0 %v4491
  %4656 = vmatprep.subr.bf16.mxu0 0
  %4657 = vmatpush1.bf16.msra.mxu0 %v4325
  %4658 = vmatprep.subr.bf16.mxu0 0
  %4659 = vmatpush1.bf16.msra.mxu0 %v4459
  %4660 = vmatprep.subr.bf16.mxu0 0
  %4661 = vmatpush1.bf16.msra.mxu0 %v4427
  %4662 = vmatprep.subr.bf16.mxu0 0
  %4663 = vmatpush1.bf16.msra.mxu0 %v4395
  %4664 = vmatprep.subr.bf16.mxu0 0
  %4665 = vmatpush1.bf16.msra.mxu0 %v4363
  %4666 = vmatprep.subr.bf16.mxu0 0
  %4667 = vmatpush2.bf16.msra.mxu0 0
  %4668 = vmatprep.subr.bf16.mxu0 0
  %4669 = vmatpush2.bf16.msra.mxu0 0
  %4670 = vmatprep.subr.bf16.mxu0 0
  %4671 = vmatpush2.bf16.msra.mxu0 0
  %4672 = vmatprep.subr.bf16.mxu0 0
  %4673 = vmatpush2.bf16.msra.mxu0 0
  %4674 = vmatprep.subr.bf16.mxu0 0
  %4675 = vmatpush2.bf16.msra.mxu0 0
  %4676 = vmatprep.subr.bf16.mxu0 0
  %4677 = vmatpush2.bf16.msra.mxu0 0
  %4678 = vmatprep.subr.bf16.mxu0 0
  %4679 = vmatpush2.bf16.msra.mxu0 0
  %4680 = vmatprep.subr.bf16.mxu0 0
  %4681 = vmatpush2.bf16.msra.mxu0 %v4587
  %4682 = vmatprep.mubr.bf16.mxu0 %v4607
  %4683 = vmatmul.mubr.bf16.gmra.mxu0 %v4603
  %v4684 = vpop.f32.mrf.mxu0
  %v4685 = vadd.f32 0.0, %v4684
  %v4686 = vpop.f32.mrf.mxu0
  %v4687 = vpop.f32.mrf.mxu0
  %v4688 = vadd.f32 0.0, %v4687
  %v4689 = vpop.f32.mrf.mxu0
  %4690 = vdwg.mxu0
  %4691 = vmatprep.subr.bf16.mxu0 0
  %4692 = vmatpush1.bf16.msra.mxu0 %v4559
  %4693 = vmatprep.subr.bf16.mxu0 0
  %4694 = vmatpush1.bf16.msra.mxu0 %v4527
  %4695 = vmatprep.subr.bf16.mxu0 0
  %4696 = vmatpush1.bf16.msra.mxu0 %v4495
  %4697 = vmatprep.subr.bf16.mxu0 0
  %4698 = vmatpush1.bf16.msra.mxu0 %v4326
  %4699 = vmatprep.subr.bf16.mxu0 0
  %4700 = vmatpush1.bf16.msra.mxu0 %v4463
  %4701 = vmatprep.subr.bf16.mxu0 0
  %4702 = vmatpush1.bf16.msra.mxu0 %v4431
  %4703 = vmatprep.subr.bf16.mxu0 0
  %4704 = vmatpush1.bf16.msra.mxu0 %v4399
  %4705 = vmatprep.subr.bf16.mxu0 0
  %4706 = vmatpush1.bf16.msra.mxu0 %v4367
  %4707 = vmatprep.subr.bf16.mxu0 0
  %4708 = vmatpush2.bf16.msra.mxu0 0
  %4709 = vmatprep.subr.bf16.mxu0 0
  %4710 = vmatpush2.bf16.msra.mxu0 0
  %4711 = vmatprep.subr.bf16.mxu0 0
  %4712 = vmatpush2.bf16.msra.mxu0 0
  %4713 = vmatprep.subr.bf16.mxu0 0
  %4714 = vmatpush2.bf16.msra.mxu0 0
  %4715 = vmatprep.subr.bf16.mxu0 0
  %4716 = vmatpush2.bf16.msra.mxu0 0
  %4717 = vmatprep.subr.bf16.mxu0 0
  %4718 = vmatpush2.bf16.msra.mxu0 0
  %4719 = vmatprep.subr.bf16.mxu0 0
  %4720 = vmatpush2.bf16.msra.mxu0 0
  %4721 = vmatprep.subr.bf16.mxu0 0
  %4722 = vmatpush2.bf16.msra.mxu0 %v4591
  %4723 = vmatprep.mubr.bf16.mxu0 %v4607
  %4724 = vmatmul.mubr.bf16.gmra.mxu0 %v4603
  %v4725 = vpop.f32.mrf.mxu0
  %v4726 = vadd.f32 0.0, %v4725
  %v4727 = vpop.f32.mrf.mxu0
  %v4728 = vpop.f32.mrf.mxu0
  %v4729 = vadd.f32 0.0, %v4728
  %v4730 = vpop.f32.mrf.mxu0
  %4731 = vdwg.mxu0
  %4732 = vmatprep.subr.bf16.mxu0 0
  %4733 = vmatpush1.bf16.msra.mxu0 %v4563
  %4734 = vmatprep.subr.bf16.mxu0 0
  %4735 = vmatpush1.bf16.msra.mxu0 %v4531
  %4736 = vmatprep.subr.bf16.mxu0 0
  %4737 = vmatpush1.bf16.msra.mxu0 %v4499
  %4738 = vmatprep.subr.bf16.mxu0 0
  %4739 = vmatpush1.bf16.msra.mxu0 %v4327
  %4740 = vmatprep.subr.bf16.mxu0 0
  %4741 = vmatpush1.bf16.msra.mxu0 %v4467
  %4742 = vmatprep.subr.bf16.mxu0 0
  %4743 = vmatpush1.bf16.msra.mxu0 %v4435
  %4744 = vmatprep.subr.bf16.mxu0 0
  %4745 = vmatpush1.bf16.msra.mxu0 %v4403
  %4746 = vmatprep.subr.bf16.mxu0 0
  %4747 = vmatpush1.bf16.msra.mxu0 %v4371
  %4748 = vmatprep.subr.bf16.mxu0 0
  %4749 = vmatpush2.bf16.msra.mxu0 0
  %4750 = vmatprep.subr.bf16.mxu0 0
  %4751 = vmatpush2.bf16.msra.mxu0 0
  %4752 = vmatprep.subr.bf16.mxu0 0
  %4753 = vmatpush2.bf16.msra.mxu0 0
  %4754 = vmatprep.subr.bf16.mxu0 0
  %4755 = vmatpush2.bf16.msra.mxu0 0
  %4756 = vmatprep.subr.bf16.mxu0 0
  %4757 = vmatpush2.bf16.msra.mxu0 0
  %4758 = vmatprep.subr.bf16.mxu0 0
  %4759 = vmatpush2.bf16.msra.mxu0 0
  %4760 = vmatprep.subr.bf16.mxu0 0
  %4761 = vmatpush2.bf16.msra.mxu0 0
  %4762 = vmatprep.subr.bf16.mxu0 0
  %4763 = vmatpush2.bf16.msra.mxu0 %v4595
  %4764 = vmatprep.mubr.bf16.mxu0 %v4607
  %4765 = vmatmul.mubr.bf16.gmra.mxu0 %v4603
  %v4766 = vpop.f32.mrf.mxu0
  %v4767 = vadd.f32 0.0, %v4766
  %v4768 = vpop.f32.mrf.mxu0
  %v4769 = vpop.f32.mrf.mxu0
  %v4770 = vadd.f32 0.0, %v4769
  %v4771 = vpop.f32.mrf.mxu0
  %4772 = vdwg.mxu0
  %v4773 = vsel %vm568, %v4644, 0.0
  %4774 = vadd.xlane.f32.xlu0 %v4773
  %v4775 = vpop.xlane.xlu0 %4774
  %v4776 = vsel %vm568, %v4647, 0.0
  %4777 = vadd.xlane.f32.xlu0 %v4776
  %v4778 = vpop.xlane.xlu0 %4777
  %v4779 = vsel %vm568, %v4685, 0.0
  %4780 = vadd.xlane.f32.xlu0 %v4779
  %v4781 = vpop.xlane.xlu0 %4780
  %v4782 = vsel %vm568, %v4688, 0.0
  %4783 = vadd.xlane.f32.xlu0 %v4782
  %v4784 = vpop.xlane.xlu0 %4783
  %v4785 = vsel %vm568, %v4726, 0.0
  %4786 = vadd.xlane.f32.xlu0 %v4785
  %v4787 = vpop.xlane.xlu0 %4786
  %v4788 = vsel %vm568, %v4729, 0.0
  %4789 = vadd.xlane.f32.xlu0 %v4788
  %v4790 = vpop.xlane.xlu0 %4789
  %v4791 = vsel %vm568, %v4767, 0.0
  %4792 = vadd.xlane.f32.xlu0 %v4791
  %v4793 = vpop.xlane.xlu0 %4792
  %v4794 = vsel %vm568, %v4770, 0.0
  %4795 = vadd.xlane.f32.xlu0 %v4794
  %v4796 = vpop.xlane.xlu0 %4795
  %v4797 = vadd.f32 %v4775, %v4781
  %v4798 = vadd.f32 %v4797, %v4787
  %v4799 = vadd.f32 %v4798, %v4793
  %v4800 = vadd.f32 %v4778, %v4784
  %v4801 = vadd.f32 %v4800, %v4790
  %v4802 = vadd.f32 %v4801, %v4796
  %v4803 = vmul.f32 %v4799, 0.00625
  %v4804 = vmul.f32 %v4802, 0.00625
  %v4805 = vsub.f32 %v4644, %v4803
  %v4806 = vsub.f32 %v4647, %v4804
  %v4807 = vsub.f32 %v4685, %v4803
  %v4808 = vsub.f32 %v4688, %v4804
  %v4809 = vsub.f32 %v4726, %v4803
  %v4810 = vsub.f32 %v4729, %v4804
  %v4811 = vsub.f32 %v4767, %v4803
  %v4812 = vsub.f32 %v4770, %v4804
  %v4813 = vmul.f32 %v4805, %v4805
  %v4814 = vmul.f32 %v4806, %v4806
  %v4815 = vmul.f32 %v4807, %v4807
  %v4816 = vmul.f32 %v4808, %v4808
  %v4817 = vmul.f32 %v4809, %v4809
  %v4818 = vmul.f32 %v4810, %v4810
  %v4819 = vmul.f32 %v4811, %v4811
  %v4820 = vmul.f32 %v4812, %v4812
  %v4821 = vsel %vm568, %v4813, 0.0
  %4822 = vadd.xlane.f32.xlu0 %v4821
  %v4823 = vpop.xlane.xlu0 %4822
  %v4824 = vsel %vm568, %v4814, 0.0
  %4825 = vadd.xlane.f32.xlu0 %v4824
  %v4826 = vpop.xlane.xlu0 %4825
  %v4827 = vsel %vm568, %v4815, 0.0
  %4828 = vadd.xlane.f32.xlu0 %v4827
  %v4829 = vpop.xlane.xlu0 %4828
  %v4830 = vsel %vm568, %v4816, 0.0
  %4831 = vadd.xlane.f32.xlu0 %v4830
  %v4832 = vpop.xlane.xlu0 %4831
  %v4833 = vsel %vm568, %v4817, 0.0
  %4834 = vadd.xlane.f32.xlu0 %v4833
  %v4835 = vpop.xlane.xlu0 %4834
  %v4836 = vsel %vm568, %v4818, 0.0
  %4837 = vadd.xlane.f32.xlu0 %v4836
  %v4838 = vpop.xlane.xlu0 %4837
  %v4839 = vsel %vm568, %v4819, 0.0
  %4840 = vadd.xlane.f32.xlu0 %v4839
  %v4841 = vpop.xlane.xlu0 %4840
  %v4842 = vsel %vm568, %v4820, 0.0
  %4843 = vadd.xlane.f32.xlu0 %v4842
  %v4844 = vpop.xlane.xlu0 %4843
  %v4845 = vadd.f32 %v4823, %v4829
  %v4846 = vadd.f32 %v4845, %v4835
  %v4847 = vadd.f32 %v4846, %v4841
  %v4848 = vadd.f32 %v4826, %v4832
  %v4849 = vadd.f32 %v4848, %v4838
  %v4850 = vadd.f32 %v4849, %v4844
  %v4851 = vmul.f32 %v4847, 0.00625
  %v4852 = vmul.f32 %v4850, 0.00625
  %v4853 = vadd.f32 %v4851, 1e-05
  %v4854 = vadd.f32 %v4852, 1e-05
  %v4855 = vrsqrt.pop %v4853
  %v4856 = vrsqrt.pop %v4854
  %v4857 = vmul.f32 %v4805, %v4855
  %v4858 = vmul.f32 %v4806, %v4856
  %v4859 = vmul.f32 %v4807, %v4855
  %v4860 = vmul.f32 %v4808, %v4856
  %v4861 = vmul.f32 %v4809, %v4855
  %v4862 = vmul.f32 %v4810, %v4856
  %v4863 = vmul.f32 %v4811, %v4855
  %v4864 = vmul.f32 %v4812, %v4856
  %4866 = vset.pattern.permute.xlu0 0
  %4867 = vperm.xlu0 %4866, %v4332
  %v4868 = vpop.permute.xlu0 %4867
  %4871 = vset.pattern.permute.xlu0 0
  %4872 = vperm.xlu0 %4871, %v4333
  %v4873 = vpop.permute.xlu0 %4872
  %v4875 = vmul.f32 %v4857, %v4868
  %v4876 = vmul.f32 %v4858, %v4873
  %v4877 = vmul.f32 %v4859, %v4868
  %v4878 = vmul.f32 %v4860, %v4873
  %v4879 = vmul.f32 %v4861, %v4868
  %v4880 = vmul.f32 %v4862, %v4873
  %v4881 = vmul.f32 %v4863, %v4868
  %v4882 = vmul.f32 %v4864, %v4873
  %4884 = vset.pattern.permute.xlu0 0
  %4885 = vperm.xlu0 %4884, %v4335
  %v4886 = vpop.permute.xlu0 %4885
  %4889 = vset.pattern.permute.xlu0 0
  %4890 = vperm.xlu0 %4889, %v4336
  %v4891 = vpop.permute.xlu0 %4890
  %v4893 = vadd.f32 %v4875, %v4886
  %v4894 = vadd.f32 %v4876, %v4891
  %v4895 = vadd.f32 %v4877, %v4886
  %v4896 = vadd.f32 %v4878, %v4891
  %v4897 = vadd.f32 %v4879, %v4886
  %v4898 = vadd.f32 %v4880, %v4891
  %v4899 = vadd.f32 %v4881, %v4886
  %v4900 = vadd.f32 %v4882, %v4891
  %v4901 = vmul.f32 %v4893, 0.01
  %v4902 = vmul.f32 %v4894, 0.01
  %v4903 = vmul.f32 %v4895, 0.01
  %v4904 = vmul.f32 %v4896, 0.01
  %v4905 = vmul.f32 %v4897, 0.01
  %v4906 = vmul.f32 %v4898, 0.01
  %v4907 = vmul.f32 %v4899, 0.01
  %v4908 = vmul.f32 %v4900, 0.01
  %v4909 = vmax.f32 %v4893, %v4901
  %v4910 = vmax.f32 %v4894, %v4902
  %v4911 = vmax.f32 %v4895, %v4903
  %v4912 = vmax.f32 %v4896, %v4904
  %v4913 = vmax.f32 %v4897, %v4905
  %v4914 = vmax.f32 %v4898, %v4906
  %v4915 = vmax.f32 %v4899, %v4907
  %v4916 = vmax.f32 %v4900, %v4908
  %v4917 = vadd.f32 %v4909, %v4316
  %v4918 = vadd.f32 %v4910, %v4317
  %v4919 = vadd.f32 %v4911, %v4318
  %v4920 = vadd.f32 %v4912, %v4319
  %v4921 = vadd.f32 %v4913, %v4320
  %v4922 = vadd.f32 %v4914, %v4321
  %v4923 = vadd.f32 %v4915, %v4322
  %v4924 = vadd.f32 %v4916, %v4323
  %v4925 = vpack.c.bf16 %v4918, %v4917
  %v4926 = vpack.c.bf16 %v4920, %v4919
  %v4927 = vpack.c.bf16 %v4922, %v4921
  %v4928 = vpack.c.bf16 %v4924, %v4923
  %v4929 = vld [vmem:[%s7] sm:$0xf]
  %v4930 = vld [vmem:[%s7 + $0x4] sm:$0xf]
  %v4931 = vld [vmem:[%s7 + $0x8] sm:$0xf]
  %v4932 = vld [vmem:[%s7 + $0xc] sm:$0xf]
  %v4933 = vld [vmem:[%s7 + $0x10] sm:$0xf]
  %v4934 = vld [vmem:[%s7 + $0x14] sm:$0xf]
  %v4935 = vld [vmem:[%s7 + $0x18] sm:$0xf]
  %v4936 = vld [vmem:[%s7 + $0x1c] sm:$0xf]
  %v4937 = vld [vmem:[%s7 + $0x20] sm:$0xf]
  %v4938 = vld [vmem:[%s7 + $0x24] sm:$0xf]
  %v4939 = vld [vmem:[%s7 + $0x28] sm:$0xf]
  %v4940 = vld [vmem:[%s7 + $0x2c] sm:$0xf]
  %v4941 = vld [vmem:[%s7 + $0x30] sm:$0xf]
  %v4942 = vld [vmem:[%s7 + $0x34] sm:$0xf]
  %v4943 = vld [vmem:[%s7 + $0x38] sm:$0xf]
  %v4944 = vld [vmem:[%s7 + $0x3c] sm:$0xf]
  %v4945 = vld [vmem:[%s7 + $0x40] sm:$0xf]
  %v4946 = vld [vmem:[%s7 + $0x44] sm:$0xf]
  %v4947 = vld [vmem:[%s7 + $0x48] sm:$0xf]
  %v4948 = vld [vmem:[%s7 + $0x4c] sm:$0xf]
  %v4949 = vld [vmem:[%s7 + $0x50] sm:$0xf]
  %v4950 = vld [vmem:[%s7 + $0x54] sm:$0xf]
  %v4951 = vld [vmem:[%s7 + $0x58] sm:$0xf]
  %v4952 = vld [vmem:[%s7 + $0x5c] sm:$0xf]
  %v4953 = vld [vmem:[%s7 + $0x60] sm:$0xf]
  %v4954 = vld [vmem:[%s7 + $0x64] sm:$0xf]
  %v4955 = vld [vmem:[%s7 + $0x68] sm:$0xf]
  %v4956 = vld [vmem:[%s7 + $0x6c] sm:$0xf]
  %v4957 = vld [vmem:[%s7 + $0x70] sm:$0xf]
  %v4958 = vld [vmem:[%s7 + $0x74] sm:$0xf]
  %v4959 = vld [vmem:[%s7 + $0x78] sm:$0xf]
  %v4960 = vld [vmem:[%s7 + $0x7c] sm:$0xf]
  %v4961 = vld [vmem:[%s8] sm:$0xff]
  %v4962 = vld [vmem:[%s8 + $0x8] sm:$0xff]
  %v4963 = vld [vmem:[%s8 + $0x10] sm:$0xff]
  %v4964 = vld [vmem:[%s8 + $0x18] sm:$0xff]
  %v4965 = vld [vmem:[%s8 + $0x20] sm:$0xff]
  %v4966 = vld [vmem:[%s8 + $0x28] sm:$0xff]
  %v4967 = vld [vmem:[%s8 + $0x30] sm:$0xff]
  %v4968 = vld [vmem:[%s8 + $0x38] sm:$0xff]
  %v4969 = vld [vmem:[%s8 + $0x40] sm:$0xff]
  %v4970 = vld [vmem:[%s8 + $0x48] sm:$0xff]
  %v4971 = vld [vmem:[%s8 + $0x50] sm:$0xff]
  %v4972 = vld [vmem:[%s8 + $0x58] sm:$0xff]
  %v4973 = vld [vmem:[%s8 + $0x60] sm:$0xff]
  %v4974 = vld [vmem:[%s8 + $0x68] sm:$0xff]
  %v4975 = vld [vmem:[%s8 + $0x70] sm:$0xff]
  %v4976 = vld [vmem:[%s8 + $0x78] sm:$0xff]
  %v4977 = vld [vmem:[%s8 + $0x80] sm:$0xff]
  %v4978 = vld [vmem:[%s8 + $0x88] sm:$0xff]
  %v4979 = vld [vmem:[%s8 + $0x90] sm:$0xff]
  %v4980 = vld [vmem:[%s8 + $0x98] sm:$0xff]
  %v4981 = vld [vmem:[%s8 + $0xa0] sm:$0xff]
  %v4982 = vld [vmem:[%s8 + $0xa8] sm:$0xff]
  %v4983 = vld [vmem:[%s8 + $0xb0] sm:$0xff]
  %v4984 = vld [vmem:[%s8 + $0xb8] sm:$0xff]
  %v4985 = vld [vmem:[%s8 + $0xc0] sm:$0xff]
  %v4986 = vld [vmem:[%s8 + $0xc8] sm:$0xff]
  %v4987 = vld [vmem:[%s8 + $0xd0] sm:$0xff]
  %v4988 = vld [vmem:[%s8 + $0xd8] sm:$0xff]
  %v4989 = vld [vmem:[%s8 + $0xe0] sm:$0xff]
  %v4990 = vld [vmem:[%s8 + $0xe8] sm:$0xff]
  %v4991 = vld [vmem:[%s8 + $0xf0] sm:$0xff]
  %v4992 = vld [vmem:[%s8 + $0xf8] sm:$0xff]
  %4994 = vset.pattern.permute.xlu0 0
  %4995 = vperm.xlu0 %4994, %v4961
  %v4996 = vpop.permute.xlu0 %4995
  %4999 = vset.pattern.permute.xlu0 0
  %5000 = vperm.xlu0 %4999, %v4962
  %v5001 = vpop.permute.xlu0 %5000
  %5004 = vset.pattern.permute.xlu0 0
  %5005 = vperm.xlu0 %5004, %v4963
  %v5006 = vpop.permute.xlu0 %5005
  %5009 = vset.pattern.permute.xlu0 0
  %5010 = vperm.xlu0 %5009, %v4964
  %v5011 = vpop.permute.xlu0 %5010
  %5014 = vset.pattern.permute.xlu0 0
  %5015 = vperm.xlu0 %5014, %v4965
  %v5016 = vpop.permute.xlu0 %5015
  %5019 = vset.pattern.permute.xlu0 0
  %5020 = vperm.xlu0 %5019, %v4966
  %v5021 = vpop.permute.xlu0 %5020
  %5024 = vset.pattern.permute.xlu0 0
  %5025 = vperm.xlu0 %5024, %v4967
  %v5026 = vpop.permute.xlu0 %5025
  %5029 = vset.pattern.permute.xlu0 0
  %5030 = vperm.xlu0 %5029, %v4968
  %v5031 = vpop.permute.xlu0 %5030
  %5034 = vset.pattern.permute.xlu0 0
  %5035 = vperm.xlu0 %5034, %v4969
  %v5036 = vpop.permute.xlu0 %5035
  %5039 = vset.pattern.permute.xlu0 0
  %5040 = vperm.xlu0 %5039, %v4970
  %v5041 = vpop.permute.xlu0 %5040
  %5044 = vset.pattern.permute.xlu0 0
  %5045 = vperm.xlu0 %5044, %v4971
  %v5046 = vpop.permute.xlu0 %5045
  %5049 = vset.pattern.permute.xlu0 0
  %5050 = vperm.xlu0 %5049, %v4972
  %v5051 = vpop.permute.xlu0 %5050
  %5054 = vset.pattern.permute.xlu0 0
  %5055 = vperm.xlu0 %5054, %v4973
  %v5056 = vpop.permute.xlu0 %5055
  %5059 = vset.pattern.permute.xlu0 0
  %5060 = vperm.xlu0 %5059, %v4974
  %v5061 = vpop.permute.xlu0 %5060
  %5064 = vset.pattern.permute.xlu0 0
  %5065 = vperm.xlu0 %5064, %v4975
  %v5066 = vpop.permute.xlu0 %5065
  %5069 = vset.pattern.permute.xlu0 0
  %5070 = vperm.xlu0 %5069, %v4976
  %v5071 = vpop.permute.xlu0 %5070
  %5074 = vset.pattern.permute.xlu0 0
  %5075 = vperm.xlu0 %5074, %v4977
  %v5076 = vpop.permute.xlu0 %5075
  %5079 = vset.pattern.permute.xlu0 0
  %5080 = vperm.xlu0 %5079, %v4978
  %v5081 = vpop.permute.xlu0 %5080
  %5084 = vset.pattern.permute.xlu0 0
  %5085 = vperm.xlu0 %5084, %v4979
  %v5086 = vpop.permute.xlu0 %5085
  %5089 = vset.pattern.permute.xlu0 0
  %5090 = vperm.xlu0 %5089, %v4980
  %v5091 = vpop.permute.xlu0 %5090
  %5094 = vset.pattern.permute.xlu0 0
  %5095 = vperm.xlu0 %5094, %v4981
  %v5096 = vpop.permute.xlu0 %5095
  %5099 = vset.pattern.permute.xlu0 0
  %5100 = vperm.xlu0 %5099, %v4982
  %v5101 = vpop.permute.xlu0 %5100
  %5104 = vset.pattern.permute.xlu0 0
  %5105 = vperm.xlu0 %5104, %v4983
  %v5106 = vpop.permute.xlu0 %5105
  %5109 = vset.pattern.permute.xlu0 0
  %5110 = vperm.xlu0 %5109, %v4984
  %v5111 = vpop.permute.xlu0 %5110
  %5114 = vset.pattern.permute.xlu0 0
  %5115 = vperm.xlu0 %5114, %v4985
  %v5116 = vpop.permute.xlu0 %5115
  %5119 = vset.pattern.permute.xlu0 0
  %5120 = vperm.xlu0 %5119, %v4986
  %v5121 = vpop.permute.xlu0 %5120
  %5124 = vset.pattern.permute.xlu0 0
  %5125 = vperm.xlu0 %5124, %v4987
  %v5126 = vpop.permute.xlu0 %5125
  %5129 = vset.pattern.permute.xlu0 0
  %5130 = vperm.xlu0 %5129, %v4988
  %v5131 = vpop.permute.xlu0 %5130
  %5134 = vset.pattern.permute.xlu0 0
  %5135 = vperm.xlu0 %5134, %v4989
  %v5136 = vpop.permute.xlu0 %5135
  %5139 = vset.pattern.permute.xlu0 0
  %5140 = vperm.xlu0 %5139, %v4990
  %v5141 = vpop.permute.xlu0 %5140
  %5144 = vset.pattern.permute.xlu0 0
  %5145 = vperm.xlu0 %5144, %v4991
  %v5146 = vpop.permute.xlu0 %5145
  %5149 = vset.pattern.permute.xlu0 0
  %5150 = vperm.xlu0 %5149, %v4992
  %v5151 = vpop.permute.xlu0 %5150
  %v5185 = vunpack.c.l.b16 %v4929
  %v5186 = vunpack.c.l.b16 %v4930
  %v5187 = vunpack.c.l.b16 %v4931
  %v5188 = vunpack.c.l.b16 %v4932
  %v5189 = vunpack.c.l.b16 %v4933
  %v5190 = vunpack.c.l.b16 %v4934
  %v5191 = vunpack.c.l.b16 %v4935
  %v5192 = vunpack.c.l.b16 %v4936
  %v5193 = vunpack.c.l.b16 %v4937
  %v5194 = vunpack.c.l.b16 %v4938
  %v5195 = vunpack.c.l.b16 %v4939
  %v5196 = vunpack.c.l.b16 %v4940
  %v5197 = vunpack.c.l.b16 %v4941
  %v5198 = vunpack.c.l.b16 %v4942
  %v5199 = vunpack.c.l.b16 %v4943
  %v5200 = vunpack.c.l.b16 %v4944
  %v5201 = vunpack.c.l.b16 %v4945
  %v5202 = vunpack.c.l.b16 %v4946
  %v5203 = vunpack.c.l.b16 %v4947
  %v5204 = vunpack.c.l.b16 %v4948
  %v5205 = vunpack.c.l.b16 %v4949
  %v5206 = vunpack.c.l.b16 %v4950
  %v5207 = vunpack.c.l.b16 %v4951
  %v5208 = vunpack.c.l.b16 %v4952
  %v5209 = vunpack.c.l.b16 %v4953
  %v5210 = vunpack.c.l.b16 %v4954
  %v5211 = vunpack.c.l.b16 %v4955
  %v5212 = vunpack.c.l.b16 %v4956
  %v5213 = vunpack.c.l.b16 %v4957
  %v5214 = vunpack.c.l.b16 %v4958
  %v5215 = vunpack.c.l.b16 %v4959
  %v5216 = vunpack.c.l.b16 %v4960
  %v5217 = vpack.c.b16 %v5186, %v5185
  %v5218 = vpack.c.b16 %v5188, %v5187
  %v5219 = vpack.c.b16 %v5190, %v5189
  %v5220 = vpack.c.b16 %v5192, %v5191
  %v5221 = vpack.c.b16 %v5194, %v5193
  %v5222 = vpack.c.b16 %v5196, %v5195
  %v5223 = vpack.c.b16 %v5198, %v5197
  %v5224 = vpack.c.b16 %v5200, %v5199
  %v5225 = vpack.c.b16 %v5202, %v5201
  %v5226 = vpack.c.b16 %v5204, %v5203
  %v5227 = vpack.c.b16 %v5206, %v5205
  %v5228 = vpack.c.b16 %v5208, %v5207
  %v5229 = vpack.c.b16 %v5210, %v5209
  %v5230 = vpack.c.b16 %v5212, %v5211
  %v5231 = vpack.c.b16 %v5214, %v5213
  %v5232 = vpack.c.b16 %v5216, %v5215
  %5249 = vmatprep.subr.bf16.mxu0 0
  %5250 = vmatpush1.bf16.msra.mxu0 %v4925
  %5251 = vmatprep.subr.bf16.mxu0 0
  %5252 = vmatpush1.bf16.msra.mxu0 %v4324
  %5253 = vmatprep.subr.bf16.mxu0 0
  %5254 = vmatpush1.bf16.msra.mxu0 %v3720
  %5255 = vmatprep.subr.bf16.mxu0 0
  %5256 = vmatpush1.bf16.msra.mxu0 %v3119
  %5257 = vmatprep.subr.bf16.mxu0 0
  %5258 = vmatpush1.bf16.msra.mxu0 %v2514
  %5259 = vmatprep.subr.bf16.mxu0 0
  %5260 = vmatpush1.bf16.msra.mxu0 %v1913
  %5261 = vmatprep.subr.bf16.mxu0 0
  %5262 = vmatpush1.bf16.msra.mxu0 %v1312
  %5263 = vmatprep.subr.bf16.mxu0 0
  %5264 = vmatpush1.bf16.msra.mxu0 %v713
  %5265 = vmatprep.subr.bf16.mxu0 0
  %5266 = vmatpush2.bf16.msra.mxu0 0
  %5267 = vmatprep.subr.bf16.mxu0 0
  %5268 = vmatpush2.bf16.msra.mxu0 0
  %5269 = vmatprep.subr.bf16.mxu0 0
  %5270 = vmatpush2.bf16.msra.mxu0 0
  %5271 = vmatprep.subr.bf16.mxu0 0
  %5272 = vmatpush2.bf16.msra.mxu0 0
  %5273 = vmatprep.subr.bf16.mxu0 0
  %5274 = vmatpush2.bf16.msra.mxu0 0
  %5275 = vmatprep.subr.bf16.mxu0 0
  %5276 = vmatpush2.bf16.msra.mxu0 0
  %5277 = vmatprep.subr.bf16.mxu0 0
  %5278 = vmatpush2.bf16.msra.mxu0 0
  %5279 = vmatprep.subr.bf16.mxu0 0
  %5280 = vmatpush2.bf16.msra.mxu0 0
  %5281 = vmatprep.mubr.bf16.mxu0 0
  %5282 = vmatmul.mubr.bf16.gmra.mxu0 %v5217
  %v5283 = vpop.f32.mrf.mxu0
  %v5284 = vadd.f32 %v4996, %v5283
  %v5285 = vpop.f32.mrf.mxu0
  %v5286 = vpop.f32.mrf.mxu0
  %v5287 = vadd.f32 %v5001, %v5286
  %v5288 = vpop.f32.mrf.mxu0
  %5289 = vmatprep.mubr.bf16.mxu0 0
  %5290 = vmatmul.mubr.bf16.gmra.mxu0 %v5218
  %v5291 = vpop.f32.mrf.mxu0
  %v5292 = vadd.f32 %v5006, %v5291
  %v5293 = vpop.f32.mrf.mxu0
  %v5294 = vpop.f32.mrf.mxu0
  %v5295 = vadd.f32 %v5011, %v5294
  %v5296 = vpop.f32.mrf.mxu0
  %5297 = vmatprep.mubr.bf16.mxu0 0
  %5298 = vmatmul.mubr.bf16.gmra.mxu0 %v5219
  %v5299 = vpop.f32.mrf.mxu0
  %v5300 = vadd.f32 %v5016, %v5299
  %v5301 = vpop.f32.mrf.mxu0
  %v5302 = vpop.f32.mrf.mxu0
  %v5303 = vadd.f32 %v5021, %v5302
  %v5304 = vpop.f32.mrf.mxu0
  %5305 = vmatprep.mubr.bf16.mxu0 0
  %5306 = vmatmul.mubr.bf16.gmra.mxu0 %v5220
  %v5307 = vpop.f32.mrf.mxu0
  %v5308 = vadd.f32 %v5026, %v5307
  %v5309 = vpop.f32.mrf.mxu0
  %v5310 = vpop.f32.mrf.mxu0
  %v5311 = vadd.f32 %v5031, %v5310
  %v5312 = vpop.f32.mrf.mxu0
  %5313 = vmatprep.mubr.bf16.mxu0 0
  %5314 = vmatmul.mubr.bf16.gmra.mxu0 %v5221
  %v5315 = vpop.f32.mrf.mxu0
  %v5316 = vadd.f32 %v5036, %v5315
  %v5317 = vpop.f32.mrf.mxu0
  %v5318 = vpop.f32.mrf.mxu0
  %v5319 = vadd.f32 %v5041, %v5318
  %v5320 = vpop.f32.mrf.mxu0
  %5321 = vmatprep.mubr.bf16.mxu0 0
  %5322 = vmatmul.mubr.bf16.gmra.mxu0 %v5222
  %v5323 = vpop.f32.mrf.mxu0
  %v5324 = vadd.f32 %v5046, %v5323
  %v5325 = vpop.f32.mrf.mxu0
  %v5326 = vpop.f32.mrf.mxu0
  %v5327 = vadd.f32 %v5051, %v5326
  %v5328 = vpop.f32.mrf.mxu0
  %5329 = vmatprep.mubr.bf16.mxu0 0
  %5330 = vmatmul.mubr.bf16.gmra.mxu0 %v5223
  %v5331 = vpop.f32.mrf.mxu0
  %v5332 = vadd.f32 %v5056, %v5331
  %v5333 = vpop.f32.mrf.mxu0
  %v5334 = vpop.f32.mrf.mxu0
  %v5335 = vadd.f32 %v5061, %v5334
  %v5336 = vpop.f32.mrf.mxu0
  %5337 = vmatprep.mubr.bf16.mxu0 0
  %5338 = vmatmul.mubr.bf16.gmra.mxu0 %v5224
  %v5339 = vpop.f32.mrf.mxu0
  %v5340 = vadd.f32 %v5066, %v5339
  %v5341 = vpop.f32.mrf.mxu0
  %v5342 = vpop.f32.mrf.mxu0
  %v5343 = vadd.f32 %v5071, %v5342
  %v5344 = vpop.f32.mrf.mxu0
  %5345 = vmatprep.mubr.bf16.mxu0 0
  %5346 = vmatmul.mubr.bf16.gmra.mxu0 %v5225
  %v5347 = vpop.f32.mrf.mxu0
  %v5348 = vadd.f32 %v5076, %v5347
  %v5349 = vpop.f32.mrf.mxu0
  %v5350 = vpop.f32.mrf.mxu0
  %v5351 = vadd.f32 %v5081, %v5350
  %v5352 = vpop.f32.mrf.mxu0
  %5353 = vmatprep.mubr.bf16.mxu0 0
  %5354 = vmatmul.mubr.bf16.gmra.mxu0 %v5226
  %v5355 = vpop.f32.mrf.mxu0
  %v5356 = vadd.f32 %v5086, %v5355
  %v5357 = vpop.f32.mrf.mxu0
  %v5358 = vpop.f32.mrf.mxu0
  %v5359 = vadd.f32 %v5091, %v5358
  %v5360 = vpop.f32.mrf.mxu0
  %5361 = vmatprep.mubr.bf16.mxu0 0
  %5362 = vmatmul.mubr.bf16.gmra.mxu0 %v5227
  %v5363 = vpop.f32.mrf.mxu0
  %v5364 = vadd.f32 %v5096, %v5363
  %v5365 = vpop.f32.mrf.mxu0
  %v5366 = vpop.f32.mrf.mxu0
  %v5367 = vadd.f32 %v5101, %v5366
  %v5368 = vpop.f32.mrf.mxu0
  %5369 = vmatprep.mubr.bf16.mxu0 0
  %5370 = vmatmul.mubr.bf16.gmra.mxu0 %v5228
  %v5371 = vpop.f32.mrf.mxu0
  %v5372 = vadd.f32 %v5106, %v5371
  %v5373 = vpop.f32.mrf.mxu0
  %v5374 = vpop.f32.mrf.mxu0
  %v5375 = vadd.f32 %v5111, %v5374
  %v5376 = vpop.f32.mrf.mxu0
  %5377 = vmatprep.mubr.bf16.mxu0 0
  %5378 = vmatmul.mubr.bf16.gmra.mxu0 %v5229
  %v5379 = vpop.f32.mrf.mxu0
  %v5380 = vadd.f32 %v5116, %v5379
  %v5381 = vpop.f32.mrf.mxu0
  %v5382 = vpop.f32.mrf.mxu0
  %v5383 = vadd.f32 %v5121, %v5382
  %v5384 = vpop.f32.mrf.mxu0
  %5385 = vmatprep.mubr.bf16.mxu0 0
  %5386 = vmatmul.mubr.bf16.gmra.mxu0 %v5230
  %v5387 = vpop.f32.mrf.mxu0
  %v5388 = vadd.f32 %v5126, %v5387
  %v5389 = vpop.f32.mrf.mxu0
  %v5390 = vpop.f32.mrf.mxu0
  %v5391 = vadd.f32 %v5131, %v5390
  %v5392 = vpop.f32.mrf.mxu0
  %5393 = vmatprep.mubr.bf16.mxu0 0
  %5394 = vmatmul.mubr.bf16.gmra.mxu0 %v5231
  %v5395 = vpop.f32.mrf.mxu0
  %v5396 = vadd.f32 %v5136, %v5395
  %v5397 = vpop.f32.mrf.mxu0
  %v5398 = vpop.f32.mrf.mxu0
  %v5399 = vadd.f32 %v5141, %v5398
  %v5400 = vpop.f32.mrf.mxu0
  %5401 = vmatprep.mubr.bf16.mxu0 0
  %5402 = vmatmul.mubr.bf16.gmra.mxu0 %v5232
  %v5403 = vpop.f32.mrf.mxu0
  %v5404 = vadd.f32 %v5146, %v5403
  %v5405 = vpop.f32.mrf.mxu0
  %v5406 = vpop.f32.mrf.mxu0
  %v5407 = vadd.f32 %v5151, %v5406
  %v5408 = vpop.f32.mrf.mxu0
  %5409 = vdwg.mxu0
  %5410 = vmatprep.subr.bf16.mxu0 0
  %5411 = vmatpush1.bf16.msra.mxu0 %v4926
  %5412 = vmatprep.subr.bf16.mxu0 0
  %5413 = vmatpush1.bf16.msra.mxu0 %v4325
  %5414 = vmatprep.subr.bf16.mxu0 0
  %5415 = vmatpush1.bf16.msra.mxu0 %v3721
  %5416 = vmatprep.subr.bf16.mxu0 0
  %5417 = vmatpush1.bf16.msra.mxu0 %v3120
  %5418 = vmatprep.subr.bf16.mxu0 0
  %5419 = vmatpush1.bf16.msra.mxu0 %v2515
  %5420 = vmatprep.subr.bf16.mxu0 0
  %5421 = vmatpush1.bf16.msra.mxu0 %v1914
  %5422 = vmatprep.subr.bf16.mxu0 0
  %5423 = vmatpush1.bf16.msra.mxu0 %v1313
  %5424 = vmatprep.subr.bf16.mxu0 0
  %5425 = vmatpush1.bf16.msra.mxu0 %v714
  %5426 = vmatprep.subr.bf16.mxu0 0
  %5427 = vmatpush2.bf16.msra.mxu0 0
  %5428 = vmatprep.subr.bf16.mxu0 0
  %5429 = vmatpush2.bf16.msra.mxu0 0
  %5430 = vmatprep.subr.bf16.mxu0 0
  %5431 = vmatpush2.bf16.msra.mxu0 0
  %5432 = vmatprep.subr.bf16.mxu0 0
  %5433 = vmatpush2.bf16.msra.mxu0 0
  %5434 = vmatprep.subr.bf16.mxu0 0
  %5435 = vmatpush2.bf16.msra.mxu0 0
  %5436 = vmatprep.subr.bf16.mxu0 0
  %5437 = vmatpush2.bf16.msra.mxu0 0
  %5438 = vmatprep.subr.bf16.mxu0 0
  %5439 = vmatpush2.bf16.msra.mxu0 0
  %5440 = vmatprep.subr.bf16.mxu0 0
  %5441 = vmatpush2.bf16.msra.mxu0 0
  %5442 = vmatprep.mubr.bf16.mxu0 0
  %5443 = vmatmul.mubr.bf16.gmra.mxu0 %v5217
  %v5444 = vpop.f32.mrf.mxu0
  %v5445 = vadd.f32 %v4996, %v5444
  %v5446 = vpop.f32.mrf.mxu0
  %v5447 = vpop.f32.mrf.mxu0
  %v5448 = vadd.f32 %v5001, %v5447
  %v5449 = vpop.f32.mrf.mxu0
  %5450 = vmatprep.mubr.bf16.mxu0 0
  %5451 = vmatmul.mubr.bf16.gmra.mxu0 %v5218
  %v5452 = vpop.f32.mrf.mxu0
  %v5453 = vadd.f32 %v5006, %v5452
  %v5454 = vpop.f32.mrf.mxu0
  %v5455 = vpop.f32.mrf.mxu0
  %v5456 = vadd.f32 %v5011, %v5455
  %v5457 = vpop.f32.mrf.mxu0
  %5458 = vmatprep.mubr.bf16.mxu0 0
  %5459 = vmatmul.mubr.bf16.gmra.mxu0 %v5219
  %v5460 = vpop.f32.mrf.mxu0
  %v5461 = vadd.f32 %v5016, %v5460
  %v5462 = vpop.f32.mrf.mxu0
  %v5463 = vpop.f32.mrf.mxu0
  %v5464 = vadd.f32 %v5021, %v5463
  %v5465 = vpop.f32.mrf.mxu0
  %5466 = vmatprep.mubr.bf16.mxu0 0
  %5467 = vmatmul.mubr.bf16.gmra.mxu0 %v5220
  %v5468 = vpop.f32.mrf.mxu0
  %v5469 = vadd.f32 %v5026, %v5468
  %v5470 = vpop.f32.mrf.mxu0
  %v5471 = vpop.f32.mrf.mxu0
  %v5472 = vadd.f32 %v5031, %v5471
  %v5473 = vpop.f32.mrf.mxu0
  %5474 = vmatprep.mubr.bf16.mxu0 0
  %5475 = vmatmul.mubr.bf16.gmra.mxu0 %v5221
  %v5476 = vpop.f32.mrf.mxu0
  %v5477 = vadd.f32 %v5036, %v5476
  %v5478 = vpop.f32.mrf.mxu0
  %v5479 = vpop.f32.mrf.mxu0
  %v5480 = vadd.f32 %v5041, %v5479
  %v5481 = vpop.f32.mrf.mxu0
  %5482 = vmatprep.mubr.bf16.mxu0 0
  %5483 = vmatmul.mubr.bf16.gmra.mxu0 %v5222
  %v5484 = vpop.f32.mrf.mxu0
  %v5485 = vadd.f32 %v5046, %v5484
  %v5486 = vpop.f32.mrf.mxu0
  %v5487 = vpop.f32.mrf.mxu0
  %v5488 = vadd.f32 %v5051, %v5487
  %v5489 = vpop.f32.mrf.mxu0
  %5490 = vmatprep.mubr.bf16.mxu0 0
  %5491 = vmatmul.mubr.bf16.gmra.mxu0 %v5223
  %v5492 = vpop.f32.mrf.mxu0
  %v5493 = vadd.f32 %v5056, %v5492
  %v5494 = vpop.f32.mrf.mxu0
  %v5495 = vpop.f32.mrf.mxu0
  %v5496 = vadd.f32 %v5061, %v5495
  %v5497 = vpop.f32.mrf.mxu0
  %5498 = vmatprep.mubr.bf16.mxu0 0
  %5499 = vmatmul.mubr.bf16.gmra.mxu0 %v5224
  %v5500 = vpop.f32.mrf.mxu0
  %v5501 = vadd.f32 %v5066, %v5500
  %v5502 = vpop.f32.mrf.mxu0
  %v5503 = vpop.f32.mrf.mxu0
  %v5504 = vadd.f32 %v5071, %v5503
  %v5505 = vpop.f32.mrf.mxu0
  %5506 = vmatprep.mubr.bf16.mxu0 0
  %5507 = vmatmul.mubr.bf16.gmra.mxu0 %v5225
  %v5508 = vpop.f32.mrf.mxu0
  %v5509 = vadd.f32 %v5076, %v5508
  %v5510 = vpop.f32.mrf.mxu0
  %v5511 = vpop.f32.mrf.mxu0
  %v5512 = vadd.f32 %v5081, %v5511
  %v5513 = vpop.f32.mrf.mxu0
  %5514 = vmatprep.mubr.bf16.mxu0 0
  %5515 = vmatmul.mubr.bf16.gmra.mxu0 %v5226
  %v5516 = vpop.f32.mrf.mxu0
  %v5517 = vadd.f32 %v5086, %v5516
  %v5518 = vpop.f32.mrf.mxu0
  %v5519 = vpop.f32.mrf.mxu0
  %v5520 = vadd.f32 %v5091, %v5519
  %v5521 = vpop.f32.mrf.mxu0
  %5522 = vmatprep.mubr.bf16.mxu0 0
  %5523 = vmatmul.mubr.bf16.gmra.mxu0 %v5227
  %v5524 = vpop.f32.mrf.mxu0
  %v5525 = vadd.f32 %v5096, %v5524
  %v5526 = vpop.f32.mrf.mxu0
  %v5527 = vpop.f32.mrf.mxu0
  %v5528 = vadd.f32 %v5101, %v5527
  %v5529 = vpop.f32.mrf.mxu0
  %5530 = vmatprep.mubr.bf16.mxu0 0
  %5531 = vmatmul.mubr.bf16.gmra.mxu0 %v5228
  %v5532 = vpop.f32.mrf.mxu0
  %v5533 = vadd.f32 %v5106, %v5532
  %v5534 = vpop.f32.mrf.mxu0
  %v5535 = vpop.f32.mrf.mxu0
  %v5536 = vadd.f32 %v5111, %v5535
  %v5537 = vpop.f32.mrf.mxu0
  %5538 = vmatprep.mubr.bf16.mxu0 0
  %5539 = vmatmul.mubr.bf16.gmra.mxu0 %v5229
  %v5540 = vpop.f32.mrf.mxu0
  %v5541 = vadd.f32 %v5116, %v5540
  %v5542 = vpop.f32.mrf.mxu0
  %v5543 = vpop.f32.mrf.mxu0
  %v5544 = vadd.f32 %v5121, %v5543
  %v5545 = vpop.f32.mrf.mxu0
  %5546 = vmatprep.mubr.bf16.mxu0 0
  %5547 = vmatmul.mubr.bf16.gmra.mxu0 %v5230
  %v5548 = vpop.f32.mrf.mxu0
  %v5549 = vadd.f32 %v5126, %v5548
  %v5550 = vpop.f32.mrf.mxu0
  %v5551 = vpop.f32.mrf.mxu0
  %v5552 = vadd.f32 %v5131, %v5551
  %v5553 = vpop.f32.mrf.mxu0
  %5554 = vmatprep.mubr.bf16.mxu0 0
  %5555 = vmatmul.mubr.bf16.gmra.mxu0 %v5231
  %v5556 = vpop.f32.mrf.mxu0
  %v5557 = vadd.f32 %v5136, %v5556
  %v5558 = vpop.f32.mrf.mxu0
  %v5559 = vpop.f32.mrf.mxu0
  %v5560 = vadd.f32 %v5141, %v5559
  %v5561 = vpop.f32.mrf.mxu0
  %5562 = vmatprep.mubr.bf16.mxu0 0
  %5563 = vmatmul.mubr.bf16.gmra.mxu0 %v5232
  %v5564 = vpop.f32.mrf.mxu0
  %v5565 = vadd.f32 %v5146, %v5564
  %v5566 = vpop.f32.mrf.mxu0
  %v5567 = vpop.f32.mrf.mxu0
  %v5568 = vadd.f32 %v5151, %v5567
  %v5569 = vpop.f32.mrf.mxu0
  %5570 = vdwg.mxu0
  %5571 = vmatprep.subr.bf16.mxu0 0
  %5572 = vmatpush1.bf16.msra.mxu0 %v4927
  %5573 = vmatprep.subr.bf16.mxu0 0
  %5574 = vmatpush1.bf16.msra.mxu0 %v4326
  %5575 = vmatprep.subr.bf16.mxu0 0
  %5576 = vmatpush1.bf16.msra.mxu0 %v3722
  %5577 = vmatprep.subr.bf16.mxu0 0
  %5578 = vmatpush1.bf16.msra.mxu0 %v3121
  %5579 = vmatprep.subr.bf16.mxu0 0
  %5580 = vmatpush1.bf16.msra.mxu0 %v2516
  %5581 = vmatprep.subr.bf16.mxu0 0
  %5582 = vmatpush1.bf16.msra.mxu0 %v1915
  %5583 = vmatprep.subr.bf16.mxu0 0
  %5584 = vmatpush1.bf16.msra.mxu0 %v1314
  %5585 = vmatprep.subr.bf16.mxu0 0
  %5586 = vmatpush1.bf16.msra.mxu0 %v715
  %5587 = vmatprep.subr.bf16.mxu0 0
  %5588 = vmatpush2.bf16.msra.mxu0 0
  %5589 = vmatprep.subr.bf16.mxu0 0
  %5590 = vmatpush2.bf16.msra.mxu0 0
  %5591 = vmatprep.subr.bf16.mxu0 0
  %5592 = vmatpush2.bf16.msra.mxu0 0
  %5593 = vmatprep.subr.bf16.mxu0 0
  %5594 = vmatpush2.bf16.msra.mxu0 0
  %5595 = vmatprep.subr.bf16.mxu0 0
  %5596 = vmatpush2.bf16.msra.mxu0 0
  %5597 = vmatprep.subr.bf16.mxu0 0
  %5598 = vmatpush2.bf16.msra.mxu0 0
  %5599 = vmatprep.subr.bf16.mxu0 0
  %5600 = vmatpush2.bf16.msra.mxu0 0
  %5601 = vmatprep.subr.bf16.mxu0 0
  %5602 = vmatpush2.bf16.msra.mxu0 0
  %5603 = vmatprep.mubr.bf16.mxu0 0
  %5604 = vmatmul.mubr.bf16.gmra.mxu0 %v5217
  %v5605 = vpop.f32.mrf.mxu0
  %v5606 = vadd.f32 %v4996, %v5605
  %v5607 = vpop.f32.mrf.mxu0
  %v5608 = vpop.f32.mrf.mxu0
  %v5609 = vadd.f32 %v5001, %v5608
  %v5610 = vpop.f32.mrf.mxu0
  %5611 = vmatprep.mubr.bf16.mxu0 0
  %5612 = vmatmul.mubr.bf16.gmra.mxu0 %v5218
  %v5613 = vpop.f32.mrf.mxu0
  %v5614 = vadd.f32 %v5006, %v5613
  %v5615 = vpop.f32.mrf.mxu0
  %v5616 = vpop.f32.mrf.mxu0
  %v5617 = vadd.f32 %v5011, %v5616
  %v5618 = vpop.f32.mrf.mxu0
  %5619 = vmatprep.mubr.bf16.mxu0 0
  %5620 = vmatmul.mubr.bf16.gmra.mxu0 %v5219
  %v5621 = vpop.f32.mrf.mxu0
  %v5622 = vadd.f32 %v5016, %v5621
  %v5623 = vpop.f32.mrf.mxu0
  %v5624 = vpop.f32.mrf.mxu0
  %v5625 = vadd.f32 %v5021, %v5624
  %v5626 = vpop.f32.mrf.mxu0
  %5627 = vmatprep.mubr.bf16.mxu0 0
  %5628 = vmatmul.mubr.bf16.gmra.mxu0 %v5220
  %v5629 = vpop.f32.mrf.mxu0
  %v5630 = vadd.f32 %v5026, %v5629
  %v5631 = vpop.f32.mrf.mxu0
  %v5632 = vpop.f32.mrf.mxu0
  %v5633 = vadd.f32 %v5031, %v5632
  %v5634 = vpop.f32.mrf.mxu0
  %5635 = vmatprep.mubr.bf16.mxu0 0
  %5636 = vmatmul.mubr.bf16.gmra.mxu0 %v5221
  %v5637 = vpop.f32.mrf.mxu0
  %v5638 = vadd.f32 %v5036, %v5637
  %v5639 = vpop.f32.mrf.mxu0
  %v5640 = vpop.f32.mrf.mxu0
  %v5641 = vadd.f32 %v5041, %v5640
  %v5642 = vpop.f32.mrf.mxu0
  %5643 = vmatprep.mubr.bf16.mxu0 0
  %5644 = vmatmul.mubr.bf16.gmra.mxu0 %v5222
  %v5645 = vpop.f32.mrf.mxu0
  %v5646 = vadd.f32 %v5046, %v5645
  %v5647 = vpop.f32.mrf.mxu0
  %v5648 = vpop.f32.mrf.mxu0
  %v5649 = vadd.f32 %v5051, %v5648
  %v5650 = vpop.f32.mrf.mxu0
  %5651 = vmatprep.mubr.bf16.mxu0 0
  %5652 = vmatmul.mubr.bf16.gmra.mxu0 %v5223
  %v5653 = vpop.f32.mrf.mxu0
  %v5654 = vadd.f32 %v5056, %v5653
  %v5655 = vpop.f32.mrf.mxu0
  %v5656 = vpop.f32.mrf.mxu0
  %v5657 = vadd.f32 %v5061, %v5656
  %v5658 = vpop.f32.mrf.mxu0
  %5659 = vmatprep.mubr.bf16.mxu0 0
  %5660 = vmatmul.mubr.bf16.gmra.mxu0 %v5224
  %v5661 = vpop.f32.mrf.mxu0
  %v5662 = vadd.f32 %v5066, %v5661
  %v5663 = vpop.f32.mrf.mxu0
  %v5664 = vpop.f32.mrf.mxu0
  %v5665 = vadd.f32 %v5071, %v5664
  %v5666 = vpop.f32.mrf.mxu0
  %5667 = vmatprep.mubr.bf16.mxu0 0
  %5668 = vmatmul.mubr.bf16.gmra.mxu0 %v5225
  %v5669 = vpop.f32.mrf.mxu0
  %v5670 = vadd.f32 %v5076, %v5669
  %v5671 = vpop.f32.mrf.mxu0
  %v5672 = vpop.f32.mrf.mxu0
  %v5673 = vadd.f32 %v5081, %v5672
  %v5674 = vpop.f32.mrf.mxu0
  %5675 = vmatprep.mubr.bf16.mxu0 0
  %5676 = vmatmul.mubr.bf16.gmra.mxu0 %v5226
  %v5677 = vpop.f32.mrf.mxu0
  %v5678 = vadd.f32 %v5086, %v5677
  %v5679 = vpop.f32.mrf.mxu0
  %v5680 = vpop.f32.mrf.mxu0
  %v5681 = vadd.f32 %v5091, %v5680
  %v5682 = vpop.f32.mrf.mxu0
  %5683 = vmatprep.mubr.bf16.mxu0 0
  %5684 = vmatmul.mubr.bf16.gmra.mxu0 %v5227
  %v5685 = vpop.f32.mrf.mxu0
  %v5686 = vadd.f32 %v5096, %v5685
  %v5687 = vpop.f32.mrf.mxu0
  %v5688 = vpop.f32.mrf.mxu0
  %v5689 = vadd.f32 %v5101, %v5688
  %v5690 = vpop.f32.mrf.mxu0
  %5691 = vmatprep.mubr.bf16.mxu0 0
  %5692 = vmatmul.mubr.bf16.gmra.mxu0 %v5228
  %v5693 = vpop.f32.mrf.mxu0
  %v5694 = vadd.f32 %v5106, %v5693
  %v5695 = vpop.f32.mrf.mxu0
  %v5696 = vpop.f32.mrf.mxu0
  %v5697 = vadd.f32 %v5111, %v5696
  %v5698 = vpop.f32.mrf.mxu0
  %5699 = vmatprep.mubr.bf16.mxu0 0
  %5700 = vmatmul.mubr.bf16.gmra.mxu0 %v5229
  %v5701 = vpop.f32.mrf.mxu0
  %v5702 = vadd.f32 %v5116, %v5701
  %v5703 = vpop.f32.mrf.mxu0
  %v5704 = vpop.f32.mrf.mxu0
  %v5705 = vadd.f32 %v5121, %v5704
  %v5706 = vpop.f32.mrf.mxu0
  %5707 = vmatprep.mubr.bf16.mxu0 0
  %5708 = vmatmul.mubr.bf16.gmra.mxu0 %v5230
  %v5709 = vpop.f32.mrf.mxu0
  %v5710 = vadd.f32 %v5126, %v5709
  %v5711 = vpop.f32.mrf.mxu0
  %v5712 = vpop.f32.mrf.mxu0
  %v5713 = vadd.f32 %v5131, %v5712
  %v5714 = vpop.f32.mrf.mxu0
  %5715 = vmatprep.mubr.bf16.mxu0 0
  %5716 = vmatmul.mubr.bf16.gmra.mxu0 %v5231
  %v5717 = vpop.f32.mrf.mxu0
  %v5718 = vadd.f32 %v5136, %v5717
  %v5719 = vpop.f32.mrf.mxu0
  %v5720 = vpop.f32.mrf.mxu0
  %v5721 = vadd.f32 %v5141, %v5720
  %v5722 = vpop.f32.mrf.mxu0
  %5723 = vmatprep.mubr.bf16.mxu0 0
  %5724 = vmatmul.mubr.bf16.gmra.mxu0 %v5232
  %v5725 = vpop.f32.mrf.mxu0
  %v5726 = vadd.f32 %v5146, %v5725
  %v5727 = vpop.f32.mrf.mxu0
  %v5728 = vpop.f32.mrf.mxu0
  %v5729 = vadd.f32 %v5151, %v5728
  %v5730 = vpop.f32.mrf.mxu0
  %5731 = vdwg.mxu0
  %5732 = vmatprep.subr.bf16.mxu0 0
  %5733 = vmatpush1.bf16.msra.mxu0 %v4928
  %5734 = vmatprep.subr.bf16.mxu0 0
  %5735 = vmatpush1.bf16.msra.mxu0 %v4327
  %5736 = vmatprep.subr.bf16.mxu0 0
  %5737 = vmatpush1.bf16.msra.mxu0 %v3723
  %5738 = vmatprep.subr.bf16.mxu0 0
  %5739 = vmatpush1.bf16.msra.mxu0 %v3122
  %5740 = vmatprep.subr.bf16.mxu0 0
  %5741 = vmatpush1.bf16.msra.mxu0 %v2517
  %5742 = vmatprep.subr.bf16.mxu0 0
  %5743 = vmatpush1.bf16.msra.mxu0 %v1916
  %5744 = vmatprep.subr.bf16.mxu0 0
  %5745 = vmatpush1.bf16.msra.mxu0 %v1315
  %5746 = vmatprep.subr.bf16.mxu0 0
  %5747 = vmatpush1.bf16.msra.mxu0 %v716
  %5748 = vmatprep.subr.bf16.mxu0 0
  %5749 = vmatpush2.bf16.msra.mxu0 0
  %5750 = vmatprep.subr.bf16.mxu0 0
  %5751 = vmatpush2.bf16.msra.mxu0 0
  %5752 = vmatprep.subr.bf16.mxu0 0
  %5753 = vmatpush2.bf16.msra.mxu0 0
  %5754 = vmatprep.subr.bf16.mxu0 0
  %5755 = vmatpush2.bf16.msra.mxu0 0
  %5756 = vmatprep.subr.bf16.mxu0 0
  %5757 = vmatpush2.bf16.msra.mxu0 0
  %5758 = vmatprep.subr.bf16.mxu0 0
  %5759 = vmatpush2.bf16.msra.mxu0 0
  %5760 = vmatprep.subr.bf16.mxu0 0
  %5761 = vmatpush2.bf16.msra.mxu0 0
  %5762 = vmatprep.subr.bf16.mxu0 0
  %5763 = vmatpush2.bf16.msra.mxu0 0
  %5764 = vmatprep.mubr.bf16.mxu0 0
  %5765 = vmatmul.mubr.bf16.gmra.mxu0 %v5217
  %v5766 = vpop.f32.mrf.mxu0
  %v5767 = vadd.f32 %v4996, %v5766
  %v5768 = vpop.f32.mrf.mxu0
  %v5769 = vpop.f32.mrf.mxu0
  %v5770 = vadd.f32 %v5001, %v5769
  %v5771 = vpop.f32.mrf.mxu0
  %5772 = vmatprep.mubr.bf16.mxu0 0
  %5773 = vmatmul.mubr.bf16.gmra.mxu0 %v5218
  %v5774 = vpop.f32.mrf.mxu0
  %v5775 = vadd.f32 %v5006, %v5774
  %v5776 = vpop.f32.mrf.mxu0
  %v5777 = vpop.f32.mrf.mxu0
  %v5778 = vadd.f32 %v5011, %v5777
  %v5779 = vpop.f32.mrf.mxu0
  %5780 = vmatprep.mubr.bf16.mxu0 0
  %5781 = vmatmul.mubr.bf16.gmra.mxu0 %v5219
  %v5782 = vpop.f32.mrf.mxu0
  %v5783 = vadd.f32 %v5016, %v5782
  %v5784 = vpop.f32.mrf.mxu0
  %v5785 = vpop.f32.mrf.mxu0
  %v5786 = vadd.f32 %v5021, %v5785
  %v5787 = vpop.f32.mrf.mxu0
  %5788 = vmatprep.mubr.bf16.mxu0 0
  %5789 = vmatmul.mubr.bf16.gmra.mxu0 %v5220
  %v5790 = vpop.f32.mrf.mxu0
  %v5791 = vadd.f32 %v5026, %v5790
  %v5792 = vpop.f32.mrf.mxu0
  %v5793 = vpop.f32.mrf.mxu0
  %v5794 = vadd.f32 %v5031, %v5793
  %v5795 = vpop.f32.mrf.mxu0
  %5796 = vmatprep.mubr.bf16.mxu0 0
  %5797 = vmatmul.mubr.bf16.gmra.mxu0 %v5221
  %v5798 = vpop.f32.mrf.mxu0
  %v5799 = vadd.f32 %v5036, %v5798
  %v5800 = vpop.f32.mrf.mxu0
  %v5801 = vpop.f32.mrf.mxu0
  %v5802 = vadd.f32 %v5041, %v5801
  %v5803 = vpop.f32.mrf.mxu0
  %5804 = vmatprep.mubr.bf16.mxu0 0
  %5805 = vmatmul.mubr.bf16.gmra.mxu0 %v5222
  %v5806 = vpop.f32.mrf.mxu0
  %v5807 = vadd.f32 %v5046, %v5806
  %v5808 = vpop.f32.mrf.mxu0
  %v5809 = vpop.f32.mrf.mxu0
  %v5810 = vadd.f32 %v5051, %v5809
  %v5811 = vpop.f32.mrf.mxu0
  %5812 = vmatprep.mubr.bf16.mxu0 0
  %5813 = vmatmul.mubr.bf16.gmra.mxu0 %v5223
  %v5814 = vpop.f32.mrf.mxu0
  %v5815 = vadd.f32 %v5056, %v5814
  %v5816 = vpop.f32.mrf.mxu0
  %v5817 = vpop.f32.mrf.mxu0
  %v5818 = vadd.f32 %v5061, %v5817
  %v5819 = vpop.f32.mrf.mxu0
  %5820 = vmatprep.mubr.bf16.mxu0 0
  %5821 = vmatmul.mubr.bf16.gmra.mxu0 %v5224
  %v5822 = vpop.f32.mrf.mxu0
  %v5823 = vadd.f32 %v5066, %v5822
  %v5824 = vpop.f32.mrf.mxu0
  %v5825 = vpop.f32.mrf.mxu0
  %v5826 = vadd.f32 %v5071, %v5825
  %v5827 = vpop.f32.mrf.mxu0
  %5828 = vmatprep.mubr.bf16.mxu0 0
  %5829 = vmatmul.mubr.bf16.gmra.mxu0 %v5225
  %v5830 = vpop.f32.mrf.mxu0
  %v5831 = vadd.f32 %v5076, %v5830
  %v5832 = vpop.f32.mrf.mxu0
  %v5833 = vpop.f32.mrf.mxu0
  %v5834 = vadd.f32 %v5081, %v5833
  %v5835 = vpop.f32.mrf.mxu0
  %5836 = vmatprep.mubr.bf16.mxu0 0
  %5837 = vmatmul.mubr.bf16.gmra.mxu0 %v5226
  %v5838 = vpop.f32.mrf.mxu0
  %v5839 = vadd.f32 %v5086, %v5838
  %v5840 = vpop.f32.mrf.mxu0
  %v5841 = vpop.f32.mrf.mxu0
  %v5842 = vadd.f32 %v5091, %v5841
  %v5843 = vpop.f32.mrf.mxu0
  %5844 = vmatprep.mubr.bf16.mxu0 0
  %5845 = vmatmul.mubr.bf16.gmra.mxu0 %v5227
  %v5846 = vpop.f32.mrf.mxu0
  %v5847 = vadd.f32 %v5096, %v5846
  %v5848 = vpop.f32.mrf.mxu0
  %v5849 = vpop.f32.mrf.mxu0
  %v5850 = vadd.f32 %v5101, %v5849
  %v5851 = vpop.f32.mrf.mxu0
  %5852 = vmatprep.mubr.bf16.mxu0 0
  %5853 = vmatmul.mubr.bf16.gmra.mxu0 %v5228
  %v5854 = vpop.f32.mrf.mxu0
  %v5855 = vadd.f32 %v5106, %v5854
  %v5856 = vpop.f32.mrf.mxu0
  %v5857 = vpop.f32.mrf.mxu0
  %v5858 = vadd.f32 %v5111, %v5857
  %v5859 = vpop.f32.mrf.mxu0
  %5860 = vmatprep.mubr.bf16.mxu0 0
  %5861 = vmatmul.mubr.bf16.gmra.mxu0 %v5229
  %v5862 = vpop.f32.mrf.mxu0
  %v5863 = vadd.f32 %v5116, %v5862
  %v5864 = vpop.f32.mrf.mxu0
  %v5865 = vpop.f32.mrf.mxu0
  %v5866 = vadd.f32 %v5121, %v5865
  %v5867 = vpop.f32.mrf.mxu0
  %5868 = vmatprep.mubr.bf16.mxu0 0
  %5869 = vmatmul.mubr.bf16.gmra.mxu0 %v5230
  %v5870 = vpop.f32.mrf.mxu0
  %v5871 = vadd.f32 %v5126, %v5870
  %v5872 = vpop.f32.mrf.mxu0
  %v5873 = vpop.f32.mrf.mxu0
  %v5874 = vadd.f32 %v5131, %v5873
  %v5875 = vpop.f32.mrf.mxu0
  %5876 = vmatprep.mubr.bf16.mxu0 0
  %5877 = vmatmul.mubr.bf16.gmra.mxu0 %v5231
  %v5878 = vpop.f32.mrf.mxu0
  %v5879 = vadd.f32 %v5136, %v5878
  %v5880 = vpop.f32.mrf.mxu0
  %v5881 = vpop.f32.mrf.mxu0
  %v5882 = vadd.f32 %v5141, %v5881
  %v5883 = vpop.f32.mrf.mxu0
  %5884 = vmatprep.mubr.bf16.mxu0 0
  %5885 = vmatmul.mubr.bf16.gmra.mxu0 %v5232
  %v5886 = vpop.f32.mrf.mxu0
  %v5887 = vadd.f32 %v5146, %v5886
  %v5888 = vpop.f32.mrf.mxu0
  %v5889 = vpop.f32.mrf.mxu0
  %v5890 = vadd.f32 %v5151, %v5889
  %v5891 = vpop.f32.mrf.mxu0
  %5892 = vdwg.mxu0
  %v5893 = vsel %vm568, %v5284, -inf
  %5894 = vmax.xlane.f32.xlu0 %v5893
  %v5895 = vpop.xlane.xlu0 %5894
  %v5896 = vsel %vm568, %v5287, -inf
  %5897 = vmax.xlane.f32.xlu0 %v5896
  %v5898 = vpop.xlane.xlu0 %5897
  %v5899 = vsel %vm568, %v5292, -inf
  %5900 = vmax.xlane.f32.xlu0 %v5899
  %v5901 = vpop.xlane.xlu0 %5900
  %v5902 = vsel %vm568, %v5295, -inf
  %5903 = vmax.xlane.f32.xlu0 %v5902
  %v5904 = vpop.xlane.xlu0 %5903
  %v5905 = vsel %vm568, %v5300, -inf
  %5906 = vmax.xlane.f32.xlu0 %v5905
  %v5907 = vpop.xlane.xlu0 %5906
  %v5908 = vsel %vm568, %v5303, -inf
  %5909 = vmax.xlane.f32.xlu0 %v5908
  %v5910 = vpop.xlane.xlu0 %5909
  %v5911 = vsel %vm568, %v5308, -inf
  %5912 = vmax.xlane.f32.xlu0 %v5911
  %v5913 = vpop.xlane.xlu0 %5912
  %v5914 = vsel %vm568, %v5311, -inf
  %5915 = vmax.xlane.f32.xlu0 %v5914
  %v5916 = vpop.xlane.xlu0 %5915
  %v5917 = vsel %vm568, %v5316, -inf
  %5918 = vmax.xlane.f32.xlu0 %v5917
  %v5919 = vpop.xlane.xlu0 %5918
  %v5920 = vsel %vm568, %v5319, -inf
  %5921 = vmax.xlane.f32.xlu0 %v5920
  %v5922 = vpop.xlane.xlu0 %5921
  %v5923 = vsel %vm568, %v5324, -inf
  %5924 = vmax.xlane.f32.xlu0 %v5923
  %v5925 = vpop.xlane.xlu0 %5924
  %v5926 = vsel %vm568, %v5327, -inf
  %5927 = vmax.xlane.f32.xlu0 %v5926
  %v5928 = vpop.xlane.xlu0 %5927
  %v5929 = vsel %vm568, %v5332, -inf
  %5930 = vmax.xlane.f32.xlu0 %v5929
  %v5931 = vpop.xlane.xlu0 %5930
  %v5932 = vsel %vm568, %v5335, -inf
  %5933 = vmax.xlane.f32.xlu0 %v5932
  %v5934 = vpop.xlane.xlu0 %5933
  %v5935 = vsel %vm568, %v5340, -inf
  %5936 = vmax.xlane.f32.xlu0 %v5935
  %v5937 = vpop.xlane.xlu0 %5936
  %v5938 = vsel %vm568, %v5343, -inf
  %5939 = vmax.xlane.f32.xlu0 %v5938
  %v5940 = vpop.xlane.xlu0 %5939
  %v5941 = vsel %vm568, %v5348, -inf
  %5942 = vmax.xlane.f32.xlu0 %v5941
  %v5943 = vpop.xlane.xlu0 %5942
  %v5944 = vsel %vm568, %v5351, -inf
  %5945 = vmax.xlane.f32.xlu0 %v5944
  %v5946 = vpop.xlane.xlu0 %5945
  %v5947 = vsel %vm568, %v5356, -inf
  %5948 = vmax.xlane.f32.xlu0 %v5947
  %v5949 = vpop.xlane.xlu0 %5948
  %v5950 = vsel %vm568, %v5359, -inf
  %5951 = vmax.xlane.f32.xlu0 %v5950
  %v5952 = vpop.xlane.xlu0 %5951
  %v5953 = vsel %vm568, %v5364, -inf
  %5954 = vmax.xlane.f32.xlu0 %v5953
  %v5955 = vpop.xlane.xlu0 %5954
  %v5956 = vsel %vm568, %v5367, -inf
  %5957 = vmax.xlane.f32.xlu0 %v5956
  %v5958 = vpop.xlane.xlu0 %5957
  %v5959 = vsel %vm568, %v5372, -inf
  %5960 = vmax.xlane.f32.xlu0 %v5959
  %v5961 = vpop.xlane.xlu0 %5960
  %v5962 = vsel %vm568, %v5375, -inf
  %5963 = vmax.xlane.f32.xlu0 %v5962
  %v5964 = vpop.xlane.xlu0 %5963
  %v5965 = vsel %vm568, %v5380, -inf
  %5966 = vmax.xlane.f32.xlu0 %v5965
  %v5967 = vpop.xlane.xlu0 %5966
  %v5968 = vsel %vm568, %v5383, -inf
  %5969 = vmax.xlane.f32.xlu0 %v5968
  %v5970 = vpop.xlane.xlu0 %5969
  %v5971 = vsel %vm568, %v5388, -inf
  %5972 = vmax.xlane.f32.xlu0 %v5971
  %v5973 = vpop.xlane.xlu0 %5972
  %v5974 = vsel %vm568, %v5391, -inf
  %5975 = vmax.xlane.f32.xlu0 %v5974
  %v5976 = vpop.xlane.xlu0 %5975
  %v5977 = vsel %vm568, %v5396, -inf
  %5978 = vmax.xlane.f32.xlu0 %v5977
  %v5979 = vpop.xlane.xlu0 %5978
  %v5980 = vsel %vm568, %v5399, -inf
  %5981 = vmax.xlane.f32.xlu0 %v5980
  %v5982 = vpop.xlane.xlu0 %5981
  %v5983 = vsel %vm568, %v5404, -inf
  %5984 = vmax.xlane.f32.xlu0 %v5983
  %v5985 = vpop.xlane.xlu0 %5984
  %v5986 = vsel %vm568, %v5407, -inf
  %5987 = vmax.xlane.f32.xlu0 %v5986
  %v5988 = vpop.xlane.xlu0 %5987
  %v5989 = vsel %vm568, %v5445, -inf
  %5990 = vmax.xlane.f32.xlu0 %v5989
  %v5991 = vpop.xlane.xlu0 %5990
  %v5992 = vsel %vm568, %v5448, -inf
  %5993 = vmax.xlane.f32.xlu0 %v5992
  %v5994 = vpop.xlane.xlu0 %5993
  %v5995 = vsel %vm568, %v5453, -inf
  %5996 = vmax.xlane.f32.xlu0 %v5995
  %v5997 = vpop.xlane.xlu0 %5996
  %v5998 = vsel %vm568, %v5456, -inf
  %5999 = vmax.xlane.f32.xlu0 %v5998
  %v6000 = vpop.xlane.xlu0 %5999
  %v6001 = vsel %vm568, %v5461, -inf
  %6002 = vmax.xlane.f32.xlu0 %v6001
  %v6003 = vpop.xlane.xlu0 %6002
  %v6004 = vsel %vm568, %v5464, -inf
  %6005 = vmax.xlane.f32.xlu0 %v6004
  %v6006 = vpop.xlane.xlu0 %6005
  %v6007 = vsel %vm568, %v5469, -inf
  %6008 = vmax.xlane.f32.xlu0 %v6007
  %v6009 = vpop.xlane.xlu0 %6008
  %v6010 = vsel %vm568, %v5472, -inf
  %6011 = vmax.xlane.f32.xlu0 %v6010
  %v6012 = vpop.xlane.xlu0 %6011
  %v6013 = vsel %vm568, %v5477, -inf
  %6014 = vmax.xlane.f32.xlu0 %v6013
  %v6015 = vpop.xlane.xlu0 %6014
  %v6016 = vsel %vm568, %v5480, -inf
  %6017 = vmax.xlane.f32.xlu0 %v6016
  %v6018 = vpop.xlane.xlu0 %6017
  %v6019 = vsel %vm568, %v5485, -inf
  %6020 = vmax.xlane.f32.xlu0 %v6019
  %v6021 = vpop.xlane.xlu0 %6020
  %v6022 = vsel %vm568, %v5488, -inf
  %6023 = vmax.xlane.f32.xlu0 %v6022
  %v6024 = vpop.xlane.xlu0 %6023
  %v6025 = vsel %vm568, %v5493, -inf
  %6026 = vmax.xlane.f32.xlu0 %v6025
  %v6027 = vpop.xlane.xlu0 %6026
  %v6028 = vsel %vm568, %v5496, -inf
  %6029 = vmax.xlane.f32.xlu0 %v6028
  %v6030 = vpop.xlane.xlu0 %6029
  %v6031 = vsel %vm568, %v5501, -inf
  %6032 = vmax.xlane.f32.xlu0 %v6031
  %v6033 = vpop.xlane.xlu0 %6032
  %v6034 = vsel %vm568, %v5504, -inf
  %6035 = vmax.xlane.f32.xlu0 %v6034
  %v6036 = vpop.xlane.xlu0 %6035
  %v6037 = vsel %vm568, %v5509, -inf
  %6038 = vmax.xlane.f32.xlu0 %v6037
  %v6039 = vpop.xlane.xlu0 %6038
  %v6040 = vsel %vm568, %v5512, -inf
  %6041 = vmax.xlane.f32.xlu0 %v6040
  %v6042 = vpop.xlane.xlu0 %6041
  %v6043 = vsel %vm568, %v5517, -inf
  %6044 = vmax.xlane.f32.xlu0 %v6043
  %v6045 = vpop.xlane.xlu0 %6044
  %v6046 = vsel %vm568, %v5520, -inf
  %6047 = vmax.xlane.f32.xlu0 %v6046
  %v6048 = vpop.xlane.xlu0 %6047
  %v6049 = vsel %vm568, %v5525, -inf
  %6050 = vmax.xlane.f32.xlu0 %v6049
  %v6051 = vpop.xlane.xlu0 %6050
  %v6052 = vsel %vm568, %v5528, -inf
  %6053 = vmax.xlane.f32.xlu0 %v6052
  %v6054 = vpop.xlane.xlu0 %6053
  %v6055 = vsel %vm568, %v5533, -inf
  %6056 = vmax.xlane.f32.xlu0 %v6055
  %v6057 = vpop.xlane.xlu0 %6056
  %v6058 = vsel %vm568, %v5536, -inf
  %6059 = vmax.xlane.f32.xlu0 %v6058
  %v6060 = vpop.xlane.xlu0 %6059
  %v6061 = vsel %vm568, %v5541, -inf
  %6062 = vmax.xlane.f32.xlu0 %v6061
  %v6063 = vpop.xlane.xlu0 %6062
  %v6064 = vsel %vm568, %v5544, -inf
  %6065 = vmax.xlane.f32.xlu0 %v6064
  %v6066 = vpop.xlane.xlu0 %6065
  %v6067 = vsel %vm568, %v5549, -inf
  %6068 = vmax.xlane.f32.xlu0 %v6067
  %v6069 = vpop.xlane.xlu0 %6068
  %v6070 = vsel %vm568, %v5552, -inf
  %6071 = vmax.xlane.f32.xlu0 %v6070
  %v6072 = vpop.xlane.xlu0 %6071
  %v6073 = vsel %vm568, %v5557, -inf
  %6074 = vmax.xlane.f32.xlu0 %v6073
  %v6075 = vpop.xlane.xlu0 %6074
  %v6076 = vsel %vm568, %v5560, -inf
  %6077 = vmax.xlane.f32.xlu0 %v6076
  %v6078 = vpop.xlane.xlu0 %6077
  %v6079 = vsel %vm568, %v5565, -inf
  %6080 = vmax.xlane.f32.xlu0 %v6079
  %v6081 = vpop.xlane.xlu0 %6080
  %v6082 = vsel %vm568, %v5568, -inf
  %6083 = vmax.xlane.f32.xlu0 %v6082
  %v6084 = vpop.xlane.xlu0 %6083
  %v6085 = vsel %vm568, %v5606, -inf
  %6086 = vmax.xlane.f32.xlu0 %v6085
  %v6087 = vpop.xlane.xlu0 %6086
  %v6088 = vsel %vm568, %v5609, -inf
  %6089 = vmax.xlane.f32.xlu0 %v6088
  %v6090 = vpop.xlane.xlu0 %6089
  %v6091 = vsel %vm568, %v5614, -inf
  %6092 = vmax.xlane.f32.xlu0 %v6091
  %v6093 = vpop.xlane.xlu0 %6092
  %v6094 = vsel %vm568, %v5617, -inf
  %6095 = vmax.xlane.f32.xlu0 %v6094
  %v6096 = vpop.xlane.xlu0 %6095
  %v6097 = vsel %vm568, %v5622, -inf
  %6098 = vmax.xlane.f32.xlu0 %v6097
  %v6099 = vpop.xlane.xlu0 %6098
  %v6100 = vsel %vm568, %v5625, -inf
  %6101 = vmax.xlane.f32.xlu0 %v6100
  %v6102 = vpop.xlane.xlu0 %6101
  %v6103 = vsel %vm568, %v5630, -inf
  %6104 = vmax.xlane.f32.xlu0 %v6103
  %v6105 = vpop.xlane.xlu0 %6104
  %v6106 = vsel %vm568, %v5633, -inf
  %6107 = vmax.xlane.f32.xlu0 %v6106
  %v6108 = vpop.xlane.xlu0 %6107
  %v6109 = vsel %vm568, %v5638, -inf
  %6110 = vmax.xlane.f32.xlu0 %v6109
  %v6111 = vpop.xlane.xlu0 %6110
  %v6112 = vsel %vm568, %v5641, -inf
  %6113 = vmax.xlane.f32.xlu0 %v6112
  %v6114 = vpop.xlane.xlu0 %6113
  %v6115 = vsel %vm568, %v5646, -inf
  %6116 = vmax.xlane.f32.xlu0 %v6115
  %v6117 = vpop.xlane.xlu0 %6116
  %v6118 = vsel %vm568, %v5649, -inf
  %6119 = vmax.xlane.f32.xlu0 %v6118
  %v6120 = vpop.xlane.xlu0 %6119
  %v6121 = vsel %vm568, %v5654, -inf
  %6122 = vmax.xlane.f32.xlu0 %v6121
  %v6123 = vpop.xlane.xlu0 %6122
  %v6124 = vsel %vm568, %v5657, -inf
  %6125 = vmax.xlane.f32.xlu0 %v6124
  %v6126 = vpop.xlane.xlu0 %6125
  %v6127 = vsel %vm568, %v5662, -inf
  %6128 = vmax.xlane.f32.xlu0 %v6127
  %v6129 = vpop.xlane.xlu0 %6128
  %v6130 = vsel %vm568, %v5665, -inf
  %6131 = vmax.xlane.f32.xlu0 %v6130
  %v6132 = vpop.xlane.xlu0 %6131
  %v6133 = vsel %vm568, %v5670, -inf
  %6134 = vmax.xlane.f32.xlu0 %v6133
  %v6135 = vpop.xlane.xlu0 %6134
  %v6136 = vsel %vm568, %v5673, -inf
  %6137 = vmax.xlane.f32.xlu0 %v6136
  %v6138 = vpop.xlane.xlu0 %6137
  %v6139 = vsel %vm568, %v5678, -inf
  %6140 = vmax.xlane.f32.xlu0 %v6139
  %v6141 = vpop.xlane.xlu0 %6140
  %v6142 = vsel %vm568, %v5681, -inf
  %6143 = vmax.xlane.f32.xlu0 %v6142
  %v6144 = vpop.xlane.xlu0 %6143
  %v6145 = vsel %vm568, %v5686, -inf
  %6146 = vmax.xlane.f32.xlu0 %v6145
  %v6147 = vpop.xlane.xlu0 %6146
  %v6148 = vsel %vm568, %v5689, -inf
  %6149 = vmax.xlane.f32.xlu0 %v6148
  %v6150 = vpop.xlane.xlu0 %6149
  %v6151 = vsel %vm568, %v5694, -inf
  %6152 = vmax.xlane.f32.xlu0 %v6151
  %v6153 = vpop.xlane.xlu0 %6152
  %v6154 = vsel %vm568, %v5697, -inf
  %6155 = vmax.xlane.f32.xlu0 %v6154
  %v6156 = vpop.xlane.xlu0 %6155
  %v6157 = vsel %vm568, %v5702, -inf
  %6158 = vmax.xlane.f32.xlu0 %v6157
  %v6159 = vpop.xlane.xlu0 %6158
  %v6160 = vsel %vm568, %v5705, -inf
  %6161 = vmax.xlane.f32.xlu0 %v6160
  %v6162 = vpop.xlane.xlu0 %6161
  %v6163 = vsel %vm568, %v5710, -inf
  %6164 = vmax.xlane.f32.xlu0 %v6163
  %v6165 = vpop.xlane.xlu0 %6164
  %v6166 = vsel %vm568, %v5713, -inf
  %6167 = vmax.xlane.f32.xlu0 %v6166
  %v6168 = vpop.xlane.xlu0 %6167
  %v6169 = vsel %vm568, %v5718, -inf
  %6170 = vmax.xlane.f32.xlu0 %v6169
  %v6171 = vpop.xlane.xlu0 %6170
  %v6172 = vsel %vm568, %v5721, -inf
  %6173 = vmax.xlane.f32.xlu0 %v6172
  %v6174 = vpop.xlane.xlu0 %6173
  %v6175 = vsel %vm568, %v5726, -inf
  %6176 = vmax.xlane.f32.xlu0 %v6175
  %v6177 = vpop.xlane.xlu0 %6176
  %v6178 = vsel %vm568, %v5729, -inf
  %6179 = vmax.xlane.f32.xlu0 %v6178
  %v6180 = vpop.xlane.xlu0 %6179
  %v6181 = vsel %vm568, %v5767, -inf
  %6182 = vmax.xlane.f32.xlu0 %v6181
  %v6183 = vpop.xlane.xlu0 %6182
  %v6184 = vsel %vm568, %v5770, -inf
  %6185 = vmax.xlane.f32.xlu0 %v6184
  %v6186 = vpop.xlane.xlu0 %6185
  %v6187 = vsel %vm568, %v5775, -inf
  %6188 = vmax.xlane.f32.xlu0 %v6187
  %v6189 = vpop.xlane.xlu0 %6188
  %v6190 = vsel %vm568, %v5778, -inf
  %6191 = vmax.xlane.f32.xlu0 %v6190
  %v6192 = vpop.xlane.xlu0 %6191
  %v6193 = vsel %vm568, %v5783, -inf
  %6194 = vmax.xlane.f32.xlu0 %v6193
  %v6195 = vpop.xlane.xlu0 %6194
  %v6196 = vsel %vm568, %v5786, -inf
  %6197 = vmax.xlane.f32.xlu0 %v6196
  %v6198 = vpop.xlane.xlu0 %6197
  %v6199 = vsel %vm568, %v5791, -inf
  %6200 = vmax.xlane.f32.xlu0 %v6199
  %v6201 = vpop.xlane.xlu0 %6200
  %v6202 = vsel %vm568, %v5794, -inf
  %6203 = vmax.xlane.f32.xlu0 %v6202
  %v6204 = vpop.xlane.xlu0 %6203
  %v6205 = vsel %vm568, %v5799, -inf
  %6206 = vmax.xlane.f32.xlu0 %v6205
  %v6207 = vpop.xlane.xlu0 %6206
  %v6208 = vsel %vm568, %v5802, -inf
  %6209 = vmax.xlane.f32.xlu0 %v6208
  %v6210 = vpop.xlane.xlu0 %6209
  %v6211 = vsel %vm568, %v5807, -inf
  %6212 = vmax.xlane.f32.xlu0 %v6211
  %v6213 = vpop.xlane.xlu0 %6212
  %v6214 = vsel %vm568, %v5810, -inf
  %6215 = vmax.xlane.f32.xlu0 %v6214
  %v6216 = vpop.xlane.xlu0 %6215
  %v6217 = vsel %vm568, %v5815, -inf
  %6218 = vmax.xlane.f32.xlu0 %v6217
  %v6219 = vpop.xlane.xlu0 %6218
  %v6220 = vsel %vm568, %v5818, -inf
  %6221 = vmax.xlane.f32.xlu0 %v6220
  %v6222 = vpop.xlane.xlu0 %6221
  %v6223 = vsel %vm568, %v5823, -inf
  %6224 = vmax.xlane.f32.xlu0 %v6223
  %v6225 = vpop.xlane.xlu0 %6224
  %v6226 = vsel %vm568, %v5826, -inf
  %6227 = vmax.xlane.f32.xlu0 %v6226
  %v6228 = vpop.xlane.xlu0 %6227
  %v6229 = vsel %vm568, %v5831, -inf
  %6230 = vmax.xlane.f32.xlu0 %v6229
  %v6231 = vpop.xlane.xlu0 %6230
  %v6232 = vsel %vm568, %v5834, -inf
  %6233 = vmax.xlane.f32.xlu0 %v6232
  %v6234 = vpop.xlane.xlu0 %6233
  %v6235 = vsel %vm568, %v5839, -inf
  %6236 = vmax.xlane.f32.xlu0 %v6235
  %v6237 = vpop.xlane.xlu0 %6236
  %v6238 = vsel %vm568, %v5842, -inf
  %6239 = vmax.xlane.f32.xlu0 %v6238
  %v6240 = vpop.xlane.xlu0 %6239
  %v6241 = vsel %vm568, %v5847, -inf
  %6242 = vmax.xlane.f32.xlu0 %v6241
  %v6243 = vpop.xlane.xlu0 %6242
  %v6244 = vsel %vm568, %v5850, -inf
  %6245 = vmax.xlane.f32.xlu0 %v6244
  %v6246 = vpop.xlane.xlu0 %6245
  %v6247 = vsel %vm568, %v5855, -inf
  %6248 = vmax.xlane.f32.xlu0 %v6247
  %v6249 = vpop.xlane.xlu0 %6248
  %v6250 = vsel %vm568, %v5858, -inf
  %6251 = vmax.xlane.f32.xlu0 %v6250
  %v6252 = vpop.xlane.xlu0 %6251
  %v6253 = vsel %vm568, %v5863, -inf
  %6254 = vmax.xlane.f32.xlu0 %v6253
  %v6255 = vpop.xlane.xlu0 %6254
  %v6256 = vsel %vm568, %v5866, -inf
  %6257 = vmax.xlane.f32.xlu0 %v6256
  %v6258 = vpop.xlane.xlu0 %6257
  %v6259 = vsel %vm568, %v5871, -inf
  %6260 = vmax.xlane.f32.xlu0 %v6259
  %v6261 = vpop.xlane.xlu0 %6260
  %v6262 = vsel %vm568, %v5874, -inf
  %6263 = vmax.xlane.f32.xlu0 %v6262
  %v6264 = vpop.xlane.xlu0 %6263
  %v6265 = vsel %vm568, %v5879, -inf
  %6266 = vmax.xlane.f32.xlu0 %v6265
  %v6267 = vpop.xlane.xlu0 %6266
  %v6268 = vsel %vm568, %v5882, -inf
  %6269 = vmax.xlane.f32.xlu0 %v6268
  %v6270 = vpop.xlane.xlu0 %6269
  %v6271 = vsel %vm568, %v5887, -inf
  %6272 = vmax.xlane.f32.xlu0 %v6271
  %v6273 = vpop.xlane.xlu0 %6272
  %v6274 = vsel %vm568, %v5890, -inf
  %6275 = vmax.xlane.f32.xlu0 %v6274
  %v6276 = vpop.xlane.xlu0 %6275
  %v6277 = vld [vmem:[%s10] sm:$0xf]
  %v6278 = vld [vmem:[%s10 + $0x4] sm:$0xf]
  %v6279 = vld [vmem:[%s10 + $0x8] sm:$0xf]
  %v6280 = vld [vmem:[%s10 + $0xc] sm:$0xf]
  %v6281 = vld [vmem:[%s10 + $0x10] sm:$0xf]
  %v6282 = vld [vmem:[%s10 + $0x14] sm:$0xf]
  %v6283 = vld [vmem:[%s10 + $0x18] sm:$0xf]
  %v6284 = vld [vmem:[%s10 + $0x1c] sm:$0xf]
  %v6285 = vld [vmem:[%s10 + $0x20] sm:$0xf]
  %v6286 = vld [vmem:[%s10 + $0x24] sm:$0xf]
  %v6287 = vld [vmem:[%s10 + $0x28] sm:$0xf]
  %v6288 = vld [vmem:[%s10 + $0x2c] sm:$0xf]
  %v6289 = vld [vmem:[%s10 + $0x30] sm:$0xf]
  %v6290 = vld [vmem:[%s10 + $0x34] sm:$0xf]
  %v6291 = vld [vmem:[%s10 + $0x38] sm:$0xf]
  %v6292 = vld [vmem:[%s10 + $0x3c] sm:$0xf]
  %v6293 = vld [vmem:[%s10 + $0x40] sm:$0xf]
  %v6294 = vld [vmem:[%s10 + $0x44] sm:$0xf]
  %v6295 = vld [vmem:[%s10 + $0x48] sm:$0xf]
  %v6296 = vld [vmem:[%s10 + $0x4c] sm:$0xf]
  %v6297 = vld [vmem:[%s10 + $0x50] sm:$0xf]
  %v6298 = vld [vmem:[%s10 + $0x54] sm:$0xf]
  %v6299 = vld [vmem:[%s10 + $0x58] sm:$0xf]
  %v6300 = vld [vmem:[%s10 + $0x5c] sm:$0xf]
  %v6301 = vld [vmem:[%s10 + $0x60] sm:$0xf]
  %v6302 = vld [vmem:[%s10 + $0x64] sm:$0xf]
  %v6303 = vld [vmem:[%s10 + $0x68] sm:$0xf]
  %v6304 = vld [vmem:[%s10 + $0x6c] sm:$0xf]
  %v6305 = vld [vmem:[%s10 + $0x70] sm:$0xf]
  %v6306 = vld [vmem:[%s10 + $0x74] sm:$0xf]
  %v6307 = vld [vmem:[%s10 + $0x78] sm:$0xf]
  %v6308 = vld [vmem:[%s10 + $0x7c] sm:$0xf]
  %v6309 = vld [vmem:[%s9] sm:$0xff]
  %v6310 = vld [vmem:[%s9 + $0x8] sm:$0xff]
  %v6311 = vld [vmem:[%s9 + $0x10] sm:$0xff]
  %v6312 = vld [vmem:[%s9 + $0x18] sm:$0xff]
  %v6313 = vld [vmem:[%s9 + $0x20] sm:$0xff]
  %v6314 = vld [vmem:[%s9 + $0x28] sm:$0xff]
  %v6315 = vld [vmem:[%s9 + $0x30] sm:$0xff]
  %v6316 = vld [vmem:[%s9 + $0x38] sm:$0xff]
  %v6317 = vld [vmem:[%s9 + $0x40] sm:$0xff]
  %v6318 = vld [vmem:[%s9 + $0x48] sm:$0xff]
  %v6319 = vld [vmem:[%s9 + $0x50] sm:$0xff]
  %v6320 = vld [vmem:[%s9 + $0x58] sm:$0xff]
  %v6321 = vld [vmem:[%s9 + $0x60] sm:$0xff]
  %v6322 = vld [vmem:[%s9 + $0x68] sm:$0xff]
  %v6323 = vld [vmem:[%s9 + $0x70] sm:$0xff]
  %v6324 = vld [vmem:[%s9 + $0x78] sm:$0xff]
  %v6325 = vld [vmem:[%s9 + $0x80] sm:$0xff]
  %v6326 = vld [vmem:[%s9 + $0x88] sm:$0xff]
  %v6327 = vld [vmem:[%s9 + $0x90] sm:$0xff]
  %v6328 = vld [vmem:[%s9 + $0x98] sm:$0xff]
  %v6329 = vld [vmem:[%s9 + $0xa0] sm:$0xff]
  %v6330 = vld [vmem:[%s9 + $0xa8] sm:$0xff]
  %v6331 = vld [vmem:[%s9 + $0xb0] sm:$0xff]
  %v6332 = vld [vmem:[%s9 + $0xb8] sm:$0xff]
  %v6333 = vld [vmem:[%s9 + $0xc0] sm:$0xff]
  %v6334 = vld [vmem:[%s9 + $0xc8] sm:$0xff]
  %v6335 = vld [vmem:[%s9 + $0xd0] sm:$0xff]
  %v6336 = vld [vmem:[%s9 + $0xd8] sm:$0xff]
  %v6337 = vld [vmem:[%s9 + $0xe0] sm:$0xff]
  %v6338 = vld [vmem:[%s9 + $0xe8] sm:$0xff]
  %v6339 = vld [vmem:[%s9 + $0xf0] sm:$0xff]
  %v6340 = vld [vmem:[%s9 + $0xf8] sm:$0xff]
  %v6341 = vpack.c.bf16 %v5898, %v5895
  %v6342 = vpack.c.bf16 %v5904, %v5901
  %v6343 = vpack.c.bf16 %v5910, %v5907
  %v6344 = vpack.c.bf16 %v5916, %v5913
  %v6345 = vpack.c.bf16 %v5922, %v5919
  %v6346 = vpack.c.bf16 %v5928, %v5925
  %v6347 = vpack.c.bf16 %v5934, %v5931
  %v6348 = vpack.c.bf16 %v5940, %v5937
  %v6349 = vpack.c.bf16 %v5946, %v5943
  %v6350 = vpack.c.bf16 %v5952, %v5949
  %v6351 = vpack.c.bf16 %v5958, %v5955
  %v6352 = vpack.c.bf16 %v5964, %v5961
  %v6353 = vpack.c.bf16 %v5970, %v5967
  %v6354 = vpack.c.bf16 %v5976, %v5973
  %v6355 = vpack.c.bf16 %v5982, %v5979
  %v6356 = vpack.c.bf16 %v5988, %v5985
  %v6357 = vpack.c.bf16 %v5994, %v5991
  %v6358 = vpack.c.bf16 %v6000, %v5997
  %v6359 = vpack.c.bf16 %v6006, %v6003
  %v6360 = vpack.c.bf16 %v6012, %v6009
  %v6361 = vpack.c.bf16 %v6018, %v6015
  %v6362 = vpack.c.bf16 %v6024, %v6021
  %v6363 = vpack.c.bf16 %v6030, %v6027
  %v6364 = vpack.c.bf16 %v6036, %v6033
  %v6365 = vpack.c.bf16 %v6042, %v6039
  %v6366 = vpack.c.bf16 %v6048, %v6045
  %v6367 = vpack.c.bf16 %v6054, %v6051
  %v6368 = vpack.c.bf16 %v6060, %v6057
  %v6369 = vpack.c.bf16 %v6066, %v6063
  %v6370 = vpack.c.bf16 %v6072, %v6069
  %v6371 = vpack.c.bf16 %v6078, %v6075
  %v6372 = vpack.c.bf16 %v6084, %v6081
  %v6373 = vpack.c.bf16 %v6090, %v6087
  %v6374 = vpack.c.bf16 %v6096, %v6093
  %v6375 = vpack.c.bf16 %v6102, %v6099
  %v6376 = vpack.c.bf16 %v6108, %v6105
  %v6377 = vpack.c.bf16 %v6114, %v6111
  %v6378 = vpack.c.bf16 %v6120, %v6117
  %v6379 = vpack.c.bf16 %v6126, %v6123
  %v6380 = vpack.c.bf16 %v6132, %v6129
  %v6381 = vpack.c.bf16 %v6138, %v6135
  %v6382 = vpack.c.bf16 %v6144, %v6141
  %v6383 = vpack.c.bf16 %v6150, %v6147
  %v6384 = vpack.c.bf16 %v6156, %v6153
  %v6385 = vpack.c.bf16 %v6162, %v6159
  %v6386 = vpack.c.bf16 %v6168, %v6165
  %v6387 = vpack.c.bf16 %v6174, %v6171
  %v6388 = vpack.c.bf16 %v6180, %v6177
  %v6389 = vpack.c.bf16 %v6186, %v6183
  %v6390 = vpack.c.bf16 %v6192, %v6189
  %v6391 = vpack.c.bf16 %v6198, %v6195
  %v6392 = vpack.c.bf16 %v6204, %v6201
  %v6393 = vpack.c.bf16 %v6210, %v6207
  %v6394 = vpack.c.bf16 %v6216, %v6213
  %v6395 = vpack.c.bf16 %v6222, %v6219
  %v6396 = vpack.c.bf16 %v6228, %v6225
  %v6397 = vpack.c.bf16 %v6234, %v6231
  %v6398 = vpack.c.bf16 %v6240, %v6237
  %v6399 = vpack.c.bf16 %v6246, %v6243
  %v6400 = vpack.c.bf16 %v6252, %v6249
  %v6401 = vpack.c.bf16 %v6258, %v6255
  %v6402 = vpack.c.bf16 %v6264, %v6261
  %v6403 = vpack.c.bf16 %v6270, %v6267
  %v6404 = vpack.c.bf16 %v6276, %v6273
  %v6437 = vunpack.c.l.b16 %v6309
  %v6438 = vunpack.c.h.b16 %v6309
  %v6439 = vunpack.c.l.b16 %v6310
  %v6440 = vunpack.c.h.b16 %v6310
  %v6441 = vunpack.c.l.b16 %v6311
  %v6442 = vunpack.c.h.b16 %v6311
  %v6443 = vunpack.c.l.b16 %v6312
  %v6444 = vunpack.c.h.b16 %v6312
  %v6445 = vunpack.c.l.b16 %v6313
  %v6446 = vunpack.c.h.b16 %v6313
  %v6447 = vunpack.c.l.b16 %v6314
  %v6448 = vunpack.c.h.b16 %v6314
  %v6449 = vunpack.c.l.b16 %v6315
  %v6450 = vunpack.c.h.b16 %v6315
  %v6451 = vunpack.c.l.b16 %v6316
  %v6452 = vunpack.c.h.b16 %v6316
  %v6453 = vunpack.c.l.b16 %v6317
  %v6454 = vunpack.c.h.b16 %v6317
  %v6455 = vunpack.c.l.b16 %v6318
  %v6456 = vunpack.c.h.b16 %v6318
  %v6457 = vunpack.c.l.b16 %v6319
  %v6458 = vunpack.c.h.b16 %v6319
  %v6459 = vunpack.c.l.b16 %v6320
  %v6460 = vunpack.c.h.b16 %v6320
  %v6461 = vunpack.c.l.b16 %v6321
  %v6462 = vunpack.c.h.b16 %v6321
  %v6463 = vunpack.c.l.b16 %v6322
  %v6464 = vunpack.c.h.b16 %v6322
  %v6465 = vunpack.c.l.b16 %v6323
  %v6466 = vunpack.c.h.b16 %v6323
  %v6467 = vunpack.c.l.b16 %v6324
  %v6468 = vunpack.c.h.b16 %v6324
  %v6469 = vunpack.c.l.b16 %v6325
  %v6470 = vunpack.c.h.b16 %v6325
  %v6471 = vunpack.c.l.b16 %v6326
  %v6472 = vunpack.c.h.b16 %v6326
  %v6473 = vunpack.c.l.b16 %v6327
  %v6474 = vunpack.c.h.b16 %v6327
  %v6475 = vunpack.c.l.b16 %v6328
  %v6476 = vunpack.c.h.b16 %v6328
  %v6477 = vunpack.c.l.b16 %v6329
  %v6478 = vunpack.c.h.b16 %v6329
  %v6479 = vunpack.c.l.b16 %v6330
  %v6480 = vunpack.c.h.b16 %v6330
  %v6481 = vunpack.c.l.b16 %v6331
  %v6482 = vunpack.c.h.b16 %v6331
  %v6483 = vunpack.c.l.b16 %v6332
  %v6484 = vunpack.c.h.b16 %v6332
  %v6485 = vunpack.c.l.b16 %v6333
  %v6486 = vunpack.c.h.b16 %v6333
  %v6487 = vunpack.c.l.b16 %v6334
  %v6488 = vunpack.c.h.b16 %v6334
  %v6489 = vunpack.c.l.b16 %v6335
  %v6490 = vunpack.c.h.b16 %v6335
  %v6491 = vunpack.c.l.b16 %v6336
  %v6492 = vunpack.c.h.b16 %v6336
  %v6493 = vunpack.c.l.b16 %v6337
  %v6494 = vunpack.c.h.b16 %v6337
  %v6495 = vunpack.c.l.b16 %v6338
  %v6496 = vunpack.c.h.b16 %v6338
  %v6497 = vunpack.c.l.b16 %v6339
  %v6498 = vunpack.c.h.b16 %v6339
  %v6499 = vunpack.c.l.b16 %v6340
  %v6500 = vunpack.c.h.b16 %v6340
  %v6501 = vpack.c.b16 %v6439, %v6437
  %v6502 = vpack.c.b16 %v6440, %v6438
  %v6503 = vpack.c.b16 %v6443, %v6441
  %v6504 = vpack.c.b16 %v6444, %v6442
  %v6505 = vpack.c.b16 %v6447, %v6445
  %v6506 = vpack.c.b16 %v6448, %v6446
  %v6507 = vpack.c.b16 %v6451, %v6449
  %v6508 = vpack.c.b16 %v6452, %v6450
  %v6509 = vpack.c.b16 %v6455, %v6453
  %v6510 = vpack.c.b16 %v6456, %v6454
  %v6511 = vpack.c.b16 %v6459, %v6457
  %v6512 = vpack.c.b16 %v6460, %v6458
  %v6513 = vpack.c.b16 %v6463, %v6461
  %v6514 = vpack.c.b16 %v6464, %v6462
  %v6515 = vpack.c.b16 %v6467, %v6465
  %v6516 = vpack.c.b16 %v6468, %v6466
  %v6517 = vpack.c.b16 %v6471, %v6469
  %v6518 = vpack.c.b16 %v6472, %v6470
  %v6519 = vpack.c.b16 %v6475, %v6473
  %v6520 = vpack.c.b16 %v6476, %v6474
  %v6521 = vpack.c.b16 %v6479, %v6477
  %v6522 = vpack.c.b16 %v6480, %v6478
  %v6523 = vpack.c.b16 %v6483, %v6481
  %v6524 = vpack.c.b16 %v6484, %v6482
  %v6525 = vpack.c.b16 %v6487, %v6485
  %v6526 = vpack.c.b16 %v6488, %v6486
  %v6527 = vpack.c.b16 %v6491, %v6489
  %v6528 = vpack.c.b16 %v6492, %v6490
  %v6529 = vpack.c.b16 %v6495, %v6493
  %v6530 = vpack.c.b16 %v6496, %v6494
  %v6531 = vpack.c.b16 %v6499, %v6497
  %v6532 = vpack.c.b16 %v6500, %v6498
  %6565 = vmatprep.subr.bf16.mxu0 0
  %6566 = vmatpush1.bf16.msra.mxu0 %v6348
  %6567 = vmatprep.subr.bf16.mxu0 0
  %6568 = vmatpush1.bf16.msra.mxu0 %v6347
  %6569 = vmatprep.subr.bf16.mxu0 0
  %6570 = vmatpush1.bf16.msra.mxu0 %v6346
  %6571 = vmatprep.subr.bf16.mxu0 0
  %6572 = vmatpush1.bf16.msra.mxu0 %v6345
  %6573 = vmatprep.subr.bf16.mxu0 0
  %6574 = vmatpush1.bf16.msra.mxu0 %v6344
  %6575 = vmatprep.subr.bf16.mxu0 0
  %6576 = vmatpush1.bf16.msra.mxu0 %v6343
  %6577 = vmatprep.subr.bf16.mxu0 0
  %6578 = vmatpush1.bf16.msra.mxu0 %v6342
  %6579 = vmatprep.subr.bf16.mxu0 0
  %6580 = vmatpush1.bf16.msra.mxu0 %v6341
  %6581 = vmatprep.subr.bf16.mxu0 0
  %6582 = vmatpush2.bf16.msra.mxu0 %v6356
  %6583 = vmatprep.subr.bf16.mxu0 0
  %6584 = vmatpush2.bf16.msra.mxu0 %v6355
  %6585 = vmatprep.subr.bf16.mxu0 0
  %6586 = vmatpush2.bf16.msra.mxu0 %v6354
  %6587 = vmatprep.subr.bf16.mxu0 0
  %6588 = vmatpush2.bf16.msra.mxu0 %v6353
  %6589 = vmatprep.subr.bf16.mxu0 0
  %6590 = vmatpush2.bf16.msra.mxu0 %v6352
  %6591 = vmatprep.subr.bf16.mxu0 0
  %6592 = vmatpush2.bf16.msra.mxu0 %v6351
  %6593 = vmatprep.subr.bf16.mxu0 0
  %6594 = vmatpush2.bf16.msra.mxu0 %v6350
  %6595 = vmatprep.subr.bf16.mxu0 0
  %6596 = vmatpush2.bf16.msra.mxu0 %v6349
  %6597 = vmatprep.mubr.bf16.mxu0 %v6502
  %6598 = vmatmul.mubr.bf16.gmra.mxu0 %v6501
  %v6599 = vpop.f32.mrf.mxu0
  %v6600 = vadd.f32 0.0, %v6599
  %v6601 = vpop.f32.mrf.mxu0
  %v6602 = vpop.f32.mrf.mxu0
  %v6603 = vadd.f32 0.0, %v6602
  %v6604 = vpop.f32.mrf.mxu0
  %6605 = vmatprep.mubr.bf16.mxu0 %v6504
  %6606 = vmatmul.mubr.bf16.gmra.mxu0 %v6503
  %v6607 = vpop.f32.mrf.mxu0
  %v6608 = vadd.f32 0.0, %v6607
  %v6609 = vpop.f32.mrf.mxu0
  %v6610 = vpop.f32.mrf.mxu0
  %v6611 = vadd.f32 0.0, %v6610
  %v6612 = vpop.f32.mrf.mxu0
  %6613 = vmatprep.mubr.bf16.mxu0 %v6506
  %6614 = vmatmul.mubr.bf16.gmra.mxu0 %v6505
  %v6615 = vpop.f32.mrf.mxu0
  %v6616 = vadd.f32 0.0, %v6615
  %v6617 = vpop.f32.mrf.mxu0
  %v6618 = vpop.f32.mrf.mxu0
  %v6619 = vadd.f32 0.0, %v6618
  %v6620 = vpop.f32.mrf.mxu0
  %6621 = vmatprep.mubr.bf16.mxu0 %v6508
  %6622 = vmatmul.mubr.bf16.gmra.mxu0 %v6507
  %v6623 = vpop.f32.mrf.mxu0
  %v6624 = vadd.f32 0.0, %v6623
  %v6625 = vpop.f32.mrf.mxu0
  %v6626 = vpop.f32.mrf.mxu0
  %v6627 = vadd.f32 0.0, %v6626
  %v6628 = vpop.f32.mrf.mxu0
  %6629 = vmatprep.mubr.bf16.mxu0 %v6510
  %6630 = vmatmul.mubr.bf16.gmra.mxu0 %v6509
  %v6631 = vpop.f32.mrf.mxu0
  %v6632 = vadd.f32 0.0, %v6631
  %v6633 = vpop.f32.mrf.mxu0
  %v6634 = vpop.f32.mrf.mxu0
  %v6635 = vadd.f32 0.0, %v6634
  %v6636 = vpop.f32.mrf.mxu0
  %6637 = vmatprep.mubr.bf16.mxu0 %v6512
  %6638 = vmatmul.mubr.bf16.gmra.mxu0 %v6511
  %v6639 = vpop.f32.mrf.mxu0
  %v6640 = vadd.f32 0.0, %v6639
  %v6641 = vpop.f32.mrf.mxu0
  %v6642 = vpop.f32.mrf.mxu0
  %v6643 = vadd.f32 0.0, %v6642
  %v6644 = vpop.f32.mrf.mxu0
  %6645 = vmatprep.mubr.bf16.mxu0 %v6514
  %6646 = vmatmul.mubr.bf16.gmra.mxu0 %v6513
  %v6647 = vpop.f32.mrf.mxu0
  %v6648 = vadd.f32 0.0, %v6647
  %v6649 = vpop.f32.mrf.mxu0
  %v6650 = vpop.f32.mrf.mxu0
  %v6651 = vadd.f32 0.0, %v6650
  %v6652 = vpop.f32.mrf.mxu0
  %6653 = vmatprep.mubr.bf16.mxu0 %v6516
  %6654 = vmatmul.mubr.bf16.gmra.mxu0 %v6515
  %v6655 = vpop.f32.mrf.mxu0
  %v6656 = vadd.f32 0.0, %v6655
  %v6657 = vpop.f32.mrf.mxu0
  %v6658 = vpop.f32.mrf.mxu0
  %v6659 = vadd.f32 0.0, %v6658
  %v6660 = vpop.f32.mrf.mxu0
  %6661 = vmatprep.mubr.bf16.mxu0 %v6518
  %6662 = vmatmul.mubr.bf16.gmra.mxu0 %v6517
  %v6663 = vpop.f32.mrf.mxu0
  %v6664 = vadd.f32 0.0, %v6663
  %v6665 = vpop.f32.mrf.mxu0
  %v6666 = vpop.f32.mrf.mxu0
  %v6667 = vadd.f32 0.0, %v6666
  %v6668 = vpop.f32.mrf.mxu0
  %6669 = vmatprep.mubr.bf16.mxu0 %v6520
  %6670 = vmatmul.mubr.bf16.gmra.mxu0 %v6519
  %v6671 = vpop.f32.mrf.mxu0
  %v6672 = vadd.f32 0.0, %v6671
  %v6673 = vpop.f32.mrf.mxu0
  %v6674 = vpop.f32.mrf.mxu0
  %v6675 = vadd.f32 0.0, %v6674
  %v6676 = vpop.f32.mrf.mxu0
  %6677 = vmatprep.mubr.bf16.mxu0 %v6522
  %6678 = vmatmul.mubr.bf16.gmra.mxu0 %v6521
  %v6679 = vpop.f32.mrf.mxu0
  %v6680 = vadd.f32 0.0, %v6679
  %v6681 = vpop.f32.mrf.mxu0
  %v6682 = vpop.f32.mrf.mxu0
  %v6683 = vadd.f32 0.0, %v6682
  %v6684 = vpop.f32.mrf.mxu0
  %6685 = vmatprep.mubr.bf16.mxu0 %v6524
  %6686 = vmatmul.mubr.bf16.gmra.mxu0 %v6523
  %v6687 = vpop.f32.mrf.mxu0
  %v6688 = vadd.f32 0.0, %v6687
  %v6689 = vpop.f32.mrf.mxu0
  %v6690 = vpop.f32.mrf.mxu0
  %v6691 = vadd.f32 0.0, %v6690
  %v6692 = vpop.f32.mrf.mxu0
  %6693 = vmatprep.mubr.bf16.mxu0 %v6526
  %6694 = vmatmul.mubr.bf16.gmra.mxu0 %v6525
  %v6695 = vpop.f32.mrf.mxu0
  %v6696 = vadd.f32 0.0, %v6695
  %v6697 = vpop.f32.mrf.mxu0
  %v6698 = vpop.f32.mrf.mxu0
  %v6699 = vadd.f32 0.0, %v6698
  %v6700 = vpop.f32.mrf.mxu0
  %6701 = vmatprep.mubr.bf16.mxu0 %v6528
  %6702 = vmatmul.mubr.bf16.gmra.mxu0 %v6527
  %v6703 = vpop.f32.mrf.mxu0
  %v6704 = vadd.f32 0.0, %v6703
  %v6705 = vpop.f32.mrf.mxu0
  %v6706 = vpop.f32.mrf.mxu0
  %v6707 = vadd.f32 0.0, %v6706
  %v6708 = vpop.f32.mrf.mxu0
  %6709 = vmatprep.mubr.bf16.mxu0 %v6530
  %6710 = vmatmul.mubr.bf16.gmra.mxu0 %v6529
  %v6711 = vpop.f32.mrf.mxu0
  %v6712 = vadd.f32 0.0, %v6711
  %v6713 = vpop.f32.mrf.mxu0
  %v6714 = vpop.f32.mrf.mxu0
  %v6715 = vadd.f32 0.0, %v6714
  %v6716 = vpop.f32.mrf.mxu0
  %6717 = vmatprep.mubr.bf16.mxu0 %v6532
  %6718 = vmatmul.mubr.bf16.gmra.mxu0 %v6531
  %v6719 = vpop.f32.mrf.mxu0
  %v6720 = vadd.f32 0.0, %v6719
  %v6721 = vpop.f32.mrf.mxu0
  %v6722 = vpop.f32.mrf.mxu0
  %v6723 = vadd.f32 0.0, %v6722
  %v6724 = vpop.f32.mrf.mxu0
  %6725 = vdwg.mxu0
  %6726 = vmatprep.subr.bf16.mxu0 0
  %6727 = vmatpush1.bf16.msra.mxu0 %v6364
  %6728 = vmatprep.subr.bf16.mxu0 0
  %6729 = vmatpush1.bf16.msra.mxu0 %v6363
  %6730 = vmatprep.subr.bf16.mxu0 0
  %6731 = vmatpush1.bf16.msra.mxu0 %v6362
  %6732 = vmatprep.subr.bf16.mxu0 0
  %6733 = vmatpush1.bf16.msra.mxu0 %v6361
  %6734 = vmatprep.subr.bf16.mxu0 0
  %6735 = vmatpush1.bf16.msra.mxu0 %v6360
  %6736 = vmatprep.subr.bf16.mxu0 0
  %6737 = vmatpush1.bf16.msra.mxu0 %v6359
  %6738 = vmatprep.subr.bf16.mxu0 0
  %6739 = vmatpush1.bf16.msra.mxu0 %v6358
  %6740 = vmatprep.subr.bf16.mxu0 0
  %6741 = vmatpush1.bf16.msra.mxu0 %v6357
  %6742 = vmatprep.subr.bf16.mxu0 0
  %6743 = vmatpush2.bf16.msra.mxu0 %v6372
  %6744 = vmatprep.subr.bf16.mxu0 0
  %6745 = vmatpush2.bf16.msra.mxu0 %v6371
  %6746 = vmatprep.subr.bf16.mxu0 0
  %6747 = vmatpush2.bf16.msra.mxu0 %v6370
  %6748 = vmatprep.subr.bf16.mxu0 0
  %6749 = vmatpush2.bf16.msra.mxu0 %v6369
  %6750 = vmatprep.subr.bf16.mxu0 0
  %6751 = vmatpush2.bf16.msra.mxu0 %v6368
  %6752 = vmatprep.subr.bf16.mxu0 0
  %6753 = vmatpush2.bf16.msra.mxu0 %v6367
  %6754 = vmatprep.subr.bf16.mxu0 0
  %6755 = vmatpush2.bf16.msra.mxu0 %v6366
  %6756 = vmatprep.subr.bf16.mxu0 0
  %6757 = vmatpush2.bf16.msra.mxu0 %v6365
  %6758 = vmatprep.mubr.bf16.mxu0 %v6502
  %6759 = vmatmul.mubr.bf16.gmra.mxu0 %v6501
  %v6760 = vpop.f32.mrf.mxu0
  %v6761 = vadd.f32 0.0, %v6760
  %v6762 = vpop.f32.mrf.mxu0
  %v6763 = vpop.f32.mrf.mxu0
  %v6764 = vadd.f32 0.0, %v6763
  %v6765 = vpop.f32.mrf.mxu0
  %6766 = vmatprep.mubr.bf16.mxu0 %v6504
  %6767 = vmatmul.mubr.bf16.gmra.mxu0 %v6503
  %v6768 = vpop.f32.mrf.mxu0
  %v6769 = vadd.f32 0.0, %v6768
  %v6770 = vpop.f32.mrf.mxu0
  %v6771 = vpop.f32.mrf.mxu0
  %v6772 = vadd.f32 0.0, %v6771
  %v6773 = vpop.f32.mrf.mxu0
  %6774 = vmatprep.mubr.bf16.mxu0 %v6506
  %6775 = vmatmul.mubr.bf16.gmra.mxu0 %v6505
  %v6776 = vpop.f32.mrf.mxu0
  %v6777 = vadd.f32 0.0, %v6776
  %v6778 = vpop.f32.mrf.mxu0
  %v6779 = vpop.f32.mrf.mxu0
  %v6780 = vadd.f32 0.0, %v6779
  %v6781 = vpop.f32.mrf.mxu0
  %6782 = vmatprep.mubr.bf16.mxu0 %v6508
  %6783 = vmatmul.mubr.bf16.gmra.mxu0 %v6507
  %v6784 = vpop.f32.mrf.mxu0
  %v6785 = vadd.f32 0.0, %v6784
  %v6786 = vpop.f32.mrf.mxu0
  %v6787 = vpop.f32.mrf.mxu0
  %v6788 = vadd.f32 0.0, %v6787
  %v6789 = vpop.f32.mrf.mxu0
  %6790 = vmatprep.mubr.bf16.mxu0 %v6510
  %6791 = vmatmul.mubr.bf16.gmra.mxu0 %v6509
  %v6792 = vpop.f32.mrf.mxu0
  %v6793 = vadd.f32 0.0, %v6792
  %v6794 = vpop.f32.mrf.mxu0
  %v6795 = vpop.f32.mrf.mxu0
  %v6796 = vadd.f32 0.0, %v6795
  %v6797 = vpop.f32.mrf.mxu0
  %6798 = vmatprep.mubr.bf16.mxu0 %v6512
  %6799 = vmatmul.mubr.bf16.gmra.mxu0 %v6511
  %v6800 = vpop.f32.mrf.mxu0
  %v6801 = vadd.f32 0.0, %v6800
  %v6802 = vpop.f32.mrf.mxu0
  %v6803 = vpop.f32.mrf.mxu0
  %v6804 = vadd.f32 0.0, %v6803
  %v6805 = vpop.f32.mrf.mxu0
  %6806 = vmatprep.mubr.bf16.mxu0 %v6514
  %6807 = vmatmul.mubr.bf16.gmra.mxu0 %v6513
  %v6808 = vpop.f32.mrf.mxu0
  %v6809 = vadd.f32 0.0, %v6808
  %v6810 = vpop.f32.mrf.mxu0
  %v6811 = vpop.f32.mrf.mxu0
  %v6812 = vadd.f32 0.0, %v6811
  %v6813 = vpop.f32.mrf.mxu0
  %6814 = vmatprep.mubr.bf16.mxu0 %v6516
  %6815 = vmatmul.mubr.bf16.gmra.mxu0 %v6515
  %v6816 = vpop.f32.mrf.mxu0
  %v6817 = vadd.f32 0.0, %v6816
  %v6818 = vpop.f32.mrf.mxu0
  %v6819 = vpop.f32.mrf.mxu0
  %v6820 = vadd.f32 0.0, %v6819
  %v6821 = vpop.f32.mrf.mxu0
  %6822 = vmatprep.mubr.bf16.mxu0 %v6518
  %6823 = vmatmul.mubr.bf16.gmra.mxu0 %v6517
  %v6824 = vpop.f32.mrf.mxu0
  %v6825 = vadd.f32 0.0, %v6824
  %v6826 = vpop.f32.mrf.mxu0
  %v6827 = vpop.f32.mrf.mxu0
  %v6828 = vadd.f32 0.0, %v6827
  %v6829 = vpop.f32.mrf.mxu0
  %6830 = vmatprep.mubr.bf16.mxu0 %v6520
  %6831 = vmatmul.mubr.bf16.gmra.mxu0 %v6519
  %v6832 = vpop.f32.mrf.mxu0
  %v6833 = vadd.f32 0.0, %v6832
  %v6834 = vpop.f32.mrf.mxu0
  %v6835 = vpop.f32.mrf.mxu0
  %v6836 = vadd.f32 0.0, %v6835
  %v6837 = vpop.f32.mrf.mxu0
  %6838 = vmatprep.mubr.bf16.mxu0 %v6522
  %6839 = vmatmul.mubr.bf16.gmra.mxu0 %v6521
  %v6840 = vpop.f32.mrf.mxu0
  %v6841 = vadd.f32 0.0, %v6840
  %v6842 = vpop.f32.mrf.mxu0
  %v6843 = vpop.f32.mrf.mxu0
  %v6844 = vadd.f32 0.0, %v6843
  %v6845 = vpop.f32.mrf.mxu0
  %6846 = vmatprep.mubr.bf16.mxu0 %v6524
  %6847 = vmatmul.mubr.bf16.gmra.mxu0 %v6523
  %v6848 = vpop.f32.mrf.mxu0
  %v6849 = vadd.f32 0.0, %v6848
  %v6850 = vpop.f32.mrf.mxu0
  %v6851 = vpop.f32.mrf.mxu0
  %v6852 = vadd.f32 0.0, %v6851
  %v6853 = vpop.f32.mrf.mxu0
  %6854 = vmatprep.mubr.bf16.mxu0 %v6526
  %6855 = vmatmul.mubr.bf16.gmra.mxu0 %v6525
  %v6856 = vpop.f32.mrf.mxu0
  %v6857 = vadd.f32 0.0, %v6856
  %v6858 = vpop.f32.mrf.mxu0
  %v6859 = vpop.f32.mrf.mxu0
  %v6860 = vadd.f32 0.0, %v6859
  %v6861 = vpop.f32.mrf.mxu0
  %6862 = vmatprep.mubr.bf16.mxu0 %v6528
  %6863 = vmatmul.mubr.bf16.gmra.mxu0 %v6527
  %v6864 = vpop.f32.mrf.mxu0
  %v6865 = vadd.f32 0.0, %v6864
  %v6866 = vpop.f32.mrf.mxu0
  %v6867 = vpop.f32.mrf.mxu0
  %v6868 = vadd.f32 0.0, %v6867
  %v6869 = vpop.f32.mrf.mxu0
  %6870 = vmatprep.mubr.bf16.mxu0 %v6530
  %6871 = vmatmul.mubr.bf16.gmra.mxu0 %v6529
  %v6872 = vpop.f32.mrf.mxu0
  %v6873 = vadd.f32 0.0, %v6872
  %v6874 = vpop.f32.mrf.mxu0
  %v6875 = vpop.f32.mrf.mxu0
  %v6876 = vadd.f32 0.0, %v6875
  %v6877 = vpop.f32.mrf.mxu0
  %6878 = vmatprep.mubr.bf16.mxu0 %v6532
  %6879 = vmatmul.mubr.bf16.gmra.mxu0 %v6531
  %v6880 = vpop.f32.mrf.mxu0
  %v6881 = vadd.f32 0.0, %v6880
  %v6882 = vpop.f32.mrf.mxu0
  %v6883 = vpop.f32.mrf.mxu0
  %v6884 = vadd.f32 0.0, %v6883
  %v6885 = vpop.f32.mrf.mxu0
  %6886 = vdwg.mxu0
  %6887 = vmatprep.subr.bf16.mxu0 0
  %6888 = vmatpush1.bf16.msra.mxu0 %v6380
  %6889 = vmatprep.subr.bf16.mxu0 0
  %6890 = vmatpush1.bf16.msra.mxu0 %v6379
  %6891 = vmatprep.subr.bf16.mxu0 0
  %6892 = vmatpush1.bf16.msra.mxu0 %v6378
  %6893 = vmatprep.subr.bf16.mxu0 0
  %6894 = vmatpush1.bf16.msra.mxu0 %v6377
  %6895 = vmatprep.subr.bf16.mxu0 0
  %6896 = vmatpush1.bf16.msra.mxu0 %v6376
  %6897 = vmatprep.subr.bf16.mxu0 0
  %6898 = vmatpush1.bf16.msra.mxu0 %v6375
  %6899 = vmatprep.subr.bf16.mxu0 0
  %6900 = vmatpush1.bf16.msra.mxu0 %v6374
  %6901 = vmatprep.subr.bf16.mxu0 0
  %6902 = vmatpush1.bf16.msra.mxu0 %v6373
  %6903 = vmatprep.subr.bf16.mxu0 0
  %6904 = vmatpush2.bf16.msra.mxu0 %v6388
  %6905 = vmatprep.subr.bf16.mxu0 0
  %6906 = vmatpush2.bf16.msra.mxu0 %v6387
  %6907 = vmatprep.subr.bf16.mxu0 0
  %6908 = vmatpush2.bf16.msra.mxu0 %v6386
  %6909 = vmatprep.subr.bf16.mxu0 0
  %6910 = vmatpush2.bf16.msra.mxu0 %v6385
  %6911 = vmatprep.subr.bf16.mxu0 0
  %6912 = vmatpush2.bf16.msra.mxu0 %v6384
  %6913 = vmatprep.subr.bf16.mxu0 0
  %6914 = vmatpush2.bf16.msra.mxu0 %v6383
  %6915 = vmatprep.subr.bf16.mxu0 0
  %6916 = vmatpush2.bf16.msra.mxu0 %v6382
  %6917 = vmatprep.subr.bf16.mxu0 0
  %6918 = vmatpush2.bf16.msra.mxu0 %v6381
  %6919 = vmatprep.mubr.bf16.mxu0 %v6502
  %6920 = vmatmul.mubr.bf16.gmra.mxu0 %v6501
  %v6921 = vpop.f32.mrf.mxu0
  %v6922 = vadd.f32 0.0, %v6921
  %v6923 = vpop.f32.mrf.mxu0
  %v6924 = vpop.f32.mrf.mxu0
  %v6925 = vadd.f32 0.0, %v6924
  %v6926 = vpop.f32.mrf.mxu0
  %6927 = vmatprep.mubr.bf16.mxu0 %v6504
  %6928 = vmatmul.mubr.bf16.gmra.mxu0 %v6503
  %v6929 = vpop.f32.mrf.mxu0
  %v6930 = vadd.f32 0.0, %v6929
  %v6931 = vpop.f32.mrf.mxu0
  %v6932 = vpop.f32.mrf.mxu0
  %v6933 = vadd.f32 0.0, %v6932
  %v6934 = vpop.f32.mrf.mxu0
  %6935 = vmatprep.mubr.bf16.mxu0 %v6506
  %6936 = vmatmul.mubr.bf16.gmra.mxu0 %v6505
  %v6937 = vpop.f32.mrf.mxu0
  %v6938 = vadd.f32 0.0, %v6937
  %v6939 = vpop.f32.mrf.mxu0
  %v6940 = vpop.f32.mrf.mxu0
  %v6941 = vadd.f32 0.0, %v6940
  %v6942 = vpop.f32.mrf.mxu0
  %6943 = vmatprep.mubr.bf16.mxu0 %v6508
  %6944 = vmatmul.mubr.bf16.gmra.mxu0 %v6507
  %v6945 = vpop.f32.mrf.mxu0
  %v6946 = vadd.f32 0.0, %v6945
  %v6947 = vpop.f32.mrf.mxu0
  %v6948 = vpop.f32.mrf.mxu0
  %v6949 = vadd.f32 0.0, %v6948
  %v6950 = vpop.f32.mrf.mxu0
  %6951 = vmatprep.mubr.bf16.mxu0 %v6510
  %6952 = vmatmul.mubr.bf16.gmra.mxu0 %v6509
  %v6953 = vpop.f32.mrf.mxu0
  %v6954 = vadd.f32 0.0, %v6953
  %v6955 = vpop.f32.mrf.mxu0
  %v6956 = vpop.f32.mrf.mxu0
  %v6957 = vadd.f32 0.0, %v6956
  %v6958 = vpop.f32.mrf.mxu0
  %6959 = vmatprep.mubr.bf16.mxu0 %v6512
  %6960 = vmatmul.mubr.bf16.gmra.mxu0 %v6511
  %v6961 = vpop.f32.mrf.mxu0
  %v6962 = vadd.f32 0.0, %v6961
  %v6963 = vpop.f32.mrf.mxu0
  %v6964 = vpop.f32.mrf.mxu0
  %v6965 = vadd.f32 0.0, %v6964
  %v6966 = vpop.f32.mrf.mxu0
  %6967 = vmatprep.mubr.bf16.mxu0 %v6514
  %6968 = vmatmul.mubr.bf16.gmra.mxu0 %v6513
  %v6969 = vpop.f32.mrf.mxu0
  %v6970 = vadd.f32 0.0, %v6969
  %v6971 = vpop.f32.mrf.mxu0
  %v6972 = vpop.f32.mrf.mxu0
  %v6973 = vadd.f32 0.0, %v6972
  %v6974 = vpop.f32.mrf.mxu0
  %6975 = vmatprep.mubr.bf16.mxu0 %v6516
  %6976 = vmatmul.mubr.bf16.gmra.mxu0 %v6515
  %v6977 = vpop.f32.mrf.mxu0
  %v6978 = vadd.f32 0.0, %v6977
  %v6979 = vpop.f32.mrf.mxu0
  %v6980 = vpop.f32.mrf.mxu0
  %v6981 = vadd.f32 0.0, %v6980
  %v6982 = vpop.f32.mrf.mxu0
  %6983 = vmatprep.mubr.bf16.mxu0 %v6518
  %6984 = vmatmul.mubr.bf16.gmra.mxu0 %v6517
  %v6985 = vpop.f32.mrf.mxu0
  %v6986 = vadd.f32 0.0, %v6985
  %v6987 = vpop.f32.mrf.mxu0
  %v6988 = vpop.f32.mrf.mxu0
  %v6989 = vadd.f32 0.0, %v6988
  %v6990 = vpop.f32.mrf.mxu0
  %6991 = vmatprep.mubr.bf16.mxu0 %v6520
  %6992 = vmatmul.mubr.bf16.gmra.mxu0 %v6519
  %v6993 = vpop.f32.mrf.mxu0
  %v6994 = vadd.f32 0.0, %v6993
  %v6995 = vpop.f32.mrf.mxu0
  %v6996 = vpop.f32.mrf.mxu0
  %v6997 = vadd.f32 0.0, %v6996
  %v6998 = vpop.f32.mrf.mxu0
  %6999 = vmatprep.mubr.bf16.mxu0 %v6522
  %7000 = vmatmul.mubr.bf16.gmra.mxu0 %v6521
  %v7001 = vpop.f32.mrf.mxu0
  %v7002 = vadd.f32 0.0, %v7001
  %v7003 = vpop.f32.mrf.mxu0
  %v7004 = vpop.f32.mrf.mxu0
  %v7005 = vadd.f32 0.0, %v7004
  %v7006 = vpop.f32.mrf.mxu0
  %7007 = vmatprep.mubr.bf16.mxu0 %v6524
  %7008 = vmatmul.mubr.bf16.gmra.mxu0 %v6523
  %v7009 = vpop.f32.mrf.mxu0
  %v7010 = vadd.f32 0.0, %v7009
  %v7011 = vpop.f32.mrf.mxu0
  %v7012 = vpop.f32.mrf.mxu0
  %v7013 = vadd.f32 0.0, %v7012
  %v7014 = vpop.f32.mrf.mxu0
  %7015 = vmatprep.mubr.bf16.mxu0 %v6526
  %7016 = vmatmul.mubr.bf16.gmra.mxu0 %v6525
  %v7017 = vpop.f32.mrf.mxu0
  %v7018 = vadd.f32 0.0, %v7017
  %v7019 = vpop.f32.mrf.mxu0
  %v7020 = vpop.f32.mrf.mxu0
  %v7021 = vadd.f32 0.0, %v7020
  %v7022 = vpop.f32.mrf.mxu0
  %7023 = vmatprep.mubr.bf16.mxu0 %v6528
  %7024 = vmatmul.mubr.bf16.gmra.mxu0 %v6527
  %v7025 = vpop.f32.mrf.mxu0
  %v7026 = vadd.f32 0.0, %v7025
  %v7027 = vpop.f32.mrf.mxu0
  %v7028 = vpop.f32.mrf.mxu0
  %v7029 = vadd.f32 0.0, %v7028
  %v7030 = vpop.f32.mrf.mxu0
  %7031 = vmatprep.mubr.bf16.mxu0 %v6530
  %7032 = vmatmul.mubr.bf16.gmra.mxu0 %v6529
  %v7033 = vpop.f32.mrf.mxu0
  %v7034 = vadd.f32 0.0, %v7033
  %v7035 = vpop.f32.mrf.mxu0
  %v7036 = vpop.f32.mrf.mxu0
  %v7037 = vadd.f32 0.0, %v7036
  %v7038 = vpop.f32.mrf.mxu0
  %7039 = vmatprep.mubr.bf16.mxu0 %v6532
  %7040 = vmatmul.mubr.bf16.gmra.mxu0 %v6531
  %v7041 = vpop.f32.mrf.mxu0
  %v7042 = vadd.f32 0.0, %v7041
  %v7043 = vpop.f32.mrf.mxu0
  %v7044 = vpop.f32.mrf.mxu0
  %v7045 = vadd.f32 0.0, %v7044
  %v7046 = vpop.f32.mrf.mxu0
  %7047 = vdwg.mxu0
  %7048 = vmatprep.subr.bf16.mxu0 0
  %7049 = vmatpush1.bf16.msra.mxu0 %v6396
  %7050 = vmatprep.subr.bf16.mxu0 0
  %7051 = vmatpush1.bf16.msra.mxu0 %v6395
  %7052 = vmatprep.subr.bf16.mxu0 0
  %7053 = vmatpush1.bf16.msra.mxu0 %v6394
  %7054 = vmatprep.subr.bf16.mxu0 0
  %7055 = vmatpush1.bf16.msra.mxu0 %v6393
  %7056 = vmatprep.subr.bf16.mxu0 0
  %7057 = vmatpush1.bf16.msra.mxu0 %v6392
  %7058 = vmatprep.subr.bf16.mxu0 0
  %7059 = vmatpush1.bf16.msra.mxu0 %v6391
  %7060 = vmatprep.subr.bf16.mxu0 0
  %7061 = vmatpush1.bf16.msra.mxu0 %v6390
  %7062 = vmatprep.subr.bf16.mxu0 0
  %7063 = vmatpush1.bf16.msra.mxu0 %v6389
  %7064 = vmatprep.subr.bf16.mxu0 0
  %7065 = vmatpush2.bf16.msra.mxu0 %v6404
  %7066 = vmatprep.subr.bf16.mxu0 0
  %7067 = vmatpush2.bf16.msra.mxu0 %v6403
  %7068 = vmatprep.subr.bf16.mxu0 0
  %7069 = vmatpush2.bf16.msra.mxu0 %v6402
  %7070 = vmatprep.subr.bf16.mxu0 0
  %7071 = vmatpush2.bf16.msra.mxu0 %v6401
  %7072 = vmatprep.subr.bf16.mxu0 0
  %7073 = vmatpush2.bf16.msra.mxu0 %v6400
  %7074 = vmatprep.subr.bf16.mxu0 0
  %7075 = vmatpush2.bf16.msra.mxu0 %v6399
  %7076 = vmatprep.subr.bf16.mxu0 0
  %7077 = vmatpush2.bf16.msra.mxu0 %v6398
  %7078 = vmatprep.subr.bf16.mxu0 0
  %7079 = vmatpush2.bf16.msra.mxu0 %v6397
  %7080 = vmatprep.mubr.bf16.mxu0 %v6502
  %7081 = vmatmul.mubr.bf16.gmra.mxu0 %v6501
  %v7082 = vpop.f32.mrf.mxu0
  %v7083 = vadd.f32 0.0, %v7082
  %v7084 = vpop.f32.mrf.mxu0
  %v7085 = vpop.f32.mrf.mxu0
  %v7086 = vadd.f32 0.0, %v7085
  %v7087 = vpop.f32.mrf.mxu0
  %7088 = vmatprep.mubr.bf16.mxu0 %v6504
  %7089 = vmatmul.mubr.bf16.gmra.mxu0 %v6503
  %v7090 = vpop.f32.mrf.mxu0
  %v7091 = vadd.f32 0.0, %v7090
  %v7092 = vpop.f32.mrf.mxu0
  %v7093 = vpop.f32.mrf.mxu0
  %v7094 = vadd.f32 0.0, %v7093
  %v7095 = vpop.f32.mrf.mxu0
  %7096 = vmatprep.mubr.bf16.mxu0 %v6506
  %7097 = vmatmul.mubr.bf16.gmra.mxu0 %v6505
  %v7098 = vpop.f32.mrf.mxu0
  %v7099 = vadd.f32 0.0, %v7098
  %v7100 = vpop.f32.mrf.mxu0
  %v7101 = vpop.f32.mrf.mxu0
  %v7102 = vadd.f32 0.0, %v7101
  %v7103 = vpop.f32.mrf.mxu0
  %7104 = vmatprep.mubr.bf16.mxu0 %v6508
  %7105 = vmatmul.mubr.bf16.gmra.mxu0 %v6507
  %v7106 = vpop.f32.mrf.mxu0
  %v7107 = vadd.f32 0.0, %v7106
  %v7108 = vpop.f32.mrf.mxu0
  %v7109 = vpop.f32.mrf.mxu0
  %v7110 = vadd.f32 0.0, %v7109
  %v7111 = vpop.f32.mrf.mxu0
  %7112 = vmatprep.mubr.bf16.mxu0 %v6510
  %7113 = vmatmul.mubr.bf16.gmra.mxu0 %v6509
  %v7114 = vpop.f32.mrf.mxu0
  %v7115 = vadd.f32 0.0, %v7114
  %v7116 = vpop.f32.mrf.mxu0
  %v7117 = vpop.f32.mrf.mxu0
  %v7118 = vadd.f32 0.0, %v7117
  %v7119 = vpop.f32.mrf.mxu0
  %7120 = vmatprep.mubr.bf16.mxu0 %v6512
  %7121 = vmatmul.mubr.bf16.gmra.mxu0 %v6511
  %v7122 = vpop.f32.mrf.mxu0
  %v7123 = vadd.f32 0.0, %v7122
  %v7124 = vpop.f32.mrf.mxu0
  %v7125 = vpop.f32.mrf.mxu0
  %v7126 = vadd.f32 0.0, %v7125
  %v7127 = vpop.f32.mrf.mxu0
  %7128 = vmatprep.mubr.bf16.mxu0 %v6514
  %7129 = vmatmul.mubr.bf16.gmra.mxu0 %v6513
  %v7130 = vpop.f32.mrf.mxu0
  %v7131 = vadd.f32 0.0, %v7130
  %v7132 = vpop.f32.mrf.mxu0
  %v7133 = vpop.f32.mrf.mxu0
  %v7134 = vadd.f32 0.0, %v7133
  %v7135 = vpop.f32.mrf.mxu0
  %7136 = vmatprep.mubr.bf16.mxu0 %v6516
  %7137 = vmatmul.mubr.bf16.gmra.mxu0 %v6515
  %v7138 = vpop.f32.mrf.mxu0
  %v7139 = vadd.f32 0.0, %v7138
  %v7140 = vpop.f32.mrf.mxu0
  %v7141 = vpop.f32.mrf.mxu0
  %v7142 = vadd.f32 0.0, %v7141
  %v7143 = vpop.f32.mrf.mxu0
  %7144 = vmatprep.mubr.bf16.mxu0 %v6518
  %7145 = vmatmul.mubr.bf16.gmra.mxu0 %v6517
  %v7146 = vpop.f32.mrf.mxu0
  %v7147 = vadd.f32 0.0, %v7146
  %v7148 = vpop.f32.mrf.mxu0
  %v7149 = vpop.f32.mrf.mxu0
  %v7150 = vadd.f32 0.0, %v7149
  %v7151 = vpop.f32.mrf.mxu0
  %7152 = vmatprep.mubr.bf16.mxu0 %v6520
  %7153 = vmatmul.mubr.bf16.gmra.mxu0 %v6519
  %v7154 = vpop.f32.mrf.mxu0
  %v7155 = vadd.f32 0.0, %v7154
  %v7156 = vpop.f32.mrf.mxu0
  %v7157 = vpop.f32.mrf.mxu0
  %v7158 = vadd.f32 0.0, %v7157
  %v7159 = vpop.f32.mrf.mxu0
  %7160 = vmatprep.mubr.bf16.mxu0 %v6522
  %7161 = vmatmul.mubr.bf16.gmra.mxu0 %v6521
  %v7162 = vpop.f32.mrf.mxu0
  %v7163 = vadd.f32 0.0, %v7162
  %v7164 = vpop.f32.mrf.mxu0
  %v7165 = vpop.f32.mrf.mxu0
  %v7166 = vadd.f32 0.0, %v7165
  %v7167 = vpop.f32.mrf.mxu0
  %7168 = vmatprep.mubr.bf16.mxu0 %v6524
  %7169 = vmatmul.mubr.bf16.gmra.mxu0 %v6523
  %v7170 = vpop.f32.mrf.mxu0
  %v7171 = vadd.f32 0.0, %v7170
  %v7172 = vpop.f32.mrf.mxu0
  %v7173 = vpop.f32.mrf.mxu0
  %v7174 = vadd.f32 0.0, %v7173
  %v7175 = vpop.f32.mrf.mxu0
  %7176 = vmatprep.mubr.bf16.mxu0 %v6526
  %7177 = vmatmul.mubr.bf16.gmra.mxu0 %v6525
  %v7178 = vpop.f32.mrf.mxu0
  %v7179 = vadd.f32 0.0, %v7178
  %v7180 = vpop.f32.mrf.mxu0
  %v7181 = vpop.f32.mrf.mxu0
  %v7182 = vadd.f32 0.0, %v7181
  %v7183 = vpop.f32.mrf.mxu0
  %7184 = vmatprep.mubr.bf16.mxu0 %v6528
  %7185 = vmatmul.mubr.bf16.gmra.mxu0 %v6527
  %v7186 = vpop.f32.mrf.mxu0
  %v7187 = vadd.f32 0.0, %v7186
  %v7188 = vpop.f32.mrf.mxu0
  %v7189 = vpop.f32.mrf.mxu0
  %v7190 = vadd.f32 0.0, %v7189
  %v7191 = vpop.f32.mrf.mxu0
  %7192 = vmatprep.mubr.bf16.mxu0 %v6530
  %7193 = vmatmul.mubr.bf16.gmra.mxu0 %v6529
  %v7194 = vpop.f32.mrf.mxu0
  %v7195 = vadd.f32 0.0, %v7194
  %v7196 = vpop.f32.mrf.mxu0
  %v7197 = vpop.f32.mrf.mxu0
  %v7198 = vadd.f32 0.0, %v7197
  %v7199 = vpop.f32.mrf.mxu0
  %7200 = vmatprep.mubr.bf16.mxu0 %v6532
  %7201 = vmatmul.mubr.bf16.gmra.mxu0 %v6531
  %v7202 = vpop.f32.mrf.mxu0
  %v7203 = vadd.f32 0.0, %v7202
  %v7204 = vpop.f32.mrf.mxu0
  %v7205 = vpop.f32.mrf.mxu0
  %v7206 = vadd.f32 0.0, %v7205
  %v7207 = vpop.f32.mrf.mxu0
  %7208 = vdwg.mxu0
  %7210 = vset.pattern.permute.xlu0 0
  %7211 = vperm.xlu0 %7210, %v6600
  %v7212 = vpop.permute.xlu0 %7211
  %7215 = vset.pattern.permute.xlu0 0
  %7216 = vperm.xlu0 %7215, %v6603
  %v7217 = vpop.permute.xlu0 %7216
  %7220 = vset.pattern.permute.xlu0 0
  %7221 = vperm.xlu0 %7220, %v6608
  %v7222 = vpop.permute.xlu0 %7221
  %7225 = vset.pattern.permute.xlu0 0
  %7226 = vperm.xlu0 %7225, %v6611
  %v7227 = vpop.permute.xlu0 %7226
  %7230 = vset.pattern.permute.xlu0 0
  %7231 = vperm.xlu0 %7230, %v6616
  %v7232 = vpop.permute.xlu0 %7231
  %7235 = vset.pattern.permute.xlu0 0
  %7236 = vperm.xlu0 %7235, %v6619
  %v7237 = vpop.permute.xlu0 %7236
  %7240 = vset.pattern.permute.xlu0 0
  %7241 = vperm.xlu0 %7240, %v6624
  %v7242 = vpop.permute.xlu0 %7241
  %7245 = vset.pattern.permute.xlu0 0
  %7246 = vperm.xlu0 %7245, %v6627
  %v7247 = vpop.permute.xlu0 %7246
  %7250 = vset.pattern.permute.xlu0 0
  %7251 = vperm.xlu0 %7250, %v6632
  %v7252 = vpop.permute.xlu0 %7251
  %7255 = vset.pattern.permute.xlu0 0
  %7256 = vperm.xlu0 %7255, %v6635
  %v7257 = vpop.permute.xlu0 %7256
  %7260 = vset.pattern.permute.xlu0 0
  %7261 = vperm.xlu0 %7260, %v6640
  %v7262 = vpop.permute.xlu0 %7261
  %7265 = vset.pattern.permute.xlu0 0
  %7266 = vperm.xlu0 %7265, %v6643
  %v7267 = vpop.permute.xlu0 %7266
  %7270 = vset.pattern.permute.xlu0 0
  %7271 = vperm.xlu0 %7270, %v6648
  %v7272 = vpop.permute.xlu0 %7271
  %7275 = vset.pattern.permute.xlu0 0
  %7276 = vperm.xlu0 %7275, %v6651
  %v7277 = vpop.permute.xlu0 %7276
  %7280 = vset.pattern.permute.xlu0 0
  %7281 = vperm.xlu0 %7280, %v6656
  %v7282 = vpop.permute.xlu0 %7281
  %7285 = vset.pattern.permute.xlu0 0
  %7286 = vperm.xlu0 %7285, %v6659
  %v7287 = vpop.permute.xlu0 %7286
  %7290 = vset.pattern.permute.xlu0 0
  %7291 = vperm.xlu0 %7290, %v6664
  %v7292 = vpop.permute.xlu0 %7291
  %7295 = vset.pattern.permute.xlu0 0
  %7296 = vperm.xlu0 %7295, %v6667
  %v7297 = vpop.permute.xlu0 %7296
  %7300 = vset.pattern.permute.xlu0 0
  %7301 = vperm.xlu0 %7300, %v6672
  %v7302 = vpop.permute.xlu0 %7301
  %7305 = vset.pattern.permute.xlu0 0
  %7306 = vperm.xlu0 %7305, %v6675
  %v7307 = vpop.permute.xlu0 %7306
  %7310 = vset.pattern.permute.xlu0 0
  %7311 = vperm.xlu0 %7310, %v6680
  %v7312 = vpop.permute.xlu0 %7311
  %7315 = vset.pattern.permute.xlu0 0
  %7316 = vperm.xlu0 %7315, %v6683
  %v7317 = vpop.permute.xlu0 %7316
  %7320 = vset.pattern.permute.xlu0 0
  %7321 = vperm.xlu0 %7320, %v6688
  %v7322 = vpop.permute.xlu0 %7321
  %7325 = vset.pattern.permute.xlu0 0
  %7326 = vperm.xlu0 %7325, %v6691
  %v7327 = vpop.permute.xlu0 %7326
  %7330 = vset.pattern.permute.xlu0 0
  %7331 = vperm.xlu0 %7330, %v6696
  %v7332 = vpop.permute.xlu0 %7331
  %7335 = vset.pattern.permute.xlu0 0
  %7336 = vperm.xlu0 %7335, %v6699
  %v7337 = vpop.permute.xlu0 %7336
  %7340 = vset.pattern.permute.xlu0 0
  %7341 = vperm.xlu0 %7340, %v6704
  %v7342 = vpop.permute.xlu0 %7341
  %7345 = vset.pattern.permute.xlu0 0
  %7346 = vperm.xlu0 %7345, %v6707
  %v7347 = vpop.permute.xlu0 %7346
  %7350 = vset.pattern.permute.xlu0 0
  %7351 = vperm.xlu0 %7350, %v6712
  %v7352 = vpop.permute.xlu0 %7351
  %7355 = vset.pattern.permute.xlu0 0
  %7356 = vperm.xlu0 %7355, %v6715
  %v7357 = vpop.permute.xlu0 %7356
  %7360 = vset.pattern.permute.xlu0 0
  %7361 = vperm.xlu0 %7360, %v6720
  %v7362 = vpop.permute.xlu0 %7361
  %7365 = vset.pattern.permute.xlu0 0
  %7366 = vperm.xlu0 %7365, %v6723
  %v7367 = vpop.permute.xlu0 %7366
  %7370 = vset.pattern.permute.xlu0 0
  %7371 = vperm.xlu0 %7370, %v6761
  %v7372 = vpop.permute.xlu0 %7371
  %7375 = vset.pattern.permute.xlu0 0
  %7376 = vperm.xlu0 %7375, %v6764
  %v7377 = vpop.permute.xlu0 %7376
  %7380 = vset.pattern.permute.xlu0 0
  %7381 = vperm.xlu0 %7380, %v6769
  %v7382 = vpop.permute.xlu0 %7381
  %7385 = vset.pattern.permute.xlu0 0
  %7386 = vperm.xlu0 %7385, %v6772
  %v7387 = vpop.permute.xlu0 %7386
  %7390 = vset.pattern.permute.xlu0 0
  %7391 = vperm.xlu0 %7390, %v6777
  %v7392 = vpop.permute.xlu0 %7391
  %7395 = vset.pattern.permute.xlu0 0
  %7396 = vperm.xlu0 %7395, %v6780
  %v7397 = vpop.permute.xlu0 %7396
  %7400 = vset.pattern.permute.xlu0 0
  %7401 = vperm.xlu0 %7400, %v6785
  %v7402 = vpop.permute.xlu0 %7401
  %7405 = vset.pattern.permute.xlu0 0
  %7406 = vperm.xlu0 %7405, %v6788
  %v7407 = vpop.permute.xlu0 %7406
  %7410 = vset.pattern.permute.xlu0 0
  %7411 = vperm.xlu0 %7410, %v6793
  %v7412 = vpop.permute.xlu0 %7411
  %7415 = vset.pattern.permute.xlu0 0
  %7416 = vperm.xlu0 %7415, %v6796
  %v7417 = vpop.permute.xlu0 %7416
  %7420 = vset.pattern.permute.xlu0 0
  %7421 = vperm.xlu0 %7420, %v6801
  %v7422 = vpop.permute.xlu0 %7421
  %7425 = vset.pattern.permute.xlu0 0
  %7426 = vperm.xlu0 %7425, %v6804
  %v7427 = vpop.permute.xlu0 %7426
  %7430 = vset.pattern.permute.xlu0 0
  %7431 = vperm.xlu0 %7430, %v6809
  %v7432 = vpop.permute.xlu0 %7431
  %7435 = vset.pattern.permute.xlu0 0
  %7436 = vperm.xlu0 %7435, %v6812
  %v7437 = vpop.permute.xlu0 %7436
  %7440 = vset.pattern.permute.xlu0 0
  %7441 = vperm.xlu0 %7440, %v6817
  %v7442 = vpop.permute.xlu0 %7441
  %7445 = vset.pattern.permute.xlu0 0
  %7446 = vperm.xlu0 %7445, %v6820
  %v7447 = vpop.permute.xlu0 %7446
  %7450 = vset.pattern.permute.xlu0 0
  %7451 = vperm.xlu0 %7450, %v6825
  %v7452 = vpop.permute.xlu0 %7451
  %7455 = vset.pattern.permute.xlu0 0
  %7456 = vperm.xlu0 %7455, %v6828
  %v7457 = vpop.permute.xlu0 %7456
  %7460 = vset.pattern.permute.xlu0 0
  %7461 = vperm.xlu0 %7460, %v6833
  %v7462 = vpop.permute.xlu0 %7461
  %7465 = vset.pattern.permute.xlu0 0
  %7466 = vperm.xlu0 %7465, %v6836
  %v7467 = vpop.permute.xlu0 %7466
  %7470 = vset.pattern.permute.xlu0 0
  %7471 = vperm.xlu0 %7470, %v6841
  %v7472 = vpop.permute.xlu0 %7471
  %7475 = vset.pattern.permute.xlu0 0
  %7476 = vperm.xlu0 %7475, %v6844
  %v7477 = vpop.permute.xlu0 %7476
  %7480 = vset.pattern.permute.xlu0 0
  %7481 = vperm.xlu0 %7480, %v6849
  %v7482 = vpop.permute.xlu0 %7481
  %7485 = vset.pattern.permute.xlu0 0
  %7486 = vperm.xlu0 %7485, %v6852
  %v7487 = vpop.permute.xlu0 %7486
  %7490 = vset.pattern.permute.xlu0 0
  %7491 = vperm.xlu0 %7490, %v6857
  %v7492 = vpop.permute.xlu0 %7491
  %7495 = vset.pattern.permute.xlu0 0
  %7496 = vperm.xlu0 %7495, %v6860
  %v7497 = vpop.permute.xlu0 %7496
  %7500 = vset.pattern.permute.xlu0 0
  %7501 = vperm.xlu0 %7500, %v6865
  %v7502 = vpop.permute.xlu0 %7501
  %7505 = vset.pattern.permute.xlu0 0
  %7506 = vperm.xlu0 %7505, %v6868
  %v7507 = vpop.permute.xlu0 %7506
  %7510 = vset.pattern.permute.xlu0 0
  %7511 = vperm.xlu0 %7510, %v6873
  %v7512 = vpop.permute.xlu0 %7511
  %7515 = vset.pattern.permute.xlu0 0
  %7516 = vperm.xlu0 %7515, %v6876
  %v7517 = vpop.permute.xlu0 %7516
  %7520 = vset.pattern.permute.xlu0 0
  %7521 = vperm.xlu0 %7520, %v6881
  %v7522 = vpop.permute.xlu0 %7521
  %7525 = vset.pattern.permute.xlu0 0
  %7526 = vperm.xlu0 %7525, %v6884
  %v7527 = vpop.permute.xlu0 %7526
  %7530 = vset.pattern.permute.xlu0 0
  %7531 = vperm.xlu0 %7530, %v6922
  %v7532 = vpop.permute.xlu0 %7531
  %7535 = vset.pattern.permute.xlu0 0
  %7536 = vperm.xlu0 %7535, %v6925
  %v7537 = vpop.permute.xlu0 %7536
  %7540 = vset.pattern.permute.xlu0 0
  %7541 = vperm.xlu0 %7540, %v6930
  %v7542 = vpop.permute.xlu0 %7541
  %7545 = vset.pattern.permute.xlu0 0
  %7546 = vperm.xlu0 %7545, %v6933
  %v7547 = vpop.permute.xlu0 %7546
  %7550 = vset.pattern.permute.xlu0 0
  %7551 = vperm.xlu0 %7550, %v6938
  %v7552 = vpop.permute.xlu0 %7551
  %7555 = vset.pattern.permute.xlu0 0
  %7556 = vperm.xlu0 %7555, %v6941
  %v7557 = vpop.permute.xlu0 %7556
  %7560 = vset.pattern.permute.xlu0 0
  %7561 = vperm.xlu0 %7560, %v6946
  %v7562 = vpop.permute.xlu0 %7561
  %7565 = vset.pattern.permute.xlu0 0
  %7566 = vperm.xlu0 %7565, %v6949
  %v7567 = vpop.permute.xlu0 %7566
  %7570 = vset.pattern.permute.xlu0 0
  %7571 = vperm.xlu0 %7570, %v6954
  %v7572 = vpop.permute.xlu0 %7571
  %7575 = vset.pattern.permute.xlu0 0
  %7576 = vperm.xlu0 %7575, %v6957
  %v7577 = vpop.permute.xlu0 %7576
  %7580 = vset.pattern.permute.xlu0 0
  %7581 = vperm.xlu0 %7580, %v6962
  %v7582 = vpop.permute.xlu0 %7581
  %7585 = vset.pattern.permute.xlu0 0
  %7586 = vperm.xlu0 %7585, %v6965
  %v7587 = vpop.permute.xlu0 %7586
  %7590 = vset.pattern.permute.xlu0 0
  %7591 = vperm.xlu0 %7590, %v6970
  %v7592 = vpop.permute.xlu0 %7591
  %7595 = vset.pattern.permute.xlu0 0
  %7596 = vperm.xlu0 %7595, %v6973
  %v7597 = vpop.permute.xlu0 %7596
  %7600 = vset.pattern.permute.xlu0 0
  %7601 = vperm.xlu0 %7600, %v6978
  %v7602 = vpop.permute.xlu0 %7601
  %7605 = vset.pattern.permute.xlu0 0
  %7606 = vperm.xlu0 %7605, %v6981
  %v7607 = vpop.permute.xlu0 %7606
  %7610 = vset.pattern.permute.xlu0 0
  %7611 = vperm.xlu0 %7610, %v6986
  %v7612 = vpop.permute.xlu0 %7611
  %7615 = vset.pattern.permute.xlu0 0
  %7616 = vperm.xlu0 %7615, %v6989
  %v7617 = vpop.permute.xlu0 %7616
  %7620 = vset.pattern.permute.xlu0 0
  %7621 = vperm.xlu0 %7620, %v6994
  %v7622 = vpop.permute.xlu0 %7621
  %7625 = vset.pattern.permute.xlu0 0
  %7626 = vperm.xlu0 %7625, %v6997
  %v7627 = vpop.permute.xlu0 %7626
  %7630 = vset.pattern.permute.xlu0 0
  %7631 = vperm.xlu0 %7630, %v7002
  %v7632 = vpop.permute.xlu0 %7631
  %7635 = vset.pattern.permute.xlu0 0
  %7636 = vperm.xlu0 %7635, %v7005
  %v7637 = vpop.permute.xlu0 %7636
  %7640 = vset.pattern.permute.xlu0 0
  %7641 = vperm.xlu0 %7640, %v7010
  %v7642 = vpop.permute.xlu0 %7641
  %7645 = vset.pattern.permute.xlu0 0
  %7646 = vperm.xlu0 %7645, %v7013
  %v7647 = vpop.permute.xlu0 %7646
  %7650 = vset.pattern.permute.xlu0 0
  %7651 = vperm.xlu0 %7650, %v7018
  %v7652 = vpop.permute.xlu0 %7651
  %7655 = vset.pattern.permute.xlu0 0
  %7656 = vperm.xlu0 %7655, %v7021
  %v7657 = vpop.permute.xlu0 %7656
  %7660 = vset.pattern.permute.xlu0 0
  %7661 = vperm.xlu0 %7660, %v7026
  %v7662 = vpop.permute.xlu0 %7661
  %7665 = vset.pattern.permute.xlu0 0
  %7666 = vperm.xlu0 %7665, %v7029
  %v7667 = vpop.permute.xlu0 %7666
  %7670 = vset.pattern.permute.xlu0 0
  %7671 = vperm.xlu0 %7670, %v7034
  %v7672 = vpop.permute.xlu0 %7671
  %7675 = vset.pattern.permute.xlu0 0
  %7676 = vperm.xlu0 %7675, %v7037
  %v7677 = vpop.permute.xlu0 %7676
  %7680 = vset.pattern.permute.xlu0 0
  %7681 = vperm.xlu0 %7680, %v7042
  %v7682 = vpop.permute.xlu0 %7681
  %7685 = vset.pattern.permute.xlu0 0
  %7686 = vperm.xlu0 %7685, %v7045
  %v7687 = vpop.permute.xlu0 %7686
  %7690 = vset.pattern.permute.xlu0 0
  %7691 = vperm.xlu0 %7690, %v7083
  %v7692 = vpop.permute.xlu0 %7691
  %7695 = vset.pattern.permute.xlu0 0
  %7696 = vperm.xlu0 %7695, %v7086
  %v7697 = vpop.permute.xlu0 %7696
  %7700 = vset.pattern.permute.xlu0 0
  %7701 = vperm.xlu0 %7700, %v7091
  %v7702 = vpop.permute.xlu0 %7701
  %7705 = vset.pattern.permute.xlu0 0
  %7706 = vperm.xlu0 %7705, %v7094
  %v7707 = vpop.permute.xlu0 %7706
  %7710 = vset.pattern.permute.xlu0 0
  %7711 = vperm.xlu0 %7710, %v7099
  %v7712 = vpop.permute.xlu0 %7711
  %7715 = vset.pattern.permute.xlu0 0
  %7716 = vperm.xlu0 %7715, %v7102
  %v7717 = vpop.permute.xlu0 %7716
  %7720 = vset.pattern.permute.xlu0 0
  %7721 = vperm.xlu0 %7720, %v7107
  %v7722 = vpop.permute.xlu0 %7721
  %7725 = vset.pattern.permute.xlu0 0
  %7726 = vperm.xlu0 %7725, %v7110
  %v7727 = vpop.permute.xlu0 %7726
  %7730 = vset.pattern.permute.xlu0 0
  %7731 = vperm.xlu0 %7730, %v7115
  %v7732 = vpop.permute.xlu0 %7731
  %7735 = vset.pattern.permute.xlu0 0
  %7736 = vperm.xlu0 %7735, %v7118
  %v7737 = vpop.permute.xlu0 %7736
  %7740 = vset.pattern.permute.xlu0 0
  %7741 = vperm.xlu0 %7740, %v7123
  %v7742 = vpop.permute.xlu0 %7741
  %7745 = vset.pattern.permute.xlu0 0
  %7746 = vperm.xlu0 %7745, %v7126
  %v7747 = vpop.permute.xlu0 %7746
  %7750 = vset.pattern.permute.xlu0 0
  %7751 = vperm.xlu0 %7750, %v7131
  %v7752 = vpop.permute.xlu0 %7751
  %7755 = vset.pattern.permute.xlu0 0
  %7756 = vperm.xlu0 %7755, %v7134
  %v7757 = vpop.permute.xlu0 %7756
  %7760 = vset.pattern.permute.xlu0 0
  %7761 = vperm.xlu0 %7760, %v7139
  %v7762 = vpop.permute.xlu0 %7761
  %7765 = vset.pattern.permute.xlu0 0
  %7766 = vperm.xlu0 %7765, %v7142
  %v7767 = vpop.permute.xlu0 %7766
  %7770 = vset.pattern.permute.xlu0 0
  %7771 = vperm.xlu0 %7770, %v7147
  %v7772 = vpop.permute.xlu0 %7771
  %7775 = vset.pattern.permute.xlu0 0
  %7776 = vperm.xlu0 %7775, %v7150
  %v7777 = vpop.permute.xlu0 %7776
  %7780 = vset.pattern.permute.xlu0 0
  %7781 = vperm.xlu0 %7780, %v7155
  %v7782 = vpop.permute.xlu0 %7781
  %7785 = vset.pattern.permute.xlu0 0
  %7786 = vperm.xlu0 %7785, %v7158
  %v7787 = vpop.permute.xlu0 %7786
  %7790 = vset.pattern.permute.xlu0 0
  %7791 = vperm.xlu0 %7790, %v7163
  %v7792 = vpop.permute.xlu0 %7791
  %7795 = vset.pattern.permute.xlu0 0
  %7796 = vperm.xlu0 %7795, %v7166
  %v7797 = vpop.permute.xlu0 %7796
  %7800 = vset.pattern.permute.xlu0 0
  %7801 = vperm.xlu0 %7800, %v7171
  %v7802 = vpop.permute.xlu0 %7801
  %7805 = vset.pattern.permute.xlu0 0
  %7806 = vperm.xlu0 %7805, %v7174
  %v7807 = vpop.permute.xlu0 %7806
  %7810 = vset.pattern.permute.xlu0 0
  %7811 = vperm.xlu0 %7810, %v7179
  %v7812 = vpop.permute.xlu0 %7811
  %7815 = vset.pattern.permute.xlu0 0
  %7816 = vperm.xlu0 %7815, %v7182
  %v7817 = vpop.permute.xlu0 %7816
  %7820 = vset.pattern.permute.xlu0 0
  %7821 = vperm.xlu0 %7820, %v7187
  %v7822 = vpop.permute.xlu0 %7821
  %7825 = vset.pattern.permute.xlu0 0
  %7826 = vperm.xlu0 %7825, %v7190
  %v7827 = vpop.permute.xlu0 %7826
  %7830 = vset.pattern.permute.xlu0 0
  %7831 = vperm.xlu0 %7830, %v7195
  %v7832 = vpop.permute.xlu0 %7831
  %7835 = vset.pattern.permute.xlu0 0
  %7836 = vperm.xlu0 %7835, %v7198
  %v7837 = vpop.permute.xlu0 %7836
  %7840 = vset.pattern.permute.xlu0 0
  %7841 = vperm.xlu0 %7840, %v7203
  %v7842 = vpop.permute.xlu0 %7841
  %7845 = vset.pattern.permute.xlu0 0
  %7846 = vperm.xlu0 %7845, %v7206
  %v7847 = vpop.permute.xlu0 %7846
  %v7881 = vunpack.c.l.b16 %v6277
  %v7882 = vunpack.c.l.b16 %v6278
  %v7883 = vunpack.c.l.b16 %v6279
  %v7884 = vunpack.c.l.b16 %v6280
  %v7885 = vunpack.c.l.b16 %v6281
  %v7886 = vunpack.c.l.b16 %v6282
  %v7887 = vunpack.c.l.b16 %v6283
  %v7888 = vunpack.c.l.b16 %v6284
  %v7889 = vunpack.c.l.b16 %v6285
  %v7890 = vunpack.c.l.b16 %v6286
  %v7891 = vunpack.c.l.b16 %v6287
  %v7892 = vunpack.c.l.b16 %v6288
  %v7893 = vunpack.c.l.b16 %v6289
  %v7894 = vunpack.c.l.b16 %v6290
  %v7895 = vunpack.c.l.b16 %v6291
  %v7896 = vunpack.c.l.b16 %v6292
  %v7897 = vunpack.c.l.b16 %v6293
  %v7898 = vunpack.c.l.b16 %v6294
  %v7899 = vunpack.c.l.b16 %v6295
  %v7900 = vunpack.c.l.b16 %v6296
  %v7901 = vunpack.c.l.b16 %v6297
  %v7902 = vunpack.c.l.b16 %v6298
  %v7903 = vunpack.c.l.b16 %v6299
  %v7904 = vunpack.c.l.b16 %v6300
  %v7905 = vunpack.c.l.b16 %v6301
  %v7906 = vunpack.c.l.b16 %v6302
  %v7907 = vunpack.c.l.b16 %v6303
  %v7908 = vunpack.c.l.b16 %v6304
  %v7909 = vunpack.c.l.b16 %v6305
  %v7910 = vunpack.c.l.b16 %v6306
  %v7911 = vunpack.c.l.b16 %v6307
  %v7912 = vunpack.c.l.b16 %v6308
  %v7913 = vpack.c.b16 %v7882, %v7881
  %v7914 = vpack.c.b16 %v7884, %v7883
  %v7915 = vpack.c.b16 %v7886, %v7885
  %v7916 = vpack.c.b16 %v7888, %v7887
  %v7917 = vpack.c.b16 %v7890, %v7889
  %v7918 = vpack.c.b16 %v7892, %v7891
  %v7919 = vpack.c.b16 %v7894, %v7893
  %v7920 = vpack.c.b16 %v7896, %v7895
  %v7921 = vpack.c.b16 %v7898, %v7897
  %v7922 = vpack.c.b16 %v7900, %v7899
  %v7923 = vpack.c.b16 %v7902, %v7901
  %v7924 = vpack.c.b16 %v7904, %v7903
  %v7925 = vpack.c.b16 %v7906, %v7905
  %v7926 = vpack.c.b16 %v7908, %v7907
  %v7927 = vpack.c.b16 %v7910, %v7909
  %v7928 = vpack.c.b16 %v7912, %v7911
  %7945 = vmatprep.subr.bf16.mxu0 0
  %7946 = vmatpush1.bf16.msra.mxu0 %v4925
  %7947 = vmatprep.subr.bf16.mxu0 0
  %7948 = vmatpush1.bf16.msra.mxu0 %v4324
  %7949 = vmatprep.subr.bf16.mxu0 0
  %7950 = vmatpush1.bf16.msra.mxu0 %v3720
  %7951 = vmatprep.subr.bf16.mxu0 0
  %7952 = vmatpush1.bf16.msra.mxu0 %v3119
  %7953 = vmatprep.subr.bf16.mxu0 0
  %7954 = vmatpush1.bf16.msra.mxu0 %v2514
  %7955 = vmatprep.subr.bf16.mxu0 0
  %7956 = vmatpush1.bf16.msra.mxu0 %v1913
  %7957 = vmatprep.subr.bf16.mxu0 0
  %7958 = vmatpush1.bf16.msra.mxu0 %v1312
  %7959 = vmatprep.subr.bf16.mxu0 0
  %7960 = vmatpush1.bf16.msra.mxu0 %v713
  %7961 = vmatprep.subr.bf16.mxu0 0
  %7962 = vmatpush2.bf16.msra.mxu0 0
  %7963 = vmatprep.subr.bf16.mxu0 0
  %7964 = vmatpush2.bf16.msra.mxu0 0
  %7965 = vmatprep.subr.bf16.mxu0 0
  %7966 = vmatpush2.bf16.msra.mxu0 0
  %7967 = vmatprep.subr.bf16.mxu0 0
  %7968 = vmatpush2.bf16.msra.mxu0 0
  %7969 = vmatprep.subr.bf16.mxu0 0
  %7970 = vmatpush2.bf16.msra.mxu0 0
  %7971 = vmatprep.subr.bf16.mxu0 0
  %7972 = vmatpush2.bf16.msra.mxu0 0
  %7973 = vmatprep.subr.bf16.mxu0 0
  %7974 = vmatpush2.bf16.msra.mxu0 0
  %7975 = vmatprep.subr.bf16.mxu0 0
  %7976 = vmatpush2.bf16.msra.mxu0 0
  %7977 = vmatprep.mubr.bf16.mxu0 0
  %7978 = vmatmul.mubr.bf16.gmra.mxu0 %v7913
  %v7979 = vpop.f32.mrf.mxu0
  %v7980 = vadd.f32 %v7212, %v7979
  %v7981 = vpop.f32.mrf.mxu0
  %v7982 = vpop.f32.mrf.mxu0
  %v7983 = vadd.f32 %v7217, %v7982
  %v7984 = vpop.f32.mrf.mxu0
  %7985 = vmatprep.mubr.bf16.mxu0 0
  %7986 = vmatmul.mubr.bf16.gmra.mxu0 %v7914
  %v7987 = vpop.f32.mrf.mxu0
  %v7988 = vadd.f32 %v7222, %v7987
  %v7989 = vpop.f32.mrf.mxu0
  %v7990 = vpop.f32.mrf.mxu0
  %v7991 = vadd.f32 %v7227, %v7990
  %v7992 = vpop.f32.mrf.mxu0
  %7993 = vmatprep.mubr.bf16.mxu0 0
  %7994 = vmatmul.mubr.bf16.gmra.mxu0 %v7915
  %v7995 = vpop.f32.mrf.mxu0
  %v7996 = vadd.f32 %v7232, %v7995
  %v7997 = vpop.f32.mrf.mxu0
  %v7998 = vpop.f32.mrf.mxu0
  %v7999 = vadd.f32 %v7237, %v7998
  %v8000 = vpop.f32.mrf.mxu0
  %8001 = vmatprep.mubr.bf16.mxu0 0
  %8002 = vmatmul.mubr.bf16.gmra.mxu0 %v7916
  %v8003 = vpop.f32.mrf.mxu0
  %v8004 = vadd.f32 %v7242, %v8003
  %v8005 = vpop.f32.mrf.mxu0
  %v8006 = vpop.f32.mrf.mxu0
  %v8007 = vadd.f32 %v7247, %v8006
  %v8008 = vpop.f32.mrf.mxu0
  %8009 = vmatprep.mubr.bf16.mxu0 0
  %8010 = vmatmul.mubr.bf16.gmra.mxu0 %v7917
  %v8011 = vpop.f32.mrf.mxu0
  %v8012 = vadd.f32 %v7252, %v8011
  %v8013 = vpop.f32.mrf.mxu0
  %v8014 = vpop.f32.mrf.mxu0
  %v8015 = vadd.f32 %v7257, %v8014
  %v8016 = vpop.f32.mrf.mxu0
  %8017 = vmatprep.mubr.bf16.mxu0 0
  %8018 = vmatmul.mubr.bf16.gmra.mxu0 %v7918
  %v8019 = vpop.f32.mrf.mxu0
  %v8020 = vadd.f32 %v7262, %v8019
  %v8021 = vpop.f32.mrf.mxu0
  %v8022 = vpop.f32.mrf.mxu0
  %v8023 = vadd.f32 %v7267, %v8022
  %v8024 = vpop.f32.mrf.mxu0
  %8025 = vmatprep.mubr.bf16.mxu0 0
  %8026 = vmatmul.mubr.bf16.gmra.mxu0 %v7919
  %v8027 = vpop.f32.mrf.mxu0
  %v8028 = vadd.f32 %v7272, %v8027
  %v8029 = vpop.f32.mrf.mxu0
  %v8030 = vpop.f32.mrf.mxu0
  %v8031 = vadd.f32 %v7277, %v8030
  %v8032 = vpop.f32.mrf.mxu0
  %8033 = vmatprep.mubr.bf16.mxu0 0
  %8034 = vmatmul.mubr.bf16.gmra.mxu0 %v7920
  %v8035 = vpop.f32.mrf.mxu0
  %v8036 = vadd.f32 %v7282, %v8035
  %v8037 = vpop.f32.mrf.mxu0
  %v8038 = vpop.f32.mrf.mxu0
  %v8039 = vadd.f32 %v7287, %v8038
  %v8040 = vpop.f32.mrf.mxu0
  %8041 = vmatprep.mubr.bf16.mxu0 0
  %8042 = vmatmul.mubr.bf16.gmra.mxu0 %v7921
  %v8043 = vpop.f32.mrf.mxu0
  %v8044 = vadd.f32 %v7292, %v8043
  %v8045 = vpop.f32.mrf.mxu0
  %v8046 = vpop.f32.mrf.mxu0
  %v8047 = vadd.f32 %v7297, %v8046
  %v8048 = vpop.f32.mrf.mxu0
  %8049 = vmatprep.mubr.bf16.mxu0 0
  %8050 = vmatmul.mubr.bf16.gmra.mxu0 %v7922
  %v8051 = vpop.f32.mrf.mxu0
  %v8052 = vadd.f32 %v7302, %v8051
  %v8053 = vpop.f32.mrf.mxu0
  %v8054 = vpop.f32.mrf.mxu0
  %v8055 = vadd.f32 %v7307, %v8054
  %v8056 = vpop.f32.mrf.mxu0
  %8057 = vmatprep.mubr.bf16.mxu0 0
  %8058 = vmatmul.mubr.bf16.gmra.mxu0 %v7923
  %v8059 = vpop.f32.mrf.mxu0
  %v8060 = vadd.f32 %v7312, %v8059
  %v8061 = vpop.f32.mrf.mxu0
  %v8062 = vpop.f32.mrf.mxu0
  %v8063 = vadd.f32 %v7317, %v8062
  %v8064 = vpop.f32.mrf.mxu0
  %8065 = vmatprep.mubr.bf16.mxu0 0
  %8066 = vmatmul.mubr.bf16.gmra.mxu0 %v7924
  %v8067 = vpop.f32.mrf.mxu0
  %v8068 = vadd.f32 %v7322, %v8067
  %v8069 = vpop.f32.mrf.mxu0
  %v8070 = vpop.f32.mrf.mxu0
  %v8071 = vadd.f32 %v7327, %v8070
  %v8072 = vpop.f32.mrf.mxu0
  %8073 = vmatprep.mubr.bf16.mxu0 0
  %8074 = vmatmul.mubr.bf16.gmra.mxu0 %v7925
  %v8075 = vpop.f32.mrf.mxu0
  %v8076 = vadd.f32 %v7332, %v8075
  %v8077 = vpop.f32.mrf.mxu0
  %v8078 = vpop.f32.mrf.mxu0
  %v8079 = vadd.f32 %v7337, %v8078
  %v8080 = vpop.f32.mrf.mxu0
  %8081 = vmatprep.mubr.bf16.mxu0 0
  %8082 = vmatmul.mubr.bf16.gmra.mxu0 %v7926
  %v8083 = vpop.f32.mrf.mxu0
  %v8084 = vadd.f32 %v7342, %v8083
  %v8085 = vpop.f32.mrf.mxu0
  %v8086 = vpop.f32.mrf.mxu0
  %v8087 = vadd.f32 %v7347, %v8086
  %v8088 = vpop.f32.mrf.mxu0
  %8089 = vmatprep.mubr.bf16.mxu0 0
  %8090 = vmatmul.mubr.bf16.gmra.mxu0 %v7927
  %v8091 = vpop.f32.mrf.mxu0
  %v8092 = vadd.f32 %v7352, %v8091
  %v8093 = vpop.f32.mrf.mxu0
  %v8094 = vpop.f32.mrf.mxu0
  %v8095 = vadd.f32 %v7357, %v8094
  %v8096 = vpop.f32.mrf.mxu0
  %8097 = vmatprep.mubr.bf16.mxu0 0
  %8098 = vmatmul.mubr.bf16.gmra.mxu0 %v7928
  %v8099 = vpop.f32.mrf.mxu0
  %v8100 = vadd.f32 %v7362, %v8099
  %v8101 = vpop.f32.mrf.mxu0
  %v8102 = vpop.f32.mrf.mxu0
  %v8103 = vadd.f32 %v7367, %v8102
  %v8104 = vpop.f32.mrf.mxu0
  %8105 = vdwg.mxu0
  %8106 = vmatprep.subr.bf16.mxu0 0
  %8107 = vmatpush1.bf16.msra.mxu0 %v4926
  %8108 = vmatprep.subr.bf16.mxu0 0
  %8109 = vmatpush1.bf16.msra.mxu0 %v4325
  %8110 = vmatprep.subr.bf16.mxu0 0
  %8111 = vmatpush1.bf16.msra.mxu0 %v3721
  %8112 = vmatprep.subr.bf16.mxu0 0
  %8113 = vmatpush1.bf16.msra.mxu0 %v3120
  %8114 = vmatprep.subr.bf16.mxu0 0
  %8115 = vmatpush1.bf16.msra.mxu0 %v2515
  %8116 = vmatprep.subr.bf16.mxu0 0
  %8117 = vmatpush1.bf16.msra.mxu0 %v1914
  %8118 = vmatprep.subr.bf16.mxu0 0
  %8119 = vmatpush1.bf16.msra.mxu0 %v1313
  %8120 = vmatprep.subr.bf16.mxu0 0
  %8121 = vmatpush1.bf16.msra.mxu0 %v714
  %8122 = vmatprep.subr.bf16.mxu0 0
  %8123 = vmatpush2.bf16.msra.mxu0 0
  %8124 = vmatprep.subr.bf16.mxu0 0
  %8125 = vmatpush2.bf16.msra.mxu0 0
  %8126 = vmatprep.subr.bf16.mxu0 0
  %8127 = vmatpush2.bf16.msra.mxu0 0
  %8128 = vmatprep.subr.bf16.mxu0 0
  %8129 = vmatpush2.bf16.msra.mxu0 0
  %8130 = vmatprep.subr.bf16.mxu0 0
  %8131 = vmatpush2.bf16.msra.mxu0 0
  %8132 = vmatprep.subr.bf16.mxu0 0
  %8133 = vmatpush2.bf16.msra.mxu0 0
  %8134 = vmatprep.subr.bf16.mxu0 0
  %8135 = vmatpush2.bf16.msra.mxu0 0
  %8136 = vmatprep.subr.bf16.mxu0 0
  %8137 = vmatpush2.bf16.msra.mxu0 0
  %8138 = vmatprep.mubr.bf16.mxu0 0
  %8139 = vmatmul.mubr.bf16.gmra.mxu0 %v7913
  %v8140 = vpop.f32.mrf.mxu0
  %v8141 = vadd.f32 %v7372, %v8140
  %v8142 = vpop.f32.mrf.mxu0
  %v8143 = vpop.f32.mrf.mxu0
  %v8144 = vadd.f32 %v7377, %v8143
  %v8145 = vpop.f32.mrf.mxu0
  %8146 = vmatprep.mubr.bf16.mxu0 0
  %8147 = vmatmul.mubr.bf16.gmra.mxu0 %v7914
  %v8148 = vpop.f32.mrf.mxu0
  %v8149 = vadd.f32 %v7382, %v8148
  %v8150 = vpop.f32.mrf.mxu0
  %v8151 = vpop.f32.mrf.mxu0
  %v8152 = vadd.f32 %v7387, %v8151
  %v8153 = vpop.f32.mrf.mxu0
  %8154 = vmatprep.mubr.bf16.mxu0 0
  %8155 = vmatmul.mubr.bf16.gmra.mxu0 %v7915
  %v8156 = vpop.f32.mrf.mxu0
  %v8157 = vadd.f32 %v7392, %v8156
  %v8158 = vpop.f32.mrf.mxu0
  %v8159 = vpop.f32.mrf.mxu0
  %v8160 = vadd.f32 %v7397, %v8159
  %v8161 = vpop.f32.mrf.mxu0
  %8162 = vmatprep.mubr.bf16.mxu0 0
  %8163 = vmatmul.mubr.bf16.gmra.mxu0 %v7916
  %v8164 = vpop.f32.mrf.mxu0
  %v8165 = vadd.f32 %v7402, %v8164
  %v8166 = vpop.f32.mrf.mxu0
  %v8167 = vpop.f32.mrf.mxu0
  %v8168 = vadd.f32 %v7407, %v8167
  %v8169 = vpop.f32.mrf.mxu0
  %8170 = vmatprep.mubr.bf16.mxu0 0
  %8171 = vmatmul.mubr.bf16.gmra.mxu0 %v7917
  %v8172 = vpop.f32.mrf.mxu0
  %v8173 = vadd.f32 %v7412, %v8172
  %v8174 = vpop.f32.mrf.mxu0
  %v8175 = vpop.f32.mrf.mxu0
  %v8176 = vadd.f32 %v7417, %v8175
  %v8177 = vpop.f32.mrf.mxu0
  %8178 = vmatprep.mubr.bf16.mxu0 0
  %8179 = vmatmul.mubr.bf16.gmra.mxu0 %v7918
  %v8180 = vpop.f32.mrf.mxu0
  %v8181 = vadd.f32 %v7422, %v8180
  %v8182 = vpop.f32.mrf.mxu0
  %v8183 = vpop.f32.mrf.mxu0
  %v8184 = vadd.f32 %v7427, %v8183
  %v8185 = vpop.f32.mrf.mxu0
  %8186 = vmatprep.mubr.bf16.mxu0 0
  %8187 = vmatmul.mubr.bf16.gmra.mxu0 %v7919
  %v8188 = vpop.f32.mrf.mxu0
  %v8189 = vadd.f32 %v7432, %v8188
  %v8190 = vpop.f32.mrf.mxu0
  %v8191 = vpop.f32.mrf.mxu0
  %v8192 = vadd.f32 %v7437, %v8191
  %v8193 = vpop.f32.mrf.mxu0
  %8194 = vmatprep.mubr.bf16.mxu0 0
  %8195 = vmatmul.mubr.bf16.gmra.mxu0 %v7920
  %v8196 = vpop.f32.mrf.mxu0
  %v8197 = vadd.f32 %v7442, %v8196
  %v8198 = vpop.f32.mrf.mxu0
  %v8199 = vpop.f32.mrf.mxu0
  %v8200 = vadd.f32 %v7447, %v8199
  %v8201 = vpop.f32.mrf.mxu0
  %8202 = vmatprep.mubr.bf16.mxu0 0
  %8203 = vmatmul.mubr.bf16.gmra.mxu0 %v7921
  %v8204 = vpop.f32.mrf.mxu0
  %v8205 = vadd.f32 %v7452, %v8204
  %v8206 = vpop.f32.mrf.mxu0
  %v8207 = vpop.f32.mrf.mxu0
  %v8208 = vadd.f32 %v7457, %v8207
  %v8209 = vpop.f32.mrf.mxu0
  %8210 = vmatprep.mubr.bf16.mxu0 0
  %8211 = vmatmul.mubr.bf16.gmra.mxu0 %v7922
  %v8212 = vpop.f32.mrf.mxu0
  %v8213 = vadd.f32 %v7462, %v8212
  %v8214 = vpop.f32.mrf.mxu0
  %v8215 = vpop.f32.mrf.mxu0
  %v8216 = vadd.f32 %v7467, %v8215
  %v8217 = vpop.f32.mrf.mxu0
  %8218 = vmatprep.mubr.bf16.mxu0 0
  %8219 = vmatmul.mubr.bf16.gmra.mxu0 %v7923
  %v8220 = vpop.f32.mrf.mxu0
  %v8221 = vadd.f32 %v7472, %v8220
  %v8222 = vpop.f32.mrf.mxu0
  %v8223 = vpop.f32.mrf.mxu0
  %v8224 = vadd.f32 %v7477, %v8223
  %v8225 = vpop.f32.mrf.mxu0
  %8226 = vmatprep.mubr.bf16.mxu0 0
  %8227 = vmatmul.mubr.bf16.gmra.mxu0 %v7924
  %v8228 = vpop.f32.mrf.mxu0
  %v8229 = vadd.f32 %v7482, %v8228
  %v8230 = vpop.f32.mrf.mxu0
  %v8231 = vpop.f32.mrf.mxu0
  %v8232 = vadd.f32 %v7487, %v8231
  %v8233 = vpop.f32.mrf.mxu0
  %8234 = vmatprep.mubr.bf16.mxu0 0
  %8235 = vmatmul.mubr.bf16.gmra.mxu0 %v7925
  %v8236 = vpop.f32.mrf.mxu0
  %v8237 = vadd.f32 %v7492, %v8236
  %v8238 = vpop.f32.mrf.mxu0
  %v8239 = vpop.f32.mrf.mxu0
  %v8240 = vadd.f32 %v7497, %v8239
  %v8241 = vpop.f32.mrf.mxu0
  %8242 = vmatprep.mubr.bf16.mxu0 0
  %8243 = vmatmul.mubr.bf16.gmra.mxu0 %v7926
  %v8244 = vpop.f32.mrf.mxu0
  %v8245 = vadd.f32 %v7502, %v8244
  %v8246 = vpop.f32.mrf.mxu0
  %v8247 = vpop.f32.mrf.mxu0
  %v8248 = vadd.f32 %v7507, %v8247
  %v8249 = vpop.f32.mrf.mxu0
  %8250 = vmatprep.mubr.bf16.mxu0 0
  %8251 = vmatmul.mubr.bf16.gmra.mxu0 %v7927
  %v8252 = vpop.f32.mrf.mxu0
  %v8253 = vadd.f32 %v7512, %v8252
  %v8254 = vpop.f32.mrf.mxu0
  %v8255 = vpop.f32.mrf.mxu0
  %v8256 = vadd.f32 %v7517, %v8255
  %v8257 = vpop.f32.mrf.mxu0
  %8258 = vmatprep.mubr.bf16.mxu0 0
  %8259 = vmatmul.mubr.bf16.gmra.mxu0 %v7928
  %v8260 = vpop.f32.mrf.mxu0
  %v8261 = vadd.f32 %v7522, %v8260
  %v8262 = vpop.f32.mrf.mxu0
  %v8263 = vpop.f32.mrf.mxu0
  %v8264 = vadd.f32 %v7527, %v8263
  %v8265 = vpop.f32.mrf.mxu0
  %8266 = vdwg.mxu0
  %8267 = vmatprep.subr.bf16.mxu0 0
  %8268 = vmatpush1.bf16.msra.mxu0 %v4927
  %8269 = vmatprep.subr.bf16.mxu0 0
  %8270 = vmatpush1.bf16.msra.mxu0 %v4326
  %8271 = vmatprep.subr.bf16.mxu0 0
  %8272 = vmatpush1.bf16.msra.mxu0 %v3722
  %8273 = vmatprep.subr.bf16.mxu0 0
  %8274 = vmatpush1.bf16.msra.mxu0 %v3121
  %8275 = vmatprep.subr.bf16.mxu0 0
  %8276 = vmatpush1.bf16.msra.mxu0 %v2516
  %8277 = vmatprep.subr.bf16.mxu0 0
  %8278 = vmatpush1.bf16.msra.mxu0 %v1915
  %8279 = vmatprep.subr.bf16.mxu0 0
  %8280 = vmatpush1.bf16.msra.mxu0 %v1314
  %8281 = vmatprep.subr.bf16.mxu0 0
  %8282 = vmatpush1.bf16.msra.mxu0 %v715
  %8283 = vmatprep.subr.bf16.mxu0 0
  %8284 = vmatpush2.bf16.msra.mxu0 0
  %8285 = vmatprep.subr.bf16.mxu0 0
  %8286 = vmatpush2.bf16.msra.mxu0 0
  %8287 = vmatprep.subr.bf16.mxu0 0
  %8288 = vmatpush2.bf16.msra.mxu0 0
  %8289 = vmatprep.subr.bf16.mxu0 0
  %8290 = vmatpush2.bf16.msra.mxu0 0
  %8291 = vmatprep.subr.bf16.mxu0 0
  %8292 = vmatpush2.bf16.msra.mxu0 0
  %8293 = vmatprep.subr.bf16.mxu0 0
  %8294 = vmatpush2.bf16.msra.mxu0 0
  %8295 = vmatprep.subr.bf16.mxu0 0
  %8296 = vmatpush2.bf16.msra.mxu0 0
  %8297 = vmatprep.subr.bf16.mxu0 0
  %8298 = vmatpush2.bf16.msra.mxu0 0
  %8299 = vmatprep.mubr.bf16.mxu0 0
  %8300 = vmatmul.mubr.bf16.gmra.mxu0 %v7913
  %v8301 = vpop.f32.mrf.mxu0
  %v8302 = vadd.f32 %v7532, %v8301
  %v8303 = vpop.f32.mrf.mxu0
  %v8304 = vpop.f32.mrf.mxu0
  %v8305 = vadd.f32 %v7537, %v8304
  %v8306 = vpop.f32.mrf.mxu0
  %8307 = vmatprep.mubr.bf16.mxu0 0
  %8308 = vmatmul.mubr.bf16.gmra.mxu0 %v7914
  %v8309 = vpop.f32.mrf.mxu0
  %v8310 = vadd.f32 %v7542, %v8309
  %v8311 = vpop.f32.mrf.mxu0
  %v8312 = vpop.f32.mrf.mxu0
  %v8313 = vadd.f32 %v7547, %v8312
  %v8314 = vpop.f32.mrf.mxu0
  %8315 = vmatprep.mubr.bf16.mxu0 0
  %8316 = vmatmul.mubr.bf16.gmra.mxu0 %v7915
  %v8317 = vpop.f32.mrf.mxu0
  %v8318 = vadd.f32 %v7552, %v8317
  %v8319 = vpop.f32.mrf.mxu0
  %v8320 = vpop.f32.mrf.mxu0
  %v8321 = vadd.f32 %v7557, %v8320
  %v8322 = vpop.f32.mrf.mxu0
  %8323 = vmatprep.mubr.bf16.mxu0 0
  %8324 = vmatmul.mubr.bf16.gmra.mxu0 %v7916
  %v8325 = vpop.f32.mrf.mxu0
  %v8326 = vadd.f32 %v7562, %v8325
  %v8327 = vpop.f32.mrf.mxu0
  %v8328 = vpop.f32.mrf.mxu0
  %v8329 = vadd.f32 %v7567, %v8328
  %v8330 = vpop.f32.mrf.mxu0
  %8331 = vmatprep.mubr.bf16.mxu0 0
  %8332 = vmatmul.mubr.bf16.gmra.mxu0 %v7917
  %v8333 = vpop.f32.mrf.mxu0
  %v8334 = vadd.f32 %v7572, %v8333
  %v8335 = vpop.f32.mrf.mxu0
  %v8336 = vpop.f32.mrf.mxu0
  %v8337 = vadd.f32 %v7577, %v8336
  %v8338 = vpop.f32.mrf.mxu0
  %8339 = vmatprep.mubr.bf16.mxu0 0
  %8340 = vmatmul.mubr.bf16.gmra.mxu0 %v7918
  %v8341 = vpop.f32.mrf.mxu0
  %v8342 = vadd.f32 %v7582, %v8341
  %v8343 = vpop.f32.mrf.mxu0
  %v8344 = vpop.f32.mrf.mxu0
  %v8345 = vadd.f32 %v7587, %v8344
  %v8346 = vpop.f32.mrf.mxu0
  %8347 = vmatprep.mubr.bf16.mxu0 0
  %8348 = vmatmul.mubr.bf16.gmra.mxu0 %v7919
  %v8349 = vpop.f32.mrf.mxu0
  %v8350 = vadd.f32 %v7592, %v8349
  %v8351 = vpop.f32.mrf.mxu0
  %v8352 = vpop.f32.mrf.mxu0
  %v8353 = vadd.f32 %v7597, %v8352
  %v8354 = vpop.f32.mrf.mxu0
  %8355 = vmatprep.mubr.bf16.mxu0 0
  %8356 = vmatmul.mubr.bf16.gmra.mxu0 %v7920
  %v8357 = vpop.f32.mrf.mxu0
  %v8358 = vadd.f32 %v7602, %v8357
  %v8359 = vpop.f32.mrf.mxu0
  %v8360 = vpop.f32.mrf.mxu0
  %v8361 = vadd.f32 %v7607, %v8360
  %v8362 = vpop.f32.mrf.mxu0
  %8363 = vmatprep.mubr.bf16.mxu0 0
  %8364 = vmatmul.mubr.bf16.gmra.mxu0 %v7921
  %v8365 = vpop.f32.mrf.mxu0
  %v8366 = vadd.f32 %v7612, %v8365
  %v8367 = vpop.f32.mrf.mxu0
  %v8368 = vpop.f32.mrf.mxu0
  %v8369 = vadd.f32 %v7617, %v8368
  %v8370 = vpop.f32.mrf.mxu0
  %8371 = vmatprep.mubr.bf16.mxu0 0
  %8372 = vmatmul.mubr.bf16.gmra.mxu0 %v7922
  %v8373 = vpop.f32.mrf.mxu0
  %v8374 = vadd.f32 %v7622, %v8373
  %v8375 = vpop.f32.mrf.mxu0
  %v8376 = vpop.f32.mrf.mxu0
  %v8377 = vadd.f32 %v7627, %v8376
  %v8378 = vpop.f32.mrf.mxu0
  %8379 = vmatprep.mubr.bf16.mxu0 0
  %8380 = vmatmul.mubr.bf16.gmra.mxu0 %v7923
  %v8381 = vpop.f32.mrf.mxu0
  %v8382 = vadd.f32 %v7632, %v8381
  %v8383 = vpop.f32.mrf.mxu0
  %v8384 = vpop.f32.mrf.mxu0
  %v8385 = vadd.f32 %v7637, %v8384
  %v8386 = vpop.f32.mrf.mxu0
  %8387 = vmatprep.mubr.bf16.mxu0 0
  %8388 = vmatmul.mubr.bf16.gmra.mxu0 %v7924
  %v8389 = vpop.f32.mrf.mxu0
  %v8390 = vadd.f32 %v7642, %v8389
  %v8391 = vpop.f32.mrf.mxu0
  %v8392 = vpop.f32.mrf.mxu0
  %v8393 = vadd.f32 %v7647, %v8392
  %v8394 = vpop.f32.mrf.mxu0
  %8395 = vmatprep.mubr.bf16.mxu0 0
  %8396 = vmatmul.mubr.bf16.gmra.mxu0 %v7925
  %v8397 = vpop.f32.mrf.mxu0
  %v8398 = vadd.f32 %v7652, %v8397
  %v8399 = vpop.f32.mrf.mxu0
  %v8400 = vpop.f32.mrf.mxu0
  %v8401 = vadd.f32 %v7657, %v8400
  %v8402 = vpop.f32.mrf.mxu0
  %8403 = vmatprep.mubr.bf16.mxu0 0
  %8404 = vmatmul.mubr.bf16.gmra.mxu0 %v7926
  %v8405 = vpop.f32.mrf.mxu0
  %v8406 = vadd.f32 %v7662, %v8405
  %v8407 = vpop.f32.mrf.mxu0
  %v8408 = vpop.f32.mrf.mxu0
  %v8409 = vadd.f32 %v7667, %v8408
  %v8410 = vpop.f32.mrf.mxu0
  %8411 = vmatprep.mubr.bf16.mxu0 0
  %8412 = vmatmul.mubr.bf16.gmra.mxu0 %v7927
  %v8413 = vpop.f32.mrf.mxu0
  %v8414 = vadd.f32 %v7672, %v8413
  %v8415 = vpop.f32.mrf.mxu0
  %v8416 = vpop.f32.mrf.mxu0
  %v8417 = vadd.f32 %v7677, %v8416
  %v8418 = vpop.f32.mrf.mxu0
  %8419 = vmatprep.mubr.bf16.mxu0 0
  %8420 = vmatmul.mubr.bf16.gmra.mxu0 %v7928
  %v8421 = vpop.f32.mrf.mxu0
  %v8422 = vadd.f32 %v7682, %v8421
  %v8423 = vpop.f32.mrf.mxu0
  %v8424 = vpop.f32.mrf.mxu0
  %v8425 = vadd.f32 %v7687, %v8424
  %v8426 = vpop.f32.mrf.mxu0
  %8427 = vdwg.mxu0
  %8428 = vmatprep.subr.bf16.mxu0 0
  %8429 = vmatpush1.bf16.msra.mxu0 %v4928
  %8430 = vmatprep.subr.bf16.mxu0 0
  %8431 = vmatpush1.bf16.msra.mxu0 %v4327
  %8432 = vmatprep.subr.bf16.mxu0 0
  %8433 = vmatpush1.bf16.msra.mxu0 %v3723
  %8434 = vmatprep.subr.bf16.mxu0 0
  %8435 = vmatpush1.bf16.msra.mxu0 %v3122
  %8436 = vmatprep.subr.bf16.mxu0 0
  %8437 = vmatpush1.bf16.msra.mxu0 %v2517
  %8438 = vmatprep.subr.bf16.mxu0 0
  %8439 = vmatpush1.bf16.msra.mxu0 %v1916
  %8440 = vmatprep.subr.bf16.mxu0 0
  %8441 = vmatpush1.bf16.msra.mxu0 %v1315
  %8442 = vmatprep.subr.bf16.mxu0 0
  %8443 = vmatpush1.bf16.msra.mxu0 %v716
  %8444 = vmatprep.subr.bf16.mxu0 0
  %8445 = vmatpush2.bf16.msra.mxu0 0
  %8446 = vmatprep.subr.bf16.mxu0 0
  %8447 = vmatpush2.bf16.msra.mxu0 0
  %8448 = vmatprep.subr.bf16.mxu0 0
  %8449 = vmatpush2.bf16.msra.mxu0 0
  %8450 = vmatprep.subr.bf16.mxu0 0
  %8451 = vmatpush2.bf16.msra.mxu0 0
  %8452 = vmatprep.subr.bf16.mxu0 0
  %8453 = vmatpush2.bf16.msra.mxu0 0
  %8454 = vmatprep.subr.bf16.mxu0 0
  %8455 = vmatpush2.bf16.msra.mxu0 0
  %8456 = vmatprep.subr.bf16.mxu0 0
  %8457 = vmatpush2.bf16.msra.mxu0 0
  %8458 = vmatprep.subr.bf16.mxu0 0
  %8459 = vmatpush2.bf16.msra.mxu0 0
  %8460 = vmatprep.mubr.bf16.mxu0 0
  %8461 = vmatmul.mubr.bf16.gmra.mxu0 %v7913
  %v8462 = vpop.f32.mrf.mxu0
  %v8463 = vadd.f32 %v7692, %v8462
  %v8464 = vpop.f32.mrf.mxu0
  %v8465 = vpop.f32.mrf.mxu0
  %v8466 = vadd.f32 %v7697, %v8465
  %v8467 = vpop.f32.mrf.mxu0
  %8468 = vmatprep.mubr.bf16.mxu0 0
  %8469 = vmatmul.mubr.bf16.gmra.mxu0 %v7914
  %v8470 = vpop.f32.mrf.mxu0
  %v8471 = vadd.f32 %v7702, %v8470
  %v8472 = vpop.f32.mrf.mxu0
  %v8473 = vpop.f32.mrf.mxu0
  %v8474 = vadd.f32 %v7707, %v8473
  %v8475 = vpop.f32.mrf.mxu0
  %8476 = vmatprep.mubr.bf16.mxu0 0
  %8477 = vmatmul.mubr.bf16.gmra.mxu0 %v7915
  %v8478 = vpop.f32.mrf.mxu0
  %v8479 = vadd.f32 %v7712, %v8478
  %v8480 = vpop.f32.mrf.mxu0
  %v8481 = vpop.f32.mrf.mxu0
  %v8482 = vadd.f32 %v7717, %v8481
  %v8483 = vpop.f32.mrf.mxu0
  %8484 = vmatprep.mubr.bf16.mxu0 0
  %8485 = vmatmul.mubr.bf16.gmra.mxu0 %v7916
  %v8486 = vpop.f32.mrf.mxu0
  %v8487 = vadd.f32 %v7722, %v8486
  %v8488 = vpop.f32.mrf.mxu0
  %v8489 = vpop.f32.mrf.mxu0
  %v8490 = vadd.f32 %v7727, %v8489
  %v8491 = vpop.f32.mrf.mxu0
  %8492 = vmatprep.mubr.bf16.mxu0 0
  %8493 = vmatmul.mubr.bf16.gmra.mxu0 %v7917
  %v8494 = vpop.f32.mrf.mxu0
  %v8495 = vadd.f32 %v7732, %v8494
  %v8496 = vpop.f32.mrf.mxu0
  %v8497 = vpop.f32.mrf.mxu0
  %v8498 = vadd.f32 %v7737, %v8497
  %v8499 = vpop.f32.mrf.mxu0
  %8500 = vmatprep.mubr.bf16.mxu0 0
  %8501 = vmatmul.mubr.bf16.gmra.mxu0 %v7918
  %v8502 = vpop.f32.mrf.mxu0
  %v8503 = vadd.f32 %v7742, %v8502
  %v8504 = vpop.f32.mrf.mxu0
  %v8505 = vpop.f32.mrf.mxu0
  %v8506 = vadd.f32 %v7747, %v8505
  %v8507 = vpop.f32.mrf.mxu0
  %8508 = vmatprep.mubr.bf16.mxu0 0
  %8509 = vmatmul.mubr.bf16.gmra.mxu0 %v7919
  %v8510 = vpop.f32.mrf.mxu0
  %v8511 = vadd.f32 %v7752, %v8510
  %v8512 = vpop.f32.mrf.mxu0
  %v8513 = vpop.f32.mrf.mxu0
  %v8514 = vadd.f32 %v7757, %v8513
  %v8515 = vpop.f32.mrf.mxu0
  %8516 = vmatprep.mubr.bf16.mxu0 0
  %8517 = vmatmul.mubr.bf16.gmra.mxu0 %v7920
  %v8518 = vpop.f32.mrf.mxu0
  %v8519 = vadd.f32 %v7762, %v8518
  %v8520 = vpop.f32.mrf.mxu0
  %v8521 = vpop.f32.mrf.mxu0
  %v8522 = vadd.f32 %v7767, %v8521
  %v8523 = vpop.f32.mrf.mxu0
  %8524 = vmatprep.mubr.bf16.mxu0 0
  %8525 = vmatmul.mubr.bf16.gmra.mxu0 %v7921
  %v8526 = vpop.f32.mrf.mxu0
  %v8527 = vadd.f32 %v7772, %v8526
  %v8528 = vpop.f32.mrf.mxu0
  %v8529 = vpop.f32.mrf.mxu0
  %v8530 = vadd.f32 %v7777, %v8529
  %v8531 = vpop.f32.mrf.mxu0
  %8532 = vmatprep.mubr.bf16.mxu0 0
  %8533 = vmatmul.mubr.bf16.gmra.mxu0 %v7922
  %v8534 = vpop.f32.mrf.mxu0
  %v8535 = vadd.f32 %v7782, %v8534
  %v8536 = vpop.f32.mrf.mxu0
  %v8537 = vpop.f32.mrf.mxu0
  %v8538 = vadd.f32 %v7787, %v8537
  %v8539 = vpop.f32.mrf.mxu0
  %8540 = vmatprep.mubr.bf16.mxu0 0
  %8541 = vmatmul.mubr.bf16.gmra.mxu0 %v7923
  %v8542 = vpop.f32.mrf.mxu0
  %v8543 = vadd.f32 %v7792, %v8542
  %v8544 = vpop.f32.mrf.mxu0
  %v8545 = vpop.f32.mrf.mxu0
  %v8546 = vadd.f32 %v7797, %v8545
  %v8547 = vpop.f32.mrf.mxu0
  %8548 = vmatprep.mubr.bf16.mxu0 0
  %8549 = vmatmul.mubr.bf16.gmra.mxu0 %v7924
  %v8550 = vpop.f32.mrf.mxu0
  %v8551 = vadd.f32 %v7802, %v8550
  %v8552 = vpop.f32.mrf.mxu0
  %v8553 = vpop.f32.mrf.mxu0
  %v8554 = vadd.f32 %v7807, %v8553
  %v8555 = vpop.f32.mrf.mxu0
  %8556 = vmatprep.mubr.bf16.mxu0 0
  %8557 = vmatmul.mubr.bf16.gmra.mxu0 %v7925
  %v8558 = vpop.f32.mrf.mxu0
  %v8559 = vadd.f32 %v7812, %v8558
  %v8560 = vpop.f32.mrf.mxu0
  %v8561 = vpop.f32.mrf.mxu0
  %v8562 = vadd.f32 %v7817, %v8561
  %v8563 = vpop.f32.mrf.mxu0
  %8564 = vmatprep.mubr.bf16.mxu0 0
  %8565 = vmatmul.mubr.bf16.gmra.mxu0 %v7926
  %v8566 = vpop.f32.mrf.mxu0
  %v8567 = vadd.f32 %v7822, %v8566
  %v8568 = vpop.f32.mrf.mxu0
  %v8569 = vpop.f32.mrf.mxu0
  %v8570 = vadd.f32 %v7827, %v8569
  %v8571 = vpop.f32.mrf.mxu0
  %8572 = vmatprep.mubr.bf16.mxu0 0
  %8573 = vmatmul.mubr.bf16.gmra.mxu0 %v7927
  %v8574 = vpop.f32.mrf.mxu0
  %v8575 = vadd.f32 %v7832, %v8574
  %v8576 = vpop.f32.mrf.mxu0
  %v8577 = vpop.f32.mrf.mxu0
  %v8578 = vadd.f32 %v7837, %v8577
  %v8579 = vpop.f32.mrf.mxu0
  %8580 = vmatprep.mubr.bf16.mxu0 0
  %8581 = vmatmul.mubr.bf16.gmra.mxu0 %v7928
  %v8582 = vpop.f32.mrf.mxu0
  %v8583 = vadd.f32 %v7842, %v8582
  %v8584 = vpop.f32.mrf.mxu0
  %v8585 = vpop.f32.mrf.mxu0
  %v8586 = vadd.f32 %v7847, %v8585
  %v8587 = vpop.f32.mrf.mxu0
  %8588 = vdwg.mxu0
  %v8589 = vld [vmem:[%s11] sm:$0xff]
  %v8590 = vld [vmem:[%s11 + $0x8] sm:$0xff]
  %v8591 = vld [vmem:[%s11 + $0x10] sm:$0xff]
  %v8592 = vld [vmem:[%s11 + $0x18] sm:$0xff]
  %v8593 = vld [vmem:[%s11 + $0x20] sm:$0xff]
  %v8594 = vld [vmem:[%s11 + $0x28] sm:$0xff]
  %v8595 = vld [vmem:[%s11 + $0x30] sm:$0xff]
  %v8596 = vld [vmem:[%s11 + $0x38] sm:$0xff]
  %v8597 = vld [vmem:[%s11 + $0x40] sm:$0xff]
  %v8598 = vld [vmem:[%s11 + $0x48] sm:$0xff]
  %v8599 = vld [vmem:[%s11 + $0x50] sm:$0xff]
  %v8600 = vld [vmem:[%s11 + $0x58] sm:$0xff]
  %v8601 = vld [vmem:[%s11 + $0x60] sm:$0xff]
  %v8602 = vld [vmem:[%s11 + $0x68] sm:$0xff]
  %v8603 = vld [vmem:[%s11 + $0x70] sm:$0xff]
  %v8604 = vld [vmem:[%s11 + $0x78] sm:$0xff]
  %v8605 = vld [vmem:[%s11 + $0x80] sm:$0xff]
  %v8606 = vld [vmem:[%s11 + $0x88] sm:$0xff]
  %v8607 = vld [vmem:[%s11 + $0x90] sm:$0xff]
  %v8608 = vld [vmem:[%s11 + $0x98] sm:$0xff]
  %v8609 = vld [vmem:[%s11 + $0xa0] sm:$0xff]
  %v8610 = vld [vmem:[%s11 + $0xa8] sm:$0xff]
  %v8611 = vld [vmem:[%s11 + $0xb0] sm:$0xff]
  %v8612 = vld [vmem:[%s11 + $0xb8] sm:$0xff]
  %v8613 = vld [vmem:[%s11 + $0xc0] sm:$0xff]
  %v8614 = vld [vmem:[%s11 + $0xc8] sm:$0xff]
  %v8615 = vld [vmem:[%s11 + $0xd0] sm:$0xff]
  %v8616 = vld [vmem:[%s11 + $0xd8] sm:$0xff]
  %v8617 = vld [vmem:[%s11 + $0xe0] sm:$0xff]
  %v8618 = vld [vmem:[%s11 + $0xe8] sm:$0xff]
  %v8619 = vld [vmem:[%s11 + $0xf0] sm:$0xff]
  %v8620 = vld [vmem:[%s11 + $0xf8] sm:$0xff]
  %8622 = vset.pattern.permute.xlu0 0
  %8623 = vperm.xlu0 %8622, %v8589
  %v8624 = vpop.permute.xlu0 %8623
  %8627 = vset.pattern.permute.xlu0 0
  %8628 = vperm.xlu0 %8627, %v8590
  %v8629 = vpop.permute.xlu0 %8628
  %8632 = vset.pattern.permute.xlu0 0
  %8633 = vperm.xlu0 %8632, %v8591
  %v8634 = vpop.permute.xlu0 %8633
  %8637 = vset.pattern.permute.xlu0 0
  %8638 = vperm.xlu0 %8637, %v8592
  %v8639 = vpop.permute.xlu0 %8638
  %8642 = vset.pattern.permute.xlu0 0
  %8643 = vperm.xlu0 %8642, %v8593
  %v8644 = vpop.permute.xlu0 %8643
  %8647 = vset.pattern.permute.xlu0 0
  %8648 = vperm.xlu0 %8647, %v8594
  %v8649 = vpop.permute.xlu0 %8648
  %8652 = vset.pattern.permute.xlu0 0
  %8653 = vperm.xlu0 %8652, %v8595
  %v8654 = vpop.permute.xlu0 %8653
  %8657 = vset.pattern.permute.xlu0 0
  %8658 = vperm.xlu0 %8657, %v8596
  %v8659 = vpop.permute.xlu0 %8658
  %8662 = vset.pattern.permute.xlu0 0
  %8663 = vperm.xlu0 %8662, %v8597
  %v8664 = vpop.permute.xlu0 %8663
  %8667 = vset.pattern.permute.xlu0 0
  %8668 = vperm.xlu0 %8667, %v8598
  %v8669 = vpop.permute.xlu0 %8668
  %8672 = vset.pattern.permute.xlu0 0
  %8673 = vperm.xlu0 %8672, %v8599
  %v8674 = vpop.permute.xlu0 %8673
  %8677 = vset.pattern.permute.xlu0 0
  %8678 = vperm.xlu0 %8677, %v8600
  %v8679 = vpop.permute.xlu0 %8678
  %8682 = vset.pattern.permute.xlu0 0
  %8683 = vperm.xlu0 %8682, %v8601
  %v8684 = vpop.permute.xlu0 %8683
  %8687 = vset.pattern.permute.xlu0 0
  %8688 = vperm.xlu0 %8687, %v8602
  %v8689 = vpop.permute.xlu0 %8688
  %8692 = vset.pattern.permute.xlu0 0
  %8693 = vperm.xlu0 %8692, %v8603
  %v8694 = vpop.permute.xlu0 %8693
  %8697 = vset.pattern.permute.xlu0 0
  %8698 = vperm.xlu0 %8697, %v8604
  %v8699 = vpop.permute.xlu0 %8698
  %8702 = vset.pattern.permute.xlu0 0
  %8703 = vperm.xlu0 %8702, %v8605
  %v8704 = vpop.permute.xlu0 %8703
  %8707 = vset.pattern.permute.xlu0 0
  %8708 = vperm.xlu0 %8707, %v8606
  %v8709 = vpop.permute.xlu0 %8708
  %8712 = vset.pattern.permute.xlu0 0
  %8713 = vperm.xlu0 %8712, %v8607
  %v8714 = vpop.permute.xlu0 %8713
  %8717 = vset.pattern.permute.xlu0 0
  %8718 = vperm.xlu0 %8717, %v8608
  %v8719 = vpop.permute.xlu0 %8718
  %8722 = vset.pattern.permute.xlu0 0
  %8723 = vperm.xlu0 %8722, %v8609
  %v8724 = vpop.permute.xlu0 %8723
  %8727 = vset.pattern.permute.xlu0 0
  %8728 = vperm.xlu0 %8727, %v8610
  %v8729 = vpop.permute.xlu0 %8728
  %8732 = vset.pattern.permute.xlu0 0
  %8733 = vperm.xlu0 %8732, %v8611
  %v8734 = vpop.permute.xlu0 %8733
  %8737 = vset.pattern.permute.xlu0 0
  %8738 = vperm.xlu0 %8737, %v8612
  %v8739 = vpop.permute.xlu0 %8738
  %8742 = vset.pattern.permute.xlu0 0
  %8743 = vperm.xlu0 %8742, %v8613
  %v8744 = vpop.permute.xlu0 %8743
  %8747 = vset.pattern.permute.xlu0 0
  %8748 = vperm.xlu0 %8747, %v8614
  %v8749 = vpop.permute.xlu0 %8748
  %8752 = vset.pattern.permute.xlu0 0
  %8753 = vperm.xlu0 %8752, %v8615
  %v8754 = vpop.permute.xlu0 %8753
  %8757 = vset.pattern.permute.xlu0 0
  %8758 = vperm.xlu0 %8757, %v8616
  %v8759 = vpop.permute.xlu0 %8758
  %8762 = vset.pattern.permute.xlu0 0
  %8763 = vperm.xlu0 %8762, %v8617
  %v8764 = vpop.permute.xlu0 %8763
  %8767 = vset.pattern.permute.xlu0 0
  %8768 = vperm.xlu0 %8767, %v8618
  %v8769 = vpop.permute.xlu0 %8768
  %8772 = vset.pattern.permute.xlu0 0
  %8773 = vperm.xlu0 %8772, %v8619
  %v8774 = vpop.permute.xlu0 %8773
  %8777 = vset.pattern.permute.xlu0 0
  %8778 = vperm.xlu0 %8777, %v8620
  %v8779 = vpop.permute.xlu0 %8778
  %v8781 = vadd.f32 %v7980, %v8624
  %v8782 = vadd.f32 %v7983, %v8629
  %v8783 = vadd.f32 %v7988, %v8634
  %v8784 = vadd.f32 %v7991, %v8639
  %v8785 = vadd.f32 %v7996, %v8644
  %v8786 = vadd.f32 %v7999, %v8649
  %v8787 = vadd.f32 %v8004, %v8654
  %v8788 = vadd.f32 %v8007, %v8659
  %v8789 = vadd.f32 %v8012, %v8664
  %v8790 = vadd.f32 %v8015, %v8669
  %v8791 = vadd.f32 %v8020, %v8674
  %v8792 = vadd.f32 %v8023, %v8679
  %v8793 = vadd.f32 %v8028, %v8684
  %v8794 = vadd.f32 %v8031, %v8689
  %v8795 = vadd.f32 %v8036, %v8694
  %v8796 = vadd.f32 %v8039, %v8699
  %v8797 = vadd.f32 %v8044, %v8704
  %v8798 = vadd.f32 %v8047, %v8709
  %v8799 = vadd.f32 %v8052, %v8714
  %v8800 = vadd.f32 %v8055, %v8719
  %v8801 = vadd.f32 %v8060, %v8724
  %v8802 = vadd.f32 %v8063, %v8729
  %v8803 = vadd.f32 %v8068, %v8734
  %v8804 = vadd.f32 %v8071, %v8739
  %v8805 = vadd.f32 %v8076, %v8744
  %v8806 = vadd.f32 %v8079, %v8749
  %v8807 = vadd.f32 %v8084, %v8754
  %v8808 = vadd.f32 %v8087, %v8759
  %v8809 = vadd.f32 %v8092, %v8764
  %v8810 = vadd.f32 %v8095, %v8769
  %v8811 = vadd.f32 %v8100, %v8774
  %v8812 = vadd.f32 %v8103, %v8779
  %v8813 = vadd.f32 %v8141, %v8624
  %v8814 = vadd.f32 %v8144, %v8629
  %v8815 = vadd.f32 %v8149, %v8634
  %v8816 = vadd.f32 %v8152, %v8639
  %v8817 = vadd.f32 %v8157, %v8644
  %v8818 = vadd.f32 %v8160, %v8649
  %v8819 = vadd.f32 %v8165, %v8654
  %v8820 = vadd.f32 %v8168, %v8659
  %v8821 = vadd.f32 %v8173, %v8664
  %v8822 = vadd.f32 %v8176, %v8669
  %v8823 = vadd.f32 %v8181, %v8674
  %v8824 = vadd.f32 %v8184, %v8679
  %v8825 = vadd.f32 %v8189, %v8684
  %v8826 = vadd.f32 %v8192, %v8689
  %v8827 = vadd.f32 %v8197, %v8694
  %v8828 = vadd.f32 %v8200, %v8699
  %v8829 = vadd.f32 %v8205, %v8704
  %v8830 = vadd.f32 %v8208, %v8709
  %v8831 = vadd.f32 %v8213, %v8714
  %v8832 = vadd.f32 %v8216, %v8719
  %v8833 = vadd.f32 %v8221, %v8724
  %v8834 = vadd.f32 %v8224, %v8729
  %v8835 = vadd.f32 %v8229, %v8734
  %v8836 = vadd.f32 %v8232, %v8739
  %v8837 = vadd.f32 %v8237, %v8744
  %v8838 = vadd.f32 %v8240, %v8749
  %v8839 = vadd.f32 %v8245, %v8754
  %v8840 = vadd.f32 %v8248, %v8759
  %v8841 = vadd.f32 %v8253, %v8764
  %v8842 = vadd.f32 %v8256, %v8769
  %v8843 = vadd.f32 %v8261, %v8774
  %v8844 = vadd.f32 %v8264, %v8779
  %v8845 = vadd.f32 %v8302, %v8624
  %v8846 = vadd.f32 %v8305, %v8629
  %v8847 = vadd.f32 %v8310, %v8634
  %v8848 = vadd.f32 %v8313, %v8639
  %v8849 = vadd.f32 %v8318, %v8644
  %v8850 = vadd.f32 %v8321, %v8649
  %v8851 = vadd.f32 %v8326, %v8654
  %v8852 = vadd.f32 %v8329, %v8659
  %v8853 = vadd.f32 %v8334, %v8664
  %v8854 = vadd.f32 %v8337, %v8669
  %v8855 = vadd.f32 %v8342, %v8674
  %v8856 = vadd.f32 %v8345, %v8679
  %v8857 = vadd.f32 %v8350, %v8684
  %v8858 = vadd.f32 %v8353, %v8689
  %v8859 = vadd.f32 %v8358, %v8694
  %v8860 = vadd.f32 %v8361, %v8699
  %v8861 = vadd.f32 %v8366, %v8704
  %v8862 = vadd.f32 %v8369, %v8709
  %v8863 = vadd.f32 %v8374, %v8714
  %v8864 = vadd.f32 %v8377, %v8719
  %v8865 = vadd.f32 %v8382, %v8724
  %v8866 = vadd.f32 %v8385, %v8729
  %v8867 = vadd.f32 %v8390, %v8734
  %v8868 = vadd.f32 %v8393, %v8739
  %v8869 = vadd.f32 %v8398, %v8744
  %v8870 = vadd.f32 %v8401, %v8749
  %v8871 = vadd.f32 %v8406, %v8754
  %v8872 = vadd.f32 %v8409, %v8759
  %v8873 = vadd.f32 %v8414, %v8764
  %v8874 = vadd.f32 %v8417, %v8769
  %v8875 = vadd.f32 %v8422, %v8774
  %v8876 = vadd.f32 %v8425, %v8779
  %v8877 = vadd.f32 %v8463, %v8624
  %v8878 = vadd.f32 %v8466, %v8629
  %v8879 = vadd.f32 %v8471, %v8634
  %v8880 = vadd.f32 %v8474, %v8639
  %v8881 = vadd.f32 %v8479, %v8644
  %v8882 = vadd.f32 %v8482, %v8649
  %v8883 = vadd.f32 %v8487, %v8654
  %v8884 = vadd.f32 %v8490, %v8659
  %v8885 = vadd.f32 %v8495, %v8664
  %v8886 = vadd.f32 %v8498, %v8669
  %v8887 = vadd.f32 %v8503, %v8674
  %v8888 = vadd.f32 %v8506, %v8679
  %v8889 = vadd.f32 %v8511, %v8684
  %v8890 = vadd.f32 %v8514, %v8689
  %v8891 = vadd.f32 %v8519, %v8694
  %v8892 = vadd.f32 %v8522, %v8699
  %v8893 = vadd.f32 %v8527, %v8704
  %v8894 = vadd.f32 %v8530, %v8709
  %v8895 = vadd.f32 %v8535, %v8714
  %v8896 = vadd.f32 %v8538, %v8719
  %v8897 = vadd.f32 %v8543, %v8724
  %v8898 = vadd.f32 %v8546, %v8729
  %v8899 = vadd.f32 %v8551, %v8734
  %v8900 = vadd.f32 %v8554, %v8739
  %v8901 = vadd.f32 %v8559, %v8744
  %v8902 = vadd.f32 %v8562, %v8749
  %v8903 = vadd.f32 %v8567, %v8754
  %v8904 = vadd.f32 %v8570, %v8759
  %v8905 = vadd.f32 %v8575, %v8764
  %v8906 = vadd.f32 %v8578, %v8769
  %v8907 = vadd.f32 %v8583, %v8774
  %v8908 = vadd.f32 %v8586, %v8779
  %v8909 = vmul.f32 %v8781, 0.01
  %v8910 = vmul.f32 %v8782, 0.01
  %v8911 = vmul.f32 %v8783, 0.01
  %v8912 = vmul.f32 %v8784, 0.01
  %v8913 = vmul.f32 %v8785, 0.01
  %v8914 = vmul.f32 %v8786, 0.01
  %v8915 = vmul.f32 %v8787, 0.01
  %v8916 = vmul.f32 %v8788, 0.01
  %v8917 = vmul.f32 %v8789, 0.01
  %v8918 = vmul.f32 %v8790, 0.01
  %v8919 = vmul.f32 %v8791, 0.01
  %v8920 = vmul.f32 %v8792, 0.01
  %v8921 = vmul.f32 %v8793, 0.01
  %v8922 = vmul.f32 %v8794, 0.01
  %v8923 = vmul.f32 %v8795, 0.01
  %v8924 = vmul.f32 %v8796, 0.01
  %v8925 = vmul.f32 %v8797, 0.01
  %v8926 = vmul.f32 %v8798, 0.01
  %v8927 = vmul.f32 %v8799, 0.01
  %v8928 = vmul.f32 %v8800, 0.01
  %v8929 = vmul.f32 %v8801, 0.01
  %v8930 = vmul.f32 %v8802, 0.01
  %v8931 = vmul.f32 %v8803, 0.01
  %v8932 = vmul.f32 %v8804, 0.01
  %v8933 = vmul.f32 %v8805, 0.01
  %v8934 = vmul.f32 %v8806, 0.01
  %v8935 = vmul.f32 %v8807, 0.01
  %v8936 = vmul.f32 %v8808, 0.01
  %v8937 = vmul.f32 %v8809, 0.01
  %v8938 = vmul.f32 %v8810, 0.01
  %v8939 = vmul.f32 %v8811, 0.01
  %v8940 = vmul.f32 %v8812, 0.01
  %v8941 = vmul.f32 %v8813, 0.01
  %v8942 = vmul.f32 %v8814, 0.01
  %v8943 = vmul.f32 %v8815, 0.01
  %v8944 = vmul.f32 %v8816, 0.01
  %v8945 = vmul.f32 %v8817, 0.01
  %v8946 = vmul.f32 %v8818, 0.01
  %v8947 = vmul.f32 %v8819, 0.01
  %v8948 = vmul.f32 %v8820, 0.01
  %v8949 = vmul.f32 %v8821, 0.01
  %v8950 = vmul.f32 %v8822, 0.01
  %v8951 = vmul.f32 %v8823, 0.01
  %v8952 = vmul.f32 %v8824, 0.01
  %v8953 = vmul.f32 %v8825, 0.01
  %v8954 = vmul.f32 %v8826, 0.01
  %v8955 = vmul.f32 %v8827, 0.01
  %v8956 = vmul.f32 %v8828, 0.01
  %v8957 = vmul.f32 %v8829, 0.01
  %v8958 = vmul.f32 %v8830, 0.01
  %v8959 = vmul.f32 %v8831, 0.01
  %v8960 = vmul.f32 %v8832, 0.01
  %v8961 = vmul.f32 %v8833, 0.01
  %v8962 = vmul.f32 %v8834, 0.01
  %v8963 = vmul.f32 %v8835, 0.01
  %v8964 = vmul.f32 %v8836, 0.01
  %v8965 = vmul.f32 %v8837, 0.01
  %v8966 = vmul.f32 %v8838, 0.01
  %v8967 = vmul.f32 %v8839, 0.01
  %v8968 = vmul.f32 %v8840, 0.01
  %v8969 = vmul.f32 %v8841, 0.01
  %v8970 = vmul.f32 %v8842, 0.01
  %v8971 = vmul.f32 %v8843, 0.01
  %v8972 = vmul.f32 %v8844, 0.01
  %v8973 = vmul.f32 %v8845, 0.01
  %v8974 = vmul.f32 %v8846, 0.01
  %v8975 = vmul.f32 %v8847, 0.01
  %v8976 = vmul.f32 %v8848, 0.01
  %v8977 = vmul.f32 %v8849, 0.01
  %v8978 = vmul.f32 %v8850, 0.01
  %v8979 = vmul.f32 %v8851, 0.01
  %v8980 = vmul.f32 %v8852, 0.01
  %v8981 = vmul.f32 %v8853, 0.01
  %v8982 = vmul.f32 %v8854, 0.01
  %v8983 = vmul.f32 %v8855, 0.01
  %v8984 = vmul.f32 %v8856, 0.01
  %v8985 = vmul.f32 %v8857, 0.01
  %v8986 = vmul.f32 %v8858, 0.01
  %v8987 = vmul.f32 %v8859, 0.01
  %v8988 = vmul.f32 %v8860, 0.01
  %v8989 = vmul.f32 %v8861, 0.01
  %v8990 = vmul.f32 %v8862, 0.01
  %v8991 = vmul.f32 %v8863, 0.01
  %v8992 = vmul.f32 %v8864, 0.01
  %v8993 = vmul.f32 %v8865, 0.01
  %v8994 = vmul.f32 %v8866, 0.01
  %v8995 = vmul.f32 %v8867, 0.01
  %v8996 = vmul.f32 %v8868, 0.01
  %v8997 = vmul.f32 %v8869, 0.01
  %v8998 = vmul.f32 %v8870, 0.01
  %v8999 = vmul.f32 %v8871, 0.01
  %v9000 = vmul.f32 %v8872, 0.01
  %v9001 = vmul.f32 %v8873, 0.01
  %v9002 = vmul.f32 %v8874, 0.01
  %v9003 = vmul.f32 %v8875, 0.01
  %v9004 = vmul.f32 %v8876, 0.01
  %v9005 = vmul.f32 %v8877, 0.01
  %v9006 = vmul.f32 %v8878, 0.01
  %v9007 = vmul.f32 %v8879, 0.01
  %v9008 = vmul.f32 %v8880, 0.01
  %v9009 = vmul.f32 %v8881, 0.01
  %v9010 = vmul.f32 %v8882, 0.01
  %v9011 = vmul.f32 %v8883, 0.01
  %v9012 = vmul.f32 %v8884, 0.01
  %v9013 = vmul.f32 %v8885, 0.01
  %v9014 = vmul.f32 %v8886, 0.01
  %v9015 = vmul.f32 %v8887, 0.01
  %v9016 = vmul.f32 %v8888, 0.01
  %v9017 = vmul.f32 %v8889, 0.01
  %v9018 = vmul.f32 %v8890, 0.01
  %v9019 = vmul.f32 %v8891, 0.01
  %v9020 = vmul.f32 %v8892, 0.01
  %v9021 = vmul.f32 %v8893, 0.01
  %v9022 = vmul.f32 %v8894, 0.01
  %v9023 = vmul.f32 %v8895, 0.01
  %v9024 = vmul.f32 %v8896, 0.01
  %v9025 = vmul.f32 %v8897, 0.01
  %v9026 = vmul.f32 %v8898, 0.01
  %v9027 = vmul.f32 %v8899, 0.01
  %v9028 = vmul.f32 %v8900, 0.01
  %v9029 = vmul.f32 %v8901, 0.01
  %v9030 = vmul.f32 %v8902, 0.01
  %v9031 = vmul.f32 %v8903, 0.01
  %v9032 = vmul.f32 %v8904, 0.01
  %v9033 = vmul.f32 %v8905, 0.01
  %v9034 = vmul.f32 %v8906, 0.01
  %v9035 = vmul.f32 %v8907, 0.01
  %v9036 = vmul.f32 %v8908, 0.01
  %v9037 = vmax.f32 %v8781, %v8909
  %v9038 = vmax.f32 %v8782, %v8910
  %v9039 = vmax.f32 %v8783, %v8911
  %v9040 = vmax.f32 %v8784, %v8912
  %v9041 = vmax.f32 %v8785, %v8913
  %v9042 = vmax.f32 %v8786, %v8914
  %v9043 = vmax.f32 %v8787, %v8915
  %v9044 = vmax.f32 %v8788, %v8916
  %v9045 = vmax.f32 %v8789, %v8917
  %v9046 = vmax.f32 %v8790, %v8918
  %v9047 = vmax.f32 %v8791, %v8919
  %v9048 = vmax.f32 %v8792, %v8920
  %v9049 = vmax.f32 %v8793, %v8921
  %v9050 = vmax.f32 %v8794, %v8922
  %v9051 = vmax.f32 %v8795, %v8923
  %v9052 = vmax.f32 %v8796, %v8924
  %v9053 = vmax.f32 %v8797, %v8925
  %v9054 = vmax.f32 %v8798, %v8926
  %v9055 = vmax.f32 %v8799, %v8927
  %v9056 = vmax.f32 %v8800, %v8928
  %v9057 = vmax.f32 %v8801, %v8929
  %v9058 = vmax.f32 %v8802, %v8930
  %v9059 = vmax.f32 %v8803, %v8931
  %v9060 = vmax.f32 %v8804, %v8932
  %v9061 = vmax.f32 %v8805, %v8933
  %v9062 = vmax.f32 %v8806, %v8934
  %v9063 = vmax.f32 %v8807, %v8935
  %v9064 = vmax.f32 %v8808, %v8936
  %v9065 = vmax.f32 %v8809, %v8937
  %v9066 = vmax.f32 %v8810, %v8938
  %v9067 = vmax.f32 %v8811, %v8939
  %v9068 = vmax.f32 %v8812, %v8940
  %v9069 = vmax.f32 %v8813, %v8941
  %v9070 = vmax.f32 %v8814, %v8942
  %v9071 = vmax.f32 %v8815, %v8943
  %v9072 = vmax.f32 %v8816, %v8944
  %v9073 = vmax.f32 %v8817, %v8945
  %v9074 = vmax.f32 %v8818, %v8946
  %v9075 = vmax.f32 %v8819, %v8947
  %v9076 = vmax.f32 %v8820, %v8948
  %v9077 = vmax.f32 %v8821, %v8949
  %v9078 = vmax.f32 %v8822, %v8950
  %v9079 = vmax.f32 %v8823, %v8951
  %v9080 = vmax.f32 %v8824, %v8952
  %v9081 = vmax.f32 %v8825, %v8953
  %v9082 = vmax.f32 %v8826, %v8954
  %v9083 = vmax.f32 %v8827, %v8955
  %v9084 = vmax.f32 %v8828, %v8956
  %v9085 = vmax.f32 %v8829, %v8957
  %v9086 = vmax.f32 %v8830, %v8958
  %v9087 = vmax.f32 %v8831, %v8959
  %v9088 = vmax.f32 %v8832, %v8960
  %v9089 = vmax.f32 %v8833, %v8961
  %v9090 = vmax.f32 %v8834, %v8962
  %v9091 = vmax.f32 %v8835, %v8963
  %v9092 = vmax.f32 %v8836, %v8964
  %v9093 = vmax.f32 %v8837, %v8965
  %v9094 = vmax.f32 %v8838, %v8966
  %v9095 = vmax.f32 %v8839, %v8967
  %v9096 = vmax.f32 %v8840, %v8968
  %v9097 = vmax.f32 %v8841, %v8969
  %v9098 = vmax.f32 %v8842, %v8970
  %v9099 = vmax.f32 %v8843, %v8971
  %v9100 = vmax.f32 %v8844, %v8972
  %v9101 = vmax.f32 %v8845, %v8973
  %v9102 = vmax.f32 %v8846, %v8974
  %v9103 = vmax.f32 %v8847, %v8975
  %v9104 = vmax.f32 %v8848, %v8976
  %v9105 = vmax.f32 %v8849, %v8977
  %v9106 = vmax.f32 %v8850, %v8978
  %v9107 = vmax.f32 %v8851, %v8979
  %v9108 = vmax.f32 %v8852, %v8980
  %v9109 = vmax.f32 %v8853, %v8981
  %v9110 = vmax.f32 %v8854, %v8982
  %v9111 = vmax.f32 %v8855, %v8983
  %v9112 = vmax.f32 %v8856, %v8984
  %v9113 = vmax.f32 %v8857, %v8985
  %v9114 = vmax.f32 %v8858, %v8986
  %v9115 = vmax.f32 %v8859, %v8987
  %v9116 = vmax.f32 %v8860, %v8988
  %v9117 = vmax.f32 %v8861, %v8989
  %v9118 = vmax.f32 %v8862, %v8990
  %v9119 = vmax.f32 %v8863, %v8991
  %v9120 = vmax.f32 %v8864, %v8992
  %v9121 = vmax.f32 %v8865, %v8993
  %v9122 = vmax.f32 %v8866, %v8994
  %v9123 = vmax.f32 %v8867, %v8995
  %v9124 = vmax.f32 %v8868, %v8996
  %v9125 = vmax.f32 %v8869, %v8997
  %v9126 = vmax.f32 %v8870, %v8998
  %v9127 = vmax.f32 %v8871, %v8999
  %v9128 = vmax.f32 %v8872, %v9000
  %v9129 = vmax.f32 %v8873, %v9001
  %v9130 = vmax.f32 %v8874, %v9002
  %v9131 = vmax.f32 %v8875, %v9003
  %v9132 = vmax.f32 %v8876, %v9004
  %v9133 = vmax.f32 %v8877, %v9005
  %v9134 = vmax.f32 %v8878, %v9006
  %v9135 = vmax.f32 %v8879, %v9007
  %v9136 = vmax.f32 %v8880, %v9008
  %v9137 = vmax.f32 %v8881, %v9009
  %v9138 = vmax.f32 %v8882, %v9010
  %v9139 = vmax.f32 %v8883, %v9011
  %v9140 = vmax.f32 %v8884, %v9012
  %v9141 = vmax.f32 %v8885, %v9013
  %v9142 = vmax.f32 %v8886, %v9014
  %v9143 = vmax.f32 %v8887, %v9015
  %v9144 = vmax.f32 %v8888, %v9016
  %v9145 = vmax.f32 %v8889, %v9017
  %v9146 = vmax.f32 %v8890, %v9018
  %v9147 = vmax.f32 %v8891, %v9019
  %v9148 = vmax.f32 %v8892, %v9020
  %v9149 = vmax.f32 %v8893, %v9021
  %v9150 = vmax.f32 %v8894, %v9022
  %v9151 = vmax.f32 %v8895, %v9023
  %v9152 = vmax.f32 %v8896, %v9024
  %v9153 = vmax.f32 %v8897, %v9025
  %v9154 = vmax.f32 %v8898, %v9026
  %v9155 = vmax.f32 %v8899, %v9027
  %v9156 = vmax.f32 %v8900, %v9028
  %v9157 = vmax.f32 %v8901, %v9029
  %v9158 = vmax.f32 %v8902, %v9030
  %v9159 = vmax.f32 %v8903, %v9031
  %v9160 = vmax.f32 %v8904, %v9032
  %v9161 = vmax.f32 %v8905, %v9033
  %v9162 = vmax.f32 %v8906, %v9034
  %v9163 = vmax.f32 %v8907, %v9035
  %v9164 = vmax.f32 %v8908, %v9036
  %v9165 = vld [vmem:[%s12] sm:$0xff]
  %v9166 = vld [vmem:[%s12 + $0x8] sm:$0xff]
  %v9167 = vld [vmem:[%s12 + $0x10] sm:$0xff]
  %v9168 = vld [vmem:[%s12 + $0x18] sm:$0xff]
  %v9169 = vld [vmem:[%s12 + $0x20] sm:$0xff]
  %v9170 = vld [vmem:[%s12 + $0x28] sm:$0xff]
  %v9171 = vld [vmem:[%s12 + $0x30] sm:$0xff]
  %v9172 = vld [vmem:[%s12 + $0x38] sm:$0xff]
  %v9173 = vpack.c.bf16 %v9038, %v9037
  %v9174 = vpack.c.bf16 %v9040, %v9039
  %v9175 = vpack.c.bf16 %v9042, %v9041
  %v9176 = vpack.c.bf16 %v9044, %v9043
  %v9177 = vpack.c.bf16 %v9046, %v9045
  %v9178 = vpack.c.bf16 %v9048, %v9047
  %v9179 = vpack.c.bf16 %v9050, %v9049
  %v9180 = vpack.c.bf16 %v9052, %v9051
  %v9181 = vpack.c.bf16 %v9054, %v9053
  %v9182 = vpack.c.bf16 %v9056, %v9055
  %v9183 = vpack.c.bf16 %v9058, %v9057
  %v9184 = vpack.c.bf16 %v9060, %v9059
  %v9185 = vpack.c.bf16 %v9062, %v9061
  %v9186 = vpack.c.bf16 %v9064, %v9063
  %v9187 = vpack.c.bf16 %v9066, %v9065
  %v9188 = vpack.c.bf16 %v9068, %v9067
  %v9189 = vpack.c.bf16 %v9070, %v9069
  %v9190 = vpack.c.bf16 %v9072, %v9071
  %v9191 = vpack.c.bf16 %v9074, %v9073
  %v9192 = vpack.c.bf16 %v9076, %v9075
  %v9193 = vpack.c.bf16 %v9078, %v9077
  %v9194 = vpack.c.bf16 %v9080, %v9079
  %v9195 = vpack.c.bf16 %v9082, %v9081
  %v9196 = vpack.c.bf16 %v9084, %v9083
  %v9197 = vpack.c.bf16 %v9086, %v9085
  %v9198 = vpack.c.bf16 %v9088, %v9087
  %v9199 = vpack.c.bf16 %v9090, %v9089
  %v9200 = vpack.c.bf16 %v9092, %v9091
  %v9201 = vpack.c.bf16 %v9094, %v9093
  %v9202 = vpack.c.bf16 %v9096, %v9095
  %v9203 = vpack.c.bf16 %v9098, %v9097
  %v9204 = vpack.c.bf16 %v9100, %v9099
  %v9205 = vpack.c.bf16 %v9102, %v9101
  %v9206 = vpack.c.bf16 %v9104, %v9103
  %v9207 = vpack.c.bf16 %v9106, %v9105
  %v9208 = vpack.c.bf16 %v9108, %v9107
  %v9209 = vpack.c.bf16 %v9110, %v9109
  %v9210 = vpack.c.bf16 %v9112, %v9111
  %v9211 = vpack.c.bf16 %v9114, %v9113
  %v9212 = vpack.c.bf16 %v9116, %v9115
  %v9213 = vpack.c.bf16 %v9118, %v9117
  %v9214 = vpack.c.bf16 %v9120, %v9119
  %v9215 = vpack.c.bf16 %v9122, %v9121
  %v9216 = vpack.c.bf16 %v9124, %v9123
  %v9217 = vpack.c.bf16 %v9126, %v9125
  %v9218 = vpack.c.bf16 %v9128, %v9127
  %v9219 = vpack.c.bf16 %v9130, %v9129
  %v9220 = vpack.c.bf16 %v9132, %v9131
  %v9221 = vpack.c.bf16 %v9134, %v9133
  %v9222 = vpack.c.bf16 %v9136, %v9135
  %v9223 = vpack.c.bf16 %v9138, %v9137
  %v9224 = vpack.c.bf16 %v9140, %v9139
  %v9225 = vpack.c.bf16 %v9142, %v9141
  %v9226 = vpack.c.bf16 %v9144, %v9143
  %v9227 = vpack.c.bf16 %v9146, %v9145
  %v9228 = vpack.c.bf16 %v9148, %v9147
  %v9229 = vpack.c.bf16 %v9150, %v9149
  %v9230 = vpack.c.bf16 %v9152, %v9151
  %v9231 = vpack.c.bf16 %v9154, %v9153
  %v9232 = vpack.c.bf16 %v9156, %v9155
  %v9233 = vpack.c.bf16 %v9158, %v9157
  %v9234 = vpack.c.bf16 %v9160, %v9159
  %v9235 = vpack.c.bf16 %v9162, %v9161
  %v9236 = vpack.c.bf16 %v9164, %v9163
  %v9237 = vld [vmem:[%s13] sm:$0xff]
  %v9238 = vld [vmem:[%s13 + $0x8] sm:$0xff]
  %v9239 = vld [vmem:[%s13 + $0x10] sm:$0xff]
  %v9240 = vld [vmem:[%s13 + $0x18] sm:$0xff]
  %v9241 = vld [vmem:[%s13 + $0x20] sm:$0xff]
  %v9242 = vld [vmem:[%s13 + $0x28] sm:$0xff]
  %v9243 = vld [vmem:[%s13 + $0x30] sm:$0xff]
  %v9244 = vld [vmem:[%s13 + $0x38] sm:$0xff]
  %9246 = vset.pattern.permute.xlu0 0
  %9247 = vperm.xlu0 %9246, %v9237
  %v9248 = vpop.permute.xlu0 %9247
  %9251 = vset.pattern.permute.xlu0 0
  %9252 = vperm.xlu0 %9251, %v9238
  %v9253 = vpop.permute.xlu0 %9252
  %9256 = vset.pattern.permute.xlu0 0
  %9257 = vperm.xlu0 %9256, %v9239
  %v9258 = vpop.permute.xlu0 %9257
  %9261 = vset.pattern.permute.xlu0 0
  %9262 = vperm.xlu0 %9261, %v9240
  %v9263 = vpop.permute.xlu0 %9262
  %9266 = vset.pattern.permute.xlu0 0
  %9267 = vperm.xlu0 %9266, %v9241
  %v9268 = vpop.permute.xlu0 %9267
  %9271 = vset.pattern.permute.xlu0 0
  %9272 = vperm.xlu0 %9271, %v9242
  %v9273 = vpop.permute.xlu0 %9272
  %9276 = vset.pattern.permute.xlu0 0
  %9277 = vperm.xlu0 %9276, %v9243
  %v9278 = vpop.permute.xlu0 %9277
  %9281 = vset.pattern.permute.xlu0 0
  %9282 = vperm.xlu0 %9281, %v9244
  %v9283 = vpop.permute.xlu0 %9282
  %v9293 = vunpack.c.l.b16 %v9165
  %v9294 = vunpack.c.h.b16 %v9165
  %v9295 = vunpack.c.l.b16 %v9166
  %v9296 = vunpack.c.h.b16 %v9166
  %v9297 = vunpack.c.l.b16 %v9167
  %v9298 = vunpack.c.h.b16 %v9167
  %v9299 = vunpack.c.l.b16 %v9168
  %v9300 = vunpack.c.h.b16 %v9168
  %v9301 = vunpack.c.l.b16 %v9169
  %v9302 = vunpack.c.h.b16 %v9169
  %v9303 = vunpack.c.l.b16 %v9170
  %v9304 = vunpack.c.h.b16 %v9170
  %v9305 = vunpack.c.l.b16 %v9171
  %v9306 = vunpack.c.h.b16 %v9171
  %v9307 = vunpack.c.l.b16 %v9172
  %v9308 = vunpack.c.h.b16 %v9172
  %v9309 = vpack.c.b16 %v9295, %v9293
  %v9310 = vpack.c.b16 %v9296, %v9294
  %v9311 = vpack.c.b16 %v9299, %v9297
  %v9312 = vpack.c.b16 %v9300, %v9298
  %v9313 = vpack.c.b16 %v9303, %v9301
  %v9314 = vpack.c.b16 %v9304, %v9302
  %v9315 = vpack.c.b16 %v9307, %v9305
  %v9316 = vpack.c.b16 %v9308, %v9306
  %9325 = vmatprep.subr.bf16.mxu0 0
  %9326 = vmatpush1.bf16.msra.mxu0 %v9180
  %9327 = vmatprep.subr.bf16.mxu0 0
  %9328 = vmatpush1.bf16.msra.mxu0 %v9179
  %9329 = vmatprep.subr.bf16.mxu0 0
  %9330 = vmatpush1.bf16.msra.mxu0 %v9178
  %9331 = vmatprep.subr.bf16.mxu0 0
  %9332 = vmatpush1.bf16.msra.mxu0 %v9177
  %9333 = vmatprep.subr.bf16.mxu0 0
  %9334 = vmatpush1.bf16.msra.mxu0 %v9176
  %9335 = vmatprep.subr.bf16.mxu0 0
  %9336 = vmatpush1.bf16.msra.mxu0 %v9175
  %9337 = vmatprep.subr.bf16.mxu0 0
  %9338 = vmatpush1.bf16.msra.mxu0 %v9174
  %9339 = vmatprep.subr.bf16.mxu0 0
  %9340 = vmatpush1.bf16.msra.mxu0 %v9173
  %9341 = vmatprep.subr.bf16.mxu0 0
  %9342 = vmatpush2.bf16.msra.mxu0 %v9188
  %9343 = vmatprep.subr.bf16.mxu0 0
  %9344 = vmatpush2.bf16.msra.mxu0 %v9187
  %9345 = vmatprep.subr.bf16.mxu0 0
  %9346 = vmatpush2.bf16.msra.mxu0 %v9186
  %9347 = vmatprep.subr.bf16.mxu0 0
  %9348 = vmatpush2.bf16.msra.mxu0 %v9185
  %9349 = vmatprep.subr.bf16.mxu0 0
  %9350 = vmatpush2.bf16.msra.mxu0 %v9184
  %9351 = vmatprep.subr.bf16.mxu0 0
  %9352 = vmatpush2.bf16.msra.mxu0 %v9183
  %9353 = vmatprep.subr.bf16.mxu0 0
  %9354 = vmatpush2.bf16.msra.mxu0 %v9182
  %9355 = vmatprep.subr.bf16.mxu0 0
  %9356 = vmatpush2.bf16.msra.mxu0 %v9181
  %9357 = vmatprep.mubr.bf16.mxu0 %v9310
  %9358 = vmatmul.mubr.bf16.gmra.mxu0 %v9309
  %v9359 = vpop.f32.mrf.mxu0
  %v9360 = vadd.f32 %v9248, %v9359
  %v9361 = vpop.f32.mrf.mxu0
  %v9362 = vpop.f32.mrf.mxu0
  %v9363 = vadd.f32 %v9253, %v9362
  %v9364 = vpop.f32.mrf.mxu0
  %9365 = vmatprep.mubr.bf16.mxu0 %v9312
  %9366 = vmatmul.mubr.bf16.gmra.mxu0 %v9311
  %v9367 = vpop.f32.mrf.mxu0
  %v9368 = vadd.f32 %v9258, %v9367
  %v9369 = vpop.f32.mrf.mxu0
  %v9370 = vpop.f32.mrf.mxu0
  %v9371 = vadd.f32 %v9263, %v9370
  %v9372 = vpop.f32.mrf.mxu0
  %9373 = vmatprep.mubr.bf16.mxu0 %v9314
  %9374 = vmatmul.mubr.bf16.gmra.mxu0 %v9313
  %v9375 = vpop.f32.mrf.mxu0
  %v9376 = vadd.f32 %v9268, %v9375
  %v9377 = vpop.f32.mrf.mxu0
  %v9378 = vpop.f32.mrf.mxu0
  %v9379 = vadd.f32 %v9273, %v9378
  %v9380 = vpop.f32.mrf.mxu0
  %9381 = vmatprep.mubr.bf16.mxu0 %v9316
  %9382 = vmatmul.mubr.bf16.gmra.mxu0 %v9315
  %v9383 = vpop.f32.mrf.mxu0
  %v9384 = vadd.f32 %v9278, %v9383
  %v9385 = vpop.f32.mrf.mxu0
  %v9386 = vpop.f32.mrf.mxu0
  %v9387 = vadd.f32 %v9283, %v9386
  %v9388 = vpop.f32.mrf.mxu0
  %9389 = vdwg.mxu0
  %9390 = vmatprep.subr.bf16.mxu0 0
  %9391 = vmatpush1.bf16.msra.mxu0 %v9196
  %9392 = vmatprep.subr.bf16.mxu0 0
  %9393 = vmatpush1.bf16.msra.mxu0 %v9195
  %9394 = vmatprep.subr.bf16.mxu0 0
  %9395 = vmatpush1.bf16.msra.mxu0 %v9194
  %9396 = vmatprep.subr.bf16.mxu0 0
  %9397 = vmatpush1.bf16.msra.mxu0 %v9193
  %9398 = vmatprep.subr.bf16.mxu0 0
  %9399 = vmatpush1.bf16.msra.mxu0 %v9192
  %9400 = vmatprep.subr.bf16.mxu0 0
  %9401 = vmatpush1.bf16.msra.mxu0 %v9191
  %9402 = vmatprep.subr.bf16.mxu0 0
  %9403 = vmatpush1.bf16.msra.mxu0 %v9190
  %9404 = vmatprep.subr.bf16.mxu0 0
  %9405 = vmatpush1.bf16.msra.mxu0 %v9189
  %9406 = vmatprep.subr.bf16.mxu0 0
  %9407 = vmatpush2.bf16.msra.mxu0 %v9204
  %9408 = vmatprep.subr.bf16.mxu0 0
  %9409 = vmatpush2.bf16.msra.mxu0 %v9203
  %9410 = vmatprep.subr.bf16.mxu0 0
  %9411 = vmatpush2.bf16.msra.mxu0 %v9202
  %9412 = vmatprep.subr.bf16.mxu0 0
  %9413 = vmatpush2.bf16.msra.mxu0 %v9201
  %9414 = vmatprep.subr.bf16.mxu0 0
  %9415 = vmatpush2.bf16.msra.mxu0 %v9200
  %9416 = vmatprep.subr.bf16.mxu0 0
  %9417 = vmatpush2.bf16.msra.mxu0 %v9199
  %9418 = vmatprep.subr.bf16.mxu0 0
  %9419 = vmatpush2.bf16.msra.mxu0 %v9198
  %9420 = vmatprep.subr.bf16.mxu0 0
  %9421 = vmatpush2.bf16.msra.mxu0 %v9197
  %9422 = vmatprep.mubr.bf16.mxu0 %v9310
  %9423 = vmatmul.mubr.bf16.gmra.mxu0 %v9309
  %v9424 = vpop.f32.mrf.mxu0
  %v9425 = vadd.f32 %v9248, %v9424
  %v9426 = vpop.f32.mrf.mxu0
  %v9427 = vpop.f32.mrf.mxu0
  %v9428 = vadd.f32 %v9253, %v9427
  %v9429 = vpop.f32.mrf.mxu0
  %9430 = vmatprep.mubr.bf16.mxu0 %v9312
  %9431 = vmatmul.mubr.bf16.gmra.mxu0 %v9311
  %v9432 = vpop.f32.mrf.mxu0
  %v9433 = vadd.f32 %v9258, %v9432
  %v9434 = vpop.f32.mrf.mxu0
  %v9435 = vpop.f32.mrf.mxu0
  %v9436 = vadd.f32 %v9263, %v9435
  %v9437 = vpop.f32.mrf.mxu0
  %9438 = vmatprep.mubr.bf16.mxu0 %v9314
  %9439 = vmatmul.mubr.bf16.gmra.mxu0 %v9313
  %v9440 = vpop.f32.mrf.mxu0
  %v9441 = vadd.f32 %v9268, %v9440
  %v9442 = vpop.f32.mrf.mxu0
  %v9443 = vpop.f32.mrf.mxu0
  %v9444 = vadd.f32 %v9273, %v9443
  %v9445 = vpop.f32.mrf.mxu0
  %9446 = vmatprep.mubr.bf16.mxu0 %v9316
  %9447 = vmatmul.mubr.bf16.gmra.mxu0 %v9315
  %v9448 = vpop.f32.mrf.mxu0
  %v9449 = vadd.f32 %v9278, %v9448
  %v9450 = vpop.f32.mrf.mxu0
  %v9451 = vpop.f32.mrf.mxu0
  %v9452 = vadd.f32 %v9283, %v9451
  %v9453 = vpop.f32.mrf.mxu0
  %9454 = vdwg.mxu0
  %9455 = vmatprep.subr.bf16.mxu0 0
  %9456 = vmatpush1.bf16.msra.mxu0 %v9212
  %9457 = vmatprep.subr.bf16.mxu0 0
  %9458 = vmatpush1.bf16.msra.mxu0 %v9211
  %9459 = vmatprep.subr.bf16.mxu0 0
  %9460 = vmatpush1.bf16.msra.mxu0 %v9210
  %9461 = vmatprep.subr.bf16.mxu0 0
  %9462 = vmatpush1.bf16.msra.mxu0 %v9209
  %9463 = vmatprep.subr.bf16.mxu0 0
  %9464 = vmatpush1.bf16.msra.mxu0 %v9208
  %9465 = vmatprep.subr.bf16.mxu0 0
  %9466 = vmatpush1.bf16.msra.mxu0 %v9207
  %9467 = vmatprep.subr.bf16.mxu0 0
  %9468 = vmatpush1.bf16.msra.mxu0 %v9206
  %9469 = vmatprep.subr.bf16.mxu0 0
  %9470 = vmatpush1.bf16.msra.mxu0 %v9205
  %9471 = vmatprep.subr.bf16.mxu0 0
  %9472 = vmatpush2.bf16.msra.mxu0 %v9220
  %9473 = vmatprep.subr.bf16.mxu0 0
  %9474 = vmatpush2.bf16.msra.mxu0 %v9219
  %9475 = vmatprep.subr.bf16.mxu0 0
  %9476 = vmatpush2.bf16.msra.mxu0 %v9218
  %9477 = vmatprep.subr.bf16.mxu0 0
  %9478 = vmatpush2.bf16.msra.mxu0 %v9217
  %9479 = vmatprep.subr.bf16.mxu0 0
  %9480 = vmatpush2.bf16.msra.mxu0 %v9216
  %9481 = vmatprep.subr.bf16.mxu0 0
  %9482 = vmatpush2.bf16.msra.mxu0 %v9215
  %9483 = vmatprep.subr.bf16.mxu0 0
  %9484 = vmatpush2.bf16.msra.mxu0 %v9214
  %9485 = vmatprep.subr.bf16.mxu0 0
  %9486 = vmatpush2.bf16.msra.mxu0 %v9213
  %9487 = vmatprep.mubr.bf16.mxu0 %v9310
  %9488 = vmatmul.mubr.bf16.gmra.mxu0 %v9309
  %v9489 = vpop.f32.mrf.mxu0
  %v9490 = vadd.f32 %v9248, %v9489
  %v9491 = vpop.f32.mrf.mxu0
  %v9492 = vpop.f32.mrf.mxu0
  %v9493 = vadd.f32 %v9253, %v9492
  %v9494 = vpop.f32.mrf.mxu0
  %9495 = vmatprep.mubr.bf16.mxu0 %v9312
  %9496 = vmatmul.mubr.bf16.gmra.mxu0 %v9311
  %v9497 = vpop.f32.mrf.mxu0
  %v9498 = vadd.f32 %v9258, %v9497
  %v9499 = vpop.f32.mrf.mxu0
  %v9500 = vpop.f32.mrf.mxu0
  %v9501 = vadd.f32 %v9263, %v9500
  %v9502 = vpop.f32.mrf.mxu0
  %9503 = vmatprep.mubr.bf16.mxu0 %v9314
  %9504 = vmatmul.mubr.bf16.gmra.mxu0 %v9313
  %v9505 = vpop.f32.mrf.mxu0
  %v9506 = vadd.f32 %v9268, %v9505
  %v9507 = vpop.f32.mrf.mxu0
  %v9508 = vpop.f32.mrf.mxu0
  %v9509 = vadd.f32 %v9273, %v9508
  %v9510 = vpop.f32.mrf.mxu0
  %9511 = vmatprep.mubr.bf16.mxu0 %v9316
  %9512 = vmatmul.mubr.bf16.gmra.mxu0 %v9315
  %v9513 = vpop.f32.mrf.mxu0
  %v9514 = vadd.f32 %v9278, %v9513
  %v9515 = vpop.f32.mrf.mxu0
  %v9516 = vpop.f32.mrf.mxu0
  %v9517 = vadd.f32 %v9283, %v9516
  %v9518 = vpop.f32.mrf.mxu0
  %9519 = vdwg.mxu0
  %9520 = vmatprep.subr.bf16.mxu0 0
  %9521 = vmatpush1.bf16.msra.mxu0 %v9228
  %9522 = vmatprep.subr.bf16.mxu0 0
  %9523 = vmatpush1.bf16.msra.mxu0 %v9227
  %9524 = vmatprep.subr.bf16.mxu0 0
  %9525 = vmatpush1.bf16.msra.mxu0 %v9226
  %9526 = vmatprep.subr.bf16.mxu0 0
  %9527 = vmatpush1.bf16.msra.mxu0 %v9225
  %9528 = vmatprep.subr.bf16.mxu0 0
  %9529 = vmatpush1.bf16.msra.mxu0 %v9224
  %9530 = vmatprep.subr.bf16.mxu0 0
  %9531 = vmatpush1.bf16.msra.mxu0 %v9223
  %9532 = vmatprep.subr.bf16.mxu0 0
  %9533 = vmatpush1.bf16.msra.mxu0 %v9222
  %9534 = vmatprep.subr.bf16.mxu0 0
  %9535 = vmatpush1.bf16.msra.mxu0 %v9221
  %9536 = vmatprep.subr.bf16.mxu0 0
  %9537 = vmatpush2.bf16.msra.mxu0 %v9236
  %9538 = vmatprep.subr.bf16.mxu0 0
  %9539 = vmatpush2.bf16.msra.mxu0 %v9235
  %9540 = vmatprep.subr.bf16.mxu0 0
  %9541 = vmatpush2.bf16.msra.mxu0 %v9234
  %9542 = vmatprep.subr.bf16.mxu0 0
  %9543 = vmatpush2.bf16.msra.mxu0 %v9233
  %9544 = vmatprep.subr.bf16.mxu0 0
  %9545 = vmatpush2.bf16.msra.mxu0 %v9232
  %9546 = vmatprep.subr.bf16.mxu0 0
  %9547 = vmatpush2.bf16.msra.mxu0 %v9231
  %9548 = vmatprep.subr.bf16.mxu0 0
  %9549 = vmatpush2.bf16.msra.mxu0 %v9230
  %9550 = vmatprep.subr.bf16.mxu0 0
  %9551 = vmatpush2.bf16.msra.mxu0 %v9229
  %9552 = vmatprep.mubr.bf16.mxu0 %v9310
  %9553 = vmatmul.mubr.bf16.gmra.mxu0 %v9309
  %v9554 = vpop.f32.mrf.mxu0
  %v9555 = vadd.f32 %v9248, %v9554
  %v9556 = vpop.f32.mrf.mxu0
  %v9557 = vpop.f32.mrf.mxu0
  %v9558 = vadd.f32 %v9253, %v9557
  %v9559 = vpop.f32.mrf.mxu0
  %9560 = vmatprep.mubr.bf16.mxu0 %v9312
  %9561 = vmatmul.mubr.bf16.gmra.mxu0 %v9311
  %v9562 = vpop.f32.mrf.mxu0
  %v9563 = vadd.f32 %v9258, %v9562
  %v9564 = vpop.f32.mrf.mxu0
  %v9565 = vpop.f32.mrf.mxu0
  %v9566 = vadd.f32 %v9263, %v9565
  %v9567 = vpop.f32.mrf.mxu0
  %9568 = vmatprep.mubr.bf16.mxu0 %v9314
  %9569 = vmatmul.mubr.bf16.gmra.mxu0 %v9313
  %v9570 = vpop.f32.mrf.mxu0
  %v9571 = vadd.f32 %v9268, %v9570
  %v9572 = vpop.f32.mrf.mxu0
  %v9573 = vpop.f32.mrf.mxu0
  %v9574 = vadd.f32 %v9273, %v9573
  %v9575 = vpop.f32.mrf.mxu0
  %9576 = vmatprep.mubr.bf16.mxu0 %v9316
  %9577 = vmatmul.mubr.bf16.gmra.mxu0 %v9315
  %v9578 = vpop.f32.mrf.mxu0
  %v9579 = vadd.f32 %v9278, %v9578
  %v9580 = vpop.f32.mrf.mxu0
  %v9581 = vpop.f32.mrf.mxu0
  %v9582 = vadd.f32 %v9283, %v9581
  %v9583 = vpop.f32.mrf.mxu0
  %9584 = vdwg.mxu0
  %9585 = vst.msk [vmem:[%s14] sm:$0xff] %vm568, %v9360
  %9586 = vst.msk [vmem:[%s14 + $0x8] sm:$0xff] %vm568, %v9363
  %9587 = vst.msk [vmem:[%s14 + $0x10] sm:$0xff] %vm568, %v9368
  %9588 = vst.msk [vmem:[%s14 + $0x18] sm:$0xff] %vm568, %v9371
  %9589 = vst.msk [vmem:[%s14 + $0x20] sm:$0xff] %vm568, %v9376
  %9590 = vst.msk [vmem:[%s14 + $0x28] sm:$0xff] %vm568, %v9379
  %9591 = vst.msk [vmem:[%s14 + $0x30] sm:$0xff] %vm568, %v9384
  %9592 = vst.msk [vmem:[%s14 + $0x38] sm:$0xff] %vm568, %v9387
  %9593 = vst.msk [vmem:[%s14 + $0x40] sm:$0xff] %vm568, %v9425
  %9594 = vst.msk [vmem:[%s14 + $0x48] sm:$0xff] %vm568, %v9428
  %9595 = vst.msk [vmem:[%s14 + $0x50] sm:$0xff] %vm568, %v9433
  %9596 = vst.msk [vmem:[%s14 + $0x58] sm:$0xff] %vm568, %v9436
  %9597 = vst.msk [vmem:[%s14 + $0x60] sm:$0xff] %vm568, %v9441
  %9598 = vst.msk [vmem:[%s14 + $0x68] sm:$0xff] %vm568, %v9444
  %9599 = vst.msk [vmem:[%s14 + $0x70] sm:$0xff] %vm568, %v9449
  %9600 = vst.msk [vmem:[%s14 + $0x78] sm:$0xff] %vm568, %v9452
  %9601 = vst.msk [vmem:[%s14 + $0x80] sm:$0xff] %vm568, %v9490
  %9602 = vst.msk [vmem:[%s14 + $0x88] sm:$0xff] %vm568, %v9493
  %9603 = vst.msk [vmem:[%s14 + $0x90] sm:$0xff] %vm568, %v9498
  %9604 = vst.msk [vmem:[%s14 + $0x98] sm:$0xff] %vm568, %v9501
  %9605 = vst.msk [vmem:[%s14 + $0xa0] sm:$0xff] %vm568, %v9506
  %9606 = vst.msk [vmem:[%s14 + $0xa8] sm:$0xff] %vm568, %v9509
  %9607 = vst.msk [vmem:[%s14 + $0xb0] sm:$0xff] %vm568, %v9514
  %9608 = vst.msk [vmem:[%s14 + $0xb8] sm:$0xff] %vm568, %v9517
  %9609 = vst.msk [vmem:[%s14 + $0xc0] sm:$0xff] %vm568, %v9555
  %9610 = vst.msk [vmem:[%s14 + $0xc8] sm:$0xff] %vm568, %v9558
  %9611 = vst.msk [vmem:[%s14 + $0xd0] sm:$0xff] %vm568, %v9563
  %9612 = vst.msk [vmem:[%s14 + $0xd8] sm:$0xff] %vm568, %v9566
  %9613 = vst.msk [vmem:[%s14 + $0xe0] sm:$0xff] %vm568, %v9571
  %9614 = vst.msk [vmem:[%s14 + $0xe8] sm:$0xff] %vm568, %v9574
  %9615 = vst.msk [vmem:[%s14 + $0xf0] sm:$0xff] %vm568, %v9579
  %9616 = vst.msk [vmem:[%s14 + $0xf8] sm:$0xff] %vm568, %v9582
  // Predicated region
  $region58: #{snake2d_forward.1} parent=0 // pred_check
    _
  $region59: #{snake2d_forward.1} parent=0 // pred_check_branch
    %9618 = sbr.rel (0) target = $region61
  $region60: #{snake2d_forward.1} parent=0 // pred_region
    _
  $region61: #{snake2d_forward.1} parent=0 // pred_fallthru
    _
  // Predicated region
  $region62: #{snake2d_forward.1} parent=0 // pred_check
    _
  $region63: #{snake2d_forward.1} parent=0 // pred_check_branch
    %9620 = sbr.rel (0) target = $region65
  $region64: #{snake2d_forward.1} parent=0 // pred_region
    _
  $region65: #{snake2d_forward.1} parent=0 // pred_fallthru
    _

</llo_original>
